<compile_context>
chip_gen: v7x
topology: tpu7x:2x2x1
jax: 0.10.0
libtpu: 0.0.40
codegen_flags: <defaults>
</compile_context>

<pallas_src>
import functools
import math

import jax
import jax.numpy as jnp
from jax.experimental import pallas as pl
from jax.experimental.pallas import tpu as pltpu


# ----------------------------------------------------------------------------
# The fused kernel (one grid step == one batch element)
# ----------------------------------------------------------------------------
def _prep_kernel(
    # per-sample inputs
    xin_ref,      # (1, T, Din)  raw phn_embed
    bias_ref,     # (1, T, D)    canon-embedding gather + positional encoding
    rel_ref,      # (1, T, D)    rel-pos embedding gather
    # input projection
    inw_ref, inb_ref,
    # stacked transformer-block weights, leading dim = depth + 2
    n1g_ref, n1b_ref, qkvw_ref, qkvb_ref, pjw_ref, pjb_ref,
    n2g_ref, n2b_ref, f1w_ref, f1b_ref, f2w_ref, f2b_ref,
    # depthwise-separable conv
    dsw_ref, dsb_ref, pww_ref, pwb_ref,
    # additive pooling attention
    aw_ref, ab_ref, av_ref,
    # stacked scoring heads (0=phone, 1=word, 2=utt)
    hg_ref, hb_ref, hw_ref, hbb_ref,
    # outputs
    utt_ref,      # (1, 1, 1)
    phone_ref,    # (1, T, 1)
    word_ref,     # (1, T, 1)
    *, depth, num_heads):
    f32 = jnp.float32
    D = inw_ref.shape[1]
    hd = D // num_heads
    scale = hd ** -0.5

    def mm(a, w):
        # bf16 operands on the MXU, f32 accumulation
        return jnp.dot(a.astype(jnp.bfloat16), w.astype(jnp.bfloat16),
                       preferred_element_type=f32)

    def ln(x, g, b):
        m = jnp.mean(x, axis=-1, keepdims=True)
        v = jnp.mean((x - m) ** 2, axis=-1, keepdims=True)
        return (x - m) * jax.lax.rsqrt(v + 1e-5) * g + b

    def block(x, d):
        # pre-norm transformer block: x + MHA(LN(x)); x + MLP(LN(x))
        h = ln(x, n1g_ref[d], n1b_ref[d])
        qkv = mm(h, qkvw_ref[d]) + qkvb_ref[d]                      # (T, 3D)
        outs = []
        for hh in range(num_heads):                                 # unrolled
            q = qkv[:, hh * hd:(hh + 1) * hd]
            k = qkv[:, D + hh * hd:D + (hh + 1) * hd]
            v = qkv[:, 2 * D + hh * hd:2 * D + (hh + 1) * hd]
            s = jnp.dot(q, k.T, preferred_element_type=f32) * scale  # (T, T)
            s = s - jnp.max(s, axis=-1, keepdims=True)
            p = jnp.exp(s)
            p = p * pl.reciprocal(jnp.sum(p, axis=-1, keepdims=True), approx=True)
            outs.append(jnp.dot(p, v, preferred_element_type=f32))   # (T, hd)
        a = jnp.concatenate(outs, axis=-1)                           # (T, D)
        x = x + mm(a, pjw_ref[d]) + pjb_ref[d]
        h = ln(x, n2g_ref[d], n2b_ref[d])
        # TODO(synk): PyTorch nn.GELU defaults to exact erf; tanh approximation
        # used here (erf lowering on Mosaic not relied upon) -> ~1e-3 delta.
        h = jax.nn.gelu(mm(h, f1w_ref[d]) + f1b_ref[d], approximate=True)
        return x + mm(h, f2w_ref[d]) + f2b_ref[d]

    def head(x, i):
        # LayerNorm + Linear(D -> 1) as VPU multiply + lane reduction
        h = ln(x, hg_ref[i], hb_ref[i])
        return jnp.sum(h * hw_ref[i], axis=-1, keepdims=True) + hbb_ref[i]

    # ---------------- phone stream ----------------
    x0 = xin_ref[0].astype(f32)                                      # (T, Din)
    p_x = mm(x0, inw_ref[...]) + inb_ref[...] + bias_ref[0]          # (T, D)
    for d in range(depth):
        p_x = block(p_x, d)
    phone_ref[0] = head(p_x, 0).astype(phone_ref.dtype)              # (T, 1)

    # ---------------- word stream ----------------
    w_x = p_x + rel_ref[0]
    # depthwise conv k=3, "same" padding handled in-kernel (no jnp.pad outside)
    dw = dsw_ref[...]                                                # (3, D)
    zrow = jnp.zeros((1, D), f32)
    left = jnp.concatenate([zrow, w_x[:-1, :]], axis=0)              # x[t-1]
    right = jnp.concatenate([w_x[1:, :], zrow], axis=0)              # x[t+1]
    dwout = left * dw[0:1] + w_x * dw[1:2] + right * dw[2:3] + dsb_ref[...]
    w_x = mm(dwout, pww_ref[...]) + pwb_ref[...]                     # pointwise
    w_x = block(w_x, depth)                                          # word Block
    word_ref[0] = head(w_x, 1).astype(word_ref.dtype)                # (T, 1)

    # ---------------- utterance stream ----------------
    w_x = block(w_x, depth + 1)                                      # utt Block
    u_x = p_x + w_x
    proj = jnp.tanh(mm(u_x, aw_ref[...]) + ab_ref[...])              # (T, D)
    score = jnp.sum(proj * av_ref[...], axis=-1, keepdims=True)      # (T, 1)
    score = score - jnp.max(score, axis=0, keepdims=True)
    attw = jnp.exp(score)
    attw = attw * pl.reciprocal(jnp.sum(attw, axis=0, keepdims=True), approx=True)
    pooled = jnp.sum(attw * u_x, axis=0, keepdims=True)              # (1, D)
    utt_ref[0] = head(pooled, 2).astype(utt_ref.dtype)               # (1, 1)


# ----------------------------------------------------------------------------
# Parameters (block weights stored stacked: [0:depth]=phone, depth=word,
# depth+1=utt; heads stacked: 0=phone, 1=word, 2=utt)
# ----------------------------------------------------------------------------
def sinusoidal_pe(max_len, d_model):
    pos = jnp.arange(max_len, dtype=jnp.float32)[:, None]
    div = jnp.exp(jnp.arange(0, d_model, 2, dtype=jnp.float32)
                  * (-math.log(10000.0) / d_model))
    pe = jnp.zeros((max_len, d_model), jnp.float32)
    pe = pe.at[:, 0::2].set(jnp.sin(pos * div))
    pe = pe.at[:, 1::2].set(jnp.cos(pos * div))
    return pe


def init_params(key, embed_dim, num_heads, depth, input_dim, num_phone, max_length):
    D = embed_dim
    NB = depth + 2  # phone blocks + 1 word block + 1 utt block
    keys = iter(jax.random.split(key, 64))

    def nrm(shape, scale=0.02):
        return scale * jax.random.normal(next(keys), shape, dtype=jnp.float32)

    zeros = lambda s: jnp.zeros(s, jnp.float32)
    ones = lambda s: jnp.ones(s, jnp.float32)

    # NOTE: phn_canon_in_proj exists in the PyTorch __init__ but is unused in
    # forward; it is intentionally omitted here.
    return dict(
        phn_in_w=nrm((input_dim, D)), phn_in_b=zeros((1, D)),
        phn_canon_emb=nrm((num_phone, D), 1.0),
        rel_pos_emb=nrm((5, D), 1.0),
        pos_pe=sinusoidal_pe(max_length, D),
        # stacked transformer blocks
        n1g=ones((NB, 1, D)), n1b=zeros((NB, 1, D)),
        qkv_w=nrm((NB, D, 3 * D)), qkv_b=zeros((NB, 1, 3 * D)),
        proj_w=nrm((NB, D, D)), proj_b=zeros((NB, 1, D)),
        n2g=ones((NB, 1, D)), n2b=zeros((NB, 1, D)),
        fc1_w=nrm((NB, D, 4 * D)), fc1_b=zeros((NB, 1, 4 * D)),
        fc2_w=nrm((NB, 4 * D, D)), fc2_b=zeros((NB, 1, D)),
        # depthwise-separable conv (k=3)
        ds_dw=nrm((3, D)), ds_db=zeros((1, D)),
        ds_pw=nrm((D, D)), ds_pb=zeros((1, D)),
        # additive pooling attention
        addi_w=nrm((D, D)), addi_b=zeros((1, D)), addi_v=nrm((1, D)),
        # stacked scoring heads
        head_g=ones((3, 1, D)), head_b=zeros((3, 1, D)),
        head_w=nrm((3, 1, D)), head_bias=zeros((3, 1, 1)),
    )


# ----------------------------------------------------------------------------
# Forward: one pallas_call for the whole model
# ----------------------------------------------------------------------------
_WEIGHT_NAMES = [
    "phn_in_w", "phn_in_b",
    "n1g", "n1b", "qkv_w", "qkv_b", "proj_w", "proj_b",
    "n2g", "n2b", "fc1_w", "fc1_b", "fc2_w", "fc2_b",
    "ds_dw", "ds_db", "ds_pw", "ds_pb",
    "addi_w", "addi_b", "addi_v",
    "head_g", "head_b", "head_w", "head_bias",
]


def prep_model_forward(params, phn_embed, phn_canonical, rel_pos, num_heads):
    B, T, _ = phn_embed.shape
    depth = params["qkv_w"].shape[0] - 2

    # tiny XLA glue: embedding gathers + PE slice
    canon = params["phn_canon_emb"][phn_canonical]            # (B, T, D)
    pe = params["pos_pe"][:T][None, :, :]                     # (1, T, D)
    add_in = canon + pe                                       # (B, T, D)
    rel = params["rel_pos_emb"][rel_pos]                      # (B, T, D)

    def sspec(x):
        shp = (1,) + x.shape[1:]
        return pl.BlockSpec(shp, lambda b, nd=x.ndim: (b,) + (0,) * (nd - 1))

    def wspec(x):
        return pl.BlockSpec(x.shape, lambda b, nd=x.ndim: (0,) * nd)

    sample_inputs = [phn_embed, add_in, rel]
    weights = [params[n] for n in _WEIGHT_NAMES]
    in_specs = [sspec(a) for a in sample_inputs] + [wspec(w) for w in weights]

    out_shape = (
        jax.ShapeDtypeStruct((B, 1, 1), jnp.float32),   # utt (squeezed below)
        jax.ShapeDtypeStruct((B, T, 1), jnp.float32),   # phone
        jax.ShapeDtypeStruct((B, T, 1), jnp.float32),   # word
    )
    out_specs = (
        pl.BlockSpec((1, 1, 1), lambda b: (b, 0, 0)),
        pl.BlockSpec((1, T, 1), lambda b: (b, 0, 0)),
        pl.BlockSpec((1, T, 1), lambda b: (b, 0, 0)),
    )

    utt3, phone, word = pl.pallas_call(
        functools.partial(_prep_kernel, depth=depth, num_heads=num_heads),
        grid=(B,),
        in_specs=in_specs,
        out_specs=out_specs,
        out_shape=out_shape,
        compiler_params=pltpu.CompilerParams(
            dimension_semantics=("parallel",)),
    )(*sample_inputs, *weights)

    # TODO(synk): dropout omitted (inference/eval); AdditiveAttention's attn
    # weights are discarded by the original forward as well.
    return utt3[:, 0, :], phone, word


# ----------------------------------------------------------------------------
if __name__ == "__main__":
    embed_dim, num_heads, depth = 32, 4, 2
    input_dim, num_phone, max_length = 24, 46, 50
    B, T = 2, 8

    key = jax.random.PRNGKey(0)
    kp, kx, kc, kr = jax.random.split(key, 4)

    params = init_params(kp, embed_dim, num_heads, depth,
                         input_dim, num_phone, max_length)
    phn_embed = jax.random.normal(kx, (B, T, input_dim), dtype=jnp.float32)
    phn_canonical = jax.random.randint(kc, (B, T), 0, num_phone)
    rel_pos = jax.random.randint(kr, (B, T), 0, 5)

    fwd = jax.jit(functools.partial(prep_model_forward, num_heads=num_heads))
    utt, phone, word = fwd(params, phn_embed, phn_canonical, rel_pos)
    jax.block_until_ready((utt, phone, word))

    assert utt.shape == (B, 1), utt.shape
    assert phone.shape == (B, T, 1), phone.shape
    assert word.shape == (B, T, 1), word.shape
    assert (jnp.all(jnp.isfinite(utt)) and jnp.all(jnp.isfinite(phone))
            and jnp.all(jnp.isfinite(word)))
    print("KERNEL_OK")
</pallas_src>

<mosaic_0001>
module attributes {stable_mosaic.version = 11 : i64} {
  func.func @_prep_kernel(%arg0: i32, %arg1: memref<1x8x24xf32, #tpu.memory_space<vmem>>, %arg2: memref<1x8x32xf32, #tpu.memory_space<vmem>>, %arg3: memref<1x8x32xf32, #tpu.memory_space<vmem>>, %arg4: memref<24x32xf32, #tpu.memory_space<vmem>>, %arg5: memref<1x32xf32, #tpu.memory_space<vmem>>, %arg6: memref<4x1x32xf32, #tpu.memory_space<vmem>>, %arg7: memref<4x1x32xf32, #tpu.memory_space<vmem>>, %arg8: memref<4x32x96xf32, #tpu.memory_space<vmem>>, %arg9: memref<4x1x96xf32, #tpu.memory_space<vmem>>, %arg10: memref<4x32x32xf32, #tpu.memory_space<vmem>>, %arg11: memref<4x1x32xf32, #tpu.memory_space<vmem>>, %arg12: memref<4x1x32xf32, #tpu.memory_space<vmem>>, %arg13: memref<4x1x32xf32, #tpu.memory_space<vmem>>, %arg14: memref<4x32x128xf32, #tpu.memory_space<vmem>>, %arg15: memref<4x1x128xf32, #tpu.memory_space<vmem>>, %arg16: memref<4x128x32xf32, #tpu.memory_space<vmem>>, %arg17: memref<4x1x32xf32, #tpu.memory_space<vmem>>, %arg18: memref<3x32xf32, #tpu.memory_space<vmem>>, %arg19: memref<1x32xf32, #tpu.memory_space<vmem>>, %arg20: memref<32x32xf32, #tpu.memory_space<vmem>>, %arg21: memref<1x32xf32, #tpu.memory_space<vmem>>, %arg22: memref<32x32xf32, #tpu.memory_space<vmem>>, %arg23: memref<1x32xf32, #tpu.memory_space<vmem>>, %arg24: memref<1x32xf32, #tpu.memory_space<vmem>>, %arg25: memref<3x1x32xf32, #tpu.memory_space<vmem>>, %arg26: memref<3x1x32xf32, #tpu.memory_space<vmem>>, %arg27: memref<3x1x32xf32, #tpu.memory_space<vmem>>, %arg28: memref<3x1x1xf32, #tpu.memory_space<vmem>>, %arg29: memref<1x1x1xf32, #tpu.memory_space<vmem>>, %arg30: memref<1x8x1xf32, #tpu.memory_space<vmem>>, %arg31: memref<1x8x1xf32, #tpu.memory_space<vmem>>) attributes {dimension_semantics = [#tpu.dimension_semantics<parallel>], iteration_bounds = array<i64: 2>, scalar_prefetch = 0 : i64, scratch_operands = 0 : i64, tpu.core_type = #tpu.core_type<tc>, window_params = [{transform_indices = @transform_0, window_bounds = array<i64: 1, 8, 24>}, {transform_indices = @transform_1, window_bounds = array<i64: 1, 8, 32>}, {transform_indices = @transform_2, window_bounds = array<i64: 1, 8, 32>}, {pipeline_mode = #tpu.pipeline_mode<synchronous>, transform_indices = @transform_3, window_bounds = array<i64: 24, 32>}, {pipeline_mode = #tpu.pipeline_mode<synchronous>, transform_indices = @transform_4, window_bounds = array<i64: 1, 32>}, {pipeline_mode = #tpu.pipeline_mode<synchronous>, transform_indices = @transform_5, window_bounds = array<i64: 4, 1, 32>}, {pipeline_mode = #tpu.pipeline_mode<synchronous>, transform_indices = @transform_6, window_bounds = array<i64: 4, 1, 32>}, {pipeline_mode = #tpu.pipeline_mode<synchronous>, transform_indices = @transform_7, window_bounds = array<i64: 4, 32, 96>}, {pipeline_mode = #tpu.pipeline_mode<synchronous>, transform_indices = @transform_8, window_bounds = array<i64: 4, 1, 96>}, {pipeline_mode = #tpu.pipeline_mode<synchronous>, transform_indices = @transform_9, window_bounds = array<i64: 4, 32, 32>}, {pipeline_mode = #tpu.pipeline_mode<synchronous>, transform_indices = @transform_10, window_bounds = array<i64: 4, 1, 32>}, {pipeline_mode = #tpu.pipeline_mode<synchronous>, transform_indices = @transform_11, window_bounds = array<i64: 4, 1, 32>}, {pipeline_mode = #tpu.pipeline_mode<synchronous>, transform_indices = @transform_12, window_bounds = array<i64: 4, 1, 32>}, {pipeline_mode = #tpu.pipeline_mode<synchronous>, transform_indices = @transform_13, window_bounds = array<i64: 4, 32, 128>}, {pipeline_mode = #tpu.pipeline_mode<synchronous>, transform_indices = @transform_14, window_bounds = array<i64: 4, 1, 128>}, {pipeline_mode = #tpu.pipeline_mode<synchronous>, transform_indices = @transform_15, window_bounds = array<i64: 4, 128, 32>}, {pipeline_mode = #tpu.pipeline_mode<synchronous>, transform_indices = @transform_16, window_bounds = array<i64: 4, 1, 32>}, {pipeline_mode = #tpu.pipeline_mode<synchronous>, transform_indices = @transform_17, window_bounds = array<i64: 3, 32>}, {pipeline_mode = #tpu.pipeline_mode<synchronous>, transform_indices = @transform_18, window_bounds = array<i64: 1, 32>}, {pipeline_mode = #tpu.pipeline_mode<synchronous>, transform_indices = @transform_19, window_bounds = array<i64: 32, 32>}, {pipeline_mode = #tpu.pipeline_mode<synchronous>, transform_indices = @transform_20, window_bounds = array<i64: 1, 32>}, {pipeline_mode = #tpu.pipeline_mode<synchronous>, transform_indices = @transform_21, window_bounds = array<i64: 32, 32>}, {pipeline_mode = #tpu.pipeline_mode<synchronous>, transform_indices = @transform_22, window_bounds = array<i64: 1, 32>}, {pipeline_mode = #tpu.pipeline_mode<synchronous>, transform_indices = @transform_23, window_bounds = array<i64: 1, 32>}, {pipeline_mode = #tpu.pipeline_mode<synchronous>, transform_indices = @transform_24, window_bounds = array<i64: 3, 1, 32>}, {pipeline_mode = #tpu.pipeline_mode<synchronous>, transform_indices = @transform_25, window_bounds = array<i64: 3, 1, 32>}, {pipeline_mode = #tpu.pipeline_mode<synchronous>, transform_indices = @transform_26, window_bounds = array<i64: 3, 1, 32>}, {pipeline_mode = #tpu.pipeline_mode<synchronous>, transform_indices = @transform_27, window_bounds = array<i64: 3, 1, 1>}, {transform_indices = @transform_28, window_bounds = array<i64: 1, 1, 1>}, {transform_indices = @transform_29, window_bounds = array<i64: 1, 8, 1>}, {transform_indices = @transform_30, window_bounds = array<i64: 1, 8, 1>}]} {
    %c0 = arith.constant 0 : index
    %c0_0 = arith.constant 0 : index
    %c0_1 = arith.constant 0 : index
    %0 = vector.load %arg1[%c0, %c0_0, %c0_1] : memref<1x8x24xf32, #tpu.memory_space<vmem>>, vector<1x8x24xf32>
    %1 = vector.shape_cast %0 : vector<1x8x24xf32> to vector<8x24xf32>
    %c0_2 = arith.constant 0 : index
    %c0_3 = arith.constant 0 : index
    %2 = vector.load %arg4[%c0_2, %c0_3] : memref<24x32xf32, #tpu.memory_space<vmem>>, vector<24x32xf32>
    %3 = arith.truncf %1 : vector<8x24xf32> to vector<8x24xbf16>
    %4 = arith.truncf %2 : vector<24x32xf32> to vector<24x32xbf16>
    %cst = arith.constant dense<0.000000e+00> : vector<8x32xf32>
    %5 = tpu.matmul %3, %4, %cst {dimension_numbers = #tpu.dot_dimension_numbers<[1], [0], [0], [1], [0, 0, 1, 1], [], []>} : vector<8x24xbf16>, vector<24x32xbf16>, vector<8x32xf32> -> vector<8x32xf32>
    %c0_4 = arith.constant 0 : index
    %c0_5 = arith.constant 0 : index
    %6 = vector.load %arg5[%c0_4, %c0_5] : memref<1x32xf32, #tpu.memory_space<vmem>>, vector<1x32xf32>
    %7 = vector.broadcast %6 : vector<1x32xf32> to vector<8x32xf32>
    %8 = arith.addf %5, %7 : vector<8x32xf32>
    %c0_6 = arith.constant 0 : index
    %c0_7 = arith.constant 0 : index
    %c0_8 = arith.constant 0 : index
    %9 = vector.load %arg2[%c0_6, %c0_7, %c0_8] : memref<1x8x32xf32, #tpu.memory_space<vmem>>, vector<1x8x32xf32>
    %10 = vector.shape_cast %9 : vector<1x8x32xf32> to vector<8x32xf32>
    %11 = arith.addf %8, %10 : vector<8x32xf32>
    %c0_9 = arith.constant 0 : index
    %c0_10 = arith.constant 0 : index
    %c0_11 = arith.constant 0 : index
    %12 = vector.load %arg6[%c0_9, %c0_10, %c0_11] : memref<4x1x32xf32, #tpu.memory_space<vmem>>, vector<1x1x32xf32>
    %13 = vector.shape_cast %12 : vector<1x1x32xf32> to vector<1x32xf32>
    %c0_12 = arith.constant 0 : index
    %c0_13 = arith.constant 0 : index
    %c0_14 = arith.constant 0 : index
    %14 = vector.load %arg7[%c0_12, %c0_13, %c0_14] : memref<4x1x32xf32, #tpu.memory_space<vmem>>, vector<1x1x32xf32>
    %15 = vector.shape_cast %14 : vector<1x1x32xf32> to vector<1x32xf32>
    %cst_15 = arith.constant dense<0.000000e+00> : vector<8xf32>
    %16 = vector.multi_reduction <add>, %11, %cst_15 [1] : vector<8x32xf32> to vector<8xf32>
    %17 = vector.shape_cast %16 : vector<8xf32> to vector<8x1xf32>
    %cst_16 = arith.constant 3.200000e+01 : f32
    %18 = vector.broadcast %cst_16 : f32 to vector<8x1xf32>
    %19 = arith.divf %17, %18 : vector<8x1xf32>
    %20 = vector.broadcast %19 : vector<8x1xf32> to vector<8x32xf32>
    %21 = arith.subf %11, %20 : vector<8x32xf32>
    %22 = arith.mulf %21, %21 : vector<8x32xf32>
    %cst_17 = arith.constant dense<0.000000e+00> : vector<8xf32>
    %23 = vector.multi_reduction <add>, %22, %cst_17 [1] : vector<8x32xf32> to vector<8xf32>
    %24 = vector.shape_cast %23 : vector<8xf32> to vector<8x1xf32>
    %cst_18 = arith.constant 3.200000e+01 : f32
    %25 = vector.broadcast %cst_18 : f32 to vector<8x1xf32>
    %26 = arith.divf %24, %25 : vector<8x1xf32>
    %27 = vector.broadcast %19 : vector<8x1xf32> to vector<8x32xf32>
    %28 = arith.subf %11, %27 : vector<8x32xf32>
    %cst_19 = arith.constant 9.99999974E-6 : f32
    %29 = vector.broadcast %cst_19 : f32 to vector<8x1xf32>
    %30 = arith.addf %26, %29 : vector<8x1xf32>
    %31 = math.rsqrt %30 : vector<8x1xf32>
    %32 = vector.broadcast %31 : vector<8x1xf32> to vector<8x32xf32>
    %33 = arith.mulf %28, %32 : vector<8x32xf32>
    %34 = vector.broadcast %13 : vector<1x32xf32> to vector<8x32xf32>
    %35 = arith.mulf %33, %34 : vector<8x32xf32>
    %36 = vector.broadcast %15 : vector<1x32xf32> to vector<8x32xf32>
    %37 = arith.addf %35, %36 : vector<8x32xf32>
    %c0_20 = arith.constant 0 : index
    %c0_21 = arith.constant 0 : index
    %c0_22 = arith.constant 0 : index
    %38 = vector.load %arg8[%c0_20, %c0_21, %c0_22] : memref<4x32x96xf32, #tpu.memory_space<vmem>>, vector<1x32x96xf32>
    %39 = vector.shape_cast %38 : vector<1x32x96xf32> to vector<32x96xf32>
    %40 = arith.truncf %37 : vector<8x32xf32> to vector<8x32xbf16>
    %41 = arith.truncf %39 : vector<32x96xf32> to vector<32x96xbf16>
    %cst_23 = arith.constant dense<0.000000e+00> : vector<8x96xf32>
    %42 = tpu.matmul %40, %41, %cst_23 {dimension_numbers = #tpu.dot_dimension_numbers<[1], [0], [0], [1], [0, 0, 1, 1], [], []>} : vector<8x32xbf16>, vector<32x96xbf16>, vector<8x96xf32> -> vector<8x96xf32>
    %c0_24 = arith.constant 0 : index
    %c0_25 = arith.constant 0 : index
    %c0_26 = arith.constant 0 : index
    %43 = vector.load %arg9[%c0_24, %c0_25, %c0_26] : memref<4x1x96xf32, #tpu.memory_space<vmem>>, vector<1x1x96xf32>
    %44 = vector.shape_cast %43 : vector<1x1x96xf32> to vector<1x96xf32>
    %45 = vector.broadcast %44 : vector<1x96xf32> to vector<8x96xf32>
    %46 = arith.addf %42, %45 : vector<8x96xf32>
    %47 = vector.extract_strided_slice %46 {offsets = [0, 0], sizes = [8, 8], strides = [1, 1]} : vector<8x96xf32> to vector<8x8xf32>
    %48 = vector.extract_strided_slice %46 {offsets = [0, 32], sizes = [8, 8], strides = [1, 1]} : vector<8x96xf32> to vector<8x8xf32>
    %49 = vector.extract_strided_slice %46 {offsets = [0, 64], sizes = [8, 8], strides = [1, 1]} : vector<8x96xf32> to vector<8x8xf32>
    %50 = tpu.transpose %48, [1, 0] : vector<8x8xf32> -> vector<8x8xf32>
    %cst_27 = arith.constant dense<0.000000e+00> : vector<8x8xf32>
    %51 = tpu.matmul %47, %50, %cst_27 {dimension_numbers = #tpu.dot_dimension_numbers<[1], [0], [0], [1], [0, 0, 1, 1], [], []>} : vector<8x8xf32>, vector<8x8xf32>, vector<8x8xf32> -> vector<8x8xf32>
    %cst_28 = arith.constant 0.353553385 : f32
    %52 = vector.broadcast %cst_28 : f32 to vector<8x8xf32>
    %53 = arith.mulf %51, %52 : vector<8x8xf32>
    %cst_29 = arith.constant dense<0xFF800000> : vector<8xf32>
    %54 = vector.multi_reduction <maximumf>, %53, %cst_29 [1] : vector<8x8xf32> to vector<8xf32>
    %55 = vector.shape_cast %54 : vector<8xf32> to vector<8x1xf32>
    %56 = vector.broadcast %55 : vector<8x1xf32> to vector<8x8xf32>
    %57 = arith.subf %53, %56 : vector<8x8xf32>
    %58 = math.exp %57 : vector<8x8xf32>
    %cst_30 = arith.constant dense<0.000000e+00> : vector<8xf32>
    %59 = vector.multi_reduction <add>, %58, %cst_30 [1] : vector<8x8xf32> to vector<8xf32>
    %60 = vector.shape_cast %59 : vector<8xf32> to vector<8x1xf32>
    %61 = tpu.reciprocal %60 {approx = true} : vector<8x1xf32> -> vector<8x1xf32>
    %62 = vector.broadcast %61 : vector<8x1xf32> to vector<8x8xf32>
    %63 = arith.mulf %58, %62 : vector<8x8xf32>
    %cst_31 = arith.constant dense<0.000000e+00> : vector<8x8xf32>
    %64 = tpu.matmul %63, %49, %cst_31 {dimension_numbers = #tpu.dot_dimension_numbers<[1], [0], [0], [1], [0, 0, 1, 1], [], []>} : vector<8x8xf32>, vector<8x8xf32>, vector<8x8xf32> -> vector<8x8xf32>
    %65 = vector.extract_strided_slice %46 {offsets = [0, 8], sizes = [8, 8], strides = [1, 1]} : vector<8x96xf32> to vector<8x8xf32>
    %66 = vector.extract_strided_slice %46 {offsets = [0, 40], sizes = [8, 8], strides = [1, 1]} : vector<8x96xf32> to vector<8x8xf32>
    %67 = vector.extract_strided_slice %46 {offsets = [0, 72], sizes = [8, 8], strides = [1, 1]} : vector<8x96xf32> to vector<8x8xf32>
    %68 = tpu.transpose %66, [1, 0] : vector<8x8xf32> -> vector<8x8xf32>
    %cst_32 = arith.constant dense<0.000000e+00> : vector<8x8xf32>
    %69 = tpu.matmul %65, %68, %cst_32 {dimension_numbers = #tpu.dot_dimension_numbers<[1], [0], [0], [1], [0, 0, 1, 1], [], []>} : vector<8x8xf32>, vector<8x8xf32>, vector<8x8xf32> -> vector<8x8xf32>
    %cst_33 = arith.constant 0.353553385 : f32
    %70 = vector.broadcast %cst_33 : f32 to vector<8x8xf32>
    %71 = arith.mulf %69, %70 : vector<8x8xf32>
    %cst_34 = arith.constant dense<0xFF800000> : vector<8xf32>
    %72 = vector.multi_reduction <maximumf>, %71, %cst_34 [1] : vector<8x8xf32> to vector<8xf32>
    %73 = vector.shape_cast %72 : vector<8xf32> to vector<8x1xf32>
    %74 = vector.broadcast %73 : vector<8x1xf32> to vector<8x8xf32>
    %75 = arith.subf %71, %74 : vector<8x8xf32>
    %76 = math.exp %75 : vector<8x8xf32>
    %cst_35 = arith.constant dense<0.000000e+00> : vector<8xf32>
    %77 = vector.multi_reduction <add>, %76, %cst_35 [1] : vector<8x8xf32> to vector<8xf32>
    %78 = vector.shape_cast %77 : vector<8xf32> to vector<8x1xf32>
    %79 = tpu.reciprocal %78 {approx = true} : vector<8x1xf32> -> vector<8x1xf32>
    %80 = vector.broadcast %79 : vector<8x1xf32> to vector<8x8xf32>
    %81 = arith.mulf %76, %80 : vector<8x8xf32>
    %cst_36 = arith.constant dense<0.000000e+00> : vector<8x8xf32>
    %82 = tpu.matmul %81, %67, %cst_36 {dimension_numbers = #tpu.dot_dimension_numbers<[1], [0], [0], [1], [0, 0, 1, 1], [], []>} : vector<8x8xf32>, vector<8x8xf32>, vector<8x8xf32> -> vector<8x8xf32>
    %83 = vector.extract_strided_slice %46 {offsets = [0, 16], sizes = [8, 8], strides = [1, 1]} : vector<8x96xf32> to vector<8x8xf32>
    %84 = vector.extract_strided_slice %46 {offsets = [0, 48], sizes = [8, 8], strides = [1, 1]} : vector<8x96xf32> to vector<8x8xf32>
    %85 = vector.extract_strided_slice %46 {offsets = [0, 80], sizes = [8, 8], strides = [1, 1]} : vector<8x96xf32> to vector<8x8xf32>
    %86 = tpu.transpose %84, [1, 0] : vector<8x8xf32> -> vector<8x8xf32>
    %cst_37 = arith.constant dense<0.000000e+00> : vector<8x8xf32>
    %87 = tpu.matmul %83, %86, %cst_37 {dimension_numbers = #tpu.dot_dimension_numbers<[1], [0], [0], [1], [0, 0, 1, 1], [], []>} : vector<8x8xf32>, vector<8x8xf32>, vector<8x8xf32> -> vector<8x8xf32>
    %cst_38 = arith.constant 0.353553385 : f32
    %88 = vector.broadcast %cst_38 : f32 to vector<8x8xf32>
    %89 = arith.mulf %87, %88 : vector<8x8xf32>
    %cst_39 = arith.constant dense<0xFF800000> : vector<8xf32>
    %90 = vector.multi_reduction <maximumf>, %89, %cst_39 [1] : vector<8x8xf32> to vector<8xf32>
    %91 = vector.shape_cast %90 : vector<8xf32> to vector<8x1xf32>
    %92 = vector.broadcast %91 : vector<8x1xf32> to vector<8x8xf32>
    %93 = arith.subf %89, %92 : vector<8x8xf32>
    %94 = math.exp %93 : vector<8x8xf32>
    %cst_40 = arith.constant dense<0.000000e+00> : vector<8xf32>
    %95 = vector.multi_reduction <add>, %94, %cst_40 [1] : vector<8x8xf32> to vector<8xf32>
    %96 = vector.shape_cast %95 : vector<8xf32> to vector<8x1xf32>
    %97 = tpu.reciprocal %96 {approx = true} : vector<8x1xf32> -> vector<8x1xf32>
    %98 = vector.broadcast %97 : vector<8x1xf32> to vector<8x8xf32>
    %99 = arith.mulf %94, %98 : vector<8x8xf32>
    %cst_41 = arith.constant dense<0.000000e+00> : vector<8x8xf32>
    %100 = tpu.matmul %99, %85, %cst_41 {dimension_numbers = #tpu.dot_dimension_numbers<[1], [0], [0], [1], [0, 0, 1, 1], [], []>} : vector<8x8xf32>, vector<8x8xf32>, vector<8x8xf32> -> vector<8x8xf32>
    %101 = vector.extract_strided_slice %46 {offsets = [0, 24], sizes = [8, 8], strides = [1, 1]} : vector<8x96xf32> to vector<8x8xf32>
    %102 = vector.extract_strided_slice %46 {offsets = [0, 56], sizes = [8, 8], strides = [1, 1]} : vector<8x96xf32> to vector<8x8xf32>
    %103 = vector.extract_strided_slice %46 {offsets = [0, 88], sizes = [8, 8], strides = [1, 1]} : vector<8x96xf32> to vector<8x8xf32>
    %104 = tpu.transpose %102, [1, 0] : vector<8x8xf32> -> vector<8x8xf32>
    %cst_42 = arith.constant dense<0.000000e+00> : vector<8x8xf32>
    %105 = tpu.matmul %101, %104, %cst_42 {dimension_numbers = #tpu.dot_dimension_numbers<[1], [0], [0], [1], [0, 0, 1, 1], [], []>} : vector<8x8xf32>, vector<8x8xf32>, vector<8x8xf32> -> vector<8x8xf32>
    %cst_43 = arith.constant 0.353553385 : f32
    %106 = vector.broadcast %cst_43 : f32 to vector<8x8xf32>
    %107 = arith.mulf %105, %106 : vector<8x8xf32>
    %cst_44 = arith.constant dense<0xFF800000> : vector<8xf32>
    %108 = vector.multi_reduction <maximumf>, %107, %cst_44 [1] : vector<8x8xf32> to vector<8xf32>
    %109 = vector.shape_cast %108 : vector<8xf32> to vector<8x1xf32>
    %110 = vector.broadcast %109 : vector<8x1xf32> to vector<8x8xf32>
    %111 = arith.subf %107, %110 : vector<8x8xf32>
    %112 = math.exp %111 : vector<8x8xf32>
    %cst_45 = arith.constant dense<0.000000e+00> : vector<8xf32>
    %113 = vector.multi_reduction <add>, %112, %cst_45 [1] : vector<8x8xf32> to vector<8xf32>
    %114 = vector.shape_cast %113 : vector<8xf32> to vector<8x1xf32>
    %115 = tpu.reciprocal %114 {approx = true} : vector<8x1xf32> -> vector<8x1xf32>
    %116 = vector.broadcast %115 : vector<8x1xf32> to vector<8x8xf32>
    %117 = arith.mulf %112, %116 : vector<8x8xf32>
    %cst_46 = arith.constant dense<0.000000e+00> : vector<8x8xf32>
    %118 = tpu.matmul %117, %103, %cst_46 {dimension_numbers = #tpu.dot_dimension_numbers<[1], [0], [0], [1], [0, 0, 1, 1], [], []>} : vector<8x8xf32>, vector<8x8xf32>, vector<8x8xf32> -> vector<8x8xf32>
    %119 = tpu.concatenate %64, %82, %100, %118 in 1 : vector<8x8xf32>, vector<8x8xf32>, vector<8x8xf32>, vector<8x8xf32> -> vector<8x32xf32>
    %c0_47 = arith.constant 0 : index
    %c0_48 = arith.constant 0 : index
    %c0_49 = arith.constant 0 : index
    %120 = vector.load %arg10[%c0_47, %c0_48, %c0_49] : memref<4x32x32xf32, #tpu.memory_space<vmem>>, vector<1x32x32xf32>
    %121 = vector.shape_cast %120 : vector<1x32x32xf32> to vector<32x32xf32>
    %122 = arith.truncf %119 : vector<8x32xf32> to vector<8x32xbf16>
    %123 = arith.truncf %121 : vector<32x32xf32> to vector<32x32xbf16>
    %cst_50 = arith.constant dense<0.000000e+00> : vector<8x32xf32>
    %124 = tpu.matmul %122, %123, %cst_50 {dimension_numbers = #tpu.dot_dimension_numbers<[1], [0], [0], [1], [0, 0, 1, 1], [], []>} : vector<8x32xbf16>, vector<32x32xbf16>, vector<8x32xf32> -> vector<8x32xf32>
    %125 = arith.addf %11, %124 : vector<8x32xf32>
    %c0_51 = arith.constant 0 : index
    %c0_52 = arith.constant 0 : index
    %c0_53 = arith.constant 0 : index
    %126 = vector.load %arg11[%c0_51, %c0_52, %c0_53] : memref<4x1x32xf32, #tpu.memory_space<vmem>>, vector<1x1x32xf32>
    %127 = vector.shape_cast %126 : vector<1x1x32xf32> to vector<1x32xf32>
    %128 = vector.broadcast %127 : vector<1x32xf32> to vector<8x32xf32>
    %129 = arith.addf %125, %128 : vector<8x32xf32>
    %c0_54 = arith.constant 0 : index
    %c0_55 = arith.constant 0 : index
    %c0_56 = arith.constant 0 : index
    %130 = vector.load %arg12[%c0_54, %c0_55, %c0_56] : memref<4x1x32xf32, #tpu.memory_space<vmem>>, vector<1x1x32xf32>
    %131 = vector.shape_cast %130 : vector<1x1x32xf32> to vector<1x32xf32>
    %c0_57 = arith.constant 0 : index
    %c0_58 = arith.constant 0 : index
    %c0_59 = arith.constant 0 : index
    %132 = vector.load %arg13[%c0_57, %c0_58, %c0_59] : memref<4x1x32xf32, #tpu.memory_space<vmem>>, vector<1x1x32xf32>
    %133 = vector.shape_cast %132 : vector<1x1x32xf32> to vector<1x32xf32>
    %cst_60 = arith.constant dense<0.000000e+00> : vector<8xf32>
    %134 = vector.multi_reduction <add>, %129, %cst_60 [1] : vector<8x32xf32> to vector<8xf32>
    %135 = vector.shape_cast %134 : vector<8xf32> to vector<8x1xf32>
    %cst_61 = arith.constant 3.200000e+01 : f32
    %136 = vector.broadcast %cst_61 : f32 to vector<8x1xf32>
    %137 = arith.divf %135, %136 : vector<8x1xf32>
    %138 = vector.broadcast %137 : vector<8x1xf32> to vector<8x32xf32>
    %139 = arith.subf %129, %138 : vector<8x32xf32>
    %140 = arith.mulf %139, %139 : vector<8x32xf32>
    %cst_62 = arith.constant dense<0.000000e+00> : vector<8xf32>
    %141 = vector.multi_reduction <add>, %140, %cst_62 [1] : vector<8x32xf32> to vector<8xf32>
    %142 = vector.shape_cast %141 : vector<8xf32> to vector<8x1xf32>
    %cst_63 = arith.constant 3.200000e+01 : f32
    %143 = vector.broadcast %cst_63 : f32 to vector<8x1xf32>
    %144 = arith.divf %142, %143 : vector<8x1xf32>
    %145 = vector.broadcast %137 : vector<8x1xf32> to vector<8x32xf32>
    %146 = arith.subf %129, %145 : vector<8x32xf32>
    %cst_64 = arith.constant 9.99999974E-6 : f32
    %147 = vector.broadcast %cst_64 : f32 to vector<8x1xf32>
    %148 = arith.addf %144, %147 : vector<8x1xf32>
    %149 = math.rsqrt %148 : vector<8x1xf32>
    %150 = vector.broadcast %149 : vector<8x1xf32> to vector<8x32xf32>
    %151 = arith.mulf %146, %150 : vector<8x32xf32>
    %152 = vector.broadcast %131 : vector<1x32xf32> to vector<8x32xf32>
    %153 = arith.mulf %151, %152 : vector<8x32xf32>
    %154 = vector.broadcast %133 : vector<1x32xf32> to vector<8x32xf32>
    %155 = arith.addf %153, %154 : vector<8x32xf32>
    %c0_65 = arith.constant 0 : index
    %c0_66 = arith.constant 0 : index
    %c0_67 = arith.constant 0 : index
    %156 = vector.load %arg14[%c0_65, %c0_66, %c0_67] : memref<4x32x128xf32, #tpu.memory_space<vmem>>, vector<1x32x128xf32>
    %157 = vector.shape_cast %156 : vector<1x32x128xf32> to vector<32x128xf32>
    %158 = arith.truncf %155 : vector<8x32xf32> to vector<8x32xbf16>
    %159 = arith.truncf %157 : vector<32x128xf32> to vector<32x128xbf16>
    %cst_68 = arith.constant dense<0.000000e+00> : vector<8x128xf32>
    %160 = tpu.matmul %158, %159, %cst_68 {dimension_numbers = #tpu.dot_dimension_numbers<[1], [0], [0], [1], [0, 0, 1, 1], [], []>} : vector<8x32xbf16>, vector<32x128xbf16>, vector<8x128xf32> -> vector<8x128xf32>
    %c0_69 = arith.constant 0 : index
    %c0_70 = arith.constant 0 : index
    %c0_71 = arith.constant 0 : index
    %161 = vector.load %arg15[%c0_69, %c0_70, %c0_71] : memref<4x1x128xf32, #tpu.memory_space<vmem>>, vector<1x1x128xf32>
    %162 = vector.shape_cast %161 : vector<1x1x128xf32> to vector<1x128xf32>
    %163 = vector.broadcast %162 : vector<1x128xf32> to vector<8x128xf32>
    %164 = arith.addf %160, %163 : vector<8x128xf32>
    %165 = arith.mulf %164, %164 : vector<8x128xf32>
    %166 = arith.mulf %164, %165 : vector<8x128xf32>
    %cst_72 = arith.constant 4.471500e-02 : f32
    %167 = vector.broadcast %cst_72 : f32 to vector<8x128xf32>
    %168 = arith.mulf %167, %166 : vector<8x128xf32>
    %169 = arith.addf %164, %168 : vector<8x128xf32>
    %cst_73 = arith.constant 0.797884583 : f32
    %170 = vector.broadcast %cst_73 : f32 to vector<8x128xf32>
    %171 = arith.mulf %170, %169 : vector<8x128xf32>
    %172 = math.tanh %171 : vector<8x128xf32>
    %cst_74 = arith.constant 1.000000e+00 : f32
    %173 = vector.broadcast %cst_74 : f32 to vector<8x128xf32>
    %174 = arith.addf %173, %172 : vector<8x128xf32>
    %cst_75 = arith.constant 5.000000e-01 : f32
    %175 = vector.broadcast %cst_75 : f32 to vector<8x128xf32>
    %176 = arith.mulf %175, %174 : vector<8x128xf32>
    %177 = arith.mulf %164, %176 : vector<8x128xf32>
    %c0_76 = arith.constant 0 : index
    %c0_77 = arith.constant 0 : index
    %c0_78 = arith.constant 0 : index
    %178 = vector.load %arg16[%c0_76, %c0_77, %c0_78] : memref<4x128x32xf32, #tpu.memory_space<vmem>>, vector<1x128x32xf32>
    %179 = vector.shape_cast %178 : vector<1x128x32xf32> to vector<128x32xf32>
    %180 = arith.truncf %177 : vector<8x128xf32> to vector<8x128xbf16>
    %181 = arith.truncf %179 : vector<128x32xf32> to vector<128x32xbf16>
    %cst_79 = arith.constant dense<0.000000e+00> : vector<8x32xf32>
    %182 = tpu.matmul %180, %181, %cst_79 {dimension_numbers = #tpu.dot_dimension_numbers<[1], [0], [0], [1], [0, 0, 1, 1], [], []>} : vector<8x128xbf16>, vector<128x32xbf16>, vector<8x32xf32> -> vector<8x32xf32>
    %183 = arith.addf %129, %182 : vector<8x32xf32>
    %c0_80 = arith.constant 0 : index
    %c0_81 = arith.constant 0 : index
    %c0_82 = arith.constant 0 : index
    %184 = vector.load %arg17[%c0_80, %c0_81, %c0_82] : memref<4x1x32xf32, #tpu.memory_space<vmem>>, vector<1x1x32xf32>
    %185 = vector.shape_cast %184 : vector<1x1x32xf32> to vector<1x32xf32>
    %186 = vector.broadcast %185 : vector<1x32xf32> to vector<8x32xf32>
    %187 = arith.addf %183, %186 : vector<8x32xf32>
    %c1 = arith.constant 1 : index
    %c0_83 = arith.constant 0 : index
    %c0_84 = arith.constant 0 : index
    %188 = vector.load %arg6[%c1, %c0_83, %c0_84] : memref<4x1x32xf32, #tpu.memory_space<vmem>>, vector<1x1x32xf32>
    %189 = vector.shape_cast %188 : vector<1x1x32xf32> to vector<1x32xf32>
    %c1_85 = arith.constant 1 : index
    %c0_86 = arith.constant 0 : index
    %c0_87 = arith.constant 0 : index
    %190 = vector.load %arg7[%c1_85, %c0_86, %c0_87] : memref<4x1x32xf32, #tpu.memory_space<vmem>>, vector<1x1x32xf32>
    %191 = vector.shape_cast %190 : vector<1x1x32xf32> to vector<1x32xf32>
    %cst_88 = arith.constant dense<0.000000e+00> : vector<8xf32>
    %192 = vector.multi_reduction <add>, %187, %cst_88 [1] : vector<8x32xf32> to vector<8xf32>
    %193 = vector.shape_cast %192 : vector<8xf32> to vector<8x1xf32>
    %cst_89 = arith.constant 3.200000e+01 : f32
    %194 = vector.broadcast %cst_89 : f32 to vector<8x1xf32>
    %195 = arith.divf %193, %194 : vector<8x1xf32>
    %196 = vector.broadcast %195 : vector<8x1xf32> to vector<8x32xf32>
    %197 = arith.subf %187, %196 : vector<8x32xf32>
    %198 = arith.mulf %197, %197 : vector<8x32xf32>
    %cst_90 = arith.constant dense<0.000000e+00> : vector<8xf32>
    %199 = vector.multi_reduction <add>, %198, %cst_90 [1] : vector<8x32xf32> to vector<8xf32>
    %200 = vector.shape_cast %199 : vector<8xf32> to vector<8x1xf32>
    %cst_91 = arith.constant 3.200000e+01 : f32
    %201 = vector.broadcast %cst_91 : f32 to vector<8x1xf32>
    %202 = arith.divf %200, %201 : vector<8x1xf32>
    %203 = vector.broadcast %195 : vector<8x1xf32> to vector<8x32xf32>
    %204 = arith.subf %187, %203 : vector<8x32xf32>
    %cst_92 = arith.constant 9.99999974E-6 : f32
    %205 = vector.broadcast %cst_92 : f32 to vector<8x1xf32>
    %206 = arith.addf %202, %205 : vector<8x1xf32>
    %207 = math.rsqrt %206 : vector<8x1xf32>
    %208 = vector.broadcast %207 : vector<8x1xf32> to vector<8x32xf32>
    %209 = arith.mulf %204, %208 : vector<8x32xf32>
    %210 = vector.broadcast %189 : vector<1x32xf32> to vector<8x32xf32>
    %211 = arith.mulf %209, %210 : vector<8x32xf32>
    %212 = vector.broadcast %191 : vector<1x32xf32> to vector<8x32xf32>
    %213 = arith.addf %211, %212 : vector<8x32xf32>
    %c1_93 = arith.constant 1 : index
    %c0_94 = arith.constant 0 : index
    %c0_95 = arith.constant 0 : index
    %214 = vector.load %arg8[%c1_93, %c0_94, %c0_95] : memref<4x32x96xf32, #tpu.memory_space<vmem>>, vector<1x32x96xf32>
    %215 = vector.shape_cast %214 : vector<1x32x96xf32> to vector<32x96xf32>
    %216 = arith.truncf %213 : vector<8x32xf32> to vector<8x32xbf16>
    %217 = arith.truncf %215 : vector<32x96xf32> to vector<32x96xbf16>
    %cst_96 = arith.constant dense<0.000000e+00> : vector<8x96xf32>
    %218 = tpu.matmul %216, %217, %cst_96 {dimension_numbers = #tpu.dot_dimension_numbers<[1], [0], [0], [1], [0, 0, 1, 1], [], []>} : vector<8x32xbf16>, vector<32x96xbf16>, vector<8x96xf32> -> vector<8x96xf32>
    %c1_97 = arith.constant 1 : index
    %c0_98 = arith.constant 0 : index
    %c0_99 = arith.constant 0 : index
    %219 = vector.load %arg9[%c1_97, %c0_98, %c0_99] : memref<4x1x96xf32, #tpu.memory_space<vmem>>, vector<1x1x96xf32>
    %220 = vector.shape_cast %219 : vector<1x1x96xf32> to vector<1x96xf32>
    %221 = vector.broadcast %220 : vector<1x96xf32> to vector<8x96xf32>
    %222 = arith.addf %218, %221 : vector<8x96xf32>
    %223 = vector.extract_strided_slice %222 {offsets = [0, 0], sizes = [8, 8], strides = [1, 1]} : vector<8x96xf32> to vector<8x8xf32>
    %224 = vector.extract_strided_slice %222 {offsets = [0, 32], sizes = [8, 8], strides = [1, 1]} : vector<8x96xf32> to vector<8x8xf32>
    %225 = vector.extract_strided_slice %222 {offsets = [0, 64], sizes = [8, 8], strides = [1, 1]} : vector<8x96xf32> to vector<8x8xf32>
    %226 = tpu.transpose %224, [1, 0] : vector<8x8xf32> -> vector<8x8xf32>
    %cst_100 = arith.constant dense<0.000000e+00> : vector<8x8xf32>
    %227 = tpu.matmul %223, %226, %cst_100 {dimension_numbers = #tpu.dot_dimension_numbers<[1], [0], [0], [1], [0, 0, 1, 1], [], []>} : vector<8x8xf32>, vector<8x8xf32>, vector<8x8xf32> -> vector<8x8xf32>
    %cst_101 = arith.constant 0.353553385 : f32
    %228 = vector.broadcast %cst_101 : f32 to vector<8x8xf32>
    %229 = arith.mulf %227, %228 : vector<8x8xf32>
    %cst_102 = arith.constant dense<0xFF800000> : vector<8xf32>
    %230 = vector.multi_reduction <maximumf>, %229, %cst_102 [1] : vector<8x8xf32> to vector<8xf32>
    %231 = vector.shape_cast %230 : vector<8xf32> to vector<8x1xf32>
    %232 = vector.broadcast %231 : vector<8x1xf32> to vector<8x8xf32>
    %233 = arith.subf %229, %232 : vector<8x8xf32>
    %234 = math.exp %233 : vector<8x8xf32>
    %cst_103 = arith.constant dense<0.000000e+00> : vector<8xf32>
    %235 = vector.multi_reduction <add>, %234, %cst_103 [1] : vector<8x8xf32> to vector<8xf32>
    %236 = vector.shape_cast %235 : vector<8xf32> to vector<8x1xf32>
    %237 = tpu.reciprocal %236 {approx = true} : vector<8x1xf32> -> vector<8x1xf32>
    %238 = vector.broadcast %237 : vector<8x1xf32> to vector<8x8xf32>
    %239 = arith.mulf %234, %238 : vector<8x8xf32>
    %cst_104 = arith.constant dense<0.000000e+00> : vector<8x8xf32>
    %240 = tpu.matmul %239, %225, %cst_104 {dimension_numbers = #tpu.dot_dimension_numbers<[1], [0], [0], [1], [0, 0, 1, 1], [], []>} : vector<8x8xf32>, vector<8x8xf32>, vector<8x8xf32> -> vector<8x8xf32>
    %241 = vector.extract_strided_slice %222 {offsets = [0, 8], sizes = [8, 8], strides = [1, 1]} : vector<8x96xf32> to vector<8x8xf32>
    %242 = vector.extract_strided_slice %222 {offsets = [0, 40], sizes = [8, 8], strides = [1, 1]} : vector<8x96xf32> to vector<8x8xf32>
    %243 = vector.extract_strided_slice %222 {offsets = [0, 72], sizes = [8, 8], strides = [1, 1]} : vector<8x96xf32> to vector<8x8xf32>
    %244 = tpu.transpose %242, [1, 0] : vector<8x8xf32> -> vector<8x8xf32>
    %cst_105 = arith.constant dense<0.000000e+00> : vector<8x8xf32>
    %245 = tpu.matmul %241, %244, %cst_105 {dimension_numbers = #tpu.dot_dimension_numbers<[1], [0], [0], [1], [0, 0, 1, 1], [], []>} : vector<8x8xf32>, vector<8x8xf32>, vector<8x8xf32> -> vector<8x8xf32>
    %cst_106 = arith.constant 0.353553385 : f32
    %246 = vector.broadcast %cst_106 : f32 to vector<8x8xf32>
    %247 = arith.mulf %245, %246 : vector<8x8xf32>
    %cst_107 = arith.constant dense<0xFF800000> : vector<8xf32>
    %248 = vector.multi_reduction <maximumf>, %247, %cst_107 [1] : vector<8x8xf32> to vector<8xf32>
    %249 = vector.shape_cast %248 : vector<8xf32> to vector<8x1xf32>
    %250 = vector.broadcast %249 : vector<8x1xf32> to vector<8x8xf32>
    %251 = arith.subf %247, %250 : vector<8x8xf32>
    %252 = math.exp %251 : vector<8x8xf32>
    %cst_108 = arith.constant dense<0.000000e+00> : vector<8xf32>
    %253 = vector.multi_reduction <add>, %252, %cst_108 [1] : vector<8x8xf32> to vector<8xf32>
    %254 = vector.shape_cast %253 : vector<8xf32> to vector<8x1xf32>
    %255 = tpu.reciprocal %254 {approx = true} : vector<8x1xf32> -> vector<8x1xf32>
    %256 = vector.broadcast %255 : vector<8x1xf32> to vector<8x8xf32>
    %257 = arith.mulf %252, %256 : vector<8x8xf32>
    %cst_109 = arith.constant dense<0.000000e+00> : vector<8x8xf32>
    %258 = tpu.matmul %257, %243, %cst_109 {dimension_numbers = #tpu.dot_dimension_numbers<[1], [0], [0], [1], [0, 0, 1, 1], [], []>} : vector<8x8xf32>, vector<8x8xf32>, vector<8x8xf32> -> vector<8x8xf32>
    %259 = vector.extract_strided_slice %222 {offsets = [0, 16], sizes = [8, 8], strides = [1, 1]} : vector<8x96xf32> to vector<8x8xf32>
    %260 = vector.extract_strided_slice %222 {offsets = [0, 48], sizes = [8, 8], strides = [1, 1]} : vector<8x96xf32> to vector<8x8xf32>
    %261 = vector.extract_strided_slice %222 {offsets = [0, 80], sizes = [8, 8], strides = [1, 1]} : vector<8x96xf32> to vector<8x8xf32>
    %262 = tpu.transpose %260, [1, 0] : vector<8x8xf32> -> vector<8x8xf32>
    %cst_110 = arith.constant dense<0.000000e+00> : vector<8x8xf32>
    %263 = tpu.matmul %259, %262, %cst_110 {dimension_numbers = #tpu.dot_dimension_numbers<[1], [0], [0], [1], [0, 0, 1, 1], [], []>} : vector<8x8xf32>, vector<8x8xf32>, vector<8x8xf32> -> vector<8x8xf32>
    %cst_111 = arith.constant 0.353553385 : f32
    %264 = vector.broadcast %cst_111 : f32 to vector<8x8xf32>
    %265 = arith.mulf %263, %264 : vector<8x8xf32>
    %cst_112 = arith.constant dense<0xFF800000> : vector<8xf32>
    %266 = vector.multi_reduction <maximumf>, %265, %cst_112 [1] : vector<8x8xf32> to vector<8xf32>
    %267 = vector.shape_cast %266 : vector<8xf32> to vector<8x1xf32>
    %268 = vector.broadcast %267 : vector<8x1xf32> to vector<8x8xf32>
    %269 = arith.subf %265, %268 : vector<8x8xf32>
    %270 = math.exp %269 : vector<8x8xf32>
    %cst_113 = arith.constant dense<0.000000e+00> : vector<8xf32>
    %271 = vector.multi_reduction <add>, %270, %cst_113 [1] : vector<8x8xf32> to vector<8xf32>
    %272 = vector.shape_cast %271 : vector<8xf32> to vector<8x1xf32>
    %273 = tpu.reciprocal %272 {approx = true} : vector<8x1xf32> -> vector<8x1xf32>
    %274 = vector.broadcast %273 : vector<8x1xf32> to vector<8x8xf32>
    %275 = arith.mulf %270, %274 : vector<8x8xf32>
    %cst_114 = arith.constant dense<0.000000e+00> : vector<8x8xf32>
    %276 = tpu.matmul %275, %261, %cst_114 {dimension_numbers = #tpu.dot_dimension_numbers<[1], [0], [0], [1], [0, 0, 1, 1], [], []>} : vector<8x8xf32>, vector<8x8xf32>, vector<8x8xf32> -> vector<8x8xf32>
    %277 = vector.extract_strided_slice %222 {offsets = [0, 24], sizes = [8, 8], strides = [1, 1]} : vector<8x96xf32> to vector<8x8xf32>
    %278 = vector.extract_strided_slice %222 {offsets = [0, 56], sizes = [8, 8], strides = [1, 1]} : vector<8x96xf32> to vector<8x8xf32>
    %279 = vector.extract_strided_slice %222 {offsets = [0, 88], sizes = [8, 8], strides = [1, 1]} : vector<8x96xf32> to vector<8x8xf32>
    %280 = tpu.transpose %278, [1, 0] : vector<8x8xf32> -> vector<8x8xf32>
    %cst_115 = arith.constant dense<0.000000e+00> : vector<8x8xf32>
    %281 = tpu.matmul %277, %280, %cst_115 {dimension_numbers = #tpu.dot_dimension_numbers<[1], [0], [0], [1], [0, 0, 1, 1], [], []>} : vector<8x8xf32>, vector<8x8xf32>, vector<8x8xf32> -> vector<8x8xf32>
    %cst_116 = arith.constant 0.353553385 : f32
    %282 = vector.broadcast %cst_116 : f32 to vector<8x8xf32>
    %283 = arith.mulf %281, %282 : vector<8x8xf32>
    %cst_117 = arith.constant dense<0xFF800000> : vector<8xf32>
    %284 = vector.multi_reduction <maximumf>, %283, %cst_117 [1] : vector<8x8xf32> to vector<8xf32>
    %285 = vector.shape_cast %284 : vector<8xf32> to vector<8x1xf32>
    %286 = vector.broadcast %285 : vector<8x1xf32> to vector<8x8xf32>
    %287 = arith.subf %283, %286 : vector<8x8xf32>
    %288 = math.exp %287 : vector<8x8xf32>
    %cst_118 = arith.constant dense<0.000000e+00> : vector<8xf32>
    %289 = vector.multi_reduction <add>, %288, %cst_118 [1] : vector<8x8xf32> to vector<8xf32>
    %290 = vector.shape_cast %289 : vector<8xf32> to vector<8x1xf32>
    %291 = tpu.reciprocal %290 {approx = true} : vector<8x1xf32> -> vector<8x1xf32>
    %292 = vector.broadcast %291 : vector<8x1xf32> to vector<8x8xf32>
    %293 = arith.mulf %288, %292 : vector<8x8xf32>
    %cst_119 = arith.constant dense<0.000000e+00> : vector<8x8xf32>
    %294 = tpu.matmul %293, %279, %cst_119 {dimension_numbers = #tpu.dot_dimension_numbers<[1], [0], [0], [1], [0, 0, 1, 1], [], []>} : vector<8x8xf32>, vector<8x8xf32>, vector<8x8xf32> -> vector<8x8xf32>
    %295 = tpu.concatenate %240, %258, %276, %294 in 1 : vector<8x8xf32>, vector<8x8xf32>, vector<8x8xf32>, vector<8x8xf32> -> vector<8x32xf32>
    %c1_120 = arith.constant 1 : index
    %c0_121 = arith.constant 0 : index
    %c0_122 = arith.constant 0 : index
    %296 = vector.load %arg10[%c1_120, %c0_121, %c0_122] : memref<4x32x32xf32, #tpu.memory_space<vmem>>, vector<1x32x32xf32>
    %297 = vector.shape_cast %296 : vector<1x32x32xf32> to vector<32x32xf32>
    %298 = arith.truncf %295 : vector<8x32xf32> to vector<8x32xbf16>
    %299 = arith.truncf %297 : vector<32x32xf32> to vector<32x32xbf16>
    %cst_123 = arith.constant dense<0.000000e+00> : vector<8x32xf32>
    %300 = tpu.matmul %298, %299, %cst_123 {dimension_numbers = #tpu.dot_dimension_numbers<[1], [0], [0], [1], [0, 0, 1, 1], [], []>} : vector<8x32xbf16>, vector<32x32xbf16>, vector<8x32xf32> -> vector<8x32xf32>
    %301 = arith.addf %187, %300 : vector<8x32xf32>
    %c1_124 = arith.constant 1 : index
    %c0_125 = arith.constant 0 : index
    %c0_126 = arith.constant 0 : index
    %302 = vector.load %arg11[%c1_124, %c0_125, %c0_126] : memref<4x1x32xf32, #tpu.memory_space<vmem>>, vector<1x1x32xf32>
    %303 = vector.shape_cast %302 : vector<1x1x32xf32> to vector<1x32xf32>
    %304 = vector.broadcast %303 : vector<1x32xf32> to vector<8x32xf32>
    %305 = arith.addf %301, %304 : vector<8x32xf32>
    %c1_127 = arith.constant 1 : index
    %c0_128 = arith.constant 0 : index
    %c0_129 = arith.constant 0 : index
    %306 = vector.load %arg12[%c1_127, %c0_128, %c0_129] : memref<4x1x32xf32, #tpu.memory_space<vmem>>, vector<1x1x32xf32>
    %307 = vector.shape_cast %306 : vector<1x1x32xf32> to vector<1x32xf32>
    %c1_130 = arith.constant 1 : index
    %c0_131 = arith.constant 0 : index
    %c0_132 = arith.constant 0 : index
    %308 = vector.load %arg13[%c1_130, %c0_131, %c0_132] : memref<4x1x32xf32, #tpu.memory_space<vmem>>, vector<1x1x32xf32>
    %309 = vector.shape_cast %308 : vector<1x1x32xf32> to vector<1x32xf32>
    %cst_133 = arith.constant dense<0.000000e+00> : vector<8xf32>
    %310 = vector.multi_reduction <add>, %305, %cst_133 [1] : vector<8x32xf32> to vector<8xf32>
    %311 = vector.shape_cast %310 : vector<8xf32> to vector<8x1xf32>
    %cst_134 = arith.constant 3.200000e+01 : f32
    %312 = vector.broadcast %cst_134 : f32 to vector<8x1xf32>
    %313 = arith.divf %311, %312 : vector<8x1xf32>
    %314 = vector.broadcast %313 : vector<8x1xf32> to vector<8x32xf32>
    %315 = arith.subf %305, %314 : vector<8x32xf32>
    %316 = arith.mulf %315, %315 : vector<8x32xf32>
    %cst_135 = arith.constant dense<0.000000e+00> : vector<8xf32>
    %317 = vector.multi_reduction <add>, %316, %cst_135 [1] : vector<8x32xf32> to vector<8xf32>
    %318 = vector.shape_cast %317 : vector<8xf32> to vector<8x1xf32>
    %cst_136 = arith.constant 3.200000e+01 : f32
    %319 = vector.broadcast %cst_136 : f32 to vector<8x1xf32>
    %320 = arith.divf %318, %319 : vector<8x1xf32>
    %321 = vector.broadcast %313 : vector<8x1xf32> to vector<8x32xf32>
    %322 = arith.subf %305, %321 : vector<8x32xf32>
    %cst_137 = arith.constant 9.99999974E-6 : f32
    %323 = vector.broadcast %cst_137 : f32 to vector<8x1xf32>
    %324 = arith.addf %320, %323 : vector<8x1xf32>
    %325 = math.rsqrt %324 : vector<8x1xf32>
    %326 = vector.broadcast %325 : vector<8x1xf32> to vector<8x32xf32>
    %327 = arith.mulf %322, %326 : vector<8x32xf32>
    %328 = vector.broadcast %307 : vector<1x32xf32> to vector<8x32xf32>
    %329 = arith.mulf %327, %328 : vector<8x32xf32>
    %330 = vector.broadcast %309 : vector<1x32xf32> to vector<8x32xf32>
    %331 = arith.addf %329, %330 : vector<8x32xf32>
    %c1_138 = arith.constant 1 : index
    %c0_139 = arith.constant 0 : index
    %c0_140 = arith.constant 0 : index
    %332 = vector.load %arg14[%c1_138, %c0_139, %c0_140] : memref<4x32x128xf32, #tpu.memory_space<vmem>>, vector<1x32x128xf32>
    %333 = vector.shape_cast %332 : vector<1x32x128xf32> to vector<32x128xf32>
    %334 = arith.truncf %331 : vector<8x32xf32> to vector<8x32xbf16>
    %335 = arith.truncf %333 : vector<32x128xf32> to vector<32x128xbf16>
    %cst_141 = arith.constant dense<0.000000e+00> : vector<8x128xf32>
    %336 = tpu.matmul %334, %335, %cst_141 {dimension_numbers = #tpu.dot_dimension_numbers<[1], [0], [0], [1], [0, 0, 1, 1], [], []>} : vector<8x32xbf16>, vector<32x128xbf16>, vector<8x128xf32> -> vector<8x128xf32>
    %c1_142 = arith.constant 1 : index
    %c0_143 = arith.constant 0 : index
    %c0_144 = arith.constant 0 : index
    %337 = vector.load %arg15[%c1_142, %c0_143, %c0_144] : memref<4x1x128xf32, #tpu.memory_space<vmem>>, vector<1x1x128xf32>
    %338 = vector.shape_cast %337 : vector<1x1x128xf32> to vector<1x128xf32>
    %339 = vector.broadcast %338 : vector<1x128xf32> to vector<8x128xf32>
    %340 = arith.addf %336, %339 : vector<8x128xf32>
    %341 = arith.mulf %340, %340 : vector<8x128xf32>
    %342 = arith.mulf %340, %341 : vector<8x128xf32>
    %cst_145 = arith.constant 4.471500e-02 : f32
    %343 = vector.broadcast %cst_145 : f32 to vector<8x128xf32>
    %344 = arith.mulf %343, %342 : vector<8x128xf32>
    %345 = arith.addf %340, %344 : vector<8x128xf32>
    %cst_146 = arith.constant 0.797884583 : f32
    %346 = vector.broadcast %cst_146 : f32 to vector<8x128xf32>
    %347 = arith.mulf %346, %345 : vector<8x128xf32>
    %348 = math.tanh %347 : vector<8x128xf32>
    %cst_147 = arith.constant 1.000000e+00 : f32
    %349 = vector.broadcast %cst_147 : f32 to vector<8x128xf32>
    %350 = arith.addf %349, %348 : vector<8x128xf32>
    %cst_148 = arith.constant 5.000000e-01 : f32
    %351 = vector.broadcast %cst_148 : f32 to vector<8x128xf32>
    %352 = arith.mulf %351, %350 : vector<8x128xf32>
    %353 = arith.mulf %340, %352 : vector<8x128xf32>
    %c1_149 = arith.constant 1 : index
    %c0_150 = arith.constant 0 : index
    %c0_151 = arith.constant 0 : index
    %354 = vector.load %arg16[%c1_149, %c0_150, %c0_151] : memref<4x128x32xf32, #tpu.memory_space<vmem>>, vector<1x128x32xf32>
    %355 = vector.shape_cast %354 : vector<1x128x32xf32> to vector<128x32xf32>
    %356 = arith.truncf %353 : vector<8x128xf32> to vector<8x128xbf16>
    %357 = arith.truncf %355 : vector<128x32xf32> to vector<128x32xbf16>
    %cst_152 = arith.constant dense<0.000000e+00> : vector<8x32xf32>
    %358 = tpu.matmul %356, %357, %cst_152 {dimension_numbers = #tpu.dot_dimension_numbers<[1], [0], [0], [1], [0, 0, 1, 1], [], []>} : vector<8x128xbf16>, vector<128x32xbf16>, vector<8x32xf32> -> vector<8x32xf32>
    %359 = arith.addf %305, %358 : vector<8x32xf32>
    %c1_153 = arith.constant 1 : index
    %c0_154 = arith.constant 0 : index
    %c0_155 = arith.constant 0 : index
    %360 = vector.load %arg17[%c1_153, %c0_154, %c0_155] : memref<4x1x32xf32, #tpu.memory_space<vmem>>, vector<1x1x32xf32>
    %361 = vector.shape_cast %360 : vector<1x1x32xf32> to vector<1x32xf32>
    %362 = vector.broadcast %361 : vector<1x32xf32> to vector<8x32xf32>
    %363 = arith.addf %359, %362 : vector<8x32xf32>
    %c0_156 = arith.constant 0 : index
    %c0_157 = arith.constant 0 : index
    %c0_158 = arith.constant 0 : index
    %364 = vector.load %arg25[%c0_156, %c0_157, %c0_158] : memref<3x1x32xf32, #tpu.memory_space<vmem>>, vector<1x1x32xf32>
    %365 = vector.shape_cast %364 : vector<1x1x32xf32> to vector<1x32xf32>
    %c0_159 = arith.constant 0 : index
    %c0_160 = arith.constant 0 : index
    %c0_161 = arith.constant 0 : index
    %366 = vector.load %arg26[%c0_159, %c0_160, %c0_161] : memref<3x1x32xf32, #tpu.memory_space<vmem>>, vector<1x1x32xf32>
    %367 = vector.shape_cast %366 : vector<1x1x32xf32> to vector<1x32xf32>
    %cst_162 = arith.constant dense<0.000000e+00> : vector<8xf32>
    %368 = vector.multi_reduction <add>, %363, %cst_162 [1] : vector<8x32xf32> to vector<8xf32>
    %369 = vector.shape_cast %368 : vector<8xf32> to vector<8x1xf32>
    %cst_163 = arith.constant 3.200000e+01 : f32
    %370 = vector.broadcast %cst_163 : f32 to vector<8x1xf32>
    %371 = arith.divf %369, %370 : vector<8x1xf32>
    %372 = vector.broadcast %371 : vector<8x1xf32> to vector<8x32xf32>
    %373 = arith.subf %363, %372 : vector<8x32xf32>
    %374 = arith.mulf %373, %373 : vector<8x32xf32>
    %cst_164 = arith.constant dense<0.000000e+00> : vector<8xf32>
    %375 = vector.multi_reduction <add>, %374, %cst_164 [1] : vector<8x32xf32> to vector<8xf32>
    %376 = vector.shape_cast %375 : vector<8xf32> to vector<8x1xf32>
    %cst_165 = arith.constant 3.200000e+01 : f32
    %377 = vector.broadcast %cst_165 : f32 to vector<8x1xf32>
    %378 = arith.divf %376, %377 : vector<8x1xf32>
    %379 = vector.broadcast %371 : vector<8x1xf32> to vector<8x32xf32>
    %380 = arith.subf %363, %379 : vector<8x32xf32>
    %cst_166 = arith.constant 9.99999974E-6 : f32
    %381 = vector.broadcast %cst_166 : f32 to vector<8x1xf32>
    %382 = arith.addf %378, %381 : vector<8x1xf32>
    %383 = math.rsqrt %382 : vector<8x1xf32>
    %384 = vector.broadcast %383 : vector<8x1xf32> to vector<8x32xf32>
    %385 = arith.mulf %380, %384 : vector<8x32xf32>
    %386 = vector.broadcast %365 : vector<1x32xf32> to vector<8x32xf32>
    %387 = arith.mulf %385, %386 : vector<8x32xf32>
    %388 = vector.broadcast %367 : vector<1x32xf32> to vector<8x32xf32>
    %389 = arith.addf %387, %388 : vector<8x32xf32>
    %c0_167 = arith.constant 0 : index
    %c0_168 = arith.constant 0 : index
    %c0_169 = arith.constant 0 : index
    %390 = vector.load %arg27[%c0_167, %c0_168, %c0_169] : memref<3x1x32xf32, #tpu.memory_space<vmem>>, vector<1x1x32xf32>
    %391 = vector.shape_cast %390 : vector<1x1x32xf32> to vector<1x32xf32>
    %392 = vector.broadcast %391 : vector<1x32xf32> to vector<8x32xf32>
    %393 = arith.mulf %389, %392 : vector<8x32xf32>
    %cst_170 = arith.constant dense<0.000000e+00> : vector<8xf32>
    %394 = vector.multi_reduction <add>, %393, %cst_170 [1] : vector<8x32xf32> to vector<8xf32>
    %395 = vector.shape_cast %394 : vector<8xf32> to vector<8x1xf32>
    %c0_171 = arith.constant 0 : index
    %c0_172 = arith.constant 0 : index
    %c0_173 = arith.constant 0 : index
    %396 = vector.load %arg28[%c0_171, %c0_172, %c0_173] : memref<3x1x1xf32, #tpu.memory_space<vmem>>, vector<1x1x1xf32>
    %397 = vector.shape_cast %396 : vector<1x1x1xf32> to vector<1x1xf32>
    %398 = vector.broadcast %397 : vector<1x1xf32> to vector<8x1xf32>
    %399 = arith.addf %395, %398 : vector<8x1xf32>
    %c0_174 = arith.constant 0 : index
    %c0_175 = arith.constant 0 : index
    %c0_176 = arith.constant 0 : index
    %400 = vector.load %arg30[%c0_174, %c0_175, %c0_176] : memref<1x8x1xf32, #tpu.memory_space<vmem>>, vector<1x8x1xf32>
    %401 = vector.shape_cast %400 : vector<1x8x1xf32> to vector<8x1xf32>
    %402 = vector.shape_cast %399 : vector<8x1xf32> to vector<1x8x1xf32>
    tpu.vector_store %arg30[%c0_174, %c0_175, %c0_176], %402 {strides = array<i32>} : memref<1x8x1xf32, #tpu.memory_space<vmem>>, vector<1x8x1xf32>,
    %c0_177 = arith.constant 0 : index
    %c0_178 = arith.constant 0 : index
    %c0_179 = arith.constant 0 : index
    %403 = vector.load %arg3[%c0_177, %c0_178, %c0_179] : memref<1x8x32xf32, #tpu.memory_space<vmem>>, vector<1x8x32xf32>
    %404 = vector.shape_cast %403 : vector<1x8x32xf32> to vector<8x32xf32>
    %405 = arith.addf %363, %404 : vector<8x32xf32>
    %c0_180 = arith.constant 0 : index
    %c0_181 = arith.constant 0 : index
    %406 = vector.load %arg18[%c0_180, %c0_181] : memref<3x32xf32, #tpu.memory_space<vmem>>, vector<3x32xf32>
    %cst_182 = arith.constant 0.000000e+00 : f32
    %407 = vector.broadcast %cst_182 : f32 to vector<1x32xf32>
    %408 = vector.extract_strided_slice %405 {offsets = [0, 0], sizes = [7, 32], strides = [1, 1]} : vector<8x32xf32> to vector<7x32xf32>
    %409 = tpu.concatenate %407, %408 in 0 : vector<1x32xf32>, vector<7x32xf32> -> vector<8x32xf32>
    %410 = vector.extract_strided_slice %405 {offsets = [1, 0], sizes = [7, 32], strides = [1, 1]} : vector<8x32xf32> to vector<7x32xf32>
    %411 = tpu.concatenate %410, %407 in 0 : vector<7x32xf32>, vector<1x32xf32> -> vector<8x32xf32>
    %412 = vector.extract_strided_slice %406 {offsets = [0, 0], sizes = [1, 32], strides = [1, 1]} : vector<3x32xf32> to vector<1x32xf32>
    %413 = vector.broadcast %412 : vector<1x32xf32> to vector<8x32xf32>
    %414 = arith.mulf %409, %413 : vector<8x32xf32>
    %415 = vector.extract_strided_slice %406 {offsets = [1, 0], sizes = [1, 32], strides = [1, 1]} : vector<3x32xf32> to vector<1x32xf32>
    %416 = vector.broadcast %415 : vector<1x32xf32> to vector<8x32xf32>
    %417 = arith.mulf %405, %416 : vector<8x32xf32>
    %418 = arith.addf %414, %417 : vector<8x32xf32>
    %419 = vector.extract_strided_slice %406 {offsets = [2, 0], sizes = [1, 32], strides = [1, 1]} : vector<3x32xf32> to vector<1x32xf32>
    %420 = vector.broadcast %419 : vector<1x32xf32> to vector<8x32xf32>
    %421 = arith.mulf %411, %420 : vector<8x32xf32>
    %422 = arith.addf %418, %421 : vector<8x32xf32>
    %c0_183 = arith.constant 0 : index
    %c0_184 = arith.constant 0 : index
    %423 = vector.load %arg19[%c0_183, %c0_184] : memref<1x32xf32, #tpu.memory_space<vmem>>, vector<1x32xf32>
    %424 = vector.broadcast %423 : vector<1x32xf32> to vector<8x32xf32>
    %425 = arith.addf %422, %424 : vector<8x32xf32>
    %c0_185 = arith.constant 0 : index
    %c0_186 = arith.constant 0 : index
    %426 = vector.load %arg20[%c0_185, %c0_186] : memref<32x32xf32, #tpu.memory_space<vmem>>, vector<32x32xf32>
    %427 = arith.truncf %425 : vector<8x32xf32> to vector<8x32xbf16>
    %428 = arith.truncf %426 : vector<32x32xf32> to vector<32x32xbf16>
    %cst_187 = arith.constant dense<0.000000e+00> : vector<8x32xf32>
    %429 = tpu.matmul %427, %428, %cst_187 {dimension_numbers = #tpu.dot_dimension_numbers<[1], [0], [0], [1], [0, 0, 1, 1], [], []>} : vector<8x32xbf16>, vector<32x32xbf16>, vector<8x32xf32> -> vector<8x32xf32>
    %c0_188 = arith.constant 0 : index
    %c0_189 = arith.constant 0 : index
    %430 = vector.load %arg21[%c0_188, %c0_189] : memref<1x32xf32, #tpu.memory_space<vmem>>, vector<1x32xf32>
    %431 = vector.broadcast %430 : vector<1x32xf32> to vector<8x32xf32>
    %432 = arith.addf %429, %431 : vector<8x32xf32>
    %c2 = arith.constant 2 : index
    %c0_190 = arith.constant 0 : index
    %c0_191 = arith.constant 0 : index
    %433 = vector.load %arg6[%c2, %c0_190, %c0_191] : memref<4x1x32xf32, #tpu.memory_space<vmem>>, vector<1x1x32xf32>
    %434 = vector.shape_cast %433 : vector<1x1x32xf32> to vector<1x32xf32>
    %c2_192 = arith.constant 2 : index
    %c0_193 = arith.constant 0 : index
    %c0_194 = arith.constant 0 : index
    %435 = vector.load %arg7[%c2_192, %c0_193, %c0_194] : memref<4x1x32xf32, #tpu.memory_space<vmem>>, vector<1x1x32xf32>
    %436 = vector.shape_cast %435 : vector<1x1x32xf32> to vector<1x32xf32>
    %cst_195 = arith.constant dense<0.000000e+00> : vector<8xf32>
    %437 = vector.multi_reduction <add>, %432, %cst_195 [1] : vector<8x32xf32> to vector<8xf32>
    %438 = vector.shape_cast %437 : vector<8xf32> to vector<8x1xf32>
    %cst_196 = arith.constant 3.200000e+01 : f32
    %439 = vector.broadcast %cst_196 : f32 to vector<8x1xf32>
    %440 = arith.divf %438, %439 : vector<8x1xf32>
    %441 = vector.broadcast %440 : vector<8x1xf32> to vector<8x32xf32>
    %442 = arith.subf %432, %441 : vector<8x32xf32>
    %443 = arith.mulf %442, %442 : vector<8x32xf32>
    %cst_197 = arith.constant dense<0.000000e+00> : vector<8xf32>
    %444 = vector.multi_reduction <add>, %443, %cst_197 [1] : vector<8x32xf32> to vector<8xf32>
    %445 = vector.shape_cast %444 : vector<8xf32> to vector<8x1xf32>
    %cst_198 = arith.constant 3.200000e+01 : f32
    %446 = vector.broadcast %cst_198 : f32 to vector<8x1xf32>
    %447 = arith.divf %445, %446 : vector<8x1xf32>
    %448 = vector.broadcast %440 : vector<8x1xf32> to vector<8x32xf32>
    %449 = arith.subf %432, %448 : vector<8x32xf32>
    %cst_199 = arith.constant 9.99999974E-6 : f32
    %450 = vector.broadcast %cst_199 : f32 to vector<8x1xf32>
    %451 = arith.addf %447, %450 : vector<8x1xf32>
    %452 = math.rsqrt %451 : vector<8x1xf32>
    %453 = vector.broadcast %452 : vector<8x1xf32> to vector<8x32xf32>
    %454 = arith.mulf %449, %453 : vector<8x32xf32>
    %455 = vector.broadcast %434 : vector<1x32xf32> to vector<8x32xf32>
    %456 = arith.mulf %454, %455 : vector<8x32xf32>
    %457 = vector.broadcast %436 : vector<1x32xf32> to vector<8x32xf32>
    %458 = arith.addf %456, %457 : vector<8x32xf32>
    %c2_200 = arith.constant 2 : index
    %c0_201 = arith.constant 0 : index
    %c0_202 = arith.constant 0 : index
    %459 = vector.load %arg8[%c2_200, %c0_201, %c0_202] : memref<4x32x96xf32, #tpu.memory_space<vmem>>, vector<1x32x96xf32>
    %460 = vector.shape_cast %459 : vector<1x32x96xf32> to vector<32x96xf32>
    %461 = arith.truncf %458 : vector<8x32xf32> to vector<8x32xbf16>
    %462 = arith.truncf %460 : vector<32x96xf32> to vector<32x96xbf16>
    %cst_203 = arith.constant dense<0.000000e+00> : vector<8x96xf32>
    %463 = tpu.matmul %461, %462, %cst_203 {dimension_numbers = #tpu.dot_dimension_numbers<[1], [0], [0], [1], [0, 0, 1, 1], [], []>} : vector<8x32xbf16>, vector<32x96xbf16>, vector<8x96xf32> -> vector<8x96xf32>
    %c2_204 = arith.constant 2 : index
    %c0_205 = arith.constant 0 : index
    %c0_206 = arith.constant 0 : index
    %464 = vector.load %arg9[%c2_204, %c0_205, %c0_206] : memref<4x1x96xf32, #tpu.memory_space<vmem>>, vector<1x1x96xf32>
    %465 = vector.shape_cast %464 : vector<1x1x96xf32> to vector<1x96xf32>
    %466 = vector.broadcast %465 : vector<1x96xf32> to vector<8x96xf32>
    %467 = arith.addf %463, %466 : vector<8x96xf32>
    %468 = vector.extract_strided_slice %467 {offsets = [0, 0], sizes = [8, 8], strides = [1, 1]} : vector<8x96xf32> to vector<8x8xf32>
    %469 = vector.extract_strided_slice %467 {offsets = [0, 32], sizes = [8, 8], strides = [1, 1]} : vector<8x96xf32> to vector<8x8xf32>
    %470 = vector.extract_strided_slice %467 {offsets = [0, 64], sizes = [8, 8], strides = [1, 1]} : vector<8x96xf32> to vector<8x8xf32>
    %471 = tpu.transpose %469, [1, 0] : vector<8x8xf32> -> vector<8x8xf32>
    %cst_207 = arith.constant dense<0.000000e+00> : vector<8x8xf32>
    %472 = tpu.matmul %468, %471, %cst_207 {dimension_numbers = #tpu.dot_dimension_numbers<[1], [0], [0], [1], [0, 0, 1, 1], [], []>} : vector<8x8xf32>, vector<8x8xf32>, vector<8x8xf32> -> vector<8x8xf32>
    %cst_208 = arith.constant 0.353553385 : f32
    %473 = vector.broadcast %cst_208 : f32 to vector<8x8xf32>
    %474 = arith.mulf %472, %473 : vector<8x8xf32>
    %cst_209 = arith.constant dense<0xFF800000> : vector<8xf32>
    %475 = vector.multi_reduction <maximumf>, %474, %cst_209 [1] : vector<8x8xf32> to vector<8xf32>
    %476 = vector.shape_cast %475 : vector<8xf32> to vector<8x1xf32>
    %477 = vector.broadcast %476 : vector<8x1xf32> to vector<8x8xf32>
    %478 = arith.subf %474, %477 : vector<8x8xf32>
    %479 = math.exp %478 : vector<8x8xf32>
    %cst_210 = arith.constant dense<0.000000e+00> : vector<8xf32>
    %480 = vector.multi_reduction <add>, %479, %cst_210 [1] : vector<8x8xf32> to vector<8xf32>
    %481 = vector.shape_cast %480 : vector<8xf32> to vector<8x1xf32>
    %482 = tpu.reciprocal %481 {approx = true} : vector<8x1xf32> -> vector<8x1xf32>
    %483 = vector.broadcast %482 : vector<8x1xf32> to vector<8x8xf32>
    %484 = arith.mulf %479, %483 : vector<8x8xf32>
    %cst_211 = arith.constant dense<0.000000e+00> : vector<8x8xf32>
    %485 = tpu.matmul %484, %470, %cst_211 {dimension_numbers = #tpu.dot_dimension_numbers<[1], [0], [0], [1], [0, 0, 1, 1], [], []>} : vector<8x8xf32>, vector<8x8xf32>, vector<8x8xf32> -> vector<8x8xf32>
    %486 = vector.extract_strided_slice %467 {offsets = [0, 8], sizes = [8, 8], strides = [1, 1]} : vector<8x96xf32> to vector<8x8xf32>
    %487 = vector.extract_strided_slice %467 {offsets = [0, 40], sizes = [8, 8], strides = [1, 1]} : vector<8x96xf32> to vector<8x8xf32>
    %488 = vector.extract_strided_slice %467 {offsets = [0, 72], sizes = [8, 8], strides = [1, 1]} : vector<8x96xf32> to vector<8x8xf32>
    %489 = tpu.transpose %487, [1, 0] : vector<8x8xf32> -> vector<8x8xf32>
    %cst_212 = arith.constant dense<0.000000e+00> : vector<8x8xf32>
    %490 = tpu.matmul %486, %489, %cst_212 {dimension_numbers = #tpu.dot_dimension_numbers<[1], [0], [0], [1], [0, 0, 1, 1], [], []>} : vector<8x8xf32>, vector<8x8xf32>, vector<8x8xf32> -> vector<8x8xf32>
    %cst_213 = arith.constant 0.353553385 : f32
    %491 = vector.broadcast %cst_213 : f32 to vector<8x8xf32>
    %492 = arith.mulf %490, %491 : vector<8x8xf32>
    %cst_214 = arith.constant dense<0xFF800000> : vector<8xf32>
    %493 = vector.multi_reduction <maximumf>, %492, %cst_214 [1] : vector<8x8xf32> to vector<8xf32>
    %494 = vector.shape_cast %493 : vector<8xf32> to vector<8x1xf32>
    %495 = vector.broadcast %494 : vector<8x1xf32> to vector<8x8xf32>
    %496 = arith.subf %492, %495 : vector<8x8xf32>
    %497 = math.exp %496 : vector<8x8xf32>
    %cst_215 = arith.constant dense<0.000000e+00> : vector<8xf32>
    %498 = vector.multi_reduction <add>, %497, %cst_215 [1] : vector<8x8xf32> to vector<8xf32>
    %499 = vector.shape_cast %498 : vector<8xf32> to vector<8x1xf32>
    %500 = tpu.reciprocal %499 {approx = true} : vector<8x1xf32> -> vector<8x1xf32>
    %501 = vector.broadcast %500 : vector<8x1xf32> to vector<8x8xf32>
    %502 = arith.mulf %497, %501 : vector<8x8xf32>
    %cst_216 = arith.constant dense<0.000000e+00> : vector<8x8xf32>
    %503 = tpu.matmul %502, %488, %cst_216 {dimension_numbers = #tpu.dot_dimension_numbers<[1], [0], [0], [1], [0, 0, 1, 1], [], []>} : vector<8x8xf32>, vector<8x8xf32>, vector<8x8xf32> -> vector<8x8xf32>
    %504 = vector.extract_strided_slice %467 {offsets = [0, 16], sizes = [8, 8], strides = [1, 1]} : vector<8x96xf32> to vector<8x8xf32>
    %505 = vector.extract_strided_slice %467 {offsets = [0, 48], sizes = [8, 8], strides = [1, 1]} : vector<8x96xf32> to vector<8x8xf32>
    %506 = vector.extract_strided_slice %467 {offsets = [0, 80], sizes = [8, 8], strides = [1, 1]} : vector<8x96xf32> to vector<8x8xf32>
    %507 = tpu.transpose %505, [1, 0] : vector<8x8xf32> -> vector<8x8xf32>
    %cst_217 = arith.constant dense<0.000000e+00> : vector<8x8xf32>
    %508 = tpu.matmul %504, %507, %cst_217 {dimension_numbers = #tpu.dot_dimension_numbers<[1], [0], [0], [1], [0, 0, 1, 1], [], []>} : vector<8x8xf32>, vector<8x8xf32>, vector<8x8xf32> -> vector<8x8xf32>
    %cst_218 = arith.constant 0.353553385 : f32
    %509 = vector.broadcast %cst_218 : f32 to vector<8x8xf32>
    %510 = arith.mulf %508, %509 : vector<8x8xf32>
    %cst_219 = arith.constant dense<0xFF800000> : vector<8xf32>
    %511 = vector.multi_reduction <maximumf>, %510, %cst_219 [1] : vector<8x8xf32> to vector<8xf32>
    %512 = vector.shape_cast %511 : vector<8xf32> to vector<8x1xf32>
    %513 = vector.broadcast %512 : vector<8x1xf32> to vector<8x8xf32>
    %514 = arith.subf %510, %513 : vector<8x8xf32>
    %515 = math.exp %514 : vector<8x8xf32>
    %cst_220 = arith.constant dense<0.000000e+00> : vector<8xf32>
    %516 = vector.multi_reduction <add>, %515, %cst_220 [1] : vector<8x8xf32> to vector<8xf32>
    %517 = vector.shape_cast %516 : vector<8xf32> to vector<8x1xf32>
    %518 = tpu.reciprocal %517 {approx = true} : vector<8x1xf32> -> vector<8x1xf32>
    %519 = vector.broadcast %518 : vector<8x1xf32> to vector<8x8xf32>
    %520 = arith.mulf %515, %519 : vector<8x8xf32>
    %cst_221 = arith.constant dense<0.000000e+00> : vector<8x8xf32>
    %521 = tpu.matmul %520, %506, %cst_221 {dimension_numbers = #tpu.dot_dimension_numbers<[1], [0], [0], [1], [0, 0, 1, 1], [], []>} : vector<8x8xf32>, vector<8x8xf32>, vector<8x8xf32> -> vector<8x8xf32>
    %522 = vector.extract_strided_slice %467 {offsets = [0, 24], sizes = [8, 8], strides = [1, 1]} : vector<8x96xf32> to vector<8x8xf32>
    %523 = vector.extract_strided_slice %467 {offsets = [0, 56], sizes = [8, 8], strides = [1, 1]} : vector<8x96xf32> to vector<8x8xf32>
    %524 = vector.extract_strided_slice %467 {offsets = [0, 88], sizes = [8, 8], strides = [1, 1]} : vector<8x96xf32> to vector<8x8xf32>
    %525 = tpu.transpose %523, [1, 0] : vector<8x8xf32> -> vector<8x8xf32>
    %cst_222 = arith.constant dense<0.000000e+00> : vector<8x8xf32>
    %526 = tpu.matmul %522, %525, %cst_222 {dimension_numbers = #tpu.dot_dimension_numbers<[1], [0], [0], [1], [0, 0, 1, 1], [], []>} : vector<8x8xf32>, vector<8x8xf32>, vector<8x8xf32> -> vector<8x8xf32>
    %cst_223 = arith.constant 0.353553385 : f32
    %527 = vector.broadcast %cst_223 : f32 to vector<8x8xf32>
    %528 = arith.mulf %526, %527 : vector<8x8xf32>
    %cst_224 = arith.constant dense<0xFF800000> : vector<8xf32>
    %529 = vector.multi_reduction <maximumf>, %528, %cst_224 [1] : vector<8x8xf32> to vector<8xf32>
    %530 = vector.shape_cast %529 : vector<8xf32> to vector<8x1xf32>
    %531 = vector.broadcast %530 : vector<8x1xf32> to vector<8x8xf32>
    %532 = arith.subf %528, %531 : vector<8x8xf32>
    %533 = math.exp %532 : vector<8x8xf32>
    %cst_225 = arith.constant dense<0.000000e+00> : vector<8xf32>
    %534 = vector.multi_reduction <add>, %533, %cst_225 [1] : vector<8x8xf32> to vector<8xf32>
    %535 = vector.shape_cast %534 : vector<8xf32> to vector<8x1xf32>
    %536 = tpu.reciprocal %535 {approx = true} : vector<8x1xf32> -> vector<8x1xf32>
    %537 = vector.broadcast %536 : vector<8x1xf32> to vector<8x8xf32>
    %538 = arith.mulf %533, %537 : vector<8x8xf32>
    %cst_226 = arith.constant dense<0.000000e+00> : vector<8x8xf32>
    %539 = tpu.matmul %538, %524, %cst_226 {dimension_numbers = #tpu.dot_dimension_numbers<[1], [0], [0], [1], [0, 0, 1, 1], [], []>} : vector<8x8xf32>, vector<8x8xf32>, vector<8x8xf32> -> vector<8x8xf32>
    %540 = tpu.concatenate %485, %503, %521, %539 in 1 : vector<8x8xf32>, vector<8x8xf32>, vector<8x8xf32>, vector<8x8xf32> -> vector<8x32xf32>
    %c2_227 = arith.constant 2 : index
    %c0_228 = arith.constant 0 : index
    %c0_229 = arith.constant 0 : index
    %541 = vector.load %arg10[%c2_227, %c0_228, %c0_229] : memref<4x32x32xf32, #tpu.memory_space<vmem>>, vector<1x32x32xf32>
    %542 = vector.shape_cast %541 : vector<1x32x32xf32> to vector<32x32xf32>
    %543 = arith.truncf %540 : vector<8x32xf32> to vector<8x32xbf16>
    %544 = arith.truncf %542 : vector<32x32xf32> to vector<32x32xbf16>
    %cst_230 = arith.constant dense<0.000000e+00> : vector<8x32xf32>
    %545 = tpu.matmul %543, %544, %cst_230 {dimension_numbers = #tpu.dot_dimension_numbers<[1], [0], [0], [1], [0, 0, 1, 1], [], []>} : vector<8x32xbf16>, vector<32x32xbf16>, vector<8x32xf32> -> vector<8x32xf32>
    %546 = arith.addf %432, %545 : vector<8x32xf32>
    %c2_231 = arith.constant 2 : index
    %c0_232 = arith.constant 0 : index
    %c0_233 = arith.constant 0 : index
    %547 = vector.load %arg11[%c2_231, %c0_232, %c0_233] : memref<4x1x32xf32, #tpu.memory_space<vmem>>, vector<1x1x32xf32>
    %548 = vector.shape_cast %547 : vector<1x1x32xf32> to vector<1x32xf32>
    %549 = vector.broadcast %548 : vector<1x32xf32> to vector<8x32xf32>
    %550 = arith.addf %546, %549 : vector<8x32xf32>
    %c2_234 = arith.constant 2 : index
    %c0_235 = arith.constant 0 : index
    %c0_236 = arith.constant 0 : index
    %551 = vector.load %arg12[%c2_234, %c0_235, %c0_236] : memref<4x1x32xf32, #tpu.memory_space<vmem>>, vector<1x1x32xf32>
    %552 = vector.shape_cast %551 : vector<1x1x32xf32> to vector<1x32xf32>
    %c2_237 = arith.constant 2 : index
    %c0_238 = arith.constant 0 : index
    %c0_239 = arith.constant 0 : index
    %553 = vector.load %arg13[%c2_237, %c0_238, %c0_239] : memref<4x1x32xf32, #tpu.memory_space<vmem>>, vector<1x1x32xf32>
    %554 = vector.shape_cast %553 : vector<1x1x32xf32> to vector<1x32xf32>
    %cst_240 = arith.constant dense<0.000000e+00> : vector<8xf32>
    %555 = vector.multi_reduction <add>, %550, %cst_240 [1] : vector<8x32xf32> to vector<8xf32>
    %556 = vector.shape_cast %555 : vector<8xf32> to vector<8x1xf32>
    %cst_241 = arith.constant 3.200000e+01 : f32
    %557 = vector.broadcast %cst_241 : f32 to vector<8x1xf32>
    %558 = arith.divf %556, %557 : vector<8x1xf32>
    %559 = vector.broadcast %558 : vector<8x1xf32> to vector<8x32xf32>
    %560 = arith.subf %550, %559 : vector<8x32xf32>
    %561 = arith.mulf %560, %560 : vector<8x32xf32>
    %cst_242 = arith.constant dense<0.000000e+00> : vector<8xf32>
    %562 = vector.multi_reduction <add>, %561, %cst_242 [1] : vector<8x32xf32> to vector<8xf32>
    %563 = vector.shape_cast %562 : vector<8xf32> to vector<8x1xf32>
    %cst_243 = arith.constant 3.200000e+01 : f32
    %564 = vector.broadcast %cst_243 : f32 to vector<8x1xf32>
    %565 = arith.divf %563, %564 : vector<8x1xf32>
    %566 = vector.broadcast %558 : vector<8x1xf32> to vector<8x32xf32>
    %567 = arith.subf %550, %566 : vector<8x32xf32>
    %cst_244 = arith.constant 9.99999974E-6 : f32
    %568 = vector.broadcast %cst_244 : f32 to vector<8x1xf32>
    %569 = arith.addf %565, %568 : vector<8x1xf32>
    %570 = math.rsqrt %569 : vector<8x1xf32>
    %571 = vector.broadcast %570 : vector<8x1xf32> to vector<8x32xf32>
    %572 = arith.mulf %567, %571 : vector<8x32xf32>
    %573 = vector.broadcast %552 : vector<1x32xf32> to vector<8x32xf32>
    %574 = arith.mulf %572, %573 : vector<8x32xf32>
    %575 = vector.broadcast %554 : vector<1x32xf32> to vector<8x32xf32>
    %576 = arith.addf %574, %575 : vector<8x32xf32>
    %c2_245 = arith.constant 2 : index
    %c0_246 = arith.constant 0 : index
    %c0_247 = arith.constant 0 : index
    %577 = vector.load %arg14[%c2_245, %c0_246, %c0_247] : memref<4x32x128xf32, #tpu.memory_space<vmem>>, vector<1x32x128xf32>
    %578 = vector.shape_cast %577 : vector<1x32x128xf32> to vector<32x128xf32>
    %579 = arith.truncf %576 : vector<8x32xf32> to vector<8x32xbf16>
    %580 = arith.truncf %578 : vector<32x128xf32> to vector<32x128xbf16>
    %cst_248 = arith.constant dense<0.000000e+00> : vector<8x128xf32>
    %581 = tpu.matmul %579, %580, %cst_248 {dimension_numbers = #tpu.dot_dimension_numbers<[1], [0], [0], [1], [0, 0, 1, 1], [], []>} : vector<8x32xbf16>, vector<32x128xbf16>, vector<8x128xf32> -> vector<8x128xf32>
    %c2_249 = arith.constant 2 : index
    %c0_250 = arith.constant 0 : index
    %c0_251 = arith.constant 0 : index
    %582 = vector.load %arg15[%c2_249, %c0_250, %c0_251] : memref<4x1x128xf32, #tpu.memory_space<vmem>>, vector<1x1x128xf32>
    %583 = vector.shape_cast %582 : vector<1x1x128xf32> to vector<1x128xf32>
    %584 = vector.broadcast %583 : vector<1x128xf32> to vector<8x128xf32>
    %585 = arith.addf %581, %584 : vector<8x128xf32>
    %586 = arith.mulf %585, %585 : vector<8x128xf32>
    %587 = arith.mulf %585, %586 : vector<8x128xf32>
    %cst_252 = arith.constant 4.471500e-02 : f32
    %588 = vector.broadcast %cst_252 : f32 to vector<8x128xf32>
    %589 = arith.mulf %588, %587 : vector<8x128xf32>
    %590 = arith.addf %585, %589 : vector<8x128xf32>
    %cst_253 = arith.constant 0.797884583 : f32
    %591 = vector.broadcast %cst_253 : f32 to vector<8x128xf32>
    %592 = arith.mulf %591, %590 : vector<8x128xf32>
    %593 = math.tanh %592 : vector<8x128xf32>
    %cst_254 = arith.constant 1.000000e+00 : f32
    %594 = vector.broadcast %cst_254 : f32 to vector<8x128xf32>
    %595 = arith.addf %594, %593 : vector<8x128xf32>
    %cst_255 = arith.constant 5.000000e-01 : f32
    %596 = vector.broadcast %cst_255 : f32 to vector<8x128xf32>
    %597 = arith.mulf %596, %595 : vector<8x128xf32>
    %598 = arith.mulf %585, %597 : vector<8x128xf32>
    %c2_256 = arith.constant 2 : index
    %c0_257 = arith.constant 0 : index
    %c0_258 = arith.constant 0 : index
    %599 = vector.load %arg16[%c2_256, %c0_257, %c0_258] : memref<4x128x32xf32, #tpu.memory_space<vmem>>, vector<1x128x32xf32>
    %600 = vector.shape_cast %599 : vector<1x128x32xf32> to vector<128x32xf32>
    %601 = arith.truncf %598 : vector<8x128xf32> to vector<8x128xbf16>
    %602 = arith.truncf %600 : vector<128x32xf32> to vector<128x32xbf16>
    %cst_259 = arith.constant dense<0.000000e+00> : vector<8x32xf32>
    %603 = tpu.matmul %601, %602, %cst_259 {dimension_numbers = #tpu.dot_dimension_numbers<[1], [0], [0], [1], [0, 0, 1, 1], [], []>} : vector<8x128xbf16>, vector<128x32xbf16>, vector<8x32xf32> -> vector<8x32xf32>
    %604 = arith.addf %550, %603 : vector<8x32xf32>
    %c2_260 = arith.constant 2 : index
    %c0_261 = arith.constant 0 : index
    %c0_262 = arith.constant 0 : index
    %605 = vector.load %arg17[%c2_260, %c0_261, %c0_262] : memref<4x1x32xf32, #tpu.memory_space<vmem>>, vector<1x1x32xf32>
    %606 = vector.shape_cast %605 : vector<1x1x32xf32> to vector<1x32xf32>
    %607 = vector.broadcast %606 : vector<1x32xf32> to vector<8x32xf32>
    %608 = arith.addf %604, %607 : vector<8x32xf32>
    %c1_263 = arith.constant 1 : index
    %c0_264 = arith.constant 0 : index
    %c0_265 = arith.constant 0 : index
    %609 = vector.load %arg25[%c1_263, %c0_264, %c0_265] : memref<3x1x32xf32, #tpu.memory_space<vmem>>, vector<1x1x32xf32>
    %610 = vector.shape_cast %609 : vector<1x1x32xf32> to vector<1x32xf32>
    %c1_266 = arith.constant 1 : index
    %c0_267 = arith.constant 0 : index
    %c0_268 = arith.constant 0 : index
    %611 = vector.load %arg26[%c1_266, %c0_267, %c0_268] : memref<3x1x32xf32, #tpu.memory_space<vmem>>, vector<1x1x32xf32>
    %612 = vector.shape_cast %611 : vector<1x1x32xf32> to vector<1x32xf32>
    %cst_269 = arith.constant dense<0.000000e+00> : vector<8xf32>
    %613 = vector.multi_reduction <add>, %608, %cst_269 [1] : vector<8x32xf32> to vector<8xf32>
    %614 = vector.shape_cast %613 : vector<8xf32> to vector<8x1xf32>
    %cst_270 = arith.constant 3.200000e+01 : f32
    %615 = vector.broadcast %cst_270 : f32 to vector<8x1xf32>
    %616 = arith.divf %614, %615 : vector<8x1xf32>
    %617 = vector.broadcast %616 : vector<8x1xf32> to vector<8x32xf32>
    %618 = arith.subf %608, %617 : vector<8x32xf32>
    %619 = arith.mulf %618, %618 : vector<8x32xf32>
    %cst_271 = arith.constant dense<0.000000e+00> : vector<8xf32>
    %620 = vector.multi_reduction <add>, %619, %cst_271 [1] : vector<8x32xf32> to vector<8xf32>
    %621 = vector.shape_cast %620 : vector<8xf32> to vector<8x1xf32>
    %cst_272 = arith.constant 3.200000e+01 : f32
    %622 = vector.broadcast %cst_272 : f32 to vector<8x1xf32>
    %623 = arith.divf %621, %622 : vector<8x1xf32>
    %624 = vector.broadcast %616 : vector<8x1xf32> to vector<8x32xf32>
    %625 = arith.subf %608, %624 : vector<8x32xf32>
    %cst_273 = arith.constant 9.99999974E-6 : f32
    %626 = vector.broadcast %cst_273 : f32 to vector<8x1xf32>
    %627 = arith.addf %623, %626 : vector<8x1xf32>
    %628 = math.rsqrt %627 : vector<8x1xf32>
    %629 = vector.broadcast %628 : vector<8x1xf32> to vector<8x32xf32>
    %630 = arith.mulf %625, %629 : vector<8x32xf32>
    %631 = vector.broadcast %610 : vector<1x32xf32> to vector<8x32xf32>
    %632 = arith.mulf %630, %631 : vector<8x32xf32>
    %633 = vector.broadcast %612 : vector<1x32xf32> to vector<8x32xf32>
    %634 = arith.addf %632, %633 : vector<8x32xf32>
    %c1_274 = arith.constant 1 : index
    %c0_275 = arith.constant 0 : index
    %c0_276 = arith.constant 0 : index
    %635 = vector.load %arg27[%c1_274, %c0_275, %c0_276] : memref<3x1x32xf32, #tpu.memory_space<vmem>>, vector<1x1x32xf32>
    %636 = vector.shape_cast %635 : vector<1x1x32xf32> to vector<1x32xf32>
    %637 = vector.broadcast %636 : vector<1x32xf32> to vector<8x32xf32>
    %638 = arith.mulf %634, %637 : vector<8x32xf32>
    %cst_277 = arith.constant dense<0.000000e+00> : vector<8xf32>
    %639 = vector.multi_reduction <add>, %638, %cst_277 [1] : vector<8x32xf32> to vector<8xf32>
    %640 = vector.shape_cast %639 : vector<8xf32> to vector<8x1xf32>
    %c1_278 = arith.constant 1 : index
    %c0_279 = arith.constant 0 : index
    %c0_280 = arith.constant 0 : index
    %641 = vector.load %arg28[%c1_278, %c0_279, %c0_280] : memref<3x1x1xf32, #tpu.memory_space<vmem>>, vector<1x1x1xf32>
    %642 = vector.shape_cast %641 : vector<1x1x1xf32> to vector<1x1xf32>
    %643 = vector.broadcast %642 : vector<1x1xf32> to vector<8x1xf32>
    %644 = arith.addf %640, %643 : vector<8x1xf32>
    %c0_281 = arith.constant 0 : index
    %c0_282 = arith.constant 0 : index
    %c0_283 = arith.constant 0 : index
    %645 = vector.load %arg31[%c0_281, %c0_282, %c0_283] : memref<1x8x1xf32, #tpu.memory_space<vmem>>, vector<1x8x1xf32>
    %646 = vector.shape_cast %645 : vector<1x8x1xf32> to vector<8x1xf32>
    %647 = vector.shape_cast %644 : vector<8x1xf32> to vector<1x8x1xf32>
    tpu.vector_store %arg31[%c0_281, %c0_282, %c0_283], %647 {strides = array<i32>} : memref<1x8x1xf32, #tpu.memory_space<vmem>>, vector<1x8x1xf32>,
    %c3 = arith.constant 3 : index
    %c0_284 = arith.constant 0 : index
    %c0_285 = arith.constant 0 : index
    %648 = vector.load %arg6[%c3, %c0_284, %c0_285] : memref<4x1x32xf32, #tpu.memory_space<vmem>>, vector<1x1x32xf32>
    %649 = vector.shape_cast %648 : vector<1x1x32xf32> to vector<1x32xf32>
    %c3_286 = arith.constant 3 : index
    %c0_287 = arith.constant 0 : index
    %c0_288 = arith.constant 0 : index
    %650 = vector.load %arg7[%c3_286, %c0_287, %c0_288] : memref<4x1x32xf32, #tpu.memory_space<vmem>>, vector<1x1x32xf32>
    %651 = vector.shape_cast %650 : vector<1x1x32xf32> to vector<1x32xf32>
    %cst_289 = arith.constant dense<0.000000e+00> : vector<8xf32>
    %652 = vector.multi_reduction <add>, %608, %cst_289 [1] : vector<8x32xf32> to vector<8xf32>
    %653 = vector.shape_cast %652 : vector<8xf32> to vector<8x1xf32>
    %cst_290 = arith.constant 3.200000e+01 : f32
    %654 = vector.broadcast %cst_290 : f32 to vector<8x1xf32>
    %655 = arith.divf %653, %654 : vector<8x1xf32>
    %656 = vector.broadcast %655 : vector<8x1xf32> to vector<8x32xf32>
    %657 = arith.subf %608, %656 : vector<8x32xf32>
    %658 = arith.mulf %657, %657 : vector<8x32xf32>
    %cst_291 = arith.constant dense<0.000000e+00> : vector<8xf32>
    %659 = vector.multi_reduction <add>, %658, %cst_291 [1] : vector<8x32xf32> to vector<8xf32>
    %660 = vector.shape_cast %659 : vector<8xf32> to vector<8x1xf32>
    %cst_292 = arith.constant 3.200000e+01 : f32
    %661 = vector.broadcast %cst_292 : f32 to vector<8x1xf32>
    %662 = arith.divf %660, %661 : vector<8x1xf32>
    %663 = vector.broadcast %655 : vector<8x1xf32> to vector<8x32xf32>
    %664 = arith.subf %608, %663 : vector<8x32xf32>
    %cst_293 = arith.constant 9.99999974E-6 : f32
    %665 = vector.broadcast %cst_293 : f32 to vector<8x1xf32>
    %666 = arith.addf %662, %665 : vector<8x1xf32>
    %667 = math.rsqrt %666 : vector<8x1xf32>
    %668 = vector.broadcast %667 : vector<8x1xf32> to vector<8x32xf32>
    %669 = arith.mulf %664, %668 : vector<8x32xf32>
    %670 = vector.broadcast %649 : vector<1x32xf32> to vector<8x32xf32>
    %671 = arith.mulf %669, %670 : vector<8x32xf32>
    %672 = vector.broadcast %651 : vector<1x32xf32> to vector<8x32xf32>
    %673 = arith.addf %671, %672 : vector<8x32xf32>
    %c3_294 = arith.constant 3 : index
    %c0_295 = arith.constant 0 : index
    %c0_296 = arith.constant 0 : index
    %674 = vector.load %arg8[%c3_294, %c0_295, %c0_296] : memref<4x32x96xf32, #tpu.memory_space<vmem>>, vector<1x32x96xf32>
    %675 = vector.shape_cast %674 : vector<1x32x96xf32> to vector<32x96xf32>
    %676 = arith.truncf %673 : vector<8x32xf32> to vector<8x32xbf16>
    %677 = arith.truncf %675 : vector<32x96xf32> to vector<32x96xbf16>
    %cst_297 = arith.constant dense<0.000000e+00> : vector<8x96xf32>
    %678 = tpu.matmul %676, %677, %cst_297 {dimension_numbers = #tpu.dot_dimension_numbers<[1], [0], [0], [1], [0, 0, 1, 1], [], []>} : vector<8x32xbf16>, vector<32x96xbf16>, vector<8x96xf32> -> vector<8x96xf32>
    %c3_298 = arith.constant 3 : index
    %c0_299 = arith.constant 0 : index
    %c0_300 = arith.constant 0 : index
    %679 = vector.load %arg9[%c3_298, %c0_299, %c0_300] : memref<4x1x96xf32, #tpu.memory_space<vmem>>, vector<1x1x96xf32>
    %680 = vector.shape_cast %679 : vector<1x1x96xf32> to vector<1x96xf32>
    %681 = vector.broadcast %680 : vector<1x96xf32> to vector<8x96xf32>
    %682 = arith.addf %678, %681 : vector<8x96xf32>
    %683 = vector.extract_strided_slice %682 {offsets = [0, 0], sizes = [8, 8], strides = [1, 1]} : vector<8x96xf32> to vector<8x8xf32>
    %684 = vector.extract_strided_slice %682 {offsets = [0, 32], sizes = [8, 8], strides = [1, 1]} : vector<8x96xf32> to vector<8x8xf32>
    %685 = vector.extract_strided_slice %682 {offsets = [0, 64], sizes = [8, 8], strides = [1, 1]} : vector<8x96xf32> to vector<8x8xf32>
    %686 = tpu.transpose %684, [1, 0] : vector<8x8xf32> -> vector<8x8xf32>
    %cst_301 = arith.constant dense<0.000000e+00> : vector<8x8xf32>
    %687 = tpu.matmul %683, %686, %cst_301 {dimension_numbers = #tpu.dot_dimension_numbers<[1], [0], [0], [1], [0, 0, 1, 1], [], []>} : vector<8x8xf32>, vector<8x8xf32>, vector<8x8xf32> -> vector<8x8xf32>
    %cst_302 = arith.constant 0.353553385 : f32
    %688 = vector.broadcast %cst_302 : f32 to vector<8x8xf32>
    %689 = arith.mulf %687, %688 : vector<8x8xf32>
    %cst_303 = arith.constant dense<0xFF800000> : vector<8xf32>
    %690 = vector.multi_reduction <maximumf>, %689, %cst_303 [1] : vector<8x8xf32> to vector<8xf32>
    %691 = vector.shape_cast %690 : vector<8xf32> to vector<8x1xf32>
    %692 = vector.broadcast %691 : vector<8x1xf32> to vector<8x8xf32>
    %693 = arith.subf %689, %692 : vector<8x8xf32>
    %694 = math.exp %693 : vector<8x8xf32>
    %cst_304 = arith.constant dense<0.000000e+00> : vector<8xf32>
    %695 = vector.multi_reduction <add>, %694, %cst_304 [1] : vector<8x8xf32> to vector<8xf32>
    %696 = vector.shape_cast %695 : vector<8xf32> to vector<8x1xf32>
    %697 = tpu.reciprocal %696 {approx = true} : vector<8x1xf32> -> vector<8x1xf32>
    %698 = vector.broadcast %697 : vector<8x1xf32> to vector<8x8xf32>
    %699 = arith.mulf %694, %698 : vector<8x8xf32>
    %cst_305 = arith.constant dense<0.000000e+00> : vector<8x8xf32>
    %700 = tpu.matmul %699, %685, %cst_305 {dimension_numbers = #tpu.dot_dimension_numbers<[1], [0], [0], [1], [0, 0, 1, 1], [], []>} : vector<8x8xf32>, vector<8x8xf32>, vector<8x8xf32> -> vector<8x8xf32>
    %701 = vector.extract_strided_slice %682 {offsets = [0, 8], sizes = [8, 8], strides = [1, 1]} : vector<8x96xf32> to vector<8x8xf32>
    %702 = vector.extract_strided_slice %682 {offsets = [0, 40], sizes = [8, 8], strides = [1, 1]} : vector<8x96xf32> to vector<8x8xf32>
    %703 = vector.extract_strided_slice %682 {offsets = [0, 72], sizes = [8, 8], strides = [1, 1]} : vector<8x96xf32> to vector<8x8xf32>
    %704 = tpu.transpose %702, [1, 0] : vector<8x8xf32> -> vector<8x8xf32>
    %cst_306 = arith.constant dense<0.000000e+00> : vector<8x8xf32>
    %705 = tpu.matmul %701, %704, %cst_306 {dimension_numbers = #tpu.dot_dimension_numbers<[1], [0], [0], [1], [0, 0, 1, 1], [], []>} : vector<8x8xf32>, vector<8x8xf32>, vector<8x8xf32> -> vector<8x8xf32>
    %cst_307 = arith.constant 0.353553385 : f32
    %706 = vector.broadcast %cst_307 : f32 to vector<8x8xf32>
    %707 = arith.mulf %705, %706 : vector<8x8xf32>
    %cst_308 = arith.constant dense<0xFF800000> : vector<8xf32>
    %708 = vector.multi_reduction <maximumf>, %707, %cst_308 [1] : vector<8x8xf32> to vector<8xf32>
    %709 = vector.shape_cast %708 : vector<8xf32> to vector<8x1xf32>
    %710 = vector.broadcast %709 : vector<8x1xf32> to vector<8x8xf32>
    %711 = arith.subf %707, %710 : vector<8x8xf32>
    %712 = math.exp %711 : vector<8x8xf32>
    %cst_309 = arith.constant dense<0.000000e+00> : vector<8xf32>
    %713 = vector.multi_reduction <add>, %712, %cst_309 [1] : vector<8x8xf32> to vector<8xf32>
    %714 = vector.shape_cast %713 : vector<8xf32> to vector<8x1xf32>
    %715 = tpu.reciprocal %714 {approx = true} : vector<8x1xf32> -> vector<8x1xf32>
    %716 = vector.broadcast %715 : vector<8x1xf32> to vector<8x8xf32>
    %717 = arith.mulf %712, %716 : vector<8x8xf32>
    %cst_310 = arith.constant dense<0.000000e+00> : vector<8x8xf32>
    %718 = tpu.matmul %717, %703, %cst_310 {dimension_numbers = #tpu.dot_dimension_numbers<[1], [0], [0], [1], [0, 0, 1, 1], [], []>} : vector<8x8xf32>, vector<8x8xf32>, vector<8x8xf32> -> vector<8x8xf32>
    %719 = vector.extract_strided_slice %682 {offsets = [0, 16], sizes = [8, 8], strides = [1, 1]} : vector<8x96xf32> to vector<8x8xf32>
    %720 = vector.extract_strided_slice %682 {offsets = [0, 48], sizes = [8, 8], strides = [1, 1]} : vector<8x96xf32> to vector<8x8xf32>
    %721 = vector.extract_strided_slice %682 {offsets = [0, 80], sizes = [8, 8], strides = [1, 1]} : vector<8x96xf32> to vector<8x8xf32>
    %722 = tpu.transpose %720, [1, 0] : vector<8x8xf32> -> vector<8x8xf32>
    %cst_311 = arith.constant dense<0.000000e+00> : vector<8x8xf32>
    %723 = tpu.matmul %719, %722, %cst_311 {dimension_numbers = #tpu.dot_dimension_numbers<[1], [0], [0], [1], [0, 0, 1, 1], [], []>} : vector<8x8xf32>, vector<8x8xf32>, vector<8x8xf32> -> vector<8x8xf32>
    %cst_312 = arith.constant 0.353553385 : f32
    %724 = vector.broadcast %cst_312 : f32 to vector<8x8xf32>
    %725 = arith.mulf %723, %724 : vector<8x8xf32>
    %cst_313 = arith.constant dense<0xFF800000> : vector<8xf32>
    %726 = vector.multi_reduction <maximumf>, %725, %cst_313 [1] : vector<8x8xf32> to vector<8xf32>
    %727 = vector.shape_cast %726 : vector<8xf32> to vector<8x1xf32>
    %728 = vector.broadcast %727 : vector<8x1xf32> to vector<8x8xf32>
    %729 = arith.subf %725, %728 : vector<8x8xf32>
    %730 = math.exp %729 : vector<8x8xf32>
    %cst_314 = arith.constant dense<0.000000e+00> : vector<8xf32>
    %731 = vector.multi_reduction <add>, %730, %cst_314 [1] : vector<8x8xf32> to vector<8xf32>
    %732 = vector.shape_cast %731 : vector<8xf32> to vector<8x1xf32>
    %733 = tpu.reciprocal %732 {approx = true} : vector<8x1xf32> -> vector<8x1xf32>
    %734 = vector.broadcast %733 : vector<8x1xf32> to vector<8x8xf32>
    %735 = arith.mulf %730, %734 : vector<8x8xf32>
    %cst_315 = arith.constant dense<0.000000e+00> : vector<8x8xf32>
    %736 = tpu.matmul %735, %721, %cst_315 {dimension_numbers = #tpu.dot_dimension_numbers<[1], [0], [0], [1], [0, 0, 1, 1], [], []>} : vector<8x8xf32>, vector<8x8xf32>, vector<8x8xf32> -> vector<8x8xf32>
    %737 = vector.extract_strided_slice %682 {offsets = [0, 24], sizes = [8, 8], strides = [1, 1]} : vector<8x96xf32> to vector<8x8xf32>
    %738 = vector.extract_strided_slice %682 {offsets = [0, 56], sizes = [8, 8], strides = [1, 1]} : vector<8x96xf32> to vector<8x8xf32>
    %739 = vector.extract_strided_slice %682 {offsets = [0, 88], sizes = [8, 8], strides = [1, 1]} : vector<8x96xf32> to vector<8x8xf32>
    %740 = tpu.transpose %738, [1, 0] : vector<8x8xf32> -> vector<8x8xf32>
    %cst_316 = arith.constant dense<0.000000e+00> : vector<8x8xf32>
    %741 = tpu.matmul %737, %740, %cst_316 {dimension_numbers = #tpu.dot_dimension_numbers<[1], [0], [0], [1], [0, 0, 1, 1], [], []>} : vector<8x8xf32>, vector<8x8xf32>, vector<8x8xf32> -> vector<8x8xf32>
    %cst_317 = arith.constant 0.353553385 : f32
    %742 = vector.broadcast %cst_317 : f32 to vector<8x8xf32>
    %743 = arith.mulf %741, %742 : vector<8x8xf32>
    %cst_318 = arith.constant dense<0xFF800000> : vector<8xf32>
    %744 = vector.multi_reduction <maximumf>, %743, %cst_318 [1] : vector<8x8xf32> to vector<8xf32>
    %745 = vector.shape_cast %744 : vector<8xf32> to vector<8x1xf32>
    %746 = vector.broadcast %745 : vector<8x1xf32> to vector<8x8xf32>
    %747 = arith.subf %743, %746 : vector<8x8xf32>
    %748 = math.exp %747 : vector<8x8xf32>
    %cst_319 = arith.constant dense<0.000000e+00> : vector<8xf32>
    %749 = vector.multi_reduction <add>, %748, %cst_319 [1] : vector<8x8xf32> to vector<8xf32>
    %750 = vector.shape_cast %749 : vector<8xf32> to vector<8x1xf32>
    %751 = tpu.reciprocal %750 {approx = true} : vector<8x1xf32> -> vector<8x1xf32>
    %752 = vector.broadcast %751 : vector<8x1xf32> to vector<8x8xf32>
    %753 = arith.mulf %748, %752 : vector<8x8xf32>
    %cst_320 = arith.constant dense<0.000000e+00> : vector<8x8xf32>
    %754 = tpu.matmul %753, %739, %cst_320 {dimension_numbers = #tpu.dot_dimension_numbers<[1], [0], [0], [1], [0, 0, 1, 1], [], []>} : vector<8x8xf32>, vector<8x8xf32>, vector<8x8xf32> -> vector<8x8xf32>
    %755 = tpu.concatenate %700, %718, %736, %754 in 1 : vector<8x8xf32>, vector<8x8xf32>, vector<8x8xf32>, vector<8x8xf32> -> vector<8x32xf32>
    %c3_321 = arith.constant 3 : index
    %c0_322 = arith.constant 0 : index
    %c0_323 = arith.constant 0 : index
    %756 = vector.load %arg10[%c3_321, %c0_322, %c0_323] : memref<4x32x32xf32, #tpu.memory_space<vmem>>, vector<1x32x32xf32>
    %757 = vector.shape_cast %756 : vector<1x32x32xf32> to vector<32x32xf32>
    %758 = arith.truncf %755 : vector<8x32xf32> to vector<8x32xbf16>
    %759 = arith.truncf %757 : vector<32x32xf32> to vector<32x32xbf16>
    %cst_324 = arith.constant dense<0.000000e+00> : vector<8x32xf32>
    %760 = tpu.matmul %758, %759, %cst_324 {dimension_numbers = #tpu.dot_dimension_numbers<[1], [0], [0], [1], [0, 0, 1, 1], [], []>} : vector<8x32xbf16>, vector<32x32xbf16>, vector<8x32xf32> -> vector<8x32xf32>
    %761 = arith.addf %608, %760 : vector<8x32xf32>
    %c3_325 = arith.constant 3 : index
    %c0_326 = arith.constant 0 : index
    %c0_327 = arith.constant 0 : index
    %762 = vector.load %arg11[%c3_325, %c0_326, %c0_327] : memref<4x1x32xf32, #tpu.memory_space<vmem>>, vector<1x1x32xf32>
    %763 = vector.shape_cast %762 : vector<1x1x32xf32> to vector<1x32xf32>
    %764 = vector.broadcast %763 : vector<1x32xf32> to vector<8x32xf32>
    %765 = arith.addf %761, %764 : vector<8x32xf32>
    %c3_328 = arith.constant 3 : index
    %c0_329 = arith.constant 0 : index
    %c0_330 = arith.constant 0 : index
    %766 = vector.load %arg12[%c3_328, %c0_329, %c0_330] : memref<4x1x32xf32, #tpu.memory_space<vmem>>, vector<1x1x32xf32>
    %767 = vector.shape_cast %766 : vector<1x1x32xf32> to vector<1x32xf32>
    %c3_331 = arith.constant 3 : index
    %c0_332 = arith.constant 0 : index
    %c0_333 = arith.constant 0 : index
    %768 = vector.load %arg13[%c3_331, %c0_332, %c0_333] : memref<4x1x32xf32, #tpu.memory_space<vmem>>, vector<1x1x32xf32>
    %769 = vector.shape_cast %768 : vector<1x1x32xf32> to vector<1x32xf32>
    %cst_334 = arith.constant dense<0.000000e+00> : vector<8xf32>
    %770 = vector.multi_reduction <add>, %765, %cst_334 [1] : vector<8x32xf32> to vector<8xf32>
    %771 = vector.shape_cast %770 : vector<8xf32> to vector<8x1xf32>
    %cst_335 = arith.constant 3.200000e+01 : f32
    %772 = vector.broadcast %cst_335 : f32 to vector<8x1xf32>
    %773 = arith.divf %771, %772 : vector<8x1xf32>
    %774 = vector.broadcast %773 : vector<8x1xf32> to vector<8x32xf32>
    %775 = arith.subf %765, %774 : vector<8x32xf32>
    %776 = arith.mulf %775, %775 : vector<8x32xf32>
    %cst_336 = arith.constant dense<0.000000e+00> : vector<8xf32>
    %777 = vector.multi_reduction <add>, %776, %cst_336 [1] : vector<8x32xf32> to vector<8xf32>
    %778 = vector.shape_cast %777 : vector<8xf32> to vector<8x1xf32>
    %cst_337 = arith.constant 3.200000e+01 : f32
    %779 = vector.broadcast %cst_337 : f32 to vector<8x1xf32>
    %780 = arith.divf %778, %779 : vector<8x1xf32>
    %781 = vector.broadcast %773 : vector<8x1xf32> to vector<8x32xf32>
    %782 = arith.subf %765, %781 : vector<8x32xf32>
    %cst_338 = arith.constant 9.99999974E-6 : f32
    %783 = vector.broadcast %cst_338 : f32 to vector<8x1xf32>
    %784 = arith.addf %780, %783 : vector<8x1xf32>
    %785 = math.rsqrt %784 : vector<8x1xf32>
    %786 = vector.broadcast %785 : vector<8x1xf32> to vector<8x32xf32>
    %787 = arith.mulf %782, %786 : vector<8x32xf32>
    %788 = vector.broadcast %767 : vector<1x32xf32> to vector<8x32xf32>
    %789 = arith.mulf %787, %788 : vector<8x32xf32>
    %790 = vector.broadcast %769 : vector<1x32xf32> to vector<8x32xf32>
    %791 = arith.addf %789, %790 : vector<8x32xf32>
    %c3_339 = arith.constant 3 : index
    %c0_340 = arith.constant 0 : index
    %c0_341 = arith.constant 0 : index
    %792 = vector.load %arg14[%c3_339, %c0_340, %c0_341] : memref<4x32x128xf32, #tpu.memory_space<vmem>>, vector<1x32x128xf32>
    %793 = vector.shape_cast %792 : vector<1x32x128xf32> to vector<32x128xf32>
    %794 = arith.truncf %791 : vector<8x32xf32> to vector<8x32xbf16>
    %795 = arith.truncf %793 : vector<32x128xf32> to vector<32x128xbf16>
    %cst_342 = arith.constant dense<0.000000e+00> : vector<8x128xf32>
    %796 = tpu.matmul %794, %795, %cst_342 {dimension_numbers = #tpu.dot_dimension_numbers<[1], [0], [0], [1], [0, 0, 1, 1], [], []>} : vector<8x32xbf16>, vector<32x128xbf16>, vector<8x128xf32> -> vector<8x128xf32>
    %c3_343 = arith.constant 3 : index
    %c0_344 = arith.constant 0 : index
    %c0_345 = arith.constant 0 : index
    %797 = vector.load %arg15[%c3_343, %c0_344, %c0_345] : memref<4x1x128xf32, #tpu.memory_space<vmem>>, vector<1x1x128xf32>
    %798 = vector.shape_cast %797 : vector<1x1x128xf32> to vector<1x128xf32>
    %799 = vector.broadcast %798 : vector<1x128xf32> to vector<8x128xf32>
    %800 = arith.addf %796, %799 : vector<8x128xf32>
    %801 = arith.mulf %800, %800 : vector<8x128xf32>
    %802 = arith.mulf %800, %801 : vector<8x128xf32>
    %cst_346 = arith.constant 4.471500e-02 : f32
    %803 = vector.broadcast %cst_346 : f32 to vector<8x128xf32>
    %804 = arith.mulf %803, %802 : vector<8x128xf32>
    %805 = arith.addf %800, %804 : vector<8x128xf32>
    %cst_347 = arith.constant 0.797884583 : f32
    %806 = vector.broadcast %cst_347 : f32 to vector<8x128xf32>
    %807 = arith.mulf %806, %805 : vector<8x128xf32>
    %808 = math.tanh %807 : vector<8x128xf32>
    %cst_348 = arith.constant 1.000000e+00 : f32
    %809 = vector.broadcast %cst_348 : f32 to vector<8x128xf32>
    %810 = arith.addf %809, %808 : vector<8x128xf32>
    %cst_349 = arith.constant 5.000000e-01 : f32
    %811 = vector.broadcast %cst_349 : f32 to vector<8x128xf32>
    %812 = arith.mulf %811, %810 : vector<8x128xf32>
    %813 = arith.mulf %800, %812 : vector<8x128xf32>
    %c3_350 = arith.constant 3 : index
    %c0_351 = arith.constant 0 : index
    %c0_352 = arith.constant 0 : index
    %814 = vector.load %arg16[%c3_350, %c0_351, %c0_352] : memref<4x128x32xf32, #tpu.memory_space<vmem>>, vector<1x128x32xf32>
    %815 = vector.shape_cast %814 : vector<1x128x32xf32> to vector<128x32xf32>
    %816 = arith.truncf %813 : vector<8x128xf32> to vector<8x128xbf16>
    %817 = arith.truncf %815 : vector<128x32xf32> to vector<128x32xbf16>
    %cst_353 = arith.constant dense<0.000000e+00> : vector<8x32xf32>
    %818 = tpu.matmul %816, %817, %cst_353 {dimension_numbers = #tpu.dot_dimension_numbers<[1], [0], [0], [1], [0, 0, 1, 1], [], []>} : vector<8x128xbf16>, vector<128x32xbf16>, vector<8x32xf32> -> vector<8x32xf32>
    %819 = arith.addf %765, %818 : vector<8x32xf32>
    %c3_354 = arith.constant 3 : index
    %c0_355 = arith.constant 0 : index
    %c0_356 = arith.constant 0 : index
    %820 = vector.load %arg17[%c3_354, %c0_355, %c0_356] : memref<4x1x32xf32, #tpu.memory_space<vmem>>, vector<1x1x32xf32>
    %821 = vector.shape_cast %820 : vector<1x1x32xf32> to vector<1x32xf32>
    %822 = vector.broadcast %821 : vector<1x32xf32> to vector<8x32xf32>
    %823 = arith.addf %819, %822 : vector<8x32xf32>
    %824 = arith.addf %363, %823 : vector<8x32xf32>
    %c0_357 = arith.constant 0 : index
    %c0_358 = arith.constant 0 : index
    %825 = vector.load %arg22[%c0_357, %c0_358] : memref<32x32xf32, #tpu.memory_space<vmem>>, vector<32x32xf32>
    %826 = arith.truncf %824 : vector<8x32xf32> to vector<8x32xbf16>
    %827 = arith.truncf %825 : vector<32x32xf32> to vector<32x32xbf16>
    %cst_359 = arith.constant dense<0.000000e+00> : vector<8x32xf32>
    %828 = tpu.matmul %826, %827, %cst_359 {dimension_numbers = #tpu.dot_dimension_numbers<[1], [0], [0], [1], [0, 0, 1, 1], [], []>} : vector<8x32xbf16>, vector<32x32xbf16>, vector<8x32xf32> -> vector<8x32xf32>
    %c0_360 = arith.constant 0 : index
    %c0_361 = arith.constant 0 : index
    %829 = vector.load %arg23[%c0_360, %c0_361] : memref<1x32xf32, #tpu.memory_space<vmem>>, vector<1x32xf32>
    %830 = vector.broadcast %829 : vector<1x32xf32> to vector<8x32xf32>
    %831 = arith.addf %828, %830 : vector<8x32xf32>
    %832 = math.tanh %831 : vector<8x32xf32>
    %c0_362 = arith.constant 0 : index
    %c0_363 = arith.constant 0 : index
    %833 = vector.load %arg24[%c0_362, %c0_363] : memref<1x32xf32, #tpu.memory_space<vmem>>, vector<1x32xf32>
    %834 = vector.broadcast %833 : vector<1x32xf32> to vector<8x32xf32>
    %835 = arith.mulf %832, %834 : vector<8x32xf32>
    %cst_364 = arith.constant dense<0.000000e+00> : vector<8xf32>
    %836 = vector.multi_reduction <add>, %835, %cst_364 [1] : vector<8x32xf32> to vector<8xf32>
    %837 = vector.shape_cast %836 : vector<8xf32> to vector<8x1xf32>
    %cst_365 = arith.constant dense<0xFF800000> : vector<1xf32>
    %838 = vector.multi_reduction <maximumf>, %837, %cst_365 [0] : vector<8x1xf32> to vector<1xf32>
    %839 = vector.shape_cast %838 : vector<1xf32> to vector<1x1xf32>
    %840 = vector.broadcast %839 : vector<1x1xf32> to vector<8x1xf32>
    %841 = arith.subf %837, %840 : vector<8x1xf32>
    %842 = math.exp %841 : vector<8x1xf32>
    %cst_366 = arith.constant dense<0.000000e+00> : vector<1xf32>
    %843 = vector.multi_reduction <add>, %842, %cst_366 [0] : vector<8x1xf32> to vector<1xf32>
    %844 = vector.shape_cast %843 : vector<1xf32> to vector<1x1xf32>
    %845 = tpu.reciprocal %844 {approx = true} : vector<1x1xf32> -> vector<1x1xf32>
    %846 = vector.broadcast %845 : vector<1x1xf32> to vector<8x1xf32>
    %847 = arith.mulf %842, %846 : vector<8x1xf32>
    %848 = vector.broadcast %847 : vector<8x1xf32> to vector<8x32xf32>
    %849 = arith.mulf %848, %824 : vector<8x32xf32>
    %cst_367 = arith.constant dense<0.000000e+00> : vector<32xf32>
    %850 = vector.multi_reduction <add>, %849, %cst_367 [0] : vector<8x32xf32> to vector<32xf32>
    %851 = vector.shape_cast %850 : vector<32xf32> to vector<1x32xf32>
    %c2_368 = arith.constant 2 : index
    %c0_369 = arith.constant 0 : index
    %c0_370 = arith.constant 0 : index
    %852 = vector.load %arg25[%c2_368, %c0_369, %c0_370] : memref<3x1x32xf32, #tpu.memory_space<vmem>>, vector<1x1x32xf32>
    %853 = vector.shape_cast %852 : vector<1x1x32xf32> to vector<1x32xf32>
    %c2_371 = arith.constant 2 : index
    %c0_372 = arith.constant 0 : index
    %c0_373 = arith.constant 0 : index
    %854 = vector.load %arg26[%c2_371, %c0_372, %c0_373] : memref<3x1x32xf32, #tpu.memory_space<vmem>>, vector<1x1x32xf32>
    %855 = vector.shape_cast %854 : vector<1x1x32xf32> to vector<1x32xf32>
    %cst_374 = arith.constant dense<0.000000e+00> : vector<1xf32>
    %856 = vector.multi_reduction <add>, %851, %cst_374 [1] : vector<1x32xf32> to vector<1xf32>
    %857 = vector.shape_cast %856 : vector<1xf32> to vector<1x1xf32>
    %cst_375 = arith.constant 3.200000e+01 : f32
    %858 = vector.broadcast %cst_375 : f32 to vector<1x1xf32>
    %859 = arith.divf %857, %858 : vector<1x1xf32>
    %860 = vector.broadcast %859 : vector<1x1xf32> to vector<1x32xf32>
    %861 = arith.subf %851, %860 : vector<1x32xf32>
    %862 = arith.mulf %861, %861 : vector<1x32xf32>
    %cst_376 = arith.constant dense<0.000000e+00> : vector<1xf32>
    %863 = vector.multi_reduction <add>, %862, %cst_376 [1] : vector<1x32xf32> to vector<1xf32>
    %864 = vector.shape_cast %863 : vector<1xf32> to vector<1x1xf32>
    %cst_377 = arith.constant 3.200000e+01 : f32
    %865 = vector.broadcast %cst_377 : f32 to vector<1x1xf32>
    %866 = arith.divf %864, %865 : vector<1x1xf32>
    %867 = vector.broadcast %859 : vector<1x1xf32> to vector<1x32xf32>
    %868 = arith.subf %851, %867 : vector<1x32xf32>
    %cst_378 = arith.constant 9.99999974E-6 : f32
    %869 = vector.broadcast %cst_378 : f32 to vector<1x1xf32>
    %870 = arith.addf %866, %869 : vector<1x1xf32>
    %871 = math.rsqrt %870 : vector<1x1xf32>
    %872 = vector.broadcast %871 : vector<1x1xf32> to vector<1x32xf32>
    %873 = arith.mulf %868, %872 : vector<1x32xf32>
    %874 = arith.mulf %873, %853 : vector<1x32xf32>
    %875 = arith.addf %874, %855 : vector<1x32xf32>
    %c2_379 = arith.constant 2 : index
    %c0_380 = arith.constant 0 : index
    %c0_381 = arith.constant 0 : index
    %876 = vector.load %arg27[%c2_379, %c0_380, %c0_381] : memref<3x1x32xf32, #tpu.memory_space<vmem>>, vector<1x1x32xf32>
    %877 = vector.shape_cast %876 : vector<1x1x32xf32> to vector<1x32xf32>
    %878 = arith.mulf %875, %877 : vector<1x32xf32>
    %cst_382 = arith.constant dense<0.000000e+00> : vector<1xf32>
    %879 = vector.multi_reduction <add>, %878, %cst_382 [1] : vector<1x32xf32> to vector<1xf32>
    %880 = vector.shape_cast %879 : vector<1xf32> to vector<1x1xf32>
    %c2_383 = arith.constant 2 : index
    %c0_384 = arith.constant 0 : index
    %c0_385 = arith.constant 0 : index
    %881 = vector.load %arg28[%c2_383, %c0_384, %c0_385] : memref<3x1x1xf32, #tpu.memory_space<vmem>>, vector<1x1x1xf32>
    %882 = vector.shape_cast %881 : vector<1x1x1xf32> to vector<1x1xf32>
    %883 = arith.addf %880, %882 : vector<1x1xf32>
    %c0_386 = arith.constant 0 : index
    %c0_387 = arith.constant 0 : index
    %c0_388 = arith.constant 0 : index
    %884 = vector.load %arg29[%c0_386, %c0_387, %c0_388] : memref<1x1x1xf32, #tpu.memory_space<vmem>>, vector<1x1x1xf32>
    %885 = vector.shape_cast %884 : vector<1x1x1xf32> to vector<1x1xf32>
    %886 = vector.shape_cast %883 : vector<1x1xf32> to vector<1x1x1xf32>
    tpu.vector_store %arg29[%c0_386, %c0_387, %c0_388], %886 {strides = array<i32>} : memref<1x1x1xf32, #tpu.memory_space<vmem>>, vector<1x1x1xf32>,
    return
  }
  func.func @transform_0(%arg0: i32) -> (i32, i32, i32) {
    %c0_i32 = arith.constant 0 : i32
    %c0_i32_0 = arith.constant 0 : i32
    %c0_i32_1 = arith.constant 0 : i32
    return %arg0, %c0_i32, %c0_i32_0 : i32, i32, i32
  }
  func.func @transform_1(%arg0: i32) -> (i32, i32, i32) {
    %c0_i32 = arith.constant 0 : i32
    %c0_i32_0 = arith.constant 0 : i32
    %c0_i32_1 = arith.constant 0 : i32
    return %arg0, %c0_i32, %c0_i32_0 : i32, i32, i32
  }
  func.func @transform_2(%arg0: i32) -> (i32, i32, i32) {
    %c0_i32 = arith.constant 0 : i32
    %c0_i32_0 = arith.constant 0 : i32
    %c0_i32_1 = arith.constant 0 : i32
    return %arg0, %c0_i32, %c0_i32_0 : i32, i32, i32
  }
  func.func @transform_3(%arg0: i32) -> (i32, i32) {
    %c0_i32 = arith.constant 0 : i32
    %c0_i32_0 = arith.constant 0 : i32
    %c0_i32_1 = arith.constant 0 : i32
    return %c0_i32, %c0_i32_0 : i32, i32
  }
  func.func @transform_4(%arg0: i32) -> (i32, i32) {
    %c0_i32 = arith.constant 0 : i32
    %c0_i32_0 = arith.constant 0 : i32
    %c0_i32_1 = arith.constant 0 : i32
    return %c0_i32, %c0_i32_0 : i32, i32
  }
  func.func @transform_5(%arg0: i32) -> (i32, i32, i32) {
    %c0_i32 = arith.constant 0 : i32
    %c0_i32_0 = arith.constant 0 : i32
    %c0_i32_1 = arith.constant 0 : i32
    %c0_i32_2 = arith.constant 0 : i32
    return %c0_i32, %c0_i32_0, %c0_i32_1 : i32, i32, i32
  }
  func.func @transform_6(%arg0: i32) -> (i32, i32, i32) {
    %c0_i32 = arith.constant 0 : i32
    %c0_i32_0 = arith.constant 0 : i32
    %c0_i32_1 = arith.constant 0 : i32
    %c0_i32_2 = arith.constant 0 : i32
    return %c0_i32, %c0_i32_0, %c0_i32_1 : i32, i32, i32
  }
  func.func @transform_7(%arg0: i32) -> (i32, i32, i32) {
    %c0_i32 = arith.constant 0 : i32
    %c0_i32_0 = arith.constant 0 : i32
    %c0_i32_1 = arith.constant 0 : i32
    %c0_i32_2 = arith.constant 0 : i32
    return %c0_i32, %c0_i32_0, %c0_i32_1 : i32, i32, i32
  }
  func.func @transform_8(%arg0: i32) -> (i32, i32, i32) {
    %c0_i32 = arith.constant 0 : i32
    %c0_i32_0 = arith.constant 0 : i32
    %c0_i32_1 = arith.constant 0 : i32
    %c0_i32_2 = arith.constant 0 : i32
    return %c0_i32, %c0_i32_0, %c0_i32_1 : i32, i32, i32
  }
  func.func @transform_9(%arg0: i32) -> (i32, i32, i32) {
    %c0_i32 = arith.constant 0 : i32
    %c0_i32_0 = arith.constant 0 : i32
    %c0_i32_1 = arith.constant 0 : i32
    %c0_i32_2 = arith.constant 0 : i32
    return %c0_i32, %c0_i32_0, %c0_i32_1 : i32, i32, i32
  }
  func.func @transform_10(%arg0: i32) -> (i32, i32, i32) {
    %c0_i32 = arith.constant 0 : i32
    %c0_i32_0 = arith.constant 0 : i32
    %c0_i32_1 = arith.constant 0 : i32
    %c0_i32_2 = arith.constant 0 : i32
    return %c0_i32, %c0_i32_0, %c0_i32_1 : i32, i32, i32
  }
  func.func @transform_11(%arg0: i32) -> (i32, i32, i32) {
    %c0_i32 = arith.constant 0 : i32
    %c0_i32_0 = arith.constant 0 : i32
    %c0_i32_1 = arith.constant 0 : i32
    %c0_i32_2 = arith.constant 0 : i32
    return %c0_i32, %c0_i32_0, %c0_i32_1 : i32, i32, i32
  }
  func.func @transform_12(%arg0: i32) -> (i32, i32, i32) {
    %c0_i32 = arith.constant 0 : i32
    %c0_i32_0 = arith.constant 0 : i32
    %c0_i32_1 = arith.constant 0 : i32
    %c0_i32_2 = arith.constant 0 : i32
    return %c0_i32, %c0_i32_0, %c0_i32_1 : i32, i32, i32
  }
  func.func @transform_13(%arg0: i32) -> (i32, i32, i32) {
    %c0_i32 = arith.constant 0 : i32
    %c0_i32_0 = arith.constant 0 : i32
    %c0_i32_1 = arith.constant 0 : i32
    %c0_i32_2 = arith.constant 0 : i32
    return %c0_i32, %c0_i32_0, %c0_i32_1 : i32, i32, i32
  }
  func.func @transform_14(%arg0: i32) -> (i32, i32, i32) {
    %c0_i32 = arith.constant 0 : i32
    %c0_i32_0 = arith.constant 0 : i32
    %c0_i32_1 = arith.constant 0 : i32
    %c0_i32_2 = arith.constant 0 : i32
    return %c0_i32, %c0_i32_0, %c0_i32_1 : i32, i32, i32
  }
  func.func @transform_15(%arg0: i32) -> (i32, i32, i32) {
    %c0_i32 = arith.constant 0 : i32
    %c0_i32_0 = arith.constant 0 : i32
    %c0_i32_1 = arith.constant 0 : i32
    %c0_i32_2 = arith.constant 0 : i32
    return %c0_i32, %c0_i32_0, %c0_i32_1 : i32, i32, i32
  }
  func.func @transform_16(%arg0: i32) -> (i32, i32, i32) {
    %c0_i32 = arith.constant 0 : i32
    %c0_i32_0 = arith.constant 0 : i32
    %c0_i32_1 = arith.constant 0 : i32
    %c0_i32_2 = arith.constant 0 : i32
    return %c0_i32, %c0_i32_0, %c0_i32_1 : i32, i32, i32
  }
  func.func @transform_17(%arg0: i32) -> (i32, i32) {
    %c0_i32 = arith.constant 0 : i32
    %c0_i32_0 = arith.constant 0 : i32
    %c0_i32_1 = arith.constant 0 : i32
    return %c0_i32, %c0_i32_0 : i32, i32
  }
  func.func @transform_18(%arg0: i32) -> (i32, i32) {
    %c0_i32 = arith.constant 0 : i32
    %c0_i32_0 = arith.constant 0 : i32
    %c0_i32_1 = arith.constant 0 : i32
    return %c0_i32, %c0_i32_0 : i32, i32
  }
  func.func @transform_19(%arg0: i32) -> (i32, i32) {
    %c0_i32 = arith.constant 0 : i32
    %c0_i32_0 = arith.constant 0 : i32
    %c0_i32_1 = arith.constant 0 : i32
    return %c0_i32, %c0_i32_0 : i32, i32
  }
  func.func @transform_20(%arg0: i32) -> (i32, i32) {
    %c0_i32 = arith.constant 0 : i32
    %c0_i32_0 = arith.constant 0 : i32
    %c0_i32_1 = arith.constant 0 : i32
    return %c0_i32, %c0_i32_0 : i32, i32
  }
  func.func @transform_21(%arg0: i32) -> (i32, i32) {
    %c0_i32 = arith.constant 0 : i32
    %c0_i32_0 = arith.constant 0 : i32
    %c0_i32_1 = arith.constant 0 : i32
    return %c0_i32, %c0_i32_0 : i32, i32
  }
  func.func @transform_22(%arg0: i32) -> (i32, i32) {
    %c0_i32 = arith.constant 0 : i32
    %c0_i32_0 = arith.constant 0 : i32
    %c0_i32_1 = arith.constant 0 : i32
    return %c0_i32, %c0_i32_0 : i32, i32
  }
  func.func @transform_23(%arg0: i32) -> (i32, i32) {
    %c0_i32 = arith.constant 0 : i32
    %c0_i32_0 = arith.constant 0 : i32
    %c0_i32_1 = arith.constant 0 : i32
    return %c0_i32, %c0_i32_0 : i32, i32
  }
  func.func @transform_24(%arg0: i32) -> (i32, i32, i32) {
    %c0_i32 = arith.constant 0 : i32
    %c0_i32_0 = arith.constant 0 : i32
    %c0_i32_1 = arith.constant 0 : i32
    %c0_i32_2 = arith.constant 0 : i32
    return %c0_i32, %c0_i32_0, %c0_i32_1 : i32, i32, i32
  }
  func.func @transform_25(%arg0: i32) -> (i32, i32, i32) {
    %c0_i32 = arith.constant 0 : i32
    %c0_i32_0 = arith.constant 0 : i32
    %c0_i32_1 = arith.constant 0 : i32
    %c0_i32_2 = arith.constant 0 : i32
    return %c0_i32, %c0_i32_0, %c0_i32_1 : i32, i32, i32
  }
  func.func @transform_26(%arg0: i32) -> (i32, i32, i32) {
    %c0_i32 = arith.constant 0 : i32
    %c0_i32_0 = arith.constant 0 : i32
    %c0_i32_1 = arith.constant 0 : i32
    %c0_i32_2 = arith.constant 0 : i32
    return %c0_i32, %c0_i32_0, %c0_i32_1 : i32, i32, i32
  }
  func.func @transform_27(%arg0: i32) -> (i32, i32, i32) {
    %c0_i32 = arith.constant 0 : i32
    %c0_i32_0 = arith.constant 0 : i32
    %c0_i32_1 = arith.constant 0 : i32
    %c0_i32_2 = arith.constant 0 : i32
    return %c0_i32, %c0_i32_0, %c0_i32_1 : i32, i32, i32
  }
  func.func @transform_28(%arg0: i32) -> (i32, i32, i32) {
    %c0_i32 = arith.constant 0 : i32
    %c0_i32_0 = arith.constant 0 : i32
    %c0_i32_1 = arith.constant 0 : i32
    return %arg0, %c0_i32, %c0_i32_0 : i32, i32, i32
  }
  func.func @transform_29(%arg0: i32) -> (i32, i32, i32) {
    %c0_i32 = arith.constant 0 : i32
    %c0_i32_0 = arith.constant 0 : i32
    %c0_i32_1 = arith.constant 0 : i32
    return %arg0, %c0_i32, %c0_i32_0 : i32, i32, i32
  }
  func.func @transform_30(%arg0: i32) -> (i32, i32, i32) {
    %c0_i32 = arith.constant 0 : i32
    %c0_i32_0 = arith.constant 0 : i32
    %c0_i32_1 = arith.constant 0 : i32
    return %arg0, %c0_i32, %c0_i32_0 : i32, i32, i32
  }
}

</mosaic_0001>

<llo_original>
// kernel: prep_model_forward.1
$region0: #{prep_model_forward.1}
  #allocation0 [shape = 'u32[]', space=smem, size = 0x4, offset = 0x4, fixed_abs, tag = 'smem constant byte address 0x4 - core index']
  #allocation1 [shape = 'u32[144,128]{1,0:T(1,128)}', space=vmem, size = 0x12000, scoped, tag = 'internal scratch']
  %s0 = inlined_call_operand.smem [shape: u32[31], index: -1, kind: input, shape index: {}]
  %s1 = sld [smem:[%s0]]
  %s2 = scalar_lea.smem %s0, 1
  %s3 = sld [smem:[%s2]]
  %s4 = scalar_lea.smem %s0, 2
  %s5 = sld [smem:[%s4]]
  %s6 = scalar_lea.smem %s0, 3
  %s7 = sld [smem:[%s6]]
  %s8 = scalar_lea.smem %s0, 4
  %s9 = sld [smem:[%s8]]
  %s10 = scalar_lea.smem %s0, 5
  %s11 = sld [smem:[%s10]]
  %s12 = scalar_lea.smem %s0, 6
  %s13 = sld [smem:[%s12]]
  %s14 = scalar_lea.smem %s0, 7
  %s15 = sld [smem:[%s14]]
  %s16 = scalar_lea.smem %s0, 8
  %s17 = sld [smem:[%s16]]
  %s18 = scalar_lea.smem %s0, 9
  %s19 = sld [smem:[%s18]]
  %s20 = scalar_lea.smem %s0, 10
  %s21 = sld [smem:[%s20]]
  %s22 = scalar_lea.smem %s0, 11
  %s23 = sld [smem:[%s22]]
  %s24 = scalar_lea.smem %s0, 12
  %s25 = sld [smem:[%s24]]
  %s26 = scalar_lea.smem %s0, 13
  %s27 = sld [smem:[%s26]]
  %s28 = scalar_lea.smem %s0, 14
  %s29 = sld [smem:[%s28]]
  %s30 = scalar_lea.smem %s0, 15
  %s31 = sld [smem:[%s30]]
  %s32 = scalar_lea.smem %s0, 16
  %s33 = sld [smem:[%s32]]
  %s34 = scalar_lea.smem %s0, 17
  %s35 = sld [smem:[%s34]]
  %s36 = scalar_lea.smem %s0, 18
  %s37 = sld [smem:[%s36]]
  %s38 = scalar_lea.smem %s0, 19
  %s39 = sld [smem:[%s38]]
  %s40 = scalar_lea.smem %s0, 20
  %s41 = sld [smem:[%s40]]
  %s42 = scalar_lea.smem %s0, 21
  %s43 = sld [smem:[%s42]]
  %s44 = scalar_lea.smem %s0, 22
  %s45 = sld [smem:[%s44]]
  %s46 = scalar_lea.smem %s0, 23
  %s47 = sld [smem:[%s46]]
  %s48 = scalar_lea.smem %s0, 24
  %s49 = sld [smem:[%s48]]
  %s50 = scalar_lea.smem %s0, 25
  %s51 = sld [smem:[%s50]]
  %s52 = scalar_lea.smem %s0, 26
  %s53 = sld [smem:[%s52]]
  %s54 = scalar_lea.smem %s0, 27
  %s55 = sld [smem:[%s54]]
  %s56 = scalar_lea.smem %s0, 28
  %s57 = sld [smem:[%s56]]
  %s58 = scalar_lea.smem %s0, 29
  %s59 = sld [smem:[%s58]]
  %s60 = scalar_lea.smem %s0, 30
  %s61 = sld [smem:[%s60]]
  %62 = xla_tuple %s57, %s59, %s61
  %s63 = sld [smem:[#allocation0]]
  $region161: #{prep_model_forward.1} parent=0
    _
  %s65 = ssub.s32 1, %s63
  %s66 = scalar_select 0, %s65, %s63
  loop: start=0, step=1, limit=4
  $region2: #{prep_model_forward.1} parent=0 // loop_pre_header
    _
  $region3: #{prep_model_forward.1} parent=0 // loop_header
    %s68 = sphi 0, %s72
    %p69 = scmp.ge.s32.totalorder %s68, 4
    %s78 = sphi 0, %s80
    %s81 = sphi 0, %s78
    %s82 = sphi 0, %s81
    %s98 = sphi 0, %s82
    %s104 = sphi 0, %s106
    %s107 = sphi 0, %s104
    %s108 = sphi 0, %s107
    %s124 = sphi 0, %s108
    %s130 = sphi 0, %s132
    %s133 = sphi 0, %s130
    %s134 = sphi 0, %s133
    %s150 = sphi 0, %s134
    %s154 = sphi 0, %s154
    %s156 = sphi 0, %s154
    %s157 = sphi 0, %s156
    %s171 = sphi 0, %s157
    %s175 = sphi 0, %s175
    %s177 = sphi 0, %s175
    %s178 = sphi 0, %s177
    %s192 = sphi 0, %s178
    %s196 = sphi 0, %s196
    %s198 = sphi 0, %s196
    %s199 = sphi 0, %s198
    %s213 = sphi 0, %s199
    %s217 = sphi 0, %s217
    %s219 = sphi 0, %s217
    %s220 = sphi 0, %s219
    %s234 = sphi 0, %s220
    %s238 = sphi 0, %s238
    %s240 = sphi 0, %s238
    %s241 = sphi 0, %s240
    %s255 = sphi 0, %s241
    %s259 = sphi 0, %s259
    %s261 = sphi 0, %s259
    %s262 = sphi 0, %s261
    %s276 = sphi 0, %s262
    %s280 = sphi 0, %s280
    %s282 = sphi 0, %s280
    %s283 = sphi 0, %s282
    %s297 = sphi 0, %s283
    %s301 = sphi 0, %s301
    %s303 = sphi 0, %s301
    %s304 = sphi 0, %s303
    %s318 = sphi 0, %s304
    %s322 = sphi 0, %s322
    %s324 = sphi 0, %s322
    %s325 = sphi 0, %s324
    %s339 = sphi 0, %s325
    %s343 = sphi 0, %s343
    %s345 = sphi 0, %s343
    %s346 = sphi 0, %s345
    %s360 = sphi 0, %s346
    %s364 = sphi 0, %s364
    %s366 = sphi 0, %s364
    %s367 = sphi 0, %s366
    %s381 = sphi 0, %s367
    %s385 = sphi 0, %s385
    %s387 = sphi 0, %s385
    %s388 = sphi 0, %s387
    %s402 = sphi 0, %s388
    %s406 = sphi 0, %s406
    %s408 = sphi 0, %s406
    %s409 = sphi 0, %s408
    %s423 = sphi 0, %s409
    %s427 = sphi 0, %s427
    %s429 = sphi 0, %s427
    %s430 = sphi 0, %s429
    %s444 = sphi 0, %s430
    %s448 = sphi 0, %s448
    %s450 = sphi 0, %s448
    %s451 = sphi 0, %s450
    %s465 = sphi 0, %s451
    %s469 = sphi 0, %s469
    %s471 = sphi 0, %s469
    %s472 = sphi 0, %s471
    %s486 = sphi 0, %s472
    %s490 = sphi 0, %s490
    %s492 = sphi 0, %s490
    %s493 = sphi 0, %s492
    %s507 = sphi 0, %s493
    %s511 = sphi 0, %s511
    %s513 = sphi 0, %s511
    %s514 = sphi 0, %s513
    %s528 = sphi 0, %s514
    %s532 = sphi 0, %s532
    %s534 = sphi 0, %s532
    %s535 = sphi 0, %s534
    %s549 = sphi 0, %s535
    %s553 = sphi 0, %s553
    %s555 = sphi 0, %s553
    %s556 = sphi 0, %s555
    %s570 = sphi 0, %s556
    %s574 = sphi 0, %s574
    %s576 = sphi 0, %s574
    %s577 = sphi 0, %s576
    %s591 = sphi 0, %s577
    %s595 = sphi 0, %s595
    %s597 = sphi 0, %s595
    %s598 = sphi 0, %s597
    %s612 = sphi 0, %s598
    %s616 = sphi 0, %s616
    %s618 = sphi 0, %s616
    %s619 = sphi 0, %s618
    %s633 = sphi 0, %s619
    %s637 = sphi 0, %s637
    %s639 = sphi 0, %s637
    %s640 = sphi 0, %s639
    %s654 = sphi 0, %s640
    %s658 = sphi 0, %s658
    %s660 = sphi 0, %s658
    %s661 = sphi 0, %s660
    %s675 = sphi 0, %s661
    %s681 = sphi 0, %s683
    %s684 = sphi 0, %s681
    %s685 = sphi 0, %s684
    %s701 = sphi 0, %s685
    %s707 = sphi 0, %s709
    %s710 = sphi 0, %s707
    %s711 = sphi 0, %s710
    %s727 = sphi 0, %s711
    %s733 = sphi 0, %s735
    %s736 = sphi 0, %s733
    %s737 = sphi 0, %s736
    %s753 = sphi 0, %s737
  $region4: #{prep_model_forward.1} parent=0 // loop_header_branch
    %71 = sbr.rel (%p69) target = $region8
  $region5: #{prep_model_forward.1} parent=0 // loop_body
    %s73 = ssub.s32 %s68, 1
    %s74 = ssub.s32 %s68, 2
    %s75 = sadd.s32 %s68, 1
    %s76 = ssub.s32 %s68, %s75
    %p77 = scmp.eq.s32.totalorder %s76, 0
    %s79 = sadd.s32 %s78, 1
    %s80 = scalar_select %p77, %s78, %s79
    %p83 = pneg %p77
    %p84 = scmp.eq.s32.totalorder %s68, 1
    %p85 = por %p83, %p84
    %p86 = scmp.ne.s32.totalorder %s78, %s81
    %p87 = scmp.eq.s32.totalorder %s68, 0
    %p88 = por %p86, %p87
    %p89 = scmp.ne.s32.totalorder %s78, %s81
    %p90 = scmp.eq.s32.totalorder %s73, 1
    %p91 = por %p89, %p90
    %p92 = scmp.ne.s32.totalorder %s81, %s82
    %p93 = scmp.eq.s32.totalorder %s73, 0
    %p94 = por %p92, %p93
    %p95 = scmp.ne.s32.totalorder %s81, %s82
    %p96 = scmp.eq.s32.totalorder %s74, 1
    %p97 = por %p95, %p96
    %p99 = scmp.ne.s32.totalorder %s82, %s98
    %p100 = scmp.eq.s32.totalorder %s74, 0
    %p101 = por %p99, %p100
    %s102 = ssub.s32 %s68, %s75
    %p103 = scmp.eq.s32.totalorder %s102, 0
    %s105 = sadd.s32 %s104, 1
    %s106 = scalar_select %p103, %s104, %s105
    %p109 = pneg %p103
    %p110 = scmp.eq.s32.totalorder %s68, 1
    %p111 = por %p109, %p110
    %p112 = scmp.ne.s32.totalorder %s104, %s107
    %p113 = scmp.eq.s32.totalorder %s68, 0
    %p114 = por %p112, %p113
    %p115 = scmp.ne.s32.totalorder %s104, %s107
    %p116 = scmp.eq.s32.totalorder %s73, 1
    %p117 = por %p115, %p116
    %p118 = scmp.ne.s32.totalorder %s107, %s108
    %p119 = scmp.eq.s32.totalorder %s73, 0
    %p120 = por %p118, %p119
    %p121 = scmp.ne.s32.totalorder %s107, %s108
    %p122 = scmp.eq.s32.totalorder %s74, 1
    %p123 = por %p121, %p122
    %p125 = scmp.ne.s32.totalorder %s108, %s124
    %p126 = scmp.eq.s32.totalorder %s74, 0
    %p127 = por %p125, %p126
    %s128 = ssub.s32 %s68, %s75
    %p129 = scmp.eq.s32.totalorder %s128, 0
    %s131 = sadd.s32 %s130, 1
    %s132 = scalar_select %p129, %s130, %s131
    %p135 = pneg %p129
    %p136 = scmp.eq.s32.totalorder %s68, 1
    %p137 = por %p135, %p136
    %p138 = scmp.ne.s32.totalorder %s130, %s133
    %p139 = scmp.eq.s32.totalorder %s68, 0
    %p140 = por %p138, %p139
    %p141 = scmp.ne.s32.totalorder %s130, %s133
    %p142 = scmp.eq.s32.totalorder %s73, 1
    %p143 = por %p141, %p142
    %p144 = scmp.ne.s32.totalorder %s133, %s134
    %p145 = scmp.eq.s32.totalorder %s73, 0
    %p146 = por %p144, %p145
    %p147 = scmp.ne.s32.totalorder %s133, %s134
    %p148 = scmp.eq.s32.totalorder %s74, 1
    %p149 = por %p147, %p148
    %p151 = scmp.ne.s32.totalorder %s134, %s150
    %p152 = scmp.eq.s32.totalorder %s74, 0
    %p153 = por %p151, %p152
    %s155 = sadd.s32 %s154, 1
    %p158 = scmp.eq.s32.totalorder %s68, 1
    %p159 = scmp.ne.s32.totalorder %s154, %s156
    %p160 = scmp.eq.s32.totalorder %s68, 0
    %p161 = por %p159, %p160
    %p162 = scmp.ne.s32.totalorder %s154, %s156
    %p163 = scmp.eq.s32.totalorder %s73, 1
    %p164 = por %p162, %p163
    %p165 = scmp.ne.s32.totalorder %s156, %s157
    %p166 = scmp.eq.s32.totalorder %s73, 0
    %p167 = por %p165, %p166
    %p168 = scmp.ne.s32.totalorder %s156, %s157
    %p169 = scmp.eq.s32.totalorder %s74, 1
    %p170 = por %p168, %p169
    %p172 = scmp.ne.s32.totalorder %s157, %s171
    %p173 = scmp.eq.s32.totalorder %s74, 0
    %p174 = por %p172, %p173
    %s176 = sadd.s32 %s175, 1
    %p179 = scmp.eq.s32.totalorder %s68, 1
    %p180 = scmp.ne.s32.totalorder %s175, %s177
    %p181 = scmp.eq.s32.totalorder %s68, 0
    %p182 = por %p180, %p181
    %p183 = scmp.ne.s32.totalorder %s175, %s177
    %p184 = scmp.eq.s32.totalorder %s73, 1
    %p185 = por %p183, %p184
    %p186 = scmp.ne.s32.totalorder %s177, %s178
    %p187 = scmp.eq.s32.totalorder %s73, 0
    %p188 = por %p186, %p187
    %p189 = scmp.ne.s32.totalorder %s177, %s178
    %p190 = scmp.eq.s32.totalorder %s74, 1
    %p191 = por %p189, %p190
    %p193 = scmp.ne.s32.totalorder %s178, %s192
    %p194 = scmp.eq.s32.totalorder %s74, 0
    %p195 = por %p193, %p194
    %s197 = sadd.s32 %s196, 1
    %p200 = scmp.eq.s32.totalorder %s68, 1
    %p201 = scmp.ne.s32.totalorder %s196, %s198
    %p202 = scmp.eq.s32.totalorder %s68, 0
    %p203 = por %p201, %p202
    %p204 = scmp.ne.s32.totalorder %s196, %s198
    %p205 = scmp.eq.s32.totalorder %s73, 1
    %p206 = por %p204, %p205
    %p207 = scmp.ne.s32.totalorder %s198, %s199
    %p208 = scmp.eq.s32.totalorder %s73, 0
    %p209 = por %p207, %p208
    %p210 = scmp.ne.s32.totalorder %s198, %s199
    %p211 = scmp.eq.s32.totalorder %s74, 1
    %p212 = por %p210, %p211
    %p214 = scmp.ne.s32.totalorder %s199, %s213
    %p215 = scmp.eq.s32.totalorder %s74, 0
    %p216 = por %p214, %p215
    %s218 = sadd.s32 %s217, 1
    %p221 = scmp.eq.s32.totalorder %s68, 1
    %p222 = scmp.ne.s32.totalorder %s217, %s219
    %p223 = scmp.eq.s32.totalorder %s68, 0
    %p224 = por %p222, %p223
    %p225 = scmp.ne.s32.totalorder %s217, %s219
    %p226 = scmp.eq.s32.totalorder %s73, 1
    %p227 = por %p225, %p226
    %p228 = scmp.ne.s32.totalorder %s219, %s220
    %p229 = scmp.eq.s32.totalorder %s73, 0
    %p230 = por %p228, %p229
    %p231 = scmp.ne.s32.totalorder %s219, %s220
    %p232 = scmp.eq.s32.totalorder %s74, 1
    %p233 = por %p231, %p232
    %p235 = scmp.ne.s32.totalorder %s220, %s234
    %p236 = scmp.eq.s32.totalorder %s74, 0
    %p237 = por %p235, %p236
    %s239 = sadd.s32 %s238, 1
    %p242 = scmp.eq.s32.totalorder %s68, 1
    %p243 = scmp.ne.s32.totalorder %s238, %s240
    %p244 = scmp.eq.s32.totalorder %s68, 0
    %p245 = por %p243, %p244
    %p246 = scmp.ne.s32.totalorder %s238, %s240
    %p247 = scmp.eq.s32.totalorder %s73, 1
    %p248 = por %p246, %p247
    %p249 = scmp.ne.s32.totalorder %s240, %s241
    %p250 = scmp.eq.s32.totalorder %s73, 0
    %p251 = por %p249, %p250
    %p252 = scmp.ne.s32.totalorder %s240, %s241
    %p253 = scmp.eq.s32.totalorder %s74, 1
    %p254 = por %p252, %p253
    %p256 = scmp.ne.s32.totalorder %s241, %s255
    %p257 = scmp.eq.s32.totalorder %s74, 0
    %p258 = por %p256, %p257
    %s260 = sadd.s32 %s259, 1
    %p263 = scmp.eq.s32.totalorder %s68, 1
    %p264 = scmp.ne.s32.totalorder %s259, %s261
    %p265 = scmp.eq.s32.totalorder %s68, 0
    %p266 = por %p264, %p265
    %p267 = scmp.ne.s32.totalorder %s259, %s261
    %p268 = scmp.eq.s32.totalorder %s73, 1
    %p269 = por %p267, %p268
    %p270 = scmp.ne.s32.totalorder %s261, %s262
    %p271 = scmp.eq.s32.totalorder %s73, 0
    %p272 = por %p270, %p271
    %p273 = scmp.ne.s32.totalorder %s261, %s262
    %p274 = scmp.eq.s32.totalorder %s74, 1
    %p275 = por %p273, %p274
    %p277 = scmp.ne.s32.totalorder %s262, %s276
    %p278 = scmp.eq.s32.totalorder %s74, 0
    %p279 = por %p277, %p278
    %s281 = sadd.s32 %s280, 1
    %p284 = scmp.eq.s32.totalorder %s68, 1
    %p285 = scmp.ne.s32.totalorder %s280, %s282
    %p286 = scmp.eq.s32.totalorder %s68, 0
    %p287 = por %p285, %p286
    %p288 = scmp.ne.s32.totalorder %s280, %s282
    %p289 = scmp.eq.s32.totalorder %s73, 1
    %p290 = por %p288, %p289
    %p291 = scmp.ne.s32.totalorder %s282, %s283
    %p292 = scmp.eq.s32.totalorder %s73, 0
    %p293 = por %p291, %p292
    %p294 = scmp.ne.s32.totalorder %s282, %s283
    %p295 = scmp.eq.s32.totalorder %s74, 1
    %p296 = por %p294, %p295
    %p298 = scmp.ne.s32.totalorder %s283, %s297
    %p299 = scmp.eq.s32.totalorder %s74, 0
    %p300 = por %p298, %p299
    %s302 = sadd.s32 %s301, 1
    %p305 = scmp.eq.s32.totalorder %s68, 1
    %p306 = scmp.ne.s32.totalorder %s301, %s303
    %p307 = scmp.eq.s32.totalorder %s68, 0
    %p308 = por %p306, %p307
    %p309 = scmp.ne.s32.totalorder %s301, %s303
    %p310 = scmp.eq.s32.totalorder %s73, 1
    %p311 = por %p309, %p310
    %p312 = scmp.ne.s32.totalorder %s303, %s304
    %p313 = scmp.eq.s32.totalorder %s73, 0
    %p314 = por %p312, %p313
    %p315 = scmp.ne.s32.totalorder %s303, %s304
    %p316 = scmp.eq.s32.totalorder %s74, 1
    %p317 = por %p315, %p316
    %p319 = scmp.ne.s32.totalorder %s304, %s318
    %p320 = scmp.eq.s32.totalorder %s74, 0
    %p321 = por %p319, %p320
    %s323 = sadd.s32 %s322, 1
    %p326 = scmp.eq.s32.totalorder %s68, 1
    %p327 = scmp.ne.s32.totalorder %s322, %s324
    %p328 = scmp.eq.s32.totalorder %s68, 0
    %p329 = por %p327, %p328
    %p330 = scmp.ne.s32.totalorder %s322, %s324
    %p331 = scmp.eq.s32.totalorder %s73, 1
    %p332 = por %p330, %p331
    %p333 = scmp.ne.s32.totalorder %s324, %s325
    %p334 = scmp.eq.s32.totalorder %s73, 0
    %p335 = por %p333, %p334
    %p336 = scmp.ne.s32.totalorder %s324, %s325
    %p337 = scmp.eq.s32.totalorder %s74, 1
    %p338 = por %p336, %p337
    %p340 = scmp.ne.s32.totalorder %s325, %s339
    %p341 = scmp.eq.s32.totalorder %s74, 0
    %p342 = por %p340, %p341
    %s344 = sadd.s32 %s343, 1
    %p347 = scmp.eq.s32.totalorder %s68, 1
    %p348 = scmp.ne.s32.totalorder %s343, %s345
    %p349 = scmp.eq.s32.totalorder %s68, 0
    %p350 = por %p348, %p349
    %p351 = scmp.ne.s32.totalorder %s343, %s345
    %p352 = scmp.eq.s32.totalorder %s73, 1
    %p353 = por %p351, %p352
    %p354 = scmp.ne.s32.totalorder %s345, %s346
    %p355 = scmp.eq.s32.totalorder %s73, 0
    %p356 = por %p354, %p355
    %p357 = scmp.ne.s32.totalorder %s345, %s346
    %p358 = scmp.eq.s32.totalorder %s74, 1
    %p359 = por %p357, %p358
    %p361 = scmp.ne.s32.totalorder %s346, %s360
    %p362 = scmp.eq.s32.totalorder %s74, 0
    %p363 = por %p361, %p362
    %s365 = sadd.s32 %s364, 1
    %p368 = scmp.eq.s32.totalorder %s68, 1
    %p369 = scmp.ne.s32.totalorder %s364, %s366
    %p370 = scmp.eq.s32.totalorder %s68, 0
    %p371 = por %p369, %p370
    %p372 = scmp.ne.s32.totalorder %s364, %s366
    %p373 = scmp.eq.s32.totalorder %s73, 1
    %p374 = por %p372, %p373
    %p375 = scmp.ne.s32.totalorder %s366, %s367
    %p376 = scmp.eq.s32.totalorder %s73, 0
    %p377 = por %p375, %p376
    %p378 = scmp.ne.s32.totalorder %s366, %s367
    %p379 = scmp.eq.s32.totalorder %s74, 1
    %p380 = por %p378, %p379
    %p382 = scmp.ne.s32.totalorder %s367, %s381
    %p383 = scmp.eq.s32.totalorder %s74, 0
    %p384 = por %p382, %p383
    %s386 = sadd.s32 %s385, 1
    %p389 = scmp.eq.s32.totalorder %s68, 1
    %p390 = scmp.ne.s32.totalorder %s385, %s387
    %p391 = scmp.eq.s32.totalorder %s68, 0
    %p392 = por %p390, %p391
    %p393 = scmp.ne.s32.totalorder %s385, %s387
    %p394 = scmp.eq.s32.totalorder %s73, 1
    %p395 = por %p393, %p394
    %p396 = scmp.ne.s32.totalorder %s387, %s388
    %p397 = scmp.eq.s32.totalorder %s73, 0
    %p398 = por %p396, %p397
    %p399 = scmp.ne.s32.totalorder %s387, %s388
    %p400 = scmp.eq.s32.totalorder %s74, 1
    %p401 = por %p399, %p400
    %p403 = scmp.ne.s32.totalorder %s388, %s402
    %p404 = scmp.eq.s32.totalorder %s74, 0
    %p405 = por %p403, %p404
    %s407 = sadd.s32 %s406, 1
    %p410 = scmp.eq.s32.totalorder %s68, 1
    %p411 = scmp.ne.s32.totalorder %s406, %s408
    %p412 = scmp.eq.s32.totalorder %s68, 0
    %p413 = por %p411, %p412
    %p414 = scmp.ne.s32.totalorder %s406, %s408
    %p415 = scmp.eq.s32.totalorder %s73, 1
    %p416 = por %p414, %p415
    %p417 = scmp.ne.s32.totalorder %s408, %s409
    %p418 = scmp.eq.s32.totalorder %s73, 0
    %p419 = por %p417, %p418
    %p420 = scmp.ne.s32.totalorder %s408, %s409
    %p421 = scmp.eq.s32.totalorder %s74, 1
    %p422 = por %p420, %p421
    %p424 = scmp.ne.s32.totalorder %s409, %s423
    %p425 = scmp.eq.s32.totalorder %s74, 0
    %p426 = por %p424, %p425
    %s428 = sadd.s32 %s427, 1
    %p431 = scmp.eq.s32.totalorder %s68, 1
    %p432 = scmp.ne.s32.totalorder %s427, %s429
    %p433 = scmp.eq.s32.totalorder %s68, 0
    %p434 = por %p432, %p433
    %p435 = scmp.ne.s32.totalorder %s427, %s429
    %p436 = scmp.eq.s32.totalorder %s73, 1
    %p437 = por %p435, %p436
    %p438 = scmp.ne.s32.totalorder %s429, %s430
    %p439 = scmp.eq.s32.totalorder %s73, 0
    %p440 = por %p438, %p439
    %p441 = scmp.ne.s32.totalorder %s429, %s430
    %p442 = scmp.eq.s32.totalorder %s74, 1
    %p443 = por %p441, %p442
    %p445 = scmp.ne.s32.totalorder %s430, %s444
    %p446 = scmp.eq.s32.totalorder %s74, 0
    %p447 = por %p445, %p446
    %s449 = sadd.s32 %s448, 1
    %p452 = scmp.eq.s32.totalorder %s68, 1
    %p453 = scmp.ne.s32.totalorder %s448, %s450
    %p454 = scmp.eq.s32.totalorder %s68, 0
    %p455 = por %p453, %p454
    %p456 = scmp.ne.s32.totalorder %s448, %s450
    %p457 = scmp.eq.s32.totalorder %s73, 1
    %p458 = por %p456, %p457
    %p459 = scmp.ne.s32.totalorder %s450, %s451
    %p460 = scmp.eq.s32.totalorder %s73, 0
    %p461 = por %p459, %p460
    %p462 = scmp.ne.s32.totalorder %s450, %s451
    %p463 = scmp.eq.s32.totalorder %s74, 1
    %p464 = por %p462, %p463
    %p466 = scmp.ne.s32.totalorder %s451, %s465
    %p467 = scmp.eq.s32.totalorder %s74, 0
    %p468 = por %p466, %p467
    %s470 = sadd.s32 %s469, 1
    %p473 = scmp.eq.s32.totalorder %s68, 1
    %p474 = scmp.ne.s32.totalorder %s469, %s471
    %p475 = scmp.eq.s32.totalorder %s68, 0
    %p476 = por %p474, %p475
    %p477 = scmp.ne.s32.totalorder %s469, %s471
    %p478 = scmp.eq.s32.totalorder %s73, 1
    %p479 = por %p477, %p478
    %p480 = scmp.ne.s32.totalorder %s471, %s472
    %p481 = scmp.eq.s32.totalorder %s73, 0
    %p482 = por %p480, %p481
    %p483 = scmp.ne.s32.totalorder %s471, %s472
    %p484 = scmp.eq.s32.totalorder %s74, 1
    %p485 = por %p483, %p484
    %p487 = scmp.ne.s32.totalorder %s472, %s486
    %p488 = scmp.eq.s32.totalorder %s74, 0
    %p489 = por %p487, %p488
    %s491 = sadd.s32 %s490, 1
    %p494 = scmp.eq.s32.totalorder %s68, 1
    %p495 = scmp.ne.s32.totalorder %s490, %s492
    %p496 = scmp.eq.s32.totalorder %s68, 0
    %p497 = por %p495, %p496
    %p498 = scmp.ne.s32.totalorder %s490, %s492
    %p499 = scmp.eq.s32.totalorder %s73, 1
    %p500 = por %p498, %p499
    %p501 = scmp.ne.s32.totalorder %s492, %s493
    %p502 = scmp.eq.s32.totalorder %s73, 0
    %p503 = por %p501, %p502
    %p504 = scmp.ne.s32.totalorder %s492, %s493
    %p505 = scmp.eq.s32.totalorder %s74, 1
    %p506 = por %p504, %p505
    %p508 = scmp.ne.s32.totalorder %s493, %s507
    %p509 = scmp.eq.s32.totalorder %s74, 0
    %p510 = por %p508, %p509
    %s512 = sadd.s32 %s511, 1
    %p515 = scmp.eq.s32.totalorder %s68, 1
    %p516 = scmp.ne.s32.totalorder %s511, %s513
    %p517 = scmp.eq.s32.totalorder %s68, 0
    %p518 = por %p516, %p517
    %p519 = scmp.ne.s32.totalorder %s511, %s513
    %p520 = scmp.eq.s32.totalorder %s73, 1
    %p521 = por %p519, %p520
    %p522 = scmp.ne.s32.totalorder %s513, %s514
    %p523 = scmp.eq.s32.totalorder %s73, 0
    %p524 = por %p522, %p523
    %p525 = scmp.ne.s32.totalorder %s513, %s514
    %p526 = scmp.eq.s32.totalorder %s74, 1
    %p527 = por %p525, %p526
    %p529 = scmp.ne.s32.totalorder %s514, %s528
    %p530 = scmp.eq.s32.totalorder %s74, 0
    %p531 = por %p529, %p530
    %s533 = sadd.s32 %s532, 1
    %p536 = scmp.eq.s32.totalorder %s68, 1
    %p537 = scmp.ne.s32.totalorder %s532, %s534
    %p538 = scmp.eq.s32.totalorder %s68, 0
    %p539 = por %p537, %p538
    %p540 = scmp.ne.s32.totalorder %s532, %s534
    %p541 = scmp.eq.s32.totalorder %s73, 1
    %p542 = por %p540, %p541
    %p543 = scmp.ne.s32.totalorder %s534, %s535
    %p544 = scmp.eq.s32.totalorder %s73, 0
    %p545 = por %p543, %p544
    %p546 = scmp.ne.s32.totalorder %s534, %s535
    %p547 = scmp.eq.s32.totalorder %s74, 1
    %p548 = por %p546, %p547
    %p550 = scmp.ne.s32.totalorder %s535, %s549
    %p551 = scmp.eq.s32.totalorder %s74, 0
    %p552 = por %p550, %p551
    %s554 = sadd.s32 %s553, 1
    %p557 = scmp.eq.s32.totalorder %s68, 1
    %p558 = scmp.ne.s32.totalorder %s553, %s555
    %p559 = scmp.eq.s32.totalorder %s68, 0
    %p560 = por %p558, %p559
    %p561 = scmp.ne.s32.totalorder %s553, %s555
    %p562 = scmp.eq.s32.totalorder %s73, 1
    %p563 = por %p561, %p562
    %p564 = scmp.ne.s32.totalorder %s555, %s556
    %p565 = scmp.eq.s32.totalorder %s73, 0
    %p566 = por %p564, %p565
    %p567 = scmp.ne.s32.totalorder %s555, %s556
    %p568 = scmp.eq.s32.totalorder %s74, 1
    %p569 = por %p567, %p568
    %p571 = scmp.ne.s32.totalorder %s556, %s570
    %p572 = scmp.eq.s32.totalorder %s74, 0
    %p573 = por %p571, %p572
    %s575 = sadd.s32 %s574, 1
    %p578 = scmp.eq.s32.totalorder %s68, 1
    %p579 = scmp.ne.s32.totalorder %s574, %s576
    %p580 = scmp.eq.s32.totalorder %s68, 0
    %p581 = por %p579, %p580
    %p582 = scmp.ne.s32.totalorder %s574, %s576
    %p583 = scmp.eq.s32.totalorder %s73, 1
    %p584 = por %p582, %p583
    %p585 = scmp.ne.s32.totalorder %s576, %s577
    %p586 = scmp.eq.s32.totalorder %s73, 0
    %p587 = por %p585, %p586
    %p588 = scmp.ne.s32.totalorder %s576, %s577
    %p589 = scmp.eq.s32.totalorder %s74, 1
    %p590 = por %p588, %p589
    %p592 = scmp.ne.s32.totalorder %s577, %s591
    %p593 = scmp.eq.s32.totalorder %s74, 0
    %p594 = por %p592, %p593
    %s596 = sadd.s32 %s595, 1
    %p599 = scmp.eq.s32.totalorder %s68, 1
    %p600 = scmp.ne.s32.totalorder %s595, %s597
    %p601 = scmp.eq.s32.totalorder %s68, 0
    %p602 = por %p600, %p601
    %p603 = scmp.ne.s32.totalorder %s595, %s597
    %p604 = scmp.eq.s32.totalorder %s73, 1
    %p605 = por %p603, %p604
    %p606 = scmp.ne.s32.totalorder %s597, %s598
    %p607 = scmp.eq.s32.totalorder %s73, 0
    %p608 = por %p606, %p607
    %p609 = scmp.ne.s32.totalorder %s597, %s598
    %p610 = scmp.eq.s32.totalorder %s74, 1
    %p611 = por %p609, %p610
    %p613 = scmp.ne.s32.totalorder %s598, %s612
    %p614 = scmp.eq.s32.totalorder %s74, 0
    %p615 = por %p613, %p614
    %s617 = sadd.s32 %s616, 1
    %p620 = scmp.eq.s32.totalorder %s68, 1
    %p621 = scmp.ne.s32.totalorder %s616, %s618
    %p622 = scmp.eq.s32.totalorder %s68, 0
    %p623 = por %p621, %p622
    %p624 = scmp.ne.s32.totalorder %s616, %s618
    %p625 = scmp.eq.s32.totalorder %s73, 1
    %p626 = por %p624, %p625
    %p627 = scmp.ne.s32.totalorder %s618, %s619
    %p628 = scmp.eq.s32.totalorder %s73, 0
    %p629 = por %p627, %p628
    %p630 = scmp.ne.s32.totalorder %s618, %s619
    %p631 = scmp.eq.s32.totalorder %s74, 1
    %p632 = por %p630, %p631
    %p634 = scmp.ne.s32.totalorder %s619, %s633
    %p635 = scmp.eq.s32.totalorder %s74, 0
    %p636 = por %p634, %p635
    %s638 = sadd.s32 %s637, 1
    %p641 = scmp.eq.s32.totalorder %s68, 1
    %p642 = scmp.ne.s32.totalorder %s637, %s639
    %p643 = scmp.eq.s32.totalorder %s68, 0
    %p644 = por %p642, %p643
    %p645 = scmp.ne.s32.totalorder %s637, %s639
    %p646 = scmp.eq.s32.totalorder %s73, 1
    %p647 = por %p645, %p646
    %p648 = scmp.ne.s32.totalorder %s639, %s640
    %p649 = scmp.eq.s32.totalorder %s73, 0
    %p650 = por %p648, %p649
    %p651 = scmp.ne.s32.totalorder %s639, %s640
    %p652 = scmp.eq.s32.totalorder %s74, 1
    %p653 = por %p651, %p652
    %p655 = scmp.ne.s32.totalorder %s640, %s654
    %p656 = scmp.eq.s32.totalorder %s74, 0
    %p657 = por %p655, %p656
    %s659 = sadd.s32 %s658, 1
    %p662 = scmp.eq.s32.totalorder %s68, 1
    %p663 = scmp.ne.s32.totalorder %s658, %s660
    %p664 = scmp.eq.s32.totalorder %s68, 0
    %p665 = por %p663, %p664
    %p666 = scmp.ne.s32.totalorder %s658, %s660
    %p667 = scmp.eq.s32.totalorder %s73, 1
    %p668 = por %p666, %p667
    %p669 = scmp.ne.s32.totalorder %s660, %s661
    %p670 = scmp.eq.s32.totalorder %s73, 0
    %p671 = por %p669, %p670
    %p672 = scmp.ne.s32.totalorder %s660, %s661
    %p673 = scmp.eq.s32.totalorder %s74, 1
    %p674 = por %p672, %p673
    %p676 = scmp.ne.s32.totalorder %s661, %s675
    %p677 = scmp.eq.s32.totalorder %s74, 0
    %p678 = por %p676, %p677
    %s679 = ssub.s32 %s68, %s75
    %p680 = scmp.eq.s32.totalorder %s679, 0
    %s682 = sadd.s32 %s681, 1
    %s683 = scalar_select %p680, %s681, %s682
    %p686 = pneg %p680
    %p687 = scmp.eq.s32.totalorder %s68, 1
    %p688 = por %p686, %p687
    %p689 = scmp.ne.s32.totalorder %s681, %s684
    %p690 = scmp.eq.s32.totalorder %s68, 0
    %p691 = por %p689, %p690
    %p692 = scmp.ne.s32.totalorder %s681, %s684
    %p693 = scmp.eq.s32.totalorder %s73, 1
    %p694 = por %p692, %p693
    %p695 = scmp.ne.s32.totalorder %s684, %s685
    %p696 = scmp.eq.s32.totalorder %s73, 0
    %p697 = por %p695, %p696
    %p698 = scmp.ne.s32.totalorder %s684, %s685
    %p699 = scmp.eq.s32.totalorder %s74, 1
    %p700 = por %p698, %p699
    %p702 = scmp.ne.s32.totalorder %s685, %s701
    %p703 = scmp.eq.s32.totalorder %s74, 0
    %p704 = por %p702, %p703
    %s705 = ssub.s32 %s68, %s75
    %p706 = scmp.eq.s32.totalorder %s705, 0
    %s708 = sadd.s32 %s707, 1
    %s709 = scalar_select %p706, %s707, %s708
    %p712 = pneg %p706
    %p713 = scmp.eq.s32.totalorder %s68, 1
    %p714 = por %p712, %p713
    %p715 = scmp.ne.s32.totalorder %s707, %s710
    %p716 = scmp.eq.s32.totalorder %s68, 0
    %p717 = por %p715, %p716
    %p718 = scmp.ne.s32.totalorder %s707, %s710
    %p719 = scmp.eq.s32.totalorder %s73, 1
    %p720 = por %p718, %p719
    %p721 = scmp.ne.s32.totalorder %s710, %s711
    %p722 = scmp.eq.s32.totalorder %s73, 0
    %p723 = por %p721, %p722
    %p724 = scmp.ne.s32.totalorder %s710, %s711
    %p725 = scmp.eq.s32.totalorder %s74, 1
    %p726 = por %p724, %p725
    %p728 = scmp.ne.s32.totalorder %s711, %s727
    %p729 = scmp.eq.s32.totalorder %s74, 0
    %p730 = por %p728, %p729
    %s731 = ssub.s32 %s68, %s75
    %p732 = scmp.eq.s32.totalorder %s731, 0
    %s734 = sadd.s32 %s733, 1
    %s735 = scalar_select %p732, %s733, %s734
    %p738 = pneg %p732
    %p739 = scmp.eq.s32.totalorder %s68, 1
    %p740 = por %p738, %p739
    %p741 = scmp.ne.s32.totalorder %s733, %s736
    %p742 = scmp.eq.s32.totalorder %s68, 0
    %p743 = por %p741, %p742
    %p744 = scmp.ne.s32.totalorder %s733, %s736
    %p745 = scmp.eq.s32.totalorder %s73, 1
    %p746 = por %p744, %p745
    %p747 = scmp.ne.s32.totalorder %s736, %s737
    %p748 = scmp.eq.s32.totalorder %s73, 0
    %p749 = por %p747, %p748
    %p750 = scmp.ne.s32.totalorder %s736, %s737
    %p751 = scmp.eq.s32.totalorder %s74, 1
    %p752 = por %p750, %p751
    %p754 = scmp.ne.s32.totalorder %s737, %s753
    %p755 = scmp.eq.s32.totalorder %s74, 0
    %p756 = por %p754, %p755
    %p757 = scmp.le.s32.totalorder 1, %s68
    %p758 = scmp.lt.s32.totalorder %s68, 3
    %p759 = pnand %p757, %p758
    %p760 = pneg %p759
    // Predicated region
    $region9: #{prep_model_forward.1} parent=5 // pred_check
      _
    $region10: #{prep_model_forward.1} parent=5 // pred_check_branch
      %762 = sbr.rel (%p759) target = $region12
    $region11: #{prep_model_forward.1} parent=5 // pred_region
      %s763 = ssub.s32 %s68, 1
      // Predicated region
      $region13: #{prep_model_forward.1} parent=11 // pred_check
        %p764 = pneg %p167
      $region14: #{prep_model_forward.1} parent=11 // pred_check_branch
        %766 = sbr.rel (%p764) target = $region16
      $region15: #{prep_model_forward.1} parent=11 // pred_region
        _
      $region16: #{prep_model_forward.1} parent=11 // pred_fallthru
        _
      // Predicated region
      $region17: #{prep_model_forward.1} parent=11 // pred_check
        %p767 = pneg %p188
      $region18: #{prep_model_forward.1} parent=11 // pred_check_branch
        %769 = sbr.rel (%p767) target = $region20
      $region19: #{prep_model_forward.1} parent=11 // pred_region
        _
      $region20: #{prep_model_forward.1} parent=11 // pred_fallthru
        _
      // Predicated region
      $region21: #{prep_model_forward.1} parent=11 // pred_check
        %p770 = pneg %p209
      $region22: #{prep_model_forward.1} parent=11 // pred_check_branch
        %772 = sbr.rel (%p770) target = $region24
      $region23: #{prep_model_forward.1} parent=11 // pred_region
        _
      $region24: #{prep_model_forward.1} parent=11 // pred_fallthru
        _
      // Predicated region
      $region25: #{prep_model_forward.1} parent=11 // pred_check
        %p773 = pneg %p230
      $region26: #{prep_model_forward.1} parent=11 // pred_check_branch
        %775 = sbr.rel (%p773) target = $region28
      $region27: #{prep_model_forward.1} parent=11 // pred_region
        _
      $region28: #{prep_model_forward.1} parent=11 // pred_fallthru
        _
      // Predicated region
      $region29: #{prep_model_forward.1} parent=11 // pred_check
        %p776 = pneg %p251
      $region30: #{prep_model_forward.1} parent=11 // pred_check_branch
        %778 = sbr.rel (%p776) target = $region32
      $region31: #{prep_model_forward.1} parent=11 // pred_region
        _
      $region32: #{prep_model_forward.1} parent=11 // pred_fallthru
        _
      // Predicated region
      $region33: #{prep_model_forward.1} parent=11 // pred_check
        %p779 = pneg %p272
      $region34: #{prep_model_forward.1} parent=11 // pred_check_branch
        %781 = sbr.rel (%p779) target = $region36
      $region35: #{prep_model_forward.1} parent=11 // pred_region
        _
      $region36: #{prep_model_forward.1} parent=11 // pred_fallthru
        _
      // Predicated region
      $region37: #{prep_model_forward.1} parent=11 // pred_check
        %p782 = pneg %p293
      $region38: #{prep_model_forward.1} parent=11 // pred_check_branch
        %784 = sbr.rel (%p782) target = $region40
      $region39: #{prep_model_forward.1} parent=11 // pred_region
        _
      $region40: #{prep_model_forward.1} parent=11 // pred_fallthru
        _
      // Predicated region
      $region41: #{prep_model_forward.1} parent=11 // pred_check
        %p785 = pneg %p314
      $region42: #{prep_model_forward.1} parent=11 // pred_check_branch
        %787 = sbr.rel (%p785) target = $region44
      $region43: #{prep_model_forward.1} parent=11 // pred_region
        _
      $region44: #{prep_model_forward.1} parent=11 // pred_fallthru
        _
      // Predicated region
      $region45: #{prep_model_forward.1} parent=11 // pred_check
        %p788 = pneg %p335
      $region46: #{prep_model_forward.1} parent=11 // pred_check_branch
        %790 = sbr.rel (%p788) target = $region48
      $region47: #{prep_model_forward.1} parent=11 // pred_region
        _
      $region48: #{prep_model_forward.1} parent=11 // pred_fallthru
        _
      // Predicated region
      $region49: #{prep_model_forward.1} parent=11 // pred_check
        %p791 = pneg %p356
      $region50: #{prep_model_forward.1} parent=11 // pred_check_branch
        %793 = sbr.rel (%p791) target = $region52
      $region51: #{prep_model_forward.1} parent=11 // pred_region
        _
      $region52: #{prep_model_forward.1} parent=11 // pred_fallthru
        _
      // Predicated region
      $region53: #{prep_model_forward.1} parent=11 // pred_check
        %p794 = pneg %p377
      $region54: #{prep_model_forward.1} parent=11 // pred_check_branch
        %796 = sbr.rel (%p794) target = $region56
      $region55: #{prep_model_forward.1} parent=11 // pred_region
        _
      $region56: #{prep_model_forward.1} parent=11 // pred_fallthru
        _
      // Predicated region
      $region57: #{prep_model_forward.1} parent=11 // pred_check
        %p797 = pneg %p398
      $region58: #{prep_model_forward.1} parent=11 // pred_check_branch
        %799 = sbr.rel (%p797) target = $region60
      $region59: #{prep_model_forward.1} parent=11 // pred_region
        _
      $region60: #{prep_model_forward.1} parent=11 // pred_fallthru
        _
      // Predicated region
      $region61: #{prep_model_forward.1} parent=11 // pred_check
        %p800 = pneg %p419
      $region62: #{prep_model_forward.1} parent=11 // pred_check_branch
        %802 = sbr.rel (%p800) target = $region64
      $region63: #{prep_model_forward.1} parent=11 // pred_region
        _
      $region64: #{prep_model_forward.1} parent=11 // pred_fallthru
        _
      // Predicated region
      $region65: #{prep_model_forward.1} parent=11 // pred_check
        %p803 = pneg %p440
      $region66: #{prep_model_forward.1} parent=11 // pred_check_branch
        %805 = sbr.rel (%p803) target = $region68
      $region67: #{prep_model_forward.1} parent=11 // pred_region
        _
      $region68: #{prep_model_forward.1} parent=11 // pred_fallthru
        _
      // Predicated region
      $region69: #{prep_model_forward.1} parent=11 // pred_check
        %p806 = pneg %p461
      $region70: #{prep_model_forward.1} parent=11 // pred_check_branch
        %808 = sbr.rel (%p806) target = $region72
      $region71: #{prep_model_forward.1} parent=11 // pred_region
        _
      $region72: #{prep_model_forward.1} parent=11 // pred_fallthru
        _
      // Predicated region
      $region73: #{prep_model_forward.1} parent=11 // pred_check
        %p809 = pneg %p482
      $region74: #{prep_model_forward.1} parent=11 // pred_check_branch
        %811 = sbr.rel (%p809) target = $region76
      $region75: #{prep_model_forward.1} parent=11 // pred_region
        _
      $region76: #{prep_model_forward.1} parent=11 // pred_fallthru
        _
      // Predicated region
      $region77: #{prep_model_forward.1} parent=11 // pred_check
        %p812 = pneg %p503
      $region78: #{prep_model_forward.1} parent=11 // pred_check_branch
        %814 = sbr.rel (%p812) target = $region80
      $region79: #{prep_model_forward.1} parent=11 // pred_region
        _
      $region80: #{prep_model_forward.1} parent=11 // pred_fallthru
        _
      // Predicated region
      $region81: #{prep_model_forward.1} parent=11 // pred_check
        %p815 = pneg %p524
      $region82: #{prep_model_forward.1} parent=11 // pred_check_branch
        %817 = sbr.rel (%p815) target = $region84
      $region83: #{prep_model_forward.1} parent=11 // pred_region
        _
      $region84: #{prep_model_forward.1} parent=11 // pred_fallthru
        _
      // Predicated region
      $region85: #{prep_model_forward.1} parent=11 // pred_check
        %p818 = pneg %p545
      $region86: #{prep_model_forward.1} parent=11 // pred_check_branch
        %820 = sbr.rel (%p818) target = $region88
      $region87: #{prep_model_forward.1} parent=11 // pred_region
        _
      $region88: #{prep_model_forward.1} parent=11 // pred_fallthru
        _
      // Predicated region
      $region89: #{prep_model_forward.1} parent=11 // pred_check
        %p821 = pneg %p566
      $region90: #{prep_model_forward.1} parent=11 // pred_check_branch
        %823 = sbr.rel (%p821) target = $region92
      $region91: #{prep_model_forward.1} parent=11 // pred_region
        _
      $region92: #{prep_model_forward.1} parent=11 // pred_fallthru
        _
      // Predicated region
      $region93: #{prep_model_forward.1} parent=11 // pred_check
        %p824 = pneg %p587
      $region94: #{prep_model_forward.1} parent=11 // pred_check_branch
        %826 = sbr.rel (%p824) target = $region96
      $region95: #{prep_model_forward.1} parent=11 // pred_region
        _
      $region96: #{prep_model_forward.1} parent=11 // pred_fallthru
        _
      // Predicated region
      $region97: #{prep_model_forward.1} parent=11 // pred_check
        %p827 = pneg %p608
      $region98: #{prep_model_forward.1} parent=11 // pred_check_branch
        %829 = sbr.rel (%p827) target = $region100
      $region99: #{prep_model_forward.1} parent=11 // pred_region
        _
      $region100: #{prep_model_forward.1} parent=11 // pred_fallthru
        _
      // Predicated region
      $region101: #{prep_model_forward.1} parent=11 // pred_check
        %p830 = pneg %p629
      $region102: #{prep_model_forward.1} parent=11 // pred_check_branch
        %832 = sbr.rel (%p830) target = $region104
      $region103: #{prep_model_forward.1} parent=11 // pred_region
        _
      $region104: #{prep_model_forward.1} parent=11 // pred_fallthru
        _
      // Predicated region
      $region105: #{prep_model_forward.1} parent=11 // pred_check
        %p833 = pneg %p650
      $region106: #{prep_model_forward.1} parent=11 // pred_check_branch
        %835 = sbr.rel (%p833) target = $region108
      $region107: #{prep_model_forward.1} parent=11 // pred_region
        _
      $region108: #{prep_model_forward.1} parent=11 // pred_fallthru
        _
      // Predicated region
      $region109: #{prep_model_forward.1} parent=11 // pred_check
        %p836 = pneg %p671
      $region110: #{prep_model_forward.1} parent=11 // pred_check_branch
        %838 = sbr.rel (%p836) target = $region112
      $region111: #{prep_model_forward.1} parent=11 // pred_region
        _
      $region112: #{prep_model_forward.1} parent=11 // pred_fallthru
        _
    $region12: #{prep_model_forward.1} parent=5 // pred_fallthru
      _
    %p839 = scmp.lt.s32.totalorder %s68, 2
    // Predicated region
    $region113: #{prep_model_forward.1} parent=5 // pred_check
      %p840 = pneg %p839
    $region114: #{prep_model_forward.1} parent=5 // pred_check_branch
      %842 = sbr.rel (%p840) target = $region116
    $region115: #{prep_model_forward.1} parent=5 // pred_region
      // Predicated region
      $region117: #{prep_model_forward.1} parent=115 // pred_check
        %p843 = pneg %p88
      $region118: #{prep_model_forward.1} parent=115 // pred_check_branch
        %845 = sbr.rel (%p843) target = $region120
      $region119: #{prep_model_forward.1} parent=115 // pred_region
        %p846 = scmp.lt.s32.totalorder %s68, 1
        %s847 = scalar_select %p846, %s68, 1
        %s848 = smul.addr %s847, 8
        %s849 = scalar_lea.vmem %s1, %s848
      $region120: #{prep_model_forward.1} parent=115 // pred_fallthru
        _
      // Predicated region
      $region121: #{prep_model_forward.1} parent=115 // pred_check
        %p850 = pneg %p114
      $region122: #{prep_model_forward.1} parent=115 // pred_check_branch
        %852 = sbr.rel (%p850) target = $region124
      $region123: #{prep_model_forward.1} parent=115 // pred_region
        %p853 = scmp.lt.s32.totalorder %s68, 1
        %s854 = scalar_select %p853, %s68, 1
        %s855 = smul.addr %s854, 8
        %s856 = scalar_lea.vmem %s3, %s855
      $region124: #{prep_model_forward.1} parent=115 // pred_fallthru
        _
      // Predicated region
      $region125: #{prep_model_forward.1} parent=115 // pred_check
        %p857 = pneg %p140
      $region126: #{prep_model_forward.1} parent=115 // pred_check_branch
        %859 = sbr.rel (%p857) target = $region128
      $region127: #{prep_model_forward.1} parent=115 // pred_region
        %p860 = scmp.lt.s32.totalorder %s68, 1
        %s861 = scalar_select %p860, %s68, 1
        %s862 = smul.addr %s861, 8
        %s863 = scalar_lea.vmem %s5, %s862
      $region128: #{prep_model_forward.1} parent=115 // pred_fallthru
        _
    $region116: #{prep_model_forward.1} parent=5 // pred_fallthru
      _
    %p864 = scmp.le.s32.totalorder 1, %s68
    %p865 = scmp.lt.s32.totalorder %s68, 3
    %p866 = pnand %p864, %p865
    %p867 = pneg %p866
    // Predicated region
    $region129: #{prep_model_forward.1} parent=5 // pred_check
      _
    $region130: #{prep_model_forward.1} parent=5 // pred_check_branch
      %869 = sbr.rel (%p866) target = $region132
    $region131: #{prep_model_forward.1} parent=5 // pred_region
      %s870 = ssub.s32 %s68, 1
      %p871 = scmp.lt.s32.totalorder %s73, 1
      %s872 = scalar_select %p871, %s73, 1
      %s873 = smul.addr %s872, 8
      %s874 = scalar_lea.vmem %s1, %s873
      %p875 = pneg %p94
      %p876 = pneg %p91
      %p877 = scmp.lt.s32.totalorder %s73, 1
      %s878 = scalar_select %p877, %s73, 1
      %s879 = smul.addr %s878, 8
      %s880 = scalar_lea.vmem %s3, %s879
      %p881 = pneg %p120
      %p882 = pneg %p117
      %p883 = scmp.lt.s32.totalorder %s73, 1
      %s884 = scalar_select %p883, %s73, 1
      %s885 = smul.addr %s884, 8
      %s886 = scalar_lea.vmem %s5, %s885
      %p887 = pneg %p146
      %p888 = pneg %p143
      %p889 = pneg %p167
      %p890 = pneg %p164
      %p891 = pneg %p188
      %p892 = pneg %p185
      %p893 = pneg %p209
      %p894 = pneg %p206
      %p895 = pneg %p230
      %p896 = pneg %p227
      %p897 = pneg %p251
      %p898 = pneg %p248
      %p899 = pneg %p272
      %p900 = pneg %p269
      %p901 = pneg %p293
      %p902 = pneg %p290
      %p903 = pneg %p314
      %p904 = pneg %p311
      %p905 = pneg %p335
      %p906 = pneg %p332
      %p907 = pneg %p356
      %p908 = pneg %p353
      %p909 = pneg %p377
      %p910 = pneg %p374
      %p911 = pneg %p398
      %p912 = pneg %p395
      %p913 = pneg %p419
      %p914 = pneg %p416
      %p915 = pneg %p440
      %p916 = pneg %p437
      %p917 = pneg %p461
      %p918 = pneg %p458
      %p919 = pneg %p482
      %p920 = pneg %p479
      %p921 = pneg %p503
      %p922 = pneg %p500
      %p923 = pneg %p524
      %p924 = pneg %p521
      %p925 = pneg %p545
      %p926 = pneg %p542
      %p927 = pneg %p566
      %p928 = pneg %p563
      %p929 = pneg %p587
      %p930 = pneg %p584
      %p931 = pneg %p608
      %p932 = pneg %p605
      %p933 = pneg %p629
      %p934 = pneg %p626
      %p935 = pneg %p650
      %p936 = pneg %p647
      %p937 = pneg %p671
      %p938 = pneg %p668
      %p939 = pneg %p697
      %p940 = pneg %p694
      %p941 = scmp.lt.s32.totalorder %s73, 1
      %s942 = scalar_select %p941, %s73, 1
      %s943 = scalar_lea.vmem %s57, %s942
      %p944 = pneg %p723
      %p945 = pneg %p720
      %p946 = scmp.lt.s32.totalorder %s73, 1
      %s947 = scalar_select %p946, %s73, 1
      %s948 = smul.addr %s947, 8
      %s949 = scalar_lea.vmem %s59, %s948
      %p950 = pneg %p749
      %p951 = pneg %p746
      %p952 = scmp.lt.s32.totalorder %s73, 1
      %s953 = scalar_select %p952, %s73, 1
      %s954 = smul.addr %s953, 8
      %s955 = scalar_lea.vmem %s61, %s954
      %p956 = scmp.lt.s32.totalorder %s73, 1
      %s957 = scalar_select %p956, %s73, 1
      %s958 = smul.addr %s957, 8
      %s959 = scalar_lea.vmem %s1, %s958
      %p960 = scmp.lt.s32.totalorder %s73, 1
      %s961 = scalar_select %p960, %s73, 1
      %s962 = smul.addr %s961, 8
      %s963 = scalar_lea.vmem %s3, %s962
      %p964 = scmp.lt.s32.totalorder %s73, 1
      %s965 = scalar_select %p964, %s73, 1
      %s966 = smul.addr %s965, 8
      %s967 = scalar_lea.vmem %s5, %s966
      %p968 = scmp.lt.s32.totalorder %s73, 1
      %s969 = scalar_select %p968, %s73, 1
      %s970 = scalar_lea.vmem %s57, %s969
      %p971 = scmp.lt.s32.totalorder %s73, 1
      %s972 = scalar_select %p971, %s73, 1
      %s973 = smul.addr %s972, 8
      %s974 = scalar_lea.vmem %s59, %s973
      %p975 = scmp.lt.s32.totalorder %s73, 1
      %s976 = scalar_select %p975, %s73, 1
      %s977 = smul.addr %s976, 8
      %s978 = scalar_lea.vmem %s61, %s977
      %v980 = vld [vmem:[%s959] sm:$0xff]
      %v981 = vld [vmem:[%s7] sm:$0xff]
      %v982 = vld [vmem:[%s7 + $0x8] sm:$0xff]
      %v983 = vld [vmem:[%s7 + $0x10] sm:$0xff]
      %v984 = vpack.c.bf16 %v980, %v980
      %v985 = vpack.c.bf16 %v982, %v981
      %v986 = vpack.c.bf16 %v983, %v983
      %v987 = vld [vmem:[%s9] sm:$0x1]
      %v989 = vlaneseq
      %v990 = vshrl.u32 %v989, 7
      %v991 = vsub.s32 0, %v990
      %v992 = vrot.slane %v987, %v991
      %vm994 = vcmask 195584
      %v996 = vsel %vm994, %v984, 0
      %vm998 = vcmask 1043456
      %v1000 = vsel %vm998, %v986, 0
      %1002 = vmatprep.subr.bf16.mxu0 0
      %1003 = vmatpush1.bf16.msra.mxu0 %v985
      %1004 = vmatprep.subr.bf16.mxu0 0
      %1005 = vmatpush1.bf16.msra.mxu0 %v1000
      %1006 = vmatprep.subr.bf16.mxu0 0
      %1007 = vmatpush1.bf16.msra.mxu0 0
      %1008 = vmatprep.subr.bf16.mxu0 0
      %1009 = vmatpush1.bf16.msra.mxu0 0
      %1010 = vmatprep.subr.bf16.mxu0 0
      %1011 = vmatpush1.bf16.msra.mxu0 0
      %1012 = vmatprep.subr.bf16.mxu0 0
      %1013 = vmatpush1.bf16.msra.mxu0 0
      %1014 = vmatprep.subr.bf16.mxu0 0
      %1015 = vmatpush1.bf16.msra.mxu0 0
      %1016 = vmatprep.subr.bf16.mxu0 0
      %1017 = vmatpush1.bf16.msra.mxu0 0
      %1018 = vmatprep.subr.bf16.mxu0 0
      %1019 = vmatpush1.bf16.msra.mxu0 0
      %1020 = vmatprep.subr.bf16.mxu0 0
      %1021 = vmatpush1.bf16.msra.mxu0 0
      %1022 = vmatprep.subr.bf16.mxu0 0
      %1023 = vmatpush1.bf16.msra.mxu0 0
      %1024 = vmatprep.subr.bf16.mxu0 0
      %1025 = vmatpush1.bf16.msra.mxu0 0
      %1026 = vmatprep.subr.bf16.mxu0 0
      %1027 = vmatpush1.bf16.msra.mxu0 0
      %1028 = vmatprep.subr.bf16.mxu0 0
      %1029 = vmatpush1.bf16.msra.mxu0 0
      %1030 = vmatprep.subr.bf16.mxu0 0
      %1031 = vmatpush1.bf16.msra.mxu0 0
      %1032 = vmatprep.subr.bf16.mxu0 0
      %1033 = vmatpush1.bf16.msra.mxu0 0
      %1034 = vmatprep.mubr.bf16.mxu0 0
      %1035 = vmatmul.mubr.bf16.gmra.mrb[0].mxu0 %v996
      %v1036 = vpop.f32.mrb[0].mxu0
      %v1037 = vadd.f32 %v992, %v1036
      %v1038 = vpop.f32.mrb[0].mxu0
      %v1039 = vpop.f32.mrb[0].mxu0
      %v1040 = vpop.f32.mrb[0].mxu0
      %1041 = vdwg.mxu0
      %v1042 = vld [vmem:[%s963] sm:$0xff]
      %v1043 = vadd.f32 %v1037, %v1042
      %v1044 = vld [vmem:[%s11] sm:$0x1]
      %v1045 = vld [vmem:[%s13] sm:$0x1]
      %vm1046 = vcmask 261120
      %v1047 = vsel %vm1046, %v1043, 0.0
      %1048 = vadd.xlane.f32.xlu0 %v1047
      %v1049 = vpop.xlane.xlu0 %1048
      %v1050 = vrcp.pop 32.0
      %v1051 = vmul.f32 %v1049, %v1050
      %v1052 = vsub.f32 %v1043, %v1051
      %v1053 = vmul.f32 %v1052, %v1052
      %v1054 = vsel %vm1046, %v1053, 0.0
      %1055 = vadd.xlane.f32.xlu0 %v1054
      %v1056 = vpop.xlane.xlu0 %1055
      %v1057 = vmul.f32 %v1056, %v1050
      %v1058 = vadd.f32 %v1057, 1e-05
      %v1059 = vrsqrt.pop %v1058
      %v1060 = vmul.f32 %v1052, %v1059
      %v1062 = vlaneseq
      %v1063 = vshrl.u32 %v1062, 7
      %v1064 = vsub.s32 0, %v1063
      %v1065 = vrot.slane %v1044, %v1064
      %v1067 = vmul.f32 %v1060, %v1065
      %v1069 = vlaneseq
      %v1070 = vshrl.u32 %v1069, 7
      %v1071 = vsub.s32 0, %v1070
      %v1072 = vrot.slane %v1045, %v1071
      %v1074 = vadd.f32 %v1067, %v1072
      %v1075 = vld [vmem:[%s15] sm:$0xff]
      %v1076 = vld [vmem:[%s15 + $0x8] sm:$0xff]
      %v1077 = vld [vmem:[%s15 + $0x10] sm:$0xff]
      %v1078 = vld [vmem:[%s15 + $0x18] sm:$0xff]
      %v1079 = vpack.c.bf16 %v1074, %v1074
      %v1080 = vpack.c.bf16 %v1076, %v1075
      %v1081 = vpack.c.bf16 %v1078, %v1077
      %v1082 = vld [vmem:[%s17] sm:$0x1]
      %v1084 = vlaneseq
      %v1085 = vshrl.u32 %v1084, 7
      %v1086 = vsub.s32 0, %v1085
      %v1087 = vrot.slane %v1082, %v1086
      %v1090 = vsel %vm1046, %v1079, 0
      %1092 = vmatprep.subr.bf16.mxu0 0
      %1093 = vmatpush1.bf16.msra.mxu0 %v1080
      %1094 = vmatprep.subr.bf16.mxu0 0
      %1095 = vmatpush1.bf16.msra.mxu0 %v1081
      %1096 = vmatprep.subr.bf16.mxu0 0
      %1097 = vmatpush1.bf16.msra.mxu0 0
      %1098 = vmatprep.subr.bf16.mxu0 0
      %1099 = vmatpush1.bf16.msra.mxu0 0
      %1100 = vmatprep.subr.bf16.mxu0 0
      %1101 = vmatpush1.bf16.msra.mxu0 0
      %1102 = vmatprep.subr.bf16.mxu0 0
      %1103 = vmatpush1.bf16.msra.mxu0 0
      %1104 = vmatprep.subr.bf16.mxu0 0
      %1105 = vmatpush1.bf16.msra.mxu0 0
      %1106 = vmatprep.subr.bf16.mxu0 0
      %1107 = vmatpush1.bf16.msra.mxu0 0
      %1108 = vmatprep.subr.bf16.mxu0 0
      %1109 = vmatpush1.bf16.msra.mxu0 0
      %1110 = vmatprep.subr.bf16.mxu0 0
      %1111 = vmatpush1.bf16.msra.mxu0 0
      %1112 = vmatprep.subr.bf16.mxu0 0
      %1113 = vmatpush1.bf16.msra.mxu0 0
      %1114 = vmatprep.subr.bf16.mxu0 0
      %1115 = vmatpush1.bf16.msra.mxu0 0
      %1116 = vmatprep.subr.bf16.mxu0 0
      %1117 = vmatpush1.bf16.msra.mxu0 0
      %1118 = vmatprep.subr.bf16.mxu0 0
      %1119 = vmatpush1.bf16.msra.mxu0 0
      %1120 = vmatprep.subr.bf16.mxu0 0
      %1121 = vmatpush1.bf16.msra.mxu0 0
      %1122 = vmatprep.subr.bf16.mxu0 0
      %1123 = vmatpush1.bf16.msra.mxu0 0
      %1124 = vmatprep.mubr.bf16.mxu0 0
      %1125 = vmatmul.mubr.bf16.gmra.mrb[0].mxu0 %v1090
      %v1126 = vpop.f32.mrb[0].mxu0
      %v1127 = vadd.f32 %v1087, %v1126
      %v1128 = vpop.f32.mrb[0].mxu0
      %v1129 = vpop.f32.mrb[0].mxu0
      %v1130 = vpop.f32.mrb[0].mxu0
      %1131 = vdwg.mxu0
      %1133 = vrot.lane.b32.xlu0 %v1127, 96
      %v1134 = vpop.permute.xlu0 %1133
      %vm1135 = vcmask 64512
      %v1136 = vsel %vm1135, %v1127, 0
      %v1138 = vsel %vm1135, %v1134, 0
      %1140 = vmatprep.subr.mxu0 0.0
      %1141 = vmatpush1.xpose.msra.mxu0 %v1138
      %1142 = vmatprep.subr.mxu0 0.0
      %1143 = vmatpush1.xpose.msra.mxu0 0.0
      %1144 = vmatprep.subr.mxu0 0.0
      %1145 = vmatpush1.xpose.msra.mxu0 0.0
      %1146 = vmatprep.subr.mxu0 0.0
      %1147 = vmatpush1.xpose.msra.mxu0 0.0
      %1148 = vmatprep.subr.mxu0 0.0
      %1149 = vmatpush1.xpose.msra.mxu0 0.0
      %1150 = vmatprep.subr.mxu0 0.0
      %1151 = vmatpush1.xpose.msra.mxu0 0.0
      %1152 = vmatprep.subr.mxu0 0.0
      %1153 = vmatpush1.xpose.msra.mxu0 0.0
      %1154 = vmatprep.subr.mxu0 0.0
      %1155 = vmatpush1.xpose.msra.mxu0 0.0
      %1156 = vmatprep.subr.mxu0 0.0
      %1157 = vmatpush1.xpose.msra.mxu0 0.0
      %1158 = vmatprep.subr.mxu0 0.0
      %1159 = vmatpush1.xpose.msra.mxu0 0.0
      %1160 = vmatprep.subr.mxu0 0.0
      %1161 = vmatpush1.xpose.msra.mxu0 0.0
      %1162 = vmatprep.subr.mxu0 0.0
      %1163 = vmatpush1.xpose.msra.mxu0 0.0
      %1164 = vmatprep.subr.mxu0 0.0
      %1165 = vmatpush1.xpose.msra.mxu0 0.0
      %1166 = vmatprep.subr.mxu0 0.0
      %1167 = vmatpush1.xpose.msra.mxu0 0.0
      %1168 = vmatprep.subr.mxu0 0.0
      %1169 = vmatpush1.xpose.msra.mxu0 0.0
      %1170 = vmatprep.subr.mxu0 0.0
      %1171 = vmatpush1.xpose.msra.mxu0 0.0
      %1172 = vmatprep.subr.mxu0 0.0
      %1173 = vmatpush1.xpose.msra.mxu0 0.0
      %1174 = vmatprep.subr.mxu0 0.0
      %1175 = vmatpush1.xpose.msra.mxu0 0.0
      %1176 = vmatprep.subr.mxu0 0.0
      %1177 = vmatpush1.xpose.msra.mxu0 0.0
      %1178 = vmatprep.subr.mxu0 0.0
      %1179 = vmatpush1.xpose.msra.mxu0 0.0
      %1180 = vmatprep.subr.mxu0 0.0
      %1181 = vmatpush1.xpose.msra.mxu0 0.0
      %1182 = vmatprep.subr.mxu0 0.0
      %1183 = vmatpush1.xpose.msra.mxu0 0.0
      %1184 = vmatprep.subr.mxu0 0.0
      %1185 = vmatpush1.xpose.msra.mxu0 0.0
      %1186 = vmatprep.subr.mxu0 0.0
      %1187 = vmatpush1.xpose.msra.mxu0 0.0
      %1188 = vmatprep.subr.mxu0 0.0
      %1189 = vmatpush1.xpose.msra.mxu0 0.0
      %1190 = vmatprep.subr.mxu0 0.0
      %1191 = vmatpush1.xpose.msra.mxu0 0.0
      %1192 = vmatprep.subr.mxu0 0.0
      %1193 = vmatpush1.xpose.msra.mxu0 0.0
      %1194 = vmatprep.subr.mxu0 0.0
      %1195 = vmatpush1.xpose.msra.mxu0 0.0
      %1196 = vmatprep.subr.mxu0 0.0
      %1197 = vmatpush1.xpose.msra.mxu0 0.0
      %1198 = vmatprep.subr.mxu0 0.0
      %1199 = vmatpush1.xpose.msra.mxu0 0.0
      %1200 = vmatprep.subr.mxu0 0.0
      %1201 = vmatpush1.xpose.msra.mxu0 0.0
      %1202 = vmatprep.subr.mxu0 0.0
      %1203 = vmatpush1.xpose.msra.mxu0 0.0
      %1204 = vmatprep.mubr.f32.mxu0 0.0
      %1205 = vmatmul.mubr.f32.gmra.mrb[0].mxu0 %v1136
      %v1206 = vpop.f32.mrb[0].mxu0
      %v1207 = vadd.f32 0.0, %v1206
      %v1208 = vpop.f32.mrb[0].mxu0
      %1209 = vdwg.mxu0
      %v1210 = vmul.f32 %v1207, 0.35355338
      %v1211 = vsel %vm1135, %v1210, -inf
      %1212 = vmax.xlane.f32.xlu0 %v1211
      %v1213 = vpop.xlane.xlu0 %1212
      %v1214 = vsub.f32 %v1210, %v1213
      %v1215 = vmul.f32 %v1214, 1.442695
      %v1216 = vpow.pop %v1215
      %v1217 = vsel %vm1135, %v1216, 0.0
      %1218 = vadd.xlane.f32.xlu0 %v1217
      %v1219 = vpop.xlane.xlu0 %1218
      %v1220 = vrcp.pop %v1219
      %v1221 = vmul.f32 %v1216, %v1220
      %1222 = vrot.lane.b32.xlu0 %v1127, 64
      %v1223 = vpop.permute.xlu0 %1222
      %v1226 = vsel %vm1135, %v1221, 0
      %1228 = vmatprep.subr.mxu0 0.0
      %1229 = vmatpush1.msra.mxu0 %v1223
      %1230 = vmatprep.subr.mxu0 0.0
      %1231 = vmatpush1.msra.mxu0 0.0
      %1232 = vmatprep.subr.mxu0 0.0
      %1233 = vmatpush1.msra.mxu0 0.0
      %1234 = vmatprep.subr.mxu0 0.0
      %1235 = vmatpush1.msra.mxu0 0.0
      %1236 = vmatprep.subr.mxu0 0.0
      %1237 = vmatpush1.msra.mxu0 0.0
      %1238 = vmatprep.subr.mxu0 0.0
      %1239 = vmatpush1.msra.mxu0 0.0
      %1240 = vmatprep.subr.mxu0 0.0
      %1241 = vmatpush1.msra.mxu0 0.0
      %1242 = vmatprep.subr.mxu0 0.0
      %1243 = vmatpush1.msra.mxu0 0.0
      %1244 = vmatprep.subr.mxu0 0.0
      %1245 = vmatpush1.msra.mxu0 0.0
      %1246 = vmatprep.subr.mxu0 0.0
      %1247 = vmatpush1.msra.mxu0 0.0
      %1248 = vmatprep.subr.mxu0 0.0
      %1249 = vmatpush1.msra.mxu0 0.0
      %1250 = vmatprep.subr.mxu0 0.0
      %1251 = vmatpush1.msra.mxu0 0.0
      %1252 = vmatprep.subr.mxu0 0.0
      %1253 = vmatpush1.msra.mxu0 0.0
      %1254 = vmatprep.subr.mxu0 0.0
      %1255 = vmatpush1.msra.mxu0 0.0
      %1256 = vmatprep.subr.mxu0 0.0
      %1257 = vmatpush1.msra.mxu0 0.0
      %1258 = vmatprep.subr.mxu0 0.0
      %1259 = vmatpush1.msra.mxu0 0.0
      %1260 = vmatprep.subr.mxu0 0.0
      %1261 = vmatpush1.msra.mxu0 0.0
      %1262 = vmatprep.subr.mxu0 0.0
      %1263 = vmatpush1.msra.mxu0 0.0
      %1264 = vmatprep.subr.mxu0 0.0
      %1265 = vmatpush1.msra.mxu0 0.0
      %1266 = vmatprep.subr.mxu0 0.0
      %1267 = vmatpush1.msra.mxu0 0.0
      %1268 = vmatprep.subr.mxu0 0.0
      %1269 = vmatpush1.msra.mxu0 0.0
      %1270 = vmatprep.subr.mxu0 0.0
      %1271 = vmatpush1.msra.mxu0 0.0
      %1272 = vmatprep.subr.mxu0 0.0
      %1273 = vmatpush1.msra.mxu0 0.0
      %1274 = vmatprep.subr.mxu0 0.0
      %1275 = vmatpush1.msra.mxu0 0.0
      %1276 = vmatprep.subr.mxu0 0.0
      %1277 = vmatpush1.msra.mxu0 0.0
      %1278 = vmatprep.subr.mxu0 0.0
      %1279 = vmatpush1.msra.mxu0 0.0
      %1280 = vmatprep.subr.mxu0 0.0
      %1281 = vmatpush1.msra.mxu0 0.0
      %1282 = vmatprep.subr.mxu0 0.0
      %1283 = vmatpush1.msra.mxu0 0.0
      %1284 = vmatprep.subr.mxu0 0.0
      %1285 = vmatpush1.msra.mxu0 0.0
      %1286 = vmatprep.subr.mxu0 0.0
      %1287 = vmatpush1.msra.mxu0 0.0
      %1288 = vmatprep.subr.mxu0 0.0
      %1289 = vmatpush1.msra.mxu0 0.0
      %1290 = vmatprep.subr.mxu0 0.0
      %1291 = vmatpush1.msra.mxu0 0.0
      %1292 = vmatprep.mubr.f32.mxu0 0.0
      %1293 = vmatmul.mubr.f32.gmra.mrb[0].mxu0 %v1226
      %v1294 = vpop.f32.mrb[0].mxu0
      %v1295 = vadd.f32 0.0, %v1294
      %v1296 = vpop.f32.mrb[0].mxu0
      %1297 = vdwg.mxu0
      %1298 = vrot.lane.b32.xlu0 %v1127, 120
      %v1299 = vpop.permute.xlu0 %1298
      %1300 = vrot.lane.b32.xlu0 %v1127, 88
      %v1301 = vpop.permute.xlu0 %1300
      %v1302 = vsel %vm1135, %v1299, 0
      %v1304 = vsel %vm1135, %v1301, 0
      %1306 = vmatprep.subr.mxu0 0.0
      %1307 = vmatpush1.xpose.msra.mxu0 %v1304
      %1308 = vmatprep.subr.mxu0 0.0
      %1309 = vmatpush1.xpose.msra.mxu0 0.0
      %1310 = vmatprep.subr.mxu0 0.0
      %1311 = vmatpush1.xpose.msra.mxu0 0.0
      %1312 = vmatprep.subr.mxu0 0.0
      %1313 = vmatpush1.xpose.msra.mxu0 0.0
      %1314 = vmatprep.subr.mxu0 0.0
      %1315 = vmatpush1.xpose.msra.mxu0 0.0
      %1316 = vmatprep.subr.mxu0 0.0
      %1317 = vmatpush1.xpose.msra.mxu0 0.0
      %1318 = vmatprep.subr.mxu0 0.0
      %1319 = vmatpush1.xpose.msra.mxu0 0.0
      %1320 = vmatprep.subr.mxu0 0.0
      %1321 = vmatpush1.xpose.msra.mxu0 0.0
      %1322 = vmatprep.subr.mxu0 0.0
      %1323 = vmatpush1.xpose.msra.mxu0 0.0
      %1324 = vmatprep.subr.mxu0 0.0
      %1325 = vmatpush1.xpose.msra.mxu0 0.0
      %1326 = vmatprep.subr.mxu0 0.0
      %1327 = vmatpush1.xpose.msra.mxu0 0.0
      %1328 = vmatprep.subr.mxu0 0.0
      %1329 = vmatpush1.xpose.msra.mxu0 0.0
      %1330 = vmatprep.subr.mxu0 0.0
      %1331 = vmatpush1.xpose.msra.mxu0 0.0
      %1332 = vmatprep.subr.mxu0 0.0
      %1333 = vmatpush1.xpose.msra.mxu0 0.0
      %1334 = vmatprep.subr.mxu0 0.0
      %1335 = vmatpush1.xpose.msra.mxu0 0.0
      %1336 = vmatprep.subr.mxu0 0.0
      %1337 = vmatpush1.xpose.msra.mxu0 0.0
      %1338 = vmatprep.subr.mxu0 0.0
      %1339 = vmatpush1.xpose.msra.mxu0 0.0
      %1340 = vmatprep.subr.mxu0 0.0
      %1341 = vmatpush1.xpose.msra.mxu0 0.0
      %1342 = vmatprep.subr.mxu0 0.0
      %1343 = vmatpush1.xpose.msra.mxu0 0.0
      %1344 = vmatprep.subr.mxu0 0.0
      %1345 = vmatpush1.xpose.msra.mxu0 0.0
      %1346 = vmatprep.subr.mxu0 0.0
      %1347 = vmatpush1.xpose.msra.mxu0 0.0
      %1348 = vmatprep.subr.mxu0 0.0
      %1349 = vmatpush1.xpose.msra.mxu0 0.0
      %1350 = vmatprep.subr.mxu0 0.0
      %1351 = vmatpush1.xpose.msra.mxu0 0.0
      %1352 = vmatprep.subr.mxu0 0.0
      %1353 = vmatpush1.xpose.msra.mxu0 0.0
      %1354 = vmatprep.subr.mxu0 0.0
      %1355 = vmatpush1.xpose.msra.mxu0 0.0
      %1356 = vmatprep.subr.mxu0 0.0
      %1357 = vmatpush1.xpose.msra.mxu0 0.0
      %1358 = vmatprep.subr.mxu0 0.0
      %1359 = vmatpush1.xpose.msra.mxu0 0.0
      %1360 = vmatprep.subr.mxu0 0.0
      %1361 = vmatpush1.xpose.msra.mxu0 0.0
      %1362 = vmatprep.subr.mxu0 0.0
      %1363 = vmatpush1.xpose.msra.mxu0 0.0
      %1364 = vmatprep.subr.mxu0 0.0
      %1365 = vmatpush1.xpose.msra.mxu0 0.0
      %1366 = vmatprep.subr.mxu0 0.0
      %1367 = vmatpush1.xpose.msra.mxu0 0.0
      %1368 = vmatprep.subr.mxu0 0.0
      %1369 = vmatpush1.xpose.msra.mxu0 0.0
      %1370 = vmatprep.mubr.f32.mxu0 0.0
      %1371 = vmatmul.mubr.f32.gmra.mrb[0].mxu0 %v1302
      %v1372 = vpop.f32.mrb[0].mxu0
      %v1373 = vadd.f32 0.0, %v1372
      %v1374 = vpop.f32.mrb[0].mxu0
      %1375 = vdwg.mxu0
      %v1376 = vmul.f32 %v1373, 0.35355338
      %v1377 = vsel %vm1135, %v1376, -inf
      %1378 = vmax.xlane.f32.xlu0 %v1377
      %v1379 = vpop.xlane.xlu0 %1378
      %v1380 = vsub.f32 %v1376, %v1379
      %v1381 = vmul.f32 %v1380, 1.442695
      %v1382 = vpow.pop %v1381
      %v1383 = vsel %vm1135, %v1382, 0.0
      %1384 = vadd.xlane.f32.xlu0 %v1383
      %v1385 = vpop.xlane.xlu0 %1384
      %v1386 = vrcp.pop %v1385
      %v1387 = vmul.f32 %v1382, %v1386
      %1388 = vrot.lane.b32.xlu0 %v1127, 56
      %v1389 = vpop.permute.xlu0 %1388
      %v1392 = vsel %vm1135, %v1387, 0
      %1394 = vmatprep.subr.mxu0 0.0
      %1395 = vmatpush1.msra.mxu0 %v1389
      %1396 = vmatprep.subr.mxu0 0.0
      %1397 = vmatpush1.msra.mxu0 0.0
      %1398 = vmatprep.subr.mxu0 0.0
      %1399 = vmatpush1.msra.mxu0 0.0
      %1400 = vmatprep.subr.mxu0 0.0
      %1401 = vmatpush1.msra.mxu0 0.0
      %1402 = vmatprep.subr.mxu0 0.0
      %1403 = vmatpush1.msra.mxu0 0.0
      %1404 = vmatprep.subr.mxu0 0.0
      %1405 = vmatpush1.msra.mxu0 0.0
      %1406 = vmatprep.subr.mxu0 0.0
      %1407 = vmatpush1.msra.mxu0 0.0
      %1408 = vmatprep.subr.mxu0 0.0
      %1409 = vmatpush1.msra.mxu0 0.0
      %1410 = vmatprep.subr.mxu0 0.0
      %1411 = vmatpush1.msra.mxu0 0.0
      %1412 = vmatprep.subr.mxu0 0.0
      %1413 = vmatpush1.msra.mxu0 0.0
      %1414 = vmatprep.subr.mxu0 0.0
      %1415 = vmatpush1.msra.mxu0 0.0
      %1416 = vmatprep.subr.mxu0 0.0
      %1417 = vmatpush1.msra.mxu0 0.0
      %1418 = vmatprep.subr.mxu0 0.0
      %1419 = vmatpush1.msra.mxu0 0.0
      %1420 = vmatprep.subr.mxu0 0.0
      %1421 = vmatpush1.msra.mxu0 0.0
      %1422 = vmatprep.subr.mxu0 0.0
      %1423 = vmatpush1.msra.mxu0 0.0
      %1424 = vmatprep.subr.mxu0 0.0
      %1425 = vmatpush1.msra.mxu0 0.0
      %1426 = vmatprep.subr.mxu0 0.0
      %1427 = vmatpush1.msra.mxu0 0.0
      %1428 = vmatprep.subr.mxu0 0.0
      %1429 = vmatpush1.msra.mxu0 0.0
      %1430 = vmatprep.subr.mxu0 0.0
      %1431 = vmatpush1.msra.mxu0 0.0
      %1432 = vmatprep.subr.mxu0 0.0
      %1433 = vmatpush1.msra.mxu0 0.0
      %1434 = vmatprep.subr.mxu0 0.0
      %1435 = vmatpush1.msra.mxu0 0.0
      %1436 = vmatprep.subr.mxu0 0.0
      %1437 = vmatpush1.msra.mxu0 0.0
      %1438 = vmatprep.subr.mxu0 0.0
      %1439 = vmatpush1.msra.mxu0 0.0
      %1440 = vmatprep.subr.mxu0 0.0
      %1441 = vmatpush1.msra.mxu0 0.0
      %1442 = vmatprep.subr.mxu0 0.0
      %1443 = vmatpush1.msra.mxu0 0.0
      %1444 = vmatprep.subr.mxu0 0.0
      %1445 = vmatpush1.msra.mxu0 0.0
      %1446 = vmatprep.subr.mxu0 0.0
      %1447 = vmatpush1.msra.mxu0 0.0
      %1448 = vmatprep.subr.mxu0 0.0
      %1449 = vmatpush1.msra.mxu0 0.0
      %1450 = vmatprep.subr.mxu0 0.0
      %1451 = vmatpush1.msra.mxu0 0.0
      %1452 = vmatprep.subr.mxu0 0.0
      %1453 = vmatpush1.msra.mxu0 0.0
      %1454 = vmatprep.subr.mxu0 0.0
      %1455 = vmatpush1.msra.mxu0 0.0
      %1456 = vmatprep.subr.mxu0 0.0
      %1457 = vmatpush1.msra.mxu0 0.0
      %1458 = vmatprep.mubr.f32.mxu0 0.0
      %1459 = vmatmul.mubr.f32.gmra.mrb[0].mxu0 %v1392
      %v1460 = vpop.f32.mrb[0].mxu0
      %v1461 = vadd.f32 0.0, %v1460
      %v1462 = vpop.f32.mrb[0].mxu0
      %1463 = vdwg.mxu0
      %1464 = vrot.lane.b32.xlu0 %v1127, 112
      %v1465 = vpop.permute.xlu0 %1464
      %1466 = vrot.lane.b32.xlu0 %v1127, 80
      %v1467 = vpop.permute.xlu0 %1466
      %v1468 = vsel %vm1135, %v1465, 0
      %v1470 = vsel %vm1135, %v1467, 0
      %1472 = vmatprep.subr.mxu0 0.0
      %1473 = vmatpush1.xpose.msra.mxu0 %v1470
      %1474 = vmatprep.subr.mxu0 0.0
      %1475 = vmatpush1.xpose.msra.mxu0 0.0
      %1476 = vmatprep.subr.mxu0 0.0
      %1477 = vmatpush1.xpose.msra.mxu0 0.0
      %1478 = vmatprep.subr.mxu0 0.0
      %1479 = vmatpush1.xpose.msra.mxu0 0.0
      %1480 = vmatprep.subr.mxu0 0.0
      %1481 = vmatpush1.xpose.msra.mxu0 0.0
      %1482 = vmatprep.subr.mxu0 0.0
      %1483 = vmatpush1.xpose.msra.mxu0 0.0
      %1484 = vmatprep.subr.mxu0 0.0
      %1485 = vmatpush1.xpose.msra.mxu0 0.0
      %1486 = vmatprep.subr.mxu0 0.0
      %1487 = vmatpush1.xpose.msra.mxu0 0.0
      %1488 = vmatprep.subr.mxu0 0.0
      %1489 = vmatpush1.xpose.msra.mxu0 0.0
      %1490 = vmatprep.subr.mxu0 0.0
      %1491 = vmatpush1.xpose.msra.mxu0 0.0
      %1492 = vmatprep.subr.mxu0 0.0
      %1493 = vmatpush1.xpose.msra.mxu0 0.0
      %1494 = vmatprep.subr.mxu0 0.0
      %1495 = vmatpush1.xpose.msra.mxu0 0.0
      %1496 = vmatprep.subr.mxu0 0.0
      %1497 = vmatpush1.xpose.msra.mxu0 0.0
      %1498 = vmatprep.subr.mxu0 0.0
      %1499 = vmatpush1.xpose.msra.mxu0 0.0
      %1500 = vmatprep.subr.mxu0 0.0
      %1501 = vmatpush1.xpose.msra.mxu0 0.0
      %1502 = vmatprep.subr.mxu0 0.0
      %1503 = vmatpush1.xpose.msra.mxu0 0.0
      %1504 = vmatprep.subr.mxu0 0.0
      %1505 = vmatpush1.xpose.msra.mxu0 0.0
      %1506 = vmatprep.subr.mxu0 0.0
      %1507 = vmatpush1.xpose.msra.mxu0 0.0
      %1508 = vmatprep.subr.mxu0 0.0
      %1509 = vmatpush1.xpose.msra.mxu0 0.0
      %1510 = vmatprep.subr.mxu0 0.0
      %1511 = vmatpush1.xpose.msra.mxu0 0.0
      %1512 = vmatprep.subr.mxu0 0.0
      %1513 = vmatpush1.xpose.msra.mxu0 0.0
      %1514 = vmatprep.subr.mxu0 0.0
      %1515 = vmatpush1.xpose.msra.mxu0 0.0
      %1516 = vmatprep.subr.mxu0 0.0
      %1517 = vmatpush1.xpose.msra.mxu0 0.0
      %1518 = vmatprep.subr.mxu0 0.0
      %1519 = vmatpush1.xpose.msra.mxu0 0.0
      %1520 = vmatprep.subr.mxu0 0.0
      %1521 = vmatpush1.xpose.msra.mxu0 0.0
      %1522 = vmatprep.subr.mxu0 0.0
      %1523 = vmatpush1.xpose.msra.mxu0 0.0
      %1524 = vmatprep.subr.mxu0 0.0
      %1525 = vmatpush1.xpose.msra.mxu0 0.0
      %1526 = vmatprep.subr.mxu0 0.0
      %1527 = vmatpush1.xpose.msra.mxu0 0.0
      %1528 = vmatprep.subr.mxu0 0.0
      %1529 = vmatpush1.xpose.msra.mxu0 0.0
      %1530 = vmatprep.subr.mxu0 0.0
      %1531 = vmatpush1.xpose.msra.mxu0 0.0
      %1532 = vmatprep.subr.mxu0 0.0
      %1533 = vmatpush1.xpose.msra.mxu0 0.0
      %1534 = vmatprep.subr.mxu0 0.0
      %1535 = vmatpush1.xpose.msra.mxu0 0.0
      %1536 = vmatprep.mubr.f32.mxu0 0.0
      %1537 = vmatmul.mubr.f32.gmra.mrb[0].mxu0 %v1468
      %v1538 = vpop.f32.mrb[0].mxu0
      %v1539 = vadd.f32 0.0, %v1538
      %v1540 = vpop.f32.mrb[0].mxu0
      %1541 = vdwg.mxu0
      %v1542 = vmul.f32 %v1539, 0.35355338
      %v1543 = vsel %vm1135, %v1542, -inf
      %1544 = vmax.xlane.f32.xlu0 %v1543
      %v1545 = vpop.xlane.xlu0 %1544
      %v1546 = vsub.f32 %v1542, %v1545
      %v1547 = vmul.f32 %v1546, 1.442695
      %v1548 = vpow.pop %v1547
      %v1549 = vsel %vm1135, %v1548, 0.0
      %1550 = vadd.xlane.f32.xlu0 %v1549
      %v1551 = vpop.xlane.xlu0 %1550
      %v1552 = vrcp.pop %v1551
      %v1553 = vmul.f32 %v1548, %v1552
      %1554 = vrot.lane.b32.xlu0 %v1127, 48
      %v1555 = vpop.permute.xlu0 %1554
      %v1558 = vsel %vm1135, %v1553, 0
      %1560 = vmatprep.subr.mxu0 0.0
      %1561 = vmatpush1.msra.mxu0 %v1555
      %1562 = vmatprep.subr.mxu0 0.0
      %1563 = vmatpush1.msra.mxu0 0.0
      %1564 = vmatprep.subr.mxu0 0.0
      %1565 = vmatpush1.msra.mxu0 0.0
      %1566 = vmatprep.subr.mxu0 0.0
      %1567 = vmatpush1.msra.mxu0 0.0
      %1568 = vmatprep.subr.mxu0 0.0
      %1569 = vmatpush1.msra.mxu0 0.0
      %1570 = vmatprep.subr.mxu0 0.0
      %1571 = vmatpush1.msra.mxu0 0.0
      %1572 = vmatprep.subr.mxu0 0.0
      %1573 = vmatpush1.msra.mxu0 0.0
      %1574 = vmatprep.subr.mxu0 0.0
      %1575 = vmatpush1.msra.mxu0 0.0
      %1576 = vmatprep.subr.mxu0 0.0
      %1577 = vmatpush1.msra.mxu0 0.0
      %1578 = vmatprep.subr.mxu0 0.0
      %1579 = vmatpush1.msra.mxu0 0.0
      %1580 = vmatprep.subr.mxu0 0.0
      %1581 = vmatpush1.msra.mxu0 0.0
      %1582 = vmatprep.subr.mxu0 0.0
      %1583 = vmatpush1.msra.mxu0 0.0
      %1584 = vmatprep.subr.mxu0 0.0
      %1585 = vmatpush1.msra.mxu0 0.0
      %1586 = vmatprep.subr.mxu0 0.0
      %1587 = vmatpush1.msra.mxu0 0.0
      %1588 = vmatprep.subr.mxu0 0.0
      %1589 = vmatpush1.msra.mxu0 0.0
      %1590 = vmatprep.subr.mxu0 0.0
      %1591 = vmatpush1.msra.mxu0 0.0
      %1592 = vmatprep.subr.mxu0 0.0
      %1593 = vmatpush1.msra.mxu0 0.0
      %1594 = vmatprep.subr.mxu0 0.0
      %1595 = vmatpush1.msra.mxu0 0.0
      %1596 = vmatprep.subr.mxu0 0.0
      %1597 = vmatpush1.msra.mxu0 0.0
      %1598 = vmatprep.subr.mxu0 0.0
      %1599 = vmatpush1.msra.mxu0 0.0
      %1600 = vmatprep.subr.mxu0 0.0
      %1601 = vmatpush1.msra.mxu0 0.0
      %1602 = vmatprep.subr.mxu0 0.0
      %1603 = vmatpush1.msra.mxu0 0.0
      %1604 = vmatprep.subr.mxu0 0.0
      %1605 = vmatpush1.msra.mxu0 0.0
      %1606 = vmatprep.subr.mxu0 0.0
      %1607 = vmatpush1.msra.mxu0 0.0
      %1608 = vmatprep.subr.mxu0 0.0
      %1609 = vmatpush1.msra.mxu0 0.0
      %1610 = vmatprep.subr.mxu0 0.0
      %1611 = vmatpush1.msra.mxu0 0.0
      %1612 = vmatprep.subr.mxu0 0.0
      %1613 = vmatpush1.msra.mxu0 0.0
      %1614 = vmatprep.subr.mxu0 0.0
      %1615 = vmatpush1.msra.mxu0 0.0
      %1616 = vmatprep.subr.mxu0 0.0
      %1617 = vmatpush1.msra.mxu0 0.0
      %1618 = vmatprep.subr.mxu0 0.0
      %1619 = vmatpush1.msra.mxu0 0.0
      %1620 = vmatprep.subr.mxu0 0.0
      %1621 = vmatpush1.msra.mxu0 0.0
      %1622 = vmatprep.subr.mxu0 0.0
      %1623 = vmatpush1.msra.mxu0 0.0
      %1624 = vmatprep.mubr.f32.mxu0 0.0
      %1625 = vmatmul.mubr.f32.gmra.mrb[0].mxu0 %v1558
      %v1626 = vpop.f32.mrb[0].mxu0
      %v1627 = vadd.f32 0.0, %v1626
      %v1628 = vpop.f32.mrb[0].mxu0
      %1629 = vdwg.mxu0
      %1630 = vrot.lane.b32.xlu0 %v1127, 104
      %v1631 = vpop.permute.xlu0 %1630
      %1632 = vrot.lane.b32.xlu0 %v1127, 72
      %v1633 = vpop.permute.xlu0 %1632
      %v1634 = vsel %vm1135, %v1631, 0
      %v1636 = vsel %vm1135, %v1633, 0
      %1638 = vmatprep.subr.mxu0 0.0
      %1639 = vmatpush1.xpose.msra.mxu0 %v1636
      %1640 = vmatprep.subr.mxu0 0.0
      %1641 = vmatpush1.xpose.msra.mxu0 0.0
      %1642 = vmatprep.subr.mxu0 0.0
      %1643 = vmatpush1.xpose.msra.mxu0 0.0
      %1644 = vmatprep.subr.mxu0 0.0
      %1645 = vmatpush1.xpose.msra.mxu0 0.0
      %1646 = vmatprep.subr.mxu0 0.0
      %1647 = vmatpush1.xpose.msra.mxu0 0.0
      %1648 = vmatprep.subr.mxu0 0.0
      %1649 = vmatpush1.xpose.msra.mxu0 0.0
      %1650 = vmatprep.subr.mxu0 0.0
      %1651 = vmatpush1.xpose.msra.mxu0 0.0
      %1652 = vmatprep.subr.mxu0 0.0
      %1653 = vmatpush1.xpose.msra.mxu0 0.0
      %1654 = vmatprep.subr.mxu0 0.0
      %1655 = vmatpush1.xpose.msra.mxu0 0.0
      %1656 = vmatprep.subr.mxu0 0.0
      %1657 = vmatpush1.xpose.msra.mxu0 0.0
      %1658 = vmatprep.subr.mxu0 0.0
      %1659 = vmatpush1.xpose.msra.mxu0 0.0
      %1660 = vmatprep.subr.mxu0 0.0
      %1661 = vmatpush1.xpose.msra.mxu0 0.0
      %1662 = vmatprep.subr.mxu0 0.0
      %1663 = vmatpush1.xpose.msra.mxu0 0.0
      %1664 = vmatprep.subr.mxu0 0.0
      %1665 = vmatpush1.xpose.msra.mxu0 0.0
      %1666 = vmatprep.subr.mxu0 0.0
      %1667 = vmatpush1.xpose.msra.mxu0 0.0
      %1668 = vmatprep.subr.mxu0 0.0
      %1669 = vmatpush1.xpose.msra.mxu0 0.0
      %1670 = vmatprep.subr.mxu0 0.0
      %1671 = vmatpush1.xpose.msra.mxu0 0.0
      %1672 = vmatprep.subr.mxu0 0.0
      %1673 = vmatpush1.xpose.msra.mxu0 0.0
      %1674 = vmatprep.subr.mxu0 0.0
      %1675 = vmatpush1.xpose.msra.mxu0 0.0
      %1676 = vmatprep.subr.mxu0 0.0
      %1677 = vmatpush1.xpose.msra.mxu0 0.0
      %1678 = vmatprep.subr.mxu0 0.0
      %1679 = vmatpush1.xpose.msra.mxu0 0.0
      %1680 = vmatprep.subr.mxu0 0.0
      %1681 = vmatpush1.xpose.msra.mxu0 0.0
      %1682 = vmatprep.subr.mxu0 0.0
      %1683 = vmatpush1.xpose.msra.mxu0 0.0
      %1684 = vmatprep.subr.mxu0 0.0
      %1685 = vmatpush1.xpose.msra.mxu0 0.0
      %1686 = vmatprep.subr.mxu0 0.0
      %1687 = vmatpush1.xpose.msra.mxu0 0.0
      %1688 = vmatprep.subr.mxu0 0.0
      %1689 = vmatpush1.xpose.msra.mxu0 0.0
      %1690 = vmatprep.subr.mxu0 0.0
      %1691 = vmatpush1.xpose.msra.mxu0 0.0
      %1692 = vmatprep.subr.mxu0 0.0
      %1693 = vmatpush1.xpose.msra.mxu0 0.0
      %1694 = vmatprep.subr.mxu0 0.0
      %1695 = vmatpush1.xpose.msra.mxu0 0.0
      %1696 = vmatprep.subr.mxu0 0.0
      %1697 = vmatpush1.xpose.msra.mxu0 0.0
      %1698 = vmatprep.subr.mxu0 0.0
      %1699 = vmatpush1.xpose.msra.mxu0 0.0
      %1700 = vmatprep.subr.mxu0 0.0
      %1701 = vmatpush1.xpose.msra.mxu0 0.0
      %1702 = vmatprep.mubr.f32.mxu0 0.0
      %1703 = vmatmul.mubr.f32.gmra.mrb[0].mxu0 %v1634
      %v1704 = vpop.f32.mrb[0].mxu0
      %v1705 = vadd.f32 0.0, %v1704
      %v1706 = vpop.f32.mrb[0].mxu0
      %1707 = vdwg.mxu0
      %v1708 = vmul.f32 %v1705, 0.35355338
      %v1709 = vsel %vm1135, %v1708, -inf
      %1710 = vmax.xlane.f32.xlu0 %v1709
      %v1711 = vpop.xlane.xlu0 %1710
      %v1712 = vsub.f32 %v1708, %v1711
      %v1713 = vmul.f32 %v1712, 1.442695
      %v1714 = vpow.pop %v1713
      %v1715 = vsel %vm1135, %v1714, 0.0
      %1716 = vadd.xlane.f32.xlu0 %v1715
      %v1717 = vpop.xlane.xlu0 %1716
      %v1718 = vrcp.pop %v1717
      %v1719 = vmul.f32 %v1714, %v1718
      %1720 = vrot.lane.b32.xlu0 %v1127, 40
      %v1721 = vpop.permute.xlu0 %1720
      %v1724 = vsel %vm1135, %v1719, 0
      %1726 = vmatprep.subr.mxu0 0.0
      %1727 = vmatpush1.msra.mxu0 %v1721
      %1728 = vmatprep.subr.mxu0 0.0
      %1729 = vmatpush1.msra.mxu0 0.0
      %1730 = vmatprep.subr.mxu0 0.0
      %1731 = vmatpush1.msra.mxu0 0.0
      %1732 = vmatprep.subr.mxu0 0.0
      %1733 = vmatpush1.msra.mxu0 0.0
      %1734 = vmatprep.subr.mxu0 0.0
      %1735 = vmatpush1.msra.mxu0 0.0
      %1736 = vmatprep.subr.mxu0 0.0
      %1737 = vmatpush1.msra.mxu0 0.0
      %1738 = vmatprep.subr.mxu0 0.0
      %1739 = vmatpush1.msra.mxu0 0.0
      %1740 = vmatprep.subr.mxu0 0.0
      %1741 = vmatpush1.msra.mxu0 0.0
      %1742 = vmatprep.subr.mxu0 0.0
      %1743 = vmatpush1.msra.mxu0 0.0
      %1744 = vmatprep.subr.mxu0 0.0
      %1745 = vmatpush1.msra.mxu0 0.0
      %1746 = vmatprep.subr.mxu0 0.0
      %1747 = vmatpush1.msra.mxu0 0.0
      %1748 = vmatprep.subr.mxu0 0.0
      %1749 = vmatpush1.msra.mxu0 0.0
      %1750 = vmatprep.subr.mxu0 0.0
      %1751 = vmatpush1.msra.mxu0 0.0
      %1752 = vmatprep.subr.mxu0 0.0
      %1753 = vmatpush1.msra.mxu0 0.0
      %1754 = vmatprep.subr.mxu0 0.0
      %1755 = vmatpush1.msra.mxu0 0.0
      %1756 = vmatprep.subr.mxu0 0.0
      %1757 = vmatpush1.msra.mxu0 0.0
      %1758 = vmatprep.subr.mxu0 0.0
      %1759 = vmatpush1.msra.mxu0 0.0
      %1760 = vmatprep.subr.mxu0 0.0
      %1761 = vmatpush1.msra.mxu0 0.0
      %1762 = vmatprep.subr.mxu0 0.0
      %1763 = vmatpush1.msra.mxu0 0.0
      %1764 = vmatprep.subr.mxu0 0.0
      %1765 = vmatpush1.msra.mxu0 0.0
      %1766 = vmatprep.subr.mxu0 0.0
      %1767 = vmatpush1.msra.mxu0 0.0
      %1768 = vmatprep.subr.mxu0 0.0
      %1769 = vmatpush1.msra.mxu0 0.0
      %1770 = vmatprep.subr.mxu0 0.0
      %1771 = vmatpush1.msra.mxu0 0.0
      %1772 = vmatprep.subr.mxu0 0.0
      %1773 = vmatpush1.msra.mxu0 0.0
      %1774 = vmatprep.subr.mxu0 0.0
      %1775 = vmatpush1.msra.mxu0 0.0
      %1776 = vmatprep.subr.mxu0 0.0
      %1777 = vmatpush1.msra.mxu0 0.0
      %1778 = vmatprep.subr.mxu0 0.0
      %1779 = vmatpush1.msra.mxu0 0.0
      %1780 = vmatprep.subr.mxu0 0.0
      %1781 = vmatpush1.msra.mxu0 0.0
      %1782 = vmatprep.subr.mxu0 0.0
      %1783 = vmatpush1.msra.mxu0 0.0
      %1784 = vmatprep.subr.mxu0 0.0
      %1785 = vmatpush1.msra.mxu0 0.0
      %1786 = vmatprep.subr.mxu0 0.0
      %1787 = vmatpush1.msra.mxu0 0.0
      %1788 = vmatprep.subr.mxu0 0.0
      %1789 = vmatpush1.msra.mxu0 0.0
      %1790 = vmatprep.mubr.f32.mxu0 0.0
      %1791 = vmatmul.mubr.f32.gmra.mrb[0].mxu0 %v1724
      %v1792 = vpop.f32.mrb[0].mxu0
      %v1793 = vadd.f32 0.0, %v1792
      %v1794 = vpop.f32.mrb[0].mxu0
      %1795 = vdwg.mxu0
      %1797 = vrot.lane.b32.xlu0 %v1461, 8
      %v1798 = vpop.permute.xlu0 %1797
      %1801 = vrot.lane.b32.xlu0 %v1627, 16
      %v1802 = vpop.permute.xlu0 %1801
      %1805 = vrot.lane.b32.xlu0 %v1793, 24
      %v1806 = vpop.permute.xlu0 %1805
      %v1808 = vsel %vm1135, %v1295, %v1798
      %vm1809 = vcmask 130048
      %v1810 = vsel %vm1809, %v1808, %v1802
      %v1811 = vsel %vm994, %v1810, %v1806
      %v1812 = vld [vmem:[%s19] sm:$0xff]
      %v1813 = vld [vmem:[%s19 + $0x8] sm:$0xff]
      %v1814 = vld [vmem:[%s19 + $0x10] sm:$0xff]
      %v1815 = vld [vmem:[%s19 + $0x18] sm:$0xff]
      %v1816 = vpack.c.bf16 %v1811, %v1811
      %v1817 = vpack.c.bf16 %v1813, %v1812
      %v1818 = vpack.c.bf16 %v1815, %v1814
      %v1820 = vsel %vm1046, %v1816, 0
      %1822 = vmatprep.subr.bf16.mxu0 0
      %1823 = vmatpush1.bf16.msra.mxu0 %v1817
      %1824 = vmatprep.subr.bf16.mxu0 0
      %1825 = vmatpush1.bf16.msra.mxu0 %v1818
      %1826 = vmatprep.subr.bf16.mxu0 0
      %1827 = vmatpush1.bf16.msra.mxu0 0
      %1828 = vmatprep.subr.bf16.mxu0 0
      %1829 = vmatpush1.bf16.msra.mxu0 0
      %1830 = vmatprep.subr.bf16.mxu0 0
      %1831 = vmatpush1.bf16.msra.mxu0 0
      %1832 = vmatprep.subr.bf16.mxu0 0
      %1833 = vmatpush1.bf16.msra.mxu0 0
      %1834 = vmatprep.subr.bf16.mxu0 0
      %1835 = vmatpush1.bf16.msra.mxu0 0
      %1836 = vmatprep.subr.bf16.mxu0 0
      %1837 = vmatpush1.bf16.msra.mxu0 0
      %1838 = vmatprep.subr.bf16.mxu0 0
      %1839 = vmatpush1.bf16.msra.mxu0 0
      %1840 = vmatprep.subr.bf16.mxu0 0
      %1841 = vmatpush1.bf16.msra.mxu0 0
      %1842 = vmatprep.subr.bf16.mxu0 0
      %1843 = vmatpush1.bf16.msra.mxu0 0
      %1844 = vmatprep.subr.bf16.mxu0 0
      %1845 = vmatpush1.bf16.msra.mxu0 0
      %1846 = vmatprep.subr.bf16.mxu0 0
      %1847 = vmatpush1.bf16.msra.mxu0 0
      %1848 = vmatprep.subr.bf16.mxu0 0
      %1849 = vmatpush1.bf16.msra.mxu0 0
      %1850 = vmatprep.subr.bf16.mxu0 0
      %1851 = vmatpush1.bf16.msra.mxu0 0
      %1852 = vmatprep.subr.bf16.mxu0 0
      %1853 = vmatpush1.bf16.msra.mxu0 0
      %1854 = vmatprep.mubr.bf16.mxu0 0
      %1855 = vmatmul.mubr.bf16.gmra.mrb[0].mxu0 %v1820
      %v1856 = vpop.f32.mrb[0].mxu0
      %v1857 = vadd.f32 0.0, %v1856
      %v1858 = vpop.f32.mrb[0].mxu0
      %v1859 = vpop.f32.mrb[0].mxu0
      %v1860 = vpop.f32.mrb[0].mxu0
      %1861 = vdwg.mxu0
      %v1862 = vadd.f32 %v1043, %v1857
      %v1863 = vld [vmem:[%s21] sm:$0x1]
      %v1865 = vlaneseq
      %v1866 = vshrl.u32 %v1865, 7
      %v1867 = vsub.s32 0, %v1866
      %v1868 = vrot.slane %v1863, %v1867
      %v1870 = vadd.f32 %v1862, %v1868
      %v1871 = vld [vmem:[%s23] sm:$0x1]
      %v1872 = vld [vmem:[%s25] sm:$0x1]
      %v1873 = vsel %vm1046, %v1870, 0.0
      %1874 = vadd.xlane.f32.xlu0 %v1873
      %v1875 = vpop.xlane.xlu0 %1874
      %v1876 = vmul.f32 %v1875, %v1050
      %v1877 = vsub.f32 %v1870, %v1876
      %v1878 = vmul.f32 %v1877, %v1877
      %v1879 = vsel %vm1046, %v1878, 0.0
      %1880 = vadd.xlane.f32.xlu0 %v1879
      %v1881 = vpop.xlane.xlu0 %1880
      %v1882 = vmul.f32 %v1881, %v1050
      %v1883 = vadd.f32 %v1882, 1e-05
      %v1884 = vrsqrt.pop %v1883
      %v1885 = vmul.f32 %v1877, %v1884
      %v1887 = vlaneseq
      %v1888 = vshrl.u32 %v1887, 7
      %v1889 = vsub.s32 0, %v1888
      %v1890 = vrot.slane %v1871, %v1889
      %v1892 = vmul.f32 %v1885, %v1890
      %v1894 = vlaneseq
      %v1895 = vshrl.u32 %v1894, 7
      %v1896 = vsub.s32 0, %v1895
      %v1897 = vrot.slane %v1872, %v1896
      %v1899 = vadd.f32 %v1892, %v1897
      %v1900 = vld [vmem:[%s27] sm:$0xff]
      %v1901 = vld [vmem:[%s27 + $0x8] sm:$0xff]
      %v1902 = vld [vmem:[%s27 + $0x10] sm:$0xff]
      %v1903 = vld [vmem:[%s27 + $0x18] sm:$0xff]
      %v1904 = vpack.c.bf16 %v1899, %v1899
      %v1905 = vpack.c.bf16 %v1901, %v1900
      %v1906 = vpack.c.bf16 %v1903, %v1902
      %v1907 = vld [vmem:[%s29] sm:$0x1]
      %v1909 = vlaneseq
      %v1910 = vshrl.u32 %v1909, 7
      %v1911 = vsub.s32 0, %v1910
      %v1912 = vrot.slane %v1907, %v1911
      %v1915 = vsel %vm1046, %v1904, 0
      %1917 = vmatprep.subr.bf16.mxu0 0
      %1918 = vmatpush1.bf16.msra.mxu0 %v1905
      %1919 = vmatprep.subr.bf16.mxu0 0
      %1920 = vmatpush1.bf16.msra.mxu0 %v1906
      %1921 = vmatprep.subr.bf16.mxu0 0
      %1922 = vmatpush1.bf16.msra.mxu0 0
      %1923 = vmatprep.subr.bf16.mxu0 0
      %1924 = vmatpush1.bf16.msra.mxu0 0
      %1925 = vmatprep.subr.bf16.mxu0 0
      %1926 = vmatpush1.bf16.msra.mxu0 0
      %1927 = vmatprep.subr.bf16.mxu0 0
      %1928 = vmatpush1.bf16.msra.mxu0 0
      %1929 = vmatprep.subr.bf16.mxu0 0
      %1930 = vmatpush1.bf16.msra.mxu0 0
      %1931 = vmatprep.subr.bf16.mxu0 0
      %1932 = vmatpush1.bf16.msra.mxu0 0
      %1933 = vmatprep.subr.bf16.mxu0 0
      %1934 = vmatpush1.bf16.msra.mxu0 0
      %1935 = vmatprep.subr.bf16.mxu0 0
      %1936 = vmatpush1.bf16.msra.mxu0 0
      %1937 = vmatprep.subr.bf16.mxu0 0
      %1938 = vmatpush1.bf16.msra.mxu0 0
      %1939 = vmatprep.subr.bf16.mxu0 0
      %1940 = vmatpush1.bf16.msra.mxu0 0
      %1941 = vmatprep.subr.bf16.mxu0 0
      %1942 = vmatpush1.bf16.msra.mxu0 0
      %1943 = vmatprep.subr.bf16.mxu0 0
      %1944 = vmatpush1.bf16.msra.mxu0 0
      %1945 = vmatprep.subr.bf16.mxu0 0
      %1946 = vmatpush1.bf16.msra.mxu0 0
      %1947 = vmatprep.subr.bf16.mxu0 0
      %1948 = vmatpush1.bf16.msra.mxu0 0
      %1949 = vmatprep.mubr.bf16.mxu0 0
      %1950 = vmatmul.mubr.bf16.gmra.mrb[0].mxu0 %v1915
      %v1951 = vpop.f32.mrb[0].mxu0
      %v1952 = vadd.f32 %v1912, %v1951
      %v1953 = vpop.f32.mrb[0].mxu0
      %v1954 = vpop.f32.mrb[0].mxu0
      %v1955 = vpop.f32.mrb[0].mxu0
      %1956 = vdwg.mxu0
      %v1957 = vmul.f32 %v1952, %v1952
      %v1958 = vmul.f32 %v1952, %v1957
      %v1959 = vmul.f32 %v1958, 0.044715
      %v1960 = vadd.f32 %v1952, %v1959
      %v1961 = vmul.f32 %v1960, 0.7978846
      %v1962 = vtanh.pop %v1961
      %v1963 = vadd.f32 %v1962, 1.0
      %v1964 = vmul.f32 %v1963, 0.5
      %v1965 = vmul.f32 %v1952, %v1964
      %v1966 = vld [vmem:[%s31] sm:$0xff]
      %v1967 = vld [vmem:[%s31 + $0x8] sm:$0xff]
      %v1968 = vld [vmem:[%s31 + $0x10] sm:$0xff]
      %v1969 = vld [vmem:[%s31 + $0x18] sm:$0xff]
      %v1970 = vld [vmem:[%s31 + $0x20] sm:$0xff]
      %v1971 = vld [vmem:[%s31 + $0x28] sm:$0xff]
      %v1972 = vld [vmem:[%s31 + $0x30] sm:$0xff]
      %v1973 = vld [vmem:[%s31 + $0x38] sm:$0xff]
      %v1974 = vld [vmem:[%s31 + $0x40] sm:$0xff]
      %v1975 = vld [vmem:[%s31 + $0x48] sm:$0xff]
      %v1976 = vld [vmem:[%s31 + $0x50] sm:$0xff]
      %v1977 = vld [vmem:[%s31 + $0x58] sm:$0xff]
      %v1978 = vld [vmem:[%s31 + $0x60] sm:$0xff]
      %v1979 = vld [vmem:[%s31 + $0x68] sm:$0xff]
      %v1980 = vld [vmem:[%s31 + $0x70] sm:$0xff]
      %v1981 = vld [vmem:[%s31 + $0x78] sm:$0xff]
      %v1982 = vpack.c.bf16 %v1965, %v1965
      %v1983 = vpack.c.bf16 %v1967, %v1966
      %v1984 = vpack.c.bf16 %v1969, %v1968
      %v1985 = vpack.c.bf16 %v1971, %v1970
      %v1986 = vpack.c.bf16 %v1973, %v1972
      %v1987 = vpack.c.bf16 %v1975, %v1974
      %v1988 = vpack.c.bf16 %v1977, %v1976
      %v1989 = vpack.c.bf16 %v1979, %v1978
      %v1990 = vpack.c.bf16 %v1981, %v1980
      %1991 = vmatprep.subr.bf16.mxu0 0
      %1992 = vmatpush1.bf16.msra.mxu0 %v1983
      %1993 = vmatprep.subr.bf16.mxu0 0
      %1994 = vmatpush1.bf16.msra.mxu0 %v1984
      %1995 = vmatprep.subr.bf16.mxu0 0
      %1996 = vmatpush1.bf16.msra.mxu0 %v1985
      %1997 = vmatprep.subr.bf16.mxu0 0
      %1998 = vmatpush1.bf16.msra.mxu0 %v1986
      %1999 = vmatprep.subr.bf16.mxu0 0
      %2000 = vmatpush1.bf16.msra.mxu0 %v1987
      %2001 = vmatprep.subr.bf16.mxu0 0
      %2002 = vmatpush1.bf16.msra.mxu0 %v1988
      %2003 = vmatprep.subr.bf16.mxu0 0
      %2004 = vmatpush1.bf16.msra.mxu0 %v1989
      %2005 = vmatprep.subr.bf16.mxu0 0
      %2006 = vmatpush1.bf16.msra.mxu0 %v1990
      %2007 = vmatprep.subr.bf16.mxu0 0
      %2008 = vmatpush1.bf16.msra.mxu0 0
      %2009 = vmatprep.subr.bf16.mxu0 0
      %2010 = vmatpush1.bf16.msra.mxu0 0
      %2011 = vmatprep.subr.bf16.mxu0 0
      %2012 = vmatpush1.bf16.msra.mxu0 0
      %2013 = vmatprep.subr.bf16.mxu0 0
      %2014 = vmatpush1.bf16.msra.mxu0 0
      %2015 = vmatprep.subr.bf16.mxu0 0
      %2016 = vmatpush1.bf16.msra.mxu0 0
      %2017 = vmatprep.subr.bf16.mxu0 0
      %2018 = vmatpush1.bf16.msra.mxu0 0
      %2019 = vmatprep.subr.bf16.mxu0 0
      %2020 = vmatpush1.bf16.msra.mxu0 0
      %2021 = vmatprep.subr.bf16.mxu0 0
      %2022 = vmatpush1.bf16.msra.mxu0 0
      %2023 = vmatprep.mubr.bf16.mxu0 0
      %2024 = vmatmul.mubr.bf16.gmra.mrb[0].mxu0 %v1982
      %v2025 = vpop.f32.mrb[0].mxu0
      %v2026 = vadd.f32 0.0, %v2025
      %v2027 = vpop.f32.mrb[0].mxu0
      %v2028 = vpop.f32.mrb[0].mxu0
      %v2029 = vpop.f32.mrb[0].mxu0
      %2030 = vdwg.mxu0
      %v2031 = vadd.f32 %v1870, %v2026
      %v2032 = vld [vmem:[%s33] sm:$0x1]
      %v2034 = vlaneseq
      %v2035 = vshrl.u32 %v2034, 7
      %v2036 = vsub.s32 0, %v2035
      %v2037 = vrot.slane %v2032, %v2036
      %v2039 = vadd.f32 %v2031, %v2037
      %s2040 = scalar_lea.vmem %s11, 1
      %v2041 = vld [vmem:[%s2040] sm:$0x1]
      %s2042 = scalar_lea.vmem %s13, 1
      %v2043 = vld [vmem:[%s2042] sm:$0x1]
      %v2044 = vsel %vm1046, %v2039, 0.0
      %2045 = vadd.xlane.f32.xlu0 %v2044
      %v2046 = vpop.xlane.xlu0 %2045
      %v2047 = vmul.f32 %v2046, %v1050
      %v2048 = vsub.f32 %v2039, %v2047
      %v2049 = vmul.f32 %v2048, %v2048
      %v2050 = vsel %vm1046, %v2049, 0.0
      %2051 = vadd.xlane.f32.xlu0 %v2050
      %v2052 = vpop.xlane.xlu0 %2051
      %v2053 = vmul.f32 %v2052, %v1050
      %v2054 = vadd.f32 %v2053, 1e-05
      %v2055 = vrsqrt.pop %v2054
      %v2056 = vmul.f32 %v2048, %v2055
      %v2058 = vlaneseq
      %v2059 = vshrl.u32 %v2058, 7
      %v2060 = vsub.s32 0, %v2059
      %v2061 = vrot.slane %v2041, %v2060
      %v2063 = vmul.f32 %v2056, %v2061
      %v2065 = vlaneseq
      %v2066 = vshrl.u32 %v2065, 7
      %v2067 = vsub.s32 0, %v2066
      %v2068 = vrot.slane %v2043, %v2067
      %v2070 = vadd.f32 %v2063, %v2068
      %s2071 = scalar_lea.vmem %s15, 32
      %v2072 = vld [vmem:[%s2071] sm:$0xff]
      %v2073 = vld [vmem:[%s2071 + $0x8] sm:$0xff]
      %v2074 = vld [vmem:[%s2071 + $0x10] sm:$0xff]
      %v2075 = vld [vmem:[%s2071 + $0x18] sm:$0xff]
      %v2076 = vpack.c.bf16 %v2070, %v2070
      %v2077 = vpack.c.bf16 %v2073, %v2072
      %v2078 = vpack.c.bf16 %v2075, %v2074
      %s2079 = scalar_lea.vmem %s17, 1
      %v2080 = vld [vmem:[%s2079] sm:$0x1]
      %v2082 = vlaneseq
      %v2083 = vshrl.u32 %v2082, 7
      %v2084 = vsub.s32 0, %v2083
      %v2085 = vrot.slane %v2080, %v2084
      %v2088 = vsel %vm1046, %v2076, 0
      %2090 = vmatprep.subr.bf16.mxu0 0
      %2091 = vmatpush1.bf16.msra.mxu0 %v2077
      %2092 = vmatprep.subr.bf16.mxu0 0
      %2093 = vmatpush1.bf16.msra.mxu0 %v2078
      %2094 = vmatprep.subr.bf16.mxu0 0
      %2095 = vmatpush1.bf16.msra.mxu0 0
      %2096 = vmatprep.subr.bf16.mxu0 0
      %2097 = vmatpush1.bf16.msra.mxu0 0
      %2098 = vmatprep.subr.bf16.mxu0 0
      %2099 = vmatpush1.bf16.msra.mxu0 0
      %2100 = vmatprep.subr.bf16.mxu0 0
      %2101 = vmatpush1.bf16.msra.mxu0 0
      %2102 = vmatprep.subr.bf16.mxu0 0
      %2103 = vmatpush1.bf16.msra.mxu0 0
      %2104 = vmatprep.subr.bf16.mxu0 0
      %2105 = vmatpush1.bf16.msra.mxu0 0
      %2106 = vmatprep.subr.bf16.mxu0 0
      %2107 = vmatpush1.bf16.msra.mxu0 0
      %2108 = vmatprep.subr.bf16.mxu0 0
      %2109 = vmatpush1.bf16.msra.mxu0 0
      %2110 = vmatprep.subr.bf16.mxu0 0
      %2111 = vmatpush1.bf16.msra.mxu0 0
      %2112 = vmatprep.subr.bf16.mxu0 0
      %2113 = vmatpush1.bf16.msra.mxu0 0
      %2114 = vmatprep.subr.bf16.mxu0 0
      %2115 = vmatpush1.bf16.msra.mxu0 0
      %2116 = vmatprep.subr.bf16.mxu0 0
      %2117 = vmatpush1.bf16.msra.mxu0 0
      %2118 = vmatprep.subr.bf16.mxu0 0
      %2119 = vmatpush1.bf16.msra.mxu0 0
      %2120 = vmatprep.subr.bf16.mxu0 0
      %2121 = vmatpush1.bf16.msra.mxu0 0
      %2122 = vmatprep.mubr.bf16.mxu0 0
      %2123 = vmatmul.mubr.bf16.gmra.mrb[0].mxu0 %v2088
      %v2124 = vpop.f32.mrb[0].mxu0
      %v2125 = vadd.f32 %v2085, %v2124
      %v2126 = vpop.f32.mrb[0].mxu0
      %v2127 = vpop.f32.mrb[0].mxu0
      %v2128 = vpop.f32.mrb[0].mxu0
      %2129 = vdwg.mxu0
      %2131 = vrot.lane.b32.xlu0 %v2125, 96
      %v2132 = vpop.permute.xlu0 %2131
      %v2133 = vsel %vm1135, %v2125, 0
      %v2135 = vsel %vm1135, %v2132, 0
      %2137 = vmatprep.subr.mxu0 0.0
      %2138 = vmatpush1.xpose.msra.mxu0 %v2135
      %2139 = vmatprep.subr.mxu0 0.0
      %2140 = vmatpush1.xpose.msra.mxu0 0.0
      %2141 = vmatprep.subr.mxu0 0.0
      %2142 = vmatpush1.xpose.msra.mxu0 0.0
      %2143 = vmatprep.subr.mxu0 0.0
      %2144 = vmatpush1.xpose.msra.mxu0 0.0
      %2145 = vmatprep.subr.mxu0 0.0
      %2146 = vmatpush1.xpose.msra.mxu0 0.0
      %2147 = vmatprep.subr.mxu0 0.0
      %2148 = vmatpush1.xpose.msra.mxu0 0.0
      %2149 = vmatprep.subr.mxu0 0.0
      %2150 = vmatpush1.xpose.msra.mxu0 0.0
      %2151 = vmatprep.subr.mxu0 0.0
      %2152 = vmatpush1.xpose.msra.mxu0 0.0
      %2153 = vmatprep.subr.mxu0 0.0
      %2154 = vmatpush1.xpose.msra.mxu0 0.0
      %2155 = vmatprep.subr.mxu0 0.0
      %2156 = vmatpush1.xpose.msra.mxu0 0.0
      %2157 = vmatprep.subr.mxu0 0.0
      %2158 = vmatpush1.xpose.msra.mxu0 0.0
      %2159 = vmatprep.subr.mxu0 0.0
      %2160 = vmatpush1.xpose.msra.mxu0 0.0
      %2161 = vmatprep.subr.mxu0 0.0
      %2162 = vmatpush1.xpose.msra.mxu0 0.0
      %2163 = vmatprep.subr.mxu0 0.0
      %2164 = vmatpush1.xpose.msra.mxu0 0.0
      %2165 = vmatprep.subr.mxu0 0.0
      %2166 = vmatpush1.xpose.msra.mxu0 0.0
      %2167 = vmatprep.subr.mxu0 0.0
      %2168 = vmatpush1.xpose.msra.mxu0 0.0
      %2169 = vmatprep.subr.mxu0 0.0
      %2170 = vmatpush1.xpose.msra.mxu0 0.0
      %2171 = vmatprep.subr.mxu0 0.0
      %2172 = vmatpush1.xpose.msra.mxu0 0.0
      %2173 = vmatprep.subr.mxu0 0.0
      %2174 = vmatpush1.xpose.msra.mxu0 0.0
      %2175 = vmatprep.subr.mxu0 0.0
      %2176 = vmatpush1.xpose.msra.mxu0 0.0
      %2177 = vmatprep.subr.mxu0 0.0
      %2178 = vmatpush1.xpose.msra.mxu0 0.0
      %2179 = vmatprep.subr.mxu0 0.0
      %2180 = vmatpush1.xpose.msra.mxu0 0.0
      %2181 = vmatprep.subr.mxu0 0.0
      %2182 = vmatpush1.xpose.msra.mxu0 0.0
      %2183 = vmatprep.subr.mxu0 0.0
      %2184 = vmatpush1.xpose.msra.mxu0 0.0
      %2185 = vmatprep.subr.mxu0 0.0
      %2186 = vmatpush1.xpose.msra.mxu0 0.0
      %2187 = vmatprep.subr.mxu0 0.0
      %2188 = vmatpush1.xpose.msra.mxu0 0.0
      %2189 = vmatprep.subr.mxu0 0.0
      %2190 = vmatpush1.xpose.msra.mxu0 0.0
      %2191 = vmatprep.subr.mxu0 0.0
      %2192 = vmatpush1.xpose.msra.mxu0 0.0
      %2193 = vmatprep.subr.mxu0 0.0
      %2194 = vmatpush1.xpose.msra.mxu0 0.0
      %2195 = vmatprep.subr.mxu0 0.0
      %2196 = vmatpush1.xpose.msra.mxu0 0.0
      %2197 = vmatprep.subr.mxu0 0.0
      %2198 = vmatpush1.xpose.msra.mxu0 0.0
      %2199 = vmatprep.subr.mxu0 0.0
      %2200 = vmatpush1.xpose.msra.mxu0 0.0
      %2201 = vmatprep.mubr.f32.mxu0 0.0
      %2202 = vmatmul.mubr.f32.gmra.mrb[0].mxu0 %v2133
      %v2203 = vpop.f32.mrb[0].mxu0
      %v2204 = vadd.f32 0.0, %v2203
      %v2205 = vpop.f32.mrb[0].mxu0
      %2206 = vdwg.mxu0
      %v2207 = vmul.f32 %v2204, 0.35355338
      %v2208 = vsel %vm1135, %v2207, -inf
      %2209 = vmax.xlane.f32.xlu0 %v2208
      %v2210 = vpop.xlane.xlu0 %2209
      %v2211 = vsub.f32 %v2207, %v2210
      %v2212 = vmul.f32 %v2211, 1.442695
      %v2213 = vpow.pop %v2212
      %v2214 = vsel %vm1135, %v2213, 0.0
      %2215 = vadd.xlane.f32.xlu0 %v2214
      %v2216 = vpop.xlane.xlu0 %2215
      %v2217 = vrcp.pop %v2216
      %v2218 = vmul.f32 %v2213, %v2217
      %2219 = vrot.lane.b32.xlu0 %v2125, 64
      %v2220 = vpop.permute.xlu0 %2219
      %v2223 = vsel %vm1135, %v2218, 0
      %2225 = vmatprep.subr.mxu0 0.0
      %2226 = vmatpush1.msra.mxu0 %v2220
      %2227 = vmatprep.subr.mxu0 0.0
      %2228 = vmatpush1.msra.mxu0 0.0
      %2229 = vmatprep.subr.mxu0 0.0
      %2230 = vmatpush1.msra.mxu0 0.0
      %2231 = vmatprep.subr.mxu0 0.0
      %2232 = vmatpush1.msra.mxu0 0.0
      %2233 = vmatprep.subr.mxu0 0.0
      %2234 = vmatpush1.msra.mxu0 0.0
      %2235 = vmatprep.subr.mxu0 0.0
      %2236 = vmatpush1.msra.mxu0 0.0
      %2237 = vmatprep.subr.mxu0 0.0
      %2238 = vmatpush1.msra.mxu0 0.0
      %2239 = vmatprep.subr.mxu0 0.0
      %2240 = vmatpush1.msra.mxu0 0.0
      %2241 = vmatprep.subr.mxu0 0.0
      %2242 = vmatpush1.msra.mxu0 0.0
      %2243 = vmatprep.subr.mxu0 0.0
      %2244 = vmatpush1.msra.mxu0 0.0
      %2245 = vmatprep.subr.mxu0 0.0
      %2246 = vmatpush1.msra.mxu0 0.0
      %2247 = vmatprep.subr.mxu0 0.0
      %2248 = vmatpush1.msra.mxu0 0.0
      %2249 = vmatprep.subr.mxu0 0.0
      %2250 = vmatpush1.msra.mxu0 0.0
      %2251 = vmatprep.subr.mxu0 0.0
      %2252 = vmatpush1.msra.mxu0 0.0
      %2253 = vmatprep.subr.mxu0 0.0
      %2254 = vmatpush1.msra.mxu0 0.0
      %2255 = vmatprep.subr.mxu0 0.0
      %2256 = vmatpush1.msra.mxu0 0.0
      %2257 = vmatprep.subr.mxu0 0.0
      %2258 = vmatpush1.msra.mxu0 0.0
      %2259 = vmatprep.subr.mxu0 0.0
      %2260 = vmatpush1.msra.mxu0 0.0
      %2261 = vmatprep.subr.mxu0 0.0
      %2262 = vmatpush1.msra.mxu0 0.0
      %2263 = vmatprep.subr.mxu0 0.0
      %2264 = vmatpush1.msra.mxu0 0.0
      %2265 = vmatprep.subr.mxu0 0.0
      %2266 = vmatpush1.msra.mxu0 0.0
      %2267 = vmatprep.subr.mxu0 0.0
      %2268 = vmatpush1.msra.mxu0 0.0
      %2269 = vmatprep.subr.mxu0 0.0
      %2270 = vmatpush1.msra.mxu0 0.0
      %2271 = vmatprep.subr.mxu0 0.0
      %2272 = vmatpush1.msra.mxu0 0.0
      %2273 = vmatprep.subr.mxu0 0.0
      %2274 = vmatpush1.msra.mxu0 0.0
      %2275 = vmatprep.subr.mxu0 0.0
      %2276 = vmatpush1.msra.mxu0 0.0
      %2277 = vmatprep.subr.mxu0 0.0
      %2278 = vmatpush1.msra.mxu0 0.0
      %2279 = vmatprep.subr.mxu0 0.0
      %2280 = vmatpush1.msra.mxu0 0.0
      %2281 = vmatprep.subr.mxu0 0.0
      %2282 = vmatpush1.msra.mxu0 0.0
      %2283 = vmatprep.subr.mxu0 0.0
      %2284 = vmatpush1.msra.mxu0 0.0
      %2285 = vmatprep.subr.mxu0 0.0
      %2286 = vmatpush1.msra.mxu0 0.0
      %2287 = vmatprep.subr.mxu0 0.0
      %2288 = vmatpush1.msra.mxu0 0.0
      %2289 = vmatprep.mubr.f32.mxu0 0.0
      %2290 = vmatmul.mubr.f32.gmra.mrb[0].mxu0 %v2223
      %v2291 = vpop.f32.mrb[0].mxu0
      %v2292 = vadd.f32 0.0, %v2291
      %v2293 = vpop.f32.mrb[0].mxu0
      %2294 = vdwg.mxu0
      %2295 = vrot.lane.b32.xlu0 %v2125, 120
      %v2296 = vpop.permute.xlu0 %2295
      %2297 = vrot.lane.b32.xlu0 %v2125, 88
      %v2298 = vpop.permute.xlu0 %2297
      %v2299 = vsel %vm1135, %v2296, 0
      %v2301 = vsel %vm1135, %v2298, 0
      %2303 = vmatprep.subr.mxu0 0.0
      %2304 = vmatpush1.xpose.msra.mxu0 %v2301
      %2305 = vmatprep.subr.mxu0 0.0
      %2306 = vmatpush1.xpose.msra.mxu0 0.0
      %2307 = vmatprep.subr.mxu0 0.0
      %2308 = vmatpush1.xpose.msra.mxu0 0.0
      %2309 = vmatprep.subr.mxu0 0.0
      %2310 = vmatpush1.xpose.msra.mxu0 0.0
      %2311 = vmatprep.subr.mxu0 0.0
      %2312 = vmatpush1.xpose.msra.mxu0 0.0
      %2313 = vmatprep.subr.mxu0 0.0
      %2314 = vmatpush1.xpose.msra.mxu0 0.0
      %2315 = vmatprep.subr.mxu0 0.0
      %2316 = vmatpush1.xpose.msra.mxu0 0.0
      %2317 = vmatprep.subr.mxu0 0.0
      %2318 = vmatpush1.xpose.msra.mxu0 0.0
      %2319 = vmatprep.subr.mxu0 0.0
      %2320 = vmatpush1.xpose.msra.mxu0 0.0
      %2321 = vmatprep.subr.mxu0 0.0
      %2322 = vmatpush1.xpose.msra.mxu0 0.0
      %2323 = vmatprep.subr.mxu0 0.0
      %2324 = vmatpush1.xpose.msra.mxu0 0.0
      %2325 = vmatprep.subr.mxu0 0.0
      %2326 = vmatpush1.xpose.msra.mxu0 0.0
      %2327 = vmatprep.subr.mxu0 0.0
      %2328 = vmatpush1.xpose.msra.mxu0 0.0
      %2329 = vmatprep.subr.mxu0 0.0
      %2330 = vmatpush1.xpose.msra.mxu0 0.0
      %2331 = vmatprep.subr.mxu0 0.0
      %2332 = vmatpush1.xpose.msra.mxu0 0.0
      %2333 = vmatprep.subr.mxu0 0.0
      %2334 = vmatpush1.xpose.msra.mxu0 0.0
      %2335 = vmatprep.subr.mxu0 0.0
      %2336 = vmatpush1.xpose.msra.mxu0 0.0
      %2337 = vmatprep.subr.mxu0 0.0
      %2338 = vmatpush1.xpose.msra.mxu0 0.0
      %2339 = vmatprep.subr.mxu0 0.0
      %2340 = vmatpush1.xpose.msra.mxu0 0.0
      %2341 = vmatprep.subr.mxu0 0.0
      %2342 = vmatpush1.xpose.msra.mxu0 0.0
      %2343 = vmatprep.subr.mxu0 0.0
      %2344 = vmatpush1.xpose.msra.mxu0 0.0
      %2345 = vmatprep.subr.mxu0 0.0
      %2346 = vmatpush1.xpose.msra.mxu0 0.0
      %2347 = vmatprep.subr.mxu0 0.0
      %2348 = vmatpush1.xpose.msra.mxu0 0.0
      %2349 = vmatprep.subr.mxu0 0.0
      %2350 = vmatpush1.xpose.msra.mxu0 0.0
      %2351 = vmatprep.subr.mxu0 0.0
      %2352 = vmatpush1.xpose.msra.mxu0 0.0
      %2353 = vmatprep.subr.mxu0 0.0
      %2354 = vmatpush1.xpose.msra.mxu0 0.0
      %2355 = vmatprep.subr.mxu0 0.0
      %2356 = vmatpush1.xpose.msra.mxu0 0.0
      %2357 = vmatprep.subr.mxu0 0.0
      %2358 = vmatpush1.xpose.msra.mxu0 0.0
      %2359 = vmatprep.subr.mxu0 0.0
      %2360 = vmatpush1.xpose.msra.mxu0 0.0
      %2361 = vmatprep.subr.mxu0 0.0
      %2362 = vmatpush1.xpose.msra.mxu0 0.0
      %2363 = vmatprep.subr.mxu0 0.0
      %2364 = vmatpush1.xpose.msra.mxu0 0.0
      %2365 = vmatprep.subr.mxu0 0.0
      %2366 = vmatpush1.xpose.msra.mxu0 0.0
      %2367 = vmatprep.mubr.f32.mxu0 0.0
      %2368 = vmatmul.mubr.f32.gmra.mrb[0].mxu0 %v2299
      %v2369 = vpop.f32.mrb[0].mxu0
      %v2370 = vadd.f32 0.0, %v2369
      %v2371 = vpop.f32.mrb[0].mxu0
      %2372 = vdwg.mxu0
      %v2373 = vmul.f32 %v2370, 0.35355338
      %v2374 = vsel %vm1135, %v2373, -inf
      %2375 = vmax.xlane.f32.xlu0 %v2374
      %v2376 = vpop.xlane.xlu0 %2375
      %v2377 = vsub.f32 %v2373, %v2376
      %v2378 = vmul.f32 %v2377, 1.442695
      %v2379 = vpow.pop %v2378
      %v2380 = vsel %vm1135, %v2379, 0.0
      %2381 = vadd.xlane.f32.xlu0 %v2380
      %v2382 = vpop.xlane.xlu0 %2381
      %v2383 = vrcp.pop %v2382
      %v2384 = vmul.f32 %v2379, %v2383
      %2385 = vrot.lane.b32.xlu0 %v2125, 56
      %v2386 = vpop.permute.xlu0 %2385
      %v2389 = vsel %vm1135, %v2384, 0
      %2391 = vmatprep.subr.mxu0 0.0
      %2392 = vmatpush1.msra.mxu0 %v2386
      %2393 = vmatprep.subr.mxu0 0.0
      %2394 = vmatpush1.msra.mxu0 0.0
      %2395 = vmatprep.subr.mxu0 0.0
      %2396 = vmatpush1.msra.mxu0 0.0
      %2397 = vmatprep.subr.mxu0 0.0
      %2398 = vmatpush1.msra.mxu0 0.0
      %2399 = vmatprep.subr.mxu0 0.0
      %2400 = vmatpush1.msra.mxu0 0.0
      %2401 = vmatprep.subr.mxu0 0.0
      %2402 = vmatpush1.msra.mxu0 0.0
      %2403 = vmatprep.subr.mxu0 0.0
      %2404 = vmatpush1.msra.mxu0 0.0
      %2405 = vmatprep.subr.mxu0 0.0
      %2406 = vmatpush1.msra.mxu0 0.0
      %2407 = vmatprep.subr.mxu0 0.0
      %2408 = vmatpush1.msra.mxu0 0.0
      %2409 = vmatprep.subr.mxu0 0.0
      %2410 = vmatpush1.msra.mxu0 0.0
      %2411 = vmatprep.subr.mxu0 0.0
      %2412 = vmatpush1.msra.mxu0 0.0
      %2413 = vmatprep.subr.mxu0 0.0
      %2414 = vmatpush1.msra.mxu0 0.0
      %2415 = vmatprep.subr.mxu0 0.0
      %2416 = vmatpush1.msra.mxu0 0.0
      %2417 = vmatprep.subr.mxu0 0.0
      %2418 = vmatpush1.msra.mxu0 0.0
      %2419 = vmatprep.subr.mxu0 0.0
      %2420 = vmatpush1.msra.mxu0 0.0
      %2421 = vmatprep.subr.mxu0 0.0
      %2422 = vmatpush1.msra.mxu0 0.0
      %2423 = vmatprep.subr.mxu0 0.0
      %2424 = vmatpush1.msra.mxu0 0.0
      %2425 = vmatprep.subr.mxu0 0.0
      %2426 = vmatpush1.msra.mxu0 0.0
      %2427 = vmatprep.subr.mxu0 0.0
      %2428 = vmatpush1.msra.mxu0 0.0
      %2429 = vmatprep.subr.mxu0 0.0
      %2430 = vmatpush1.msra.mxu0 0.0
      %2431 = vmatprep.subr.mxu0 0.0
      %2432 = vmatpush1.msra.mxu0 0.0
      %2433 = vmatprep.subr.mxu0 0.0
      %2434 = vmatpush1.msra.mxu0 0.0
      %2435 = vmatprep.subr.mxu0 0.0
      %2436 = vmatpush1.msra.mxu0 0.0
      %2437 = vmatprep.subr.mxu0 0.0
      %2438 = vmatpush1.msra.mxu0 0.0
      %2439 = vmatprep.subr.mxu0 0.0
      %2440 = vmatpush1.msra.mxu0 0.0
      %2441 = vmatprep.subr.mxu0 0.0
      %2442 = vmatpush1.msra.mxu0 0.0
      %2443 = vmatprep.subr.mxu0 0.0
      %2444 = vmatpush1.msra.mxu0 0.0
      %2445 = vmatprep.subr.mxu0 0.0
      %2446 = vmatpush1.msra.mxu0 0.0
      %2447 = vmatprep.subr.mxu0 0.0
      %2448 = vmatpush1.msra.mxu0 0.0
      %2449 = vmatprep.subr.mxu0 0.0
      %2450 = vmatpush1.msra.mxu0 0.0
      %2451 = vmatprep.subr.mxu0 0.0
      %2452 = vmatpush1.msra.mxu0 0.0
      %2453 = vmatprep.subr.mxu0 0.0
      %2454 = vmatpush1.msra.mxu0 0.0
      %2455 = vmatprep.mubr.f32.mxu0 0.0
      %2456 = vmatmul.mubr.f32.gmra.mrb[0].mxu0 %v2389
      %v2457 = vpop.f32.mrb[0].mxu0
      %v2458 = vadd.f32 0.0, %v2457
      %v2459 = vpop.f32.mrb[0].mxu0
      %2460 = vdwg.mxu0
      %2461 = vrot.lane.b32.xlu0 %v2125, 112
      %v2462 = vpop.permute.xlu0 %2461
      %2463 = vrot.lane.b32.xlu0 %v2125, 80
      %v2464 = vpop.permute.xlu0 %2463
      %v2465 = vsel %vm1135, %v2462, 0
      %v2467 = vsel %vm1135, %v2464, 0
      %2469 = vmatprep.subr.mxu0 0.0
      %2470 = vmatpush1.xpose.msra.mxu0 %v2467
      %2471 = vmatprep.subr.mxu0 0.0
      %2472 = vmatpush1.xpose.msra.mxu0 0.0
      %2473 = vmatprep.subr.mxu0 0.0
      %2474 = vmatpush1.xpose.msra.mxu0 0.0
      %2475 = vmatprep.subr.mxu0 0.0
      %2476 = vmatpush1.xpose.msra.mxu0 0.0
      %2477 = vmatprep.subr.mxu0 0.0
      %2478 = vmatpush1.xpose.msra.mxu0 0.0
      %2479 = vmatprep.subr.mxu0 0.0
      %2480 = vmatpush1.xpose.msra.mxu0 0.0
      %2481 = vmatprep.subr.mxu0 0.0
      %2482 = vmatpush1.xpose.msra.mxu0 0.0
      %2483 = vmatprep.subr.mxu0 0.0
      %2484 = vmatpush1.xpose.msra.mxu0 0.0
      %2485 = vmatprep.subr.mxu0 0.0
      %2486 = vmatpush1.xpose.msra.mxu0 0.0
      %2487 = vmatprep.subr.mxu0 0.0
      %2488 = vmatpush1.xpose.msra.mxu0 0.0
      %2489 = vmatprep.subr.mxu0 0.0
      %2490 = vmatpush1.xpose.msra.mxu0 0.0
      %2491 = vmatprep.subr.mxu0 0.0
      %2492 = vmatpush1.xpose.msra.mxu0 0.0
      %2493 = vmatprep.subr.mxu0 0.0
      %2494 = vmatpush1.xpose.msra.mxu0 0.0
      %2495 = vmatprep.subr.mxu0 0.0
      %2496 = vmatpush1.xpose.msra.mxu0 0.0
      %2497 = vmatprep.subr.mxu0 0.0
      %2498 = vmatpush1.xpose.msra.mxu0 0.0
      %2499 = vmatprep.subr.mxu0 0.0
      %2500 = vmatpush1.xpose.msra.mxu0 0.0
      %2501 = vmatprep.subr.mxu0 0.0
      %2502 = vmatpush1.xpose.msra.mxu0 0.0
      %2503 = vmatprep.subr.mxu0 0.0
      %2504 = vmatpush1.xpose.msra.mxu0 0.0
      %2505 = vmatprep.subr.mxu0 0.0
      %2506 = vmatpush1.xpose.msra.mxu0 0.0
      %2507 = vmatprep.subr.mxu0 0.0
      %2508 = vmatpush1.xpose.msra.mxu0 0.0
      %2509 = vmatprep.subr.mxu0 0.0
      %2510 = vmatpush1.xpose.msra.mxu0 0.0
      %2511 = vmatprep.subr.mxu0 0.0
      %2512 = vmatpush1.xpose.msra.mxu0 0.0
      %2513 = vmatprep.subr.mxu0 0.0
      %2514 = vmatpush1.xpose.msra.mxu0 0.0
      %2515 = vmatprep.subr.mxu0 0.0
      %2516 = vmatpush1.xpose.msra.mxu0 0.0
      %2517 = vmatprep.subr.mxu0 0.0
      %2518 = vmatpush1.xpose.msra.mxu0 0.0
      %2519 = vmatprep.subr.mxu0 0.0
      %2520 = vmatpush1.xpose.msra.mxu0 0.0
      %2521 = vmatprep.subr.mxu0 0.0
      %2522 = vmatpush1.xpose.msra.mxu0 0.0
      %2523 = vmatprep.subr.mxu0 0.0
      %2524 = vmatpush1.xpose.msra.mxu0 0.0
      %2525 = vmatprep.subr.mxu0 0.0
      %2526 = vmatpush1.xpose.msra.mxu0 0.0
      %2527 = vmatprep.subr.mxu0 0.0
      %2528 = vmatpush1.xpose.msra.mxu0 0.0
      %2529 = vmatprep.subr.mxu0 0.0
      %2530 = vmatpush1.xpose.msra.mxu0 0.0
      %2531 = vmatprep.subr.mxu0 0.0
      %2532 = vmatpush1.xpose.msra.mxu0 0.0
      %2533 = vmatprep.mubr.f32.mxu0 0.0
      %2534 = vmatmul.mubr.f32.gmra.mrb[0].mxu0 %v2465
      %v2535 = vpop.f32.mrb[0].mxu0
      %v2536 = vadd.f32 0.0, %v2535
      %v2537 = vpop.f32.mrb[0].mxu0
      %2538 = vdwg.mxu0
      %v2539 = vmul.f32 %v2536, 0.35355338
      %v2540 = vsel %vm1135, %v2539, -inf
      %2541 = vmax.xlane.f32.xlu0 %v2540
      %v2542 = vpop.xlane.xlu0 %2541
      %v2543 = vsub.f32 %v2539, %v2542
      %v2544 = vmul.f32 %v2543, 1.442695
      %v2545 = vpow.pop %v2544
      %v2546 = vsel %vm1135, %v2545, 0.0
      %2547 = vadd.xlane.f32.xlu0 %v2546
      %v2548 = vpop.xlane.xlu0 %2547
      %v2549 = vrcp.pop %v2548
      %v2550 = vmul.f32 %v2545, %v2549
      %2551 = vrot.lane.b32.xlu0 %v2125, 48
      %v2552 = vpop.permute.xlu0 %2551
      %v2555 = vsel %vm1135, %v2550, 0
      %2557 = vmatprep.subr.mxu0 0.0
      %2558 = vmatpush1.msra.mxu0 %v2552
      %2559 = vmatprep.subr.mxu0 0.0
      %2560 = vmatpush1.msra.mxu0 0.0
      %2561 = vmatprep.subr.mxu0 0.0
      %2562 = vmatpush1.msra.mxu0 0.0
      %2563 = vmatprep.subr.mxu0 0.0
      %2564 = vmatpush1.msra.mxu0 0.0
      %2565 = vmatprep.subr.mxu0 0.0
      %2566 = vmatpush1.msra.mxu0 0.0
      %2567 = vmatprep.subr.mxu0 0.0
      %2568 = vmatpush1.msra.mxu0 0.0
      %2569 = vmatprep.subr.mxu0 0.0
      %2570 = vmatpush1.msra.mxu0 0.0
      %2571 = vmatprep.subr.mxu0 0.0
      %2572 = vmatpush1.msra.mxu0 0.0
      %2573 = vmatprep.subr.mxu0 0.0
      %2574 = vmatpush1.msra.mxu0 0.0
      %2575 = vmatprep.subr.mxu0 0.0
      %2576 = vmatpush1.msra.mxu0 0.0
      %2577 = vmatprep.subr.mxu0 0.0
      %2578 = vmatpush1.msra.mxu0 0.0
      %2579 = vmatprep.subr.mxu0 0.0
      %2580 = vmatpush1.msra.mxu0 0.0
      %2581 = vmatprep.subr.mxu0 0.0
      %2582 = vmatpush1.msra.mxu0 0.0
      %2583 = vmatprep.subr.mxu0 0.0
      %2584 = vmatpush1.msra.mxu0 0.0
      %2585 = vmatprep.subr.mxu0 0.0
      %2586 = vmatpush1.msra.mxu0 0.0
      %2587 = vmatprep.subr.mxu0 0.0
      %2588 = vmatpush1.msra.mxu0 0.0
      %2589 = vmatprep.subr.mxu0 0.0
      %2590 = vmatpush1.msra.mxu0 0.0
      %2591 = vmatprep.subr.mxu0 0.0
      %2592 = vmatpush1.msra.mxu0 0.0
      %2593 = vmatprep.subr.mxu0 0.0
      %2594 = vmatpush1.msra.mxu0 0.0
      %2595 = vmatprep.subr.mxu0 0.0
      %2596 = vmatpush1.msra.mxu0 0.0
      %2597 = vmatprep.subr.mxu0 0.0
      %2598 = vmatpush1.msra.mxu0 0.0
      %2599 = vmatprep.subr.mxu0 0.0
      %2600 = vmatpush1.msra.mxu0 0.0
      %2601 = vmatprep.subr.mxu0 0.0
      %2602 = vmatpush1.msra.mxu0 0.0
      %2603 = vmatprep.subr.mxu0 0.0
      %2604 = vmatpush1.msra.mxu0 0.0
      %2605 = vmatprep.subr.mxu0 0.0
      %2606 = vmatpush1.msra.mxu0 0.0
      %2607 = vmatprep.subr.mxu0 0.0
      %2608 = vmatpush1.msra.mxu0 0.0
      %2609 = vmatprep.subr.mxu0 0.0
      %2610 = vmatpush1.msra.mxu0 0.0
      %2611 = vmatprep.subr.mxu0 0.0
      %2612 = vmatpush1.msra.mxu0 0.0
      %2613 = vmatprep.subr.mxu0 0.0
      %2614 = vmatpush1.msra.mxu0 0.0
      %2615 = vmatprep.subr.mxu0 0.0
      %2616 = vmatpush1.msra.mxu0 0.0
      %2617 = vmatprep.subr.mxu0 0.0
      %2618 = vmatpush1.msra.mxu0 0.0
      %2619 = vmatprep.subr.mxu0 0.0
      %2620 = vmatpush1.msra.mxu0 0.0
      %2621 = vmatprep.mubr.f32.mxu0 0.0
      %2622 = vmatmul.mubr.f32.gmra.mrb[0].mxu0 %v2555
      %v2623 = vpop.f32.mrb[0].mxu0
      %v2624 = vadd.f32 0.0, %v2623
      %v2625 = vpop.f32.mrb[0].mxu0
      %2626 = vdwg.mxu0
      %2627 = vrot.lane.b32.xlu0 %v2125, 104
      %v2628 = vpop.permute.xlu0 %2627
      %2629 = vrot.lane.b32.xlu0 %v2125, 72
      %v2630 = vpop.permute.xlu0 %2629
      %v2631 = vsel %vm1135, %v2628, 0
      %v2633 = vsel %vm1135, %v2630, 0
      %2635 = vmatprep.subr.mxu0 0.0
      %2636 = vmatpush1.xpose.msra.mxu0 %v2633
      %2637 = vmatprep.subr.mxu0 0.0
      %2638 = vmatpush1.xpose.msra.mxu0 0.0
      %2639 = vmatprep.subr.mxu0 0.0
      %2640 = vmatpush1.xpose.msra.mxu0 0.0
      %2641 = vmatprep.subr.mxu0 0.0
      %2642 = vmatpush1.xpose.msra.mxu0 0.0
      %2643 = vmatprep.subr.mxu0 0.0
      %2644 = vmatpush1.xpose.msra.mxu0 0.0
      %2645 = vmatprep.subr.mxu0 0.0
      %2646 = vmatpush1.xpose.msra.mxu0 0.0
      %2647 = vmatprep.subr.mxu0 0.0
      %2648 = vmatpush1.xpose.msra.mxu0 0.0
      %2649 = vmatprep.subr.mxu0 0.0
      %2650 = vmatpush1.xpose.msra.mxu0 0.0
      %2651 = vmatprep.subr.mxu0 0.0
      %2652 = vmatpush1.xpose.msra.mxu0 0.0
      %2653 = vmatprep.subr.mxu0 0.0
      %2654 = vmatpush1.xpose.msra.mxu0 0.0
      %2655 = vmatprep.subr.mxu0 0.0
      %2656 = vmatpush1.xpose.msra.mxu0 0.0
      %2657 = vmatprep.subr.mxu0 0.0
      %2658 = vmatpush1.xpose.msra.mxu0 0.0
      %2659 = vmatprep.subr.mxu0 0.0
      %2660 = vmatpush1.xpose.msra.mxu0 0.0
      %2661 = vmatprep.subr.mxu0 0.0
      %2662 = vmatpush1.xpose.msra.mxu0 0.0
      %2663 = vmatprep.subr.mxu0 0.0
      %2664 = vmatpush1.xpose.msra.mxu0 0.0
      %2665 = vmatprep.subr.mxu0 0.0
      %2666 = vmatpush1.xpose.msra.mxu0 0.0
      %2667 = vmatprep.subr.mxu0 0.0
      %2668 = vmatpush1.xpose.msra.mxu0 0.0
      %2669 = vmatprep.subr.mxu0 0.0
      %2670 = vmatpush1.xpose.msra.mxu0 0.0
      %2671 = vmatprep.subr.mxu0 0.0
      %2672 = vmatpush1.xpose.msra.mxu0 0.0
      %2673 = vmatprep.subr.mxu0 0.0
      %2674 = vmatpush1.xpose.msra.mxu0 0.0
      %2675 = vmatprep.subr.mxu0 0.0
      %2676 = vmatpush1.xpose.msra.mxu0 0.0
      %2677 = vmatprep.subr.mxu0 0.0
      %2678 = vmatpush1.xpose.msra.mxu0 0.0
      %2679 = vmatprep.subr.mxu0 0.0
      %2680 = vmatpush1.xpose.msra.mxu0 0.0
      %2681 = vmatprep.subr.mxu0 0.0
      %2682 = vmatpush1.xpose.msra.mxu0 0.0
      %2683 = vmatprep.subr.mxu0 0.0
      %2684 = vmatpush1.xpose.msra.mxu0 0.0
      %2685 = vmatprep.subr.mxu0 0.0
      %2686 = vmatpush1.xpose.msra.mxu0 0.0
      %2687 = vmatprep.subr.mxu0 0.0
      %2688 = vmatpush1.xpose.msra.mxu0 0.0
      %2689 = vmatprep.subr.mxu0 0.0
      %2690 = vmatpush1.xpose.msra.mxu0 0.0
      %2691 = vmatprep.subr.mxu0 0.0
      %2692 = vmatpush1.xpose.msra.mxu0 0.0
      %2693 = vmatprep.subr.mxu0 0.0
      %2694 = vmatpush1.xpose.msra.mxu0 0.0
      %2695 = vmatprep.subr.mxu0 0.0
      %2696 = vmatpush1.xpose.msra.mxu0 0.0
      %2697 = vmatprep.subr.mxu0 0.0
      %2698 = vmatpush1.xpose.msra.mxu0 0.0
      %2699 = vmatprep.mubr.f32.mxu0 0.0
      %2700 = vmatmul.mubr.f32.gmra.mrb[0].mxu0 %v2631
      %v2701 = vpop.f32.mrb[0].mxu0
      %v2702 = vadd.f32 0.0, %v2701
      %v2703 = vpop.f32.mrb[0].mxu0
      %2704 = vdwg.mxu0
      %v2705 = vmul.f32 %v2702, 0.35355338
      %v2706 = vsel %vm1135, %v2705, -inf
      %2707 = vmax.xlane.f32.xlu0 %v2706
      %v2708 = vpop.xlane.xlu0 %2707
      %v2709 = vsub.f32 %v2705, %v2708
      %v2710 = vmul.f32 %v2709, 1.442695
      %v2711 = vpow.pop %v2710
      %v2712 = vsel %vm1135, %v2711, 0.0
      %2713 = vadd.xlane.f32.xlu0 %v2712
      %v2714 = vpop.xlane.xlu0 %2713
      %v2715 = vrcp.pop %v2714
      %v2716 = vmul.f32 %v2711, %v2715
      %2717 = vrot.lane.b32.xlu0 %v2125, 40
      %v2718 = vpop.permute.xlu0 %2717
      %v2721 = vsel %vm1135, %v2716, 0
      %2723 = vmatprep.subr.mxu0 0.0
      %2724 = vmatpush1.msra.mxu0 %v2718
      %2725 = vmatprep.subr.mxu0 0.0
      %2726 = vmatpush1.msra.mxu0 0.0
      %2727 = vmatprep.subr.mxu0 0.0
      %2728 = vmatpush1.msra.mxu0 0.0
      %2729 = vmatprep.subr.mxu0 0.0
      %2730 = vmatpush1.msra.mxu0 0.0
      %2731 = vmatprep.subr.mxu0 0.0
      %2732 = vmatpush1.msra.mxu0 0.0
      %2733 = vmatprep.subr.mxu0 0.0
      %2734 = vmatpush1.msra.mxu0 0.0
      %2735 = vmatprep.subr.mxu0 0.0
      %2736 = vmatpush1.msra.mxu0 0.0
      %2737 = vmatprep.subr.mxu0 0.0
      %2738 = vmatpush1.msra.mxu0 0.0
      %2739 = vmatprep.subr.mxu0 0.0
      %2740 = vmatpush1.msra.mxu0 0.0
      %2741 = vmatprep.subr.mxu0 0.0
      %2742 = vmatpush1.msra.mxu0 0.0
      %2743 = vmatprep.subr.mxu0 0.0
      %2744 = vmatpush1.msra.mxu0 0.0
      %2745 = vmatprep.subr.mxu0 0.0
      %2746 = vmatpush1.msra.mxu0 0.0
      %2747 = vmatprep.subr.mxu0 0.0
      %2748 = vmatpush1.msra.mxu0 0.0
      %2749 = vmatprep.subr.mxu0 0.0
      %2750 = vmatpush1.msra.mxu0 0.0
      %2751 = vmatprep.subr.mxu0 0.0
      %2752 = vmatpush1.msra.mxu0 0.0
      %2753 = vmatprep.subr.mxu0 0.0
      %2754 = vmatpush1.msra.mxu0 0.0
      %2755 = vmatprep.subr.mxu0 0.0
      %2756 = vmatpush1.msra.mxu0 0.0
      %2757 = vmatprep.subr.mxu0 0.0
      %2758 = vmatpush1.msra.mxu0 0.0
      %2759 = vmatprep.subr.mxu0 0.0
      %2760 = vmatpush1.msra.mxu0 0.0
      %2761 = vmatprep.subr.mxu0 0.0
      %2762 = vmatpush1.msra.mxu0 0.0
      %2763 = vmatprep.subr.mxu0 0.0
      %2764 = vmatpush1.msra.mxu0 0.0
      %2765 = vmatprep.subr.mxu0 0.0
      %2766 = vmatpush1.msra.mxu0 0.0
      %2767 = vmatprep.subr.mxu0 0.0
      %2768 = vmatpush1.msra.mxu0 0.0
      %2769 = vmatprep.subr.mxu0 0.0
      %2770 = vmatpush1.msra.mxu0 0.0
      %2771 = vmatprep.subr.mxu0 0.0
      %2772 = vmatpush1.msra.mxu0 0.0
      %2773 = vmatprep.subr.mxu0 0.0
      %2774 = vmatpush1.msra.mxu0 0.0
      %2775 = vmatprep.subr.mxu0 0.0
      %2776 = vmatpush1.msra.mxu0 0.0
      %2777 = vmatprep.subr.mxu0 0.0
      %2778 = vmatpush1.msra.mxu0 0.0
      %2779 = vmatprep.subr.mxu0 0.0
      %2780 = vmatpush1.msra.mxu0 0.0
      %2781 = vmatprep.subr.mxu0 0.0
      %2782 = vmatpush1.msra.mxu0 0.0
      %2783 = vmatprep.subr.mxu0 0.0
      %2784 = vmatpush1.msra.mxu0 0.0
      %2785 = vmatprep.subr.mxu0 0.0
      %2786 = vmatpush1.msra.mxu0 0.0
      %2787 = vmatprep.mubr.f32.mxu0 0.0
      %2788 = vmatmul.mubr.f32.gmra.mrb[0].mxu0 %v2721
      %v2789 = vpop.f32.mrb[0].mxu0
      %v2790 = vadd.f32 0.0, %v2789
      %v2791 = vpop.f32.mrb[0].mxu0
      %2792 = vdwg.mxu0
      %2794 = vrot.lane.b32.xlu0 %v2458, 8
      %v2795 = vpop.permute.xlu0 %2794
      %2798 = vrot.lane.b32.xlu0 %v2624, 16
      %v2799 = vpop.permute.xlu0 %2798
      %2802 = vrot.lane.b32.xlu0 %v2790, 24
      %v2803 = vpop.permute.xlu0 %2802
      %v2805 = vsel %vm1135, %v2292, %v2795
      %v2806 = vsel %vm1809, %v2805, %v2799
      %v2807 = vsel %vm994, %v2806, %v2803
      %s2808 = scalar_lea.vmem %s19, 32
      %v2809 = vld [vmem:[%s2808] sm:$0xff]
      %v2810 = vld [vmem:[%s2808 + $0x8] sm:$0xff]
      %v2811 = vld [vmem:[%s2808 + $0x10] sm:$0xff]
      %v2812 = vld [vmem:[%s2808 + $0x18] sm:$0xff]
      %v2813 = vpack.c.bf16 %v2807, %v2807
      %v2814 = vpack.c.bf16 %v2810, %v2809
      %v2815 = vpack.c.bf16 %v2812, %v2811
      %v2817 = vsel %vm1046, %v2813, 0
      %2819 = vmatprep.subr.bf16.mxu0 0
      %2820 = vmatpush1.bf16.msra.mxu0 %v2814
      %2821 = vmatprep.subr.bf16.mxu0 0
      %2822 = vmatpush1.bf16.msra.mxu0 %v2815
      %2823 = vmatprep.subr.bf16.mxu0 0
      %2824 = vmatpush1.bf16.msra.mxu0 0
      %2825 = vmatprep.subr.bf16.mxu0 0
      %2826 = vmatpush1.bf16.msra.mxu0 0
      %2827 = vmatprep.subr.bf16.mxu0 0
      %2828 = vmatpush1.bf16.msra.mxu0 0
      %2829 = vmatprep.subr.bf16.mxu0 0
      %2830 = vmatpush1.bf16.msra.mxu0 0
      %2831 = vmatprep.subr.bf16.mxu0 0
      %2832 = vmatpush1.bf16.msra.mxu0 0
      %2833 = vmatprep.subr.bf16.mxu0 0
      %2834 = vmatpush1.bf16.msra.mxu0 0
      %2835 = vmatprep.subr.bf16.mxu0 0
      %2836 = vmatpush1.bf16.msra.mxu0 0
      %2837 = vmatprep.subr.bf16.mxu0 0
      %2838 = vmatpush1.bf16.msra.mxu0 0
      %2839 = vmatprep.subr.bf16.mxu0 0
      %2840 = vmatpush1.bf16.msra.mxu0 0
      %2841 = vmatprep.subr.bf16.mxu0 0
      %2842 = vmatpush1.bf16.msra.mxu0 0
      %2843 = vmatprep.subr.bf16.mxu0 0
      %2844 = vmatpush1.bf16.msra.mxu0 0
      %2845 = vmatprep.subr.bf16.mxu0 0
      %2846 = vmatpush1.bf16.msra.mxu0 0
      %2847 = vmatprep.subr.bf16.mxu0 0
      %2848 = vmatpush1.bf16.msra.mxu0 0
      %2849 = vmatprep.subr.bf16.mxu0 0
      %2850 = vmatpush1.bf16.msra.mxu0 0
      %2851 = vmatprep.mubr.bf16.mxu0 0
      %2852 = vmatmul.mubr.bf16.gmra.mrb[0].mxu0 %v2817
      %v2853 = vpop.f32.mrb[0].mxu0
      %v2854 = vadd.f32 0.0, %v2853
      %v2855 = vpop.f32.mrb[0].mxu0
      %v2856 = vpop.f32.mrb[0].mxu0
      %v2857 = vpop.f32.mrb[0].mxu0
      %2858 = vdwg.mxu0
      %v2859 = vadd.f32 %v2039, %v2854
      %s2860 = scalar_lea.vmem %s21, 1
      %v2861 = vld [vmem:[%s2860] sm:$0x1]
      %v2863 = vlaneseq
      %v2864 = vshrl.u32 %v2863, 7
      %v2865 = vsub.s32 0, %v2864
      %v2866 = vrot.slane %v2861, %v2865
      %v2868 = vadd.f32 %v2859, %v2866
      %s2869 = scalar_lea.vmem %s23, 1
      %v2870 = vld [vmem:[%s2869] sm:$0x1]
      %s2871 = scalar_lea.vmem %s25, 1
      %v2872 = vld [vmem:[%s2871] sm:$0x1]
      %v2873 = vsel %vm1046, %v2868, 0.0
      %2874 = vadd.xlane.f32.xlu0 %v2873
      %v2875 = vpop.xlane.xlu0 %2874
      %v2876 = vmul.f32 %v2875, %v1050
      %v2877 = vsub.f32 %v2868, %v2876
      %v2878 = vmul.f32 %v2877, %v2877
      %v2879 = vsel %vm1046, %v2878, 0.0
      %2880 = vadd.xlane.f32.xlu0 %v2879
      %v2881 = vpop.xlane.xlu0 %2880
      %v2882 = vmul.f32 %v2881, %v1050
      %v2883 = vadd.f32 %v2882, 1e-05
      %v2884 = vrsqrt.pop %v2883
      %v2885 = vmul.f32 %v2877, %v2884
      %v2887 = vlaneseq
      %v2888 = vshrl.u32 %v2887, 7
      %v2889 = vsub.s32 0, %v2888
      %v2890 = vrot.slane %v2870, %v2889
      %v2892 = vmul.f32 %v2885, %v2890
      %v2894 = vlaneseq
      %v2895 = vshrl.u32 %v2894, 7
      %v2896 = vsub.s32 0, %v2895
      %v2897 = vrot.slane %v2872, %v2896
      %v2899 = vadd.f32 %v2892, %v2897
      %s2900 = scalar_lea.vmem %s27, 32
      %v2901 = vld [vmem:[%s2900] sm:$0xff]
      %v2902 = vld [vmem:[%s2900 + $0x8] sm:$0xff]
      %v2903 = vld [vmem:[%s2900 + $0x10] sm:$0xff]
      %v2904 = vld [vmem:[%s2900 + $0x18] sm:$0xff]
      %v2905 = vpack.c.bf16 %v2899, %v2899
      %v2906 = vpack.c.bf16 %v2902, %v2901
      %v2907 = vpack.c.bf16 %v2904, %v2903
      %s2908 = scalar_lea.vmem %s29, 1
      %v2909 = vld [vmem:[%s2908] sm:$0x1]
      %v2911 = vlaneseq
      %v2912 = vshrl.u32 %v2911, 7
      %v2913 = vsub.s32 0, %v2912
      %v2914 = vrot.slane %v2909, %v2913
      %v2917 = vsel %vm1046, %v2905, 0
      %2919 = vmatprep.subr.bf16.mxu0 0
      %2920 = vmatpush1.bf16.msra.mxu0 %v2906
      %2921 = vmatprep.subr.bf16.mxu0 0
      %2922 = vmatpush1.bf16.msra.mxu0 %v2907
      %2923 = vmatprep.subr.bf16.mxu0 0
      %2924 = vmatpush1.bf16.msra.mxu0 0
      %2925 = vmatprep.subr.bf16.mxu0 0
      %2926 = vmatpush1.bf16.msra.mxu0 0
      %2927 = vmatprep.subr.bf16.mxu0 0
      %2928 = vmatpush1.bf16.msra.mxu0 0
      %2929 = vmatprep.subr.bf16.mxu0 0
      %2930 = vmatpush1.bf16.msra.mxu0 0
      %2931 = vmatprep.subr.bf16.mxu0 0
      %2932 = vmatpush1.bf16.msra.mxu0 0
      %2933 = vmatprep.subr.bf16.mxu0 0
      %2934 = vmatpush1.bf16.msra.mxu0 0
      %2935 = vmatprep.subr.bf16.mxu0 0
      %2936 = vmatpush1.bf16.msra.mxu0 0
      %2937 = vmatprep.subr.bf16.mxu0 0
      %2938 = vmatpush1.bf16.msra.mxu0 0
      %2939 = vmatprep.subr.bf16.mxu0 0
      %2940 = vmatpush1.bf16.msra.mxu0 0
      %2941 = vmatprep.subr.bf16.mxu0 0
      %2942 = vmatpush1.bf16.msra.mxu0 0
      %2943 = vmatprep.subr.bf16.mxu0 0
      %2944 = vmatpush1.bf16.msra.mxu0 0
      %2945 = vmatprep.subr.bf16.mxu0 0
      %2946 = vmatpush1.bf16.msra.mxu0 0
      %2947 = vmatprep.subr.bf16.mxu0 0
      %2948 = vmatpush1.bf16.msra.mxu0 0
      %2949 = vmatprep.subr.bf16.mxu0 0
      %2950 = vmatpush1.bf16.msra.mxu0 0
      %2951 = vmatprep.mubr.bf16.mxu0 0
      %2952 = vmatmul.mubr.bf16.gmra.mrb[0].mxu0 %v2917
      %v2953 = vpop.f32.mrb[0].mxu0
      %v2954 = vadd.f32 %v2914, %v2953
      %v2955 = vpop.f32.mrb[0].mxu0
      %v2956 = vpop.f32.mrb[0].mxu0
      %v2957 = vpop.f32.mrb[0].mxu0
      %2958 = vdwg.mxu0
      %v2959 = vmul.f32 %v2954, %v2954
      %v2960 = vmul.f32 %v2954, %v2959
      %v2961 = vmul.f32 %v2960, 0.044715
      %v2962 = vadd.f32 %v2954, %v2961
      %v2963 = vmul.f32 %v2962, 0.7978846
      %v2964 = vtanh.pop %v2963
      %v2965 = vadd.f32 %v2964, 1.0
      %v2966 = vmul.f32 %v2965, 0.5
      %v2967 = vmul.f32 %v2954, %v2966
      %s2968 = scalar_lea.vmem %s31, 128
      %v2969 = vld [vmem:[%s2968] sm:$0xff]
      %v2970 = vld [vmem:[%s2968 + $0x8] sm:$0xff]
      %v2971 = vld [vmem:[%s2968 + $0x10] sm:$0xff]
      %v2972 = vld [vmem:[%s2968 + $0x18] sm:$0xff]
      %v2973 = vld [vmem:[%s2968 + $0x20] sm:$0xff]
      %v2974 = vld [vmem:[%s2968 + $0x28] sm:$0xff]
      %v2975 = vld [vmem:[%s2968 + $0x30] sm:$0xff]
      %v2976 = vld [vmem:[%s2968 + $0x38] sm:$0xff]
      %v2977 = vld [vmem:[%s2968 + $0x40] sm:$0xff]
      %v2978 = vld [vmem:[%s2968 + $0x48] sm:$0xff]
      %v2979 = vld [vmem:[%s2968 + $0x50] sm:$0xff]
      %v2980 = vld [vmem:[%s2968 + $0x58] sm:$0xff]
      %v2981 = vld [vmem:[%s2968 + $0x60] sm:$0xff]
      %v2982 = vld [vmem:[%s2968 + $0x68] sm:$0xff]
      %v2983 = vld [vmem:[%s2968 + $0x70] sm:$0xff]
      %v2984 = vld [vmem:[%s2968 + $0x78] sm:$0xff]
      %v2985 = vpack.c.bf16 %v2967, %v2967
      %v2986 = vpack.c.bf16 %v2970, %v2969
      %v2987 = vpack.c.bf16 %v2972, %v2971
      %v2988 = vpack.c.bf16 %v2974, %v2973
      %v2989 = vpack.c.bf16 %v2976, %v2975
      %v2990 = vpack.c.bf16 %v2978, %v2977
      %v2991 = vpack.c.bf16 %v2980, %v2979
      %v2992 = vpack.c.bf16 %v2982, %v2981
      %v2993 = vpack.c.bf16 %v2984, %v2983
      %2994 = vmatprep.subr.bf16.mxu0 0
      %2995 = vmatpush1.bf16.msra.mxu0 %v2986
      %2996 = vmatprep.subr.bf16.mxu0 0
      %2997 = vmatpush1.bf16.msra.mxu0 %v2987
      %2998 = vmatprep.subr.bf16.mxu0 0
      %2999 = vmatpush1.bf16.msra.mxu0 %v2988
      %3000 = vmatprep.subr.bf16.mxu0 0
      %3001 = vmatpush1.bf16.msra.mxu0 %v2989
      %3002 = vmatprep.subr.bf16.mxu0 0
      %3003 = vmatpush1.bf16.msra.mxu0 %v2990
      %3004 = vmatprep.subr.bf16.mxu0 0
      %3005 = vmatpush1.bf16.msra.mxu0 %v2991
      %3006 = vmatprep.subr.bf16.mxu0 0
      %3007 = vmatpush1.bf16.msra.mxu0 %v2992
      %3008 = vmatprep.subr.bf16.mxu0 0
      %3009 = vmatpush1.bf16.msra.mxu0 %v2993
      %3010 = vmatprep.subr.bf16.mxu0 0
      %3011 = vmatpush1.bf16.msra.mxu0 0
      %3012 = vmatprep.subr.bf16.mxu0 0
      %3013 = vmatpush1.bf16.msra.mxu0 0
      %3014 = vmatprep.subr.bf16.mxu0 0
      %3015 = vmatpush1.bf16.msra.mxu0 0
      %3016 = vmatprep.subr.bf16.mxu0 0
      %3017 = vmatpush1.bf16.msra.mxu0 0
      %3018 = vmatprep.subr.bf16.mxu0 0
      %3019 = vmatpush1.bf16.msra.mxu0 0
      %3020 = vmatprep.subr.bf16.mxu0 0
      %3021 = vmatpush1.bf16.msra.mxu0 0
      %3022 = vmatprep.subr.bf16.mxu0 0
      %3023 = vmatpush1.bf16.msra.mxu0 0
      %3024 = vmatprep.subr.bf16.mxu0 0
      %3025 = vmatpush1.bf16.msra.mxu0 0
      %3026 = vmatprep.mubr.bf16.mxu0 0
      %3027 = vmatmul.mubr.bf16.gmra.mrb[0].mxu0 %v2985
      %v3028 = vpop.f32.mrb[0].mxu0
      %v3029 = vadd.f32 0.0, %v3028
      %v3030 = vpop.f32.mrb[0].mxu0
      %v3031 = vpop.f32.mrb[0].mxu0
      %v3032 = vpop.f32.mrb[0].mxu0
      %3033 = vdwg.mxu0
      %v3034 = vadd.f32 %v2868, %v3029
      %s3035 = scalar_lea.vmem %s33, 1
      %v3036 = vld [vmem:[%s3035] sm:$0x1]
      %v3038 = vlaneseq
      %v3039 = vshrl.u32 %v3038, 7
      %v3040 = vsub.s32 0, %v3039
      %v3041 = vrot.slane %v3036, %v3040
      %v3043 = vadd.f32 %v3034, %v3041
      %v3044 = vld [vmem:[%s49] sm:$0x1]
      %v3045 = vld [vmem:[%s51] sm:$0x1]
      %v3046 = vsel %vm1046, %v3043, 0.0
      %3047 = vadd.xlane.f32.xlu0 %v3046
      %v3048 = vpop.xlane.xlu0 %3047
      %v3049 = vmul.f32 %v3048, %v1050
      %v3050 = vsub.f32 %v3043, %v3049
      %v3051 = vmul.f32 %v3050, %v3050
      %v3052 = vsel %vm1046, %v3051, 0.0
      %3053 = vadd.xlane.f32.xlu0 %v3052
      %v3054 = vpop.xlane.xlu0 %3053
      %v3055 = vmul.f32 %v3054, %v1050
      %v3056 = vadd.f32 %v3055, 1e-05
      %v3057 = vrsqrt.pop %v3056
      %v3058 = vmul.f32 %v3050, %v3057
      %v3060 = vlaneseq
      %v3061 = vshrl.u32 %v3060, 7
      %v3062 = vsub.s32 0, %v3061
      %v3063 = vrot.slane %v3044, %v3062
      %v3065 = vmul.f32 %v3058, %v3063
      %v3067 = vlaneseq
      %v3068 = vshrl.u32 %v3067, 7
      %v3069 = vsub.s32 0, %v3068
      %v3070 = vrot.slane %v3045, %v3069
      %v3072 = vadd.f32 %v3065, %v3070
      %v3073 = vld [vmem:[%s53] sm:$0x1]
      %v3075 = vlaneseq
      %v3076 = vshrl.u32 %v3075, 7
      %v3077 = vsub.s32 0, %v3076
      %v3078 = vrot.slane %v3073, %v3077
      %v3080 = vmul.f32 %v3072, %v3078
      %v3081 = vsel %vm1046, %v3080, 0.0
      %3082 = vadd.xlane.f32.xlu0 %v3081
      %v3083 = vpop.xlane.xlu0 %3082
      %v3084 = vld [vmem:[%s55] sm:$0x1]
      %v3086 = vlaneseq
      %v3087 = vshrl.u32 %v3086, 7
      %v3088 = vsub.s32 0, %v3087
      %v3089 = vrot.slane %v3084, %v3088
      %v3091 = vadd.f32 %v3083, %v3089
      %vm3092 = vcmask 7168
      %3093 = vst.msk [vmem:[%s974] sm:$0xff] %vm3092, %v3091
      %v3094 = vld [vmem:[%s967] sm:$0xff]
      %v3095 = vadd.f32 %v3043, %v3094
      %v3096 = vld [vmem:[%s35] sm:$0x7]
      %v3098 = vrot.slane %v3095, 7
      %vm3100 = vcmask 1040384
      %v3101 = vsel %vm3100, 0.0, %v3098
      %v3102 = vrot.slane %v3095, 1
      %vm3104 = vcmask 1046528
      %v3105 = vsel %vm3104, %v3102, 0.0
      %v3106 = vlaneseq
      %v3107 = vshrl.u32 %v3106, 7
      %v3108 = vsub.s32 0, %v3107
      %v3109 = vrot.slane %v3096, %v3108
      %v3110 = vmul.f32 %v3101, %v3109
      %v3111 = vlaneseq
      %v3112 = vshrl.u32 %v3111, 7
      %v3113 = vsub.s32 1, %v3112
      %v3114 = vrot.slane %v3096, %v3113
      %v3115 = vmul.f32 %v3095, %v3114
      %v3116 = vadd.f32 %v3110, %v3115
      %v3117 = vlaneseq
      %v3118 = vshrl.u32 %v3117, 7
      %v3119 = vsub.s32 2, %v3118
      %v3120 = vrot.slane %v3096, %v3119
      %v3121 = vmul.f32 %v3105, %v3120
      %v3122 = vadd.f32 %v3116, %v3121
      %v3123 = vld [vmem:[%s37] sm:$0x1]
      %v3125 = vlaneseq
      %v3126 = vshrl.u32 %v3125, 7
      %v3127 = vsub.s32 0, %v3126
      %v3128 = vrot.slane %v3123, %v3127
      %v3130 = vadd.f32 %v3122, %v3128
      %v3131 = vld [vmem:[%s39] sm:$0xff]
      %v3132 = vld [vmem:[%s39 + $0x8] sm:$0xff]
      %v3133 = vld [vmem:[%s39 + $0x10] sm:$0xff]
      %v3134 = vld [vmem:[%s39 + $0x18] sm:$0xff]
      %v3135 = vpack.c.bf16 %v3130, %v3130
      %v3136 = vpack.c.bf16 %v3132, %v3131
      %v3137 = vpack.c.bf16 %v3134, %v3133
      %v3138 = vld [vmem:[%s41] sm:$0x1]
      %v3140 = vlaneseq
      %v3141 = vshrl.u32 %v3140, 7
      %v3142 = vsub.s32 0, %v3141
      %v3143 = vrot.slane %v3138, %v3142
      %v3146 = vsel %vm1046, %v3135, 0
      %3148 = vmatprep.subr.bf16.mxu0 0
      %3149 = vmatpush1.bf16.msra.mxu0 %v3136
      %3150 = vmatprep.subr.bf16.mxu0 0
      %3151 = vmatpush1.bf16.msra.mxu0 %v3137
      %3152 = vmatprep.subr.bf16.mxu0 0
      %3153 = vmatpush1.bf16.msra.mxu0 0
      %3154 = vmatprep.subr.bf16.mxu0 0
      %3155 = vmatpush1.bf16.msra.mxu0 0
      %3156 = vmatprep.subr.bf16.mxu0 0
      %3157 = vmatpush1.bf16.msra.mxu0 0
      %3158 = vmatprep.subr.bf16.mxu0 0
      %3159 = vmatpush1.bf16.msra.mxu0 0
      %3160 = vmatprep.subr.bf16.mxu0 0
      %3161 = vmatpush1.bf16.msra.mxu0 0
      %3162 = vmatprep.subr.bf16.mxu0 0
      %3163 = vmatpush1.bf16.msra.mxu0 0
      %3164 = vmatprep.subr.bf16.mxu0 0
      %3165 = vmatpush1.bf16.msra.mxu0 0
      %3166 = vmatprep.subr.bf16.mxu0 0
      %3167 = vmatpush1.bf16.msra.mxu0 0
      %3168 = vmatprep.subr.bf16.mxu0 0
      %3169 = vmatpush1.bf16.msra.mxu0 0
      %3170 = vmatprep.subr.bf16.mxu0 0
      %3171 = vmatpush1.bf16.msra.mxu0 0
      %3172 = vmatprep.subr.bf16.mxu0 0
      %3173 = vmatpush1.bf16.msra.mxu0 0
      %3174 = vmatprep.subr.bf16.mxu0 0
      %3175 = vmatpush1.bf16.msra.mxu0 0
      %3176 = vmatprep.subr.bf16.mxu0 0
      %3177 = vmatpush1.bf16.msra.mxu0 0
      %3178 = vmatprep.subr.bf16.mxu0 0
      %3179 = vmatpush1.bf16.msra.mxu0 0
      %3180 = vmatprep.mubr.bf16.mxu0 0
      %3181 = vmatmul.mubr.bf16.gmra.mrb[0].mxu0 %v3146
      %v3182 = vpop.f32.mrb[0].mxu0
      %v3183 = vadd.f32 %v3143, %v3182
      %v3184 = vpop.f32.mrb[0].mxu0
      %v3185 = vpop.f32.mrb[0].mxu0
      %v3186 = vpop.f32.mrb[0].mxu0
      %3187 = vdwg.mxu0
      %s3188 = scalar_lea.vmem %s11, 2
      %v3189 = vld [vmem:[%s3188] sm:$0x1]
      %s3190 = scalar_lea.vmem %s13, 2
      %v3191 = vld [vmem:[%s3190] sm:$0x1]
      %v3192 = vsel %vm1046, %v3183, 0.0
      %3193 = vadd.xlane.f32.xlu0 %v3192
      %v3194 = vpop.xlane.xlu0 %3193
      %v3195 = vmul.f32 %v3194, %v1050
      %v3196 = vsub.f32 %v3183, %v3195
      %v3197 = vmul.f32 %v3196, %v3196
      %v3198 = vsel %vm1046, %v3197, 0.0
      %3199 = vadd.xlane.f32.xlu0 %v3198
      %v3200 = vpop.xlane.xlu0 %3199
      %v3201 = vmul.f32 %v3200, %v1050
      %v3202 = vadd.f32 %v3201, 1e-05
      %v3203 = vrsqrt.pop %v3202
      %v3204 = vmul.f32 %v3196, %v3203
      %v3206 = vlaneseq
      %v3207 = vshrl.u32 %v3206, 7
      %v3208 = vsub.s32 0, %v3207
      %v3209 = vrot.slane %v3189, %v3208
      %v3211 = vmul.f32 %v3204, %v3209
      %v3213 = vlaneseq
      %v3214 = vshrl.u32 %v3213, 7
      %v3215 = vsub.s32 0, %v3214
      %v3216 = vrot.slane %v3191, %v3215
      %v3218 = vadd.f32 %v3211, %v3216
      %s3219 = scalar_lea.vmem %s15, 64
      %v3220 = vld [vmem:[%s3219] sm:$0xff]
      %v3221 = vld [vmem:[%s3219 + $0x8] sm:$0xff]
      %v3222 = vld [vmem:[%s3219 + $0x10] sm:$0xff]
      %v3223 = vld [vmem:[%s3219 + $0x18] sm:$0xff]
      %v3224 = vpack.c.bf16 %v3218, %v3218
      %v3225 = vpack.c.bf16 %v3221, %v3220
      %v3226 = vpack.c.bf16 %v3223, %v3222
      %s3227 = scalar_lea.vmem %s17, 2
      %v3228 = vld [vmem:[%s3227] sm:$0x1]
      %v3230 = vlaneseq
      %v3231 = vshrl.u32 %v3230, 7
      %v3232 = vsub.s32 0, %v3231
      %v3233 = vrot.slane %v3228, %v3232
      %v3236 = vsel %vm1046, %v3224, 0
      %3238 = vmatprep.subr.bf16.mxu0 0
      %3239 = vmatpush1.bf16.msra.mxu0 %v3225
      %3240 = vmatprep.subr.bf16.mxu0 0
      %3241 = vmatpush1.bf16.msra.mxu0 %v3226
      %3242 = vmatprep.subr.bf16.mxu0 0
      %3243 = vmatpush1.bf16.msra.mxu0 0
      %3244 = vmatprep.subr.bf16.mxu0 0
      %3245 = vmatpush1.bf16.msra.mxu0 0
      %3246 = vmatprep.subr.bf16.mxu0 0
      %3247 = vmatpush1.bf16.msra.mxu0 0
      %3248 = vmatprep.subr.bf16.mxu0 0
      %3249 = vmatpush1.bf16.msra.mxu0 0
      %3250 = vmatprep.subr.bf16.mxu0 0
      %3251 = vmatpush1.bf16.msra.mxu0 0
      %3252 = vmatprep.subr.bf16.mxu0 0
      %3253 = vmatpush1.bf16.msra.mxu0 0
      %3254 = vmatprep.subr.bf16.mxu0 0
      %3255 = vmatpush1.bf16.msra.mxu0 0
      %3256 = vmatprep.subr.bf16.mxu0 0
      %3257 = vmatpush1.bf16.msra.mxu0 0
      %3258 = vmatprep.subr.bf16.mxu0 0
      %3259 = vmatpush1.bf16.msra.mxu0 0
      %3260 = vmatprep.subr.bf16.mxu0 0
      %3261 = vmatpush1.bf16.msra.mxu0 0
      %3262 = vmatprep.subr.bf16.mxu0 0
      %3263 = vmatpush1.bf16.msra.mxu0 0
      %3264 = vmatprep.subr.bf16.mxu0 0
      %3265 = vmatpush1.bf16.msra.mxu0 0
      %3266 = vmatprep.subr.bf16.mxu0 0
      %3267 = vmatpush1.bf16.msra.mxu0 0
      %3268 = vmatprep.subr.bf16.mxu0 0
      %3269 = vmatpush1.bf16.msra.mxu0 0
      %3270 = vmatprep.mubr.bf16.mxu0 0
      %3271 = vmatmul.mubr.bf16.gmra.mrb[0].mxu0 %v3236
      %v3272 = vpop.f32.mrb[0].mxu0
      %v3273 = vadd.f32 %v3233, %v3272
      %v3274 = vpop.f32.mrb[0].mxu0
      %v3275 = vpop.f32.mrb[0].mxu0
      %v3276 = vpop.f32.mrb[0].mxu0
      %3277 = vdwg.mxu0
      %3279 = vrot.lane.b32.xlu0 %v3273, 96
      %v3280 = vpop.permute.xlu0 %3279
      %v3281 = vsel %vm1135, %v3273, 0
      %v3283 = vsel %vm1135, %v3280, 0
      %3285 = vmatprep.subr.mxu0 0.0
      %3286 = vmatpush1.xpose.msra.mxu0 %v3283
      %3287 = vmatprep.subr.mxu0 0.0
      %3288 = vmatpush1.xpose.msra.mxu0 0.0
      %3289 = vmatprep.subr.mxu0 0.0
      %3290 = vmatpush1.xpose.msra.mxu0 0.0
      %3291 = vmatprep.subr.mxu0 0.0
      %3292 = vmatpush1.xpose.msra.mxu0 0.0
      %3293 = vmatprep.subr.mxu0 0.0
      %3294 = vmatpush1.xpose.msra.mxu0 0.0
      %3295 = vmatprep.subr.mxu0 0.0
      %3296 = vmatpush1.xpose.msra.mxu0 0.0
      %3297 = vmatprep.subr.mxu0 0.0
      %3298 = vmatpush1.xpose.msra.mxu0 0.0
      %3299 = vmatprep.subr.mxu0 0.0
      %3300 = vmatpush1.xpose.msra.mxu0 0.0
      %3301 = vmatprep.subr.mxu0 0.0
      %3302 = vmatpush1.xpose.msra.mxu0 0.0
      %3303 = vmatprep.subr.mxu0 0.0
      %3304 = vmatpush1.xpose.msra.mxu0 0.0
      %3305 = vmatprep.subr.mxu0 0.0
      %3306 = vmatpush1.xpose.msra.mxu0 0.0
      %3307 = vmatprep.subr.mxu0 0.0
      %3308 = vmatpush1.xpose.msra.mxu0 0.0
      %3309 = vmatprep.subr.mxu0 0.0
      %3310 = vmatpush1.xpose.msra.mxu0 0.0
      %3311 = vmatprep.subr.mxu0 0.0
      %3312 = vmatpush1.xpose.msra.mxu0 0.0
      %3313 = vmatprep.subr.mxu0 0.0
      %3314 = vmatpush1.xpose.msra.mxu0 0.0
      %3315 = vmatprep.subr.mxu0 0.0
      %3316 = vmatpush1.xpose.msra.mxu0 0.0
      %3317 = vmatprep.subr.mxu0 0.0
      %3318 = vmatpush1.xpose.msra.mxu0 0.0
      %3319 = vmatprep.subr.mxu0 0.0
      %3320 = vmatpush1.xpose.msra.mxu0 0.0
      %3321 = vmatprep.subr.mxu0 0.0
      %3322 = vmatpush1.xpose.msra.mxu0 0.0
      %3323 = vmatprep.subr.mxu0 0.0
      %3324 = vmatpush1.xpose.msra.mxu0 0.0
      %3325 = vmatprep.subr.mxu0 0.0
      %3326 = vmatpush1.xpose.msra.mxu0 0.0
      %3327 = vmatprep.subr.mxu0 0.0
      %3328 = vmatpush1.xpose.msra.mxu0 0.0
      %3329 = vmatprep.subr.mxu0 0.0
      %3330 = vmatpush1.xpose.msra.mxu0 0.0
      %3331 = vmatprep.subr.mxu0 0.0
      %3332 = vmatpush1.xpose.msra.mxu0 0.0
      %3333 = vmatprep.subr.mxu0 0.0
      %3334 = vmatpush1.xpose.msra.mxu0 0.0
      %3335 = vmatprep.subr.mxu0 0.0
      %3336 = vmatpush1.xpose.msra.mxu0 0.0
      %3337 = vmatprep.subr.mxu0 0.0
      %3338 = vmatpush1.xpose.msra.mxu0 0.0
      %3339 = vmatprep.subr.mxu0 0.0
      %3340 = vmatpush1.xpose.msra.mxu0 0.0
      %3341 = vmatprep.subr.mxu0 0.0
      %3342 = vmatpush1.xpose.msra.mxu0 0.0
      %3343 = vmatprep.subr.mxu0 0.0
      %3344 = vmatpush1.xpose.msra.mxu0 0.0
      %3345 = vmatprep.subr.mxu0 0.0
      %3346 = vmatpush1.xpose.msra.mxu0 0.0
      %3347 = vmatprep.subr.mxu0 0.0
      %3348 = vmatpush1.xpose.msra.mxu0 0.0
      %3349 = vmatprep.mubr.f32.mxu0 0.0
      %3350 = vmatmul.mubr.f32.gmra.mrb[0].mxu0 %v3281
      %v3351 = vpop.f32.mrb[0].mxu0
      %v3352 = vadd.f32 0.0, %v3351
      %v3353 = vpop.f32.mrb[0].mxu0
      %3354 = vdwg.mxu0
      %v3355 = vmul.f32 %v3352, 0.35355338
      %v3356 = vsel %vm1135, %v3355, -inf
      %3357 = vmax.xlane.f32.xlu0 %v3356
      %v3358 = vpop.xlane.xlu0 %3357
      %v3359 = vsub.f32 %v3355, %v3358
      %v3360 = vmul.f32 %v3359, 1.442695
      %v3361 = vpow.pop %v3360
      %v3362 = vsel %vm1135, %v3361, 0.0
      %3363 = vadd.xlane.f32.xlu0 %v3362
      %v3364 = vpop.xlane.xlu0 %3363
      %v3365 = vrcp.pop %v3364
      %v3366 = vmul.f32 %v3361, %v3365
      %3367 = vrot.lane.b32.xlu0 %v3273, 64
      %v3368 = vpop.permute.xlu0 %3367
      %v3371 = vsel %vm1135, %v3366, 0
      %3373 = vmatprep.subr.mxu0 0.0
      %3374 = vmatpush1.msra.mxu0 %v3368
      %3375 = vmatprep.subr.mxu0 0.0
      %3376 = vmatpush1.msra.mxu0 0.0
      %3377 = vmatprep.subr.mxu0 0.0
      %3378 = vmatpush1.msra.mxu0 0.0
      %3379 = vmatprep.subr.mxu0 0.0
      %3380 = vmatpush1.msra.mxu0 0.0
      %3381 = vmatprep.subr.mxu0 0.0
      %3382 = vmatpush1.msra.mxu0 0.0
      %3383 = vmatprep.subr.mxu0 0.0
      %3384 = vmatpush1.msra.mxu0 0.0
      %3385 = vmatprep.subr.mxu0 0.0
      %3386 = vmatpush1.msra.mxu0 0.0
      %3387 = vmatprep.subr.mxu0 0.0
      %3388 = vmatpush1.msra.mxu0 0.0
      %3389 = vmatprep.subr.mxu0 0.0
      %3390 = vmatpush1.msra.mxu0 0.0
      %3391 = vmatprep.subr.mxu0 0.0
      %3392 = vmatpush1.msra.mxu0 0.0
      %3393 = vmatprep.subr.mxu0 0.0
      %3394 = vmatpush1.msra.mxu0 0.0
      %3395 = vmatprep.subr.mxu0 0.0
      %3396 = vmatpush1.msra.mxu0 0.0
      %3397 = vmatprep.subr.mxu0 0.0
      %3398 = vmatpush1.msra.mxu0 0.0
      %3399 = vmatprep.subr.mxu0 0.0
      %3400 = vmatpush1.msra.mxu0 0.0
      %3401 = vmatprep.subr.mxu0 0.0
      %3402 = vmatpush1.msra.mxu0 0.0
      %3403 = vmatprep.subr.mxu0 0.0
      %3404 = vmatpush1.msra.mxu0 0.0
      %3405 = vmatprep.subr.mxu0 0.0
      %3406 = vmatpush1.msra.mxu0 0.0
      %3407 = vmatprep.subr.mxu0 0.0
      %3408 = vmatpush1.msra.mxu0 0.0
      %3409 = vmatprep.subr.mxu0 0.0
      %3410 = vmatpush1.msra.mxu0 0.0
      %3411 = vmatprep.subr.mxu0 0.0
      %3412 = vmatpush1.msra.mxu0 0.0
      %3413 = vmatprep.subr.mxu0 0.0
      %3414 = vmatpush1.msra.mxu0 0.0
      %3415 = vmatprep.subr.mxu0 0.0
      %3416 = vmatpush1.msra.mxu0 0.0
      %3417 = vmatprep.subr.mxu0 0.0
      %3418 = vmatpush1.msra.mxu0 0.0
      %3419 = vmatprep.subr.mxu0 0.0
      %3420 = vmatpush1.msra.mxu0 0.0
      %3421 = vmatprep.subr.mxu0 0.0
      %3422 = vmatpush1.msra.mxu0 0.0
      %3423 = vmatprep.subr.mxu0 0.0
      %3424 = vmatpush1.msra.mxu0 0.0
      %3425 = vmatprep.subr.mxu0 0.0
      %3426 = vmatpush1.msra.mxu0 0.0
      %3427 = vmatprep.subr.mxu0 0.0
      %3428 = vmatpush1.msra.mxu0 0.0
      %3429 = vmatprep.subr.mxu0 0.0
      %3430 = vmatpush1.msra.mxu0 0.0
      %3431 = vmatprep.subr.mxu0 0.0
      %3432 = vmatpush1.msra.mxu0 0.0
      %3433 = vmatprep.subr.mxu0 0.0
      %3434 = vmatpush1.msra.mxu0 0.0
      %3435 = vmatprep.subr.mxu0 0.0
      %3436 = vmatpush1.msra.mxu0 0.0
      %3437 = vmatprep.mubr.f32.mxu0 0.0
      %3438 = vmatmul.mubr.f32.gmra.mrb[0].mxu0 %v3371
      %v3439 = vpop.f32.mrb[0].mxu0
      %v3440 = vadd.f32 0.0, %v3439
      %v3441 = vpop.f32.mrb[0].mxu0
      %3442 = vdwg.mxu0
      %3443 = vrot.lane.b32.xlu0 %v3273, 120
      %v3444 = vpop.permute.xlu0 %3443
      %3445 = vrot.lane.b32.xlu0 %v3273, 88
      %v3446 = vpop.permute.xlu0 %3445
      %v3447 = vsel %vm1135, %v3444, 0
      %v3449 = vsel %vm1135, %v3446, 0
      %3451 = vmatprep.subr.mxu0 0.0
      %3452 = vmatpush1.xpose.msra.mxu0 %v3449
      %3453 = vmatprep.subr.mxu0 0.0
      %3454 = vmatpush1.xpose.msra.mxu0 0.0
      %3455 = vmatprep.subr.mxu0 0.0
      %3456 = vmatpush1.xpose.msra.mxu0 0.0
      %3457 = vmatprep.subr.mxu0 0.0
      %3458 = vmatpush1.xpose.msra.mxu0 0.0
      %3459 = vmatprep.subr.mxu0 0.0
      %3460 = vmatpush1.xpose.msra.mxu0 0.0
      %3461 = vmatprep.subr.mxu0 0.0
      %3462 = vmatpush1.xpose.msra.mxu0 0.0
      %3463 = vmatprep.subr.mxu0 0.0
      %3464 = vmatpush1.xpose.msra.mxu0 0.0
      %3465 = vmatprep.subr.mxu0 0.0
      %3466 = vmatpush1.xpose.msra.mxu0 0.0
      %3467 = vmatprep.subr.mxu0 0.0
      %3468 = vmatpush1.xpose.msra.mxu0 0.0
      %3469 = vmatprep.subr.mxu0 0.0
      %3470 = vmatpush1.xpose.msra.mxu0 0.0
      %3471 = vmatprep.subr.mxu0 0.0
      %3472 = vmatpush1.xpose.msra.mxu0 0.0
      %3473 = vmatprep.subr.mxu0 0.0
      %3474 = vmatpush1.xpose.msra.mxu0 0.0
      %3475 = vmatprep.subr.mxu0 0.0
      %3476 = vmatpush1.xpose.msra.mxu0 0.0
      %3477 = vmatprep.subr.mxu0 0.0
      %3478 = vmatpush1.xpose.msra.mxu0 0.0
      %3479 = vmatprep.subr.mxu0 0.0
      %3480 = vmatpush1.xpose.msra.mxu0 0.0
      %3481 = vmatprep.subr.mxu0 0.0
      %3482 = vmatpush1.xpose.msra.mxu0 0.0
      %3483 = vmatprep.subr.mxu0 0.0
      %3484 = vmatpush1.xpose.msra.mxu0 0.0
      %3485 = vmatprep.subr.mxu0 0.0
      %3486 = vmatpush1.xpose.msra.mxu0 0.0
      %3487 = vmatprep.subr.mxu0 0.0
      %3488 = vmatpush1.xpose.msra.mxu0 0.0
      %3489 = vmatprep.subr.mxu0 0.0
      %3490 = vmatpush1.xpose.msra.mxu0 0.0
      %3491 = vmatprep.subr.mxu0 0.0
      %3492 = vmatpush1.xpose.msra.mxu0 0.0
      %3493 = vmatprep.subr.mxu0 0.0
      %3494 = vmatpush1.xpose.msra.mxu0 0.0
      %3495 = vmatprep.subr.mxu0 0.0
      %3496 = vmatpush1.xpose.msra.mxu0 0.0
      %3497 = vmatprep.subr.mxu0 0.0
      %3498 = vmatpush1.xpose.msra.mxu0 0.0
      %3499 = vmatprep.subr.mxu0 0.0
      %3500 = vmatpush1.xpose.msra.mxu0 0.0
      %3501 = vmatprep.subr.mxu0 0.0
      %3502 = vmatpush1.xpose.msra.mxu0 0.0
      %3503 = vmatprep.subr.mxu0 0.0
      %3504 = vmatpush1.xpose.msra.mxu0 0.0
      %3505 = vmatprep.subr.mxu0 0.0
      %3506 = vmatpush1.xpose.msra.mxu0 0.0
      %3507 = vmatprep.subr.mxu0 0.0
      %3508 = vmatpush1.xpose.msra.mxu0 0.0
      %3509 = vmatprep.subr.mxu0 0.0
      %3510 = vmatpush1.xpose.msra.mxu0 0.0
      %3511 = vmatprep.subr.mxu0 0.0
      %3512 = vmatpush1.xpose.msra.mxu0 0.0
      %3513 = vmatprep.subr.mxu0 0.0
      %3514 = vmatpush1.xpose.msra.mxu0 0.0
      %3515 = vmatprep.mubr.f32.mxu0 0.0
      %3516 = vmatmul.mubr.f32.gmra.mrb[0].mxu0 %v3447
      %v3517 = vpop.f32.mrb[0].mxu0
      %v3518 = vadd.f32 0.0, %v3517
      %v3519 = vpop.f32.mrb[0].mxu0
      %3520 = vdwg.mxu0
      %v3521 = vmul.f32 %v3518, 0.35355338
      %v3522 = vsel %vm1135, %v3521, -inf
      %3523 = vmax.xlane.f32.xlu0 %v3522
      %v3524 = vpop.xlane.xlu0 %3523
      %v3525 = vsub.f32 %v3521, %v3524
      %v3526 = vmul.f32 %v3525, 1.442695
      %v3527 = vpow.pop %v3526
      %v3528 = vsel %vm1135, %v3527, 0.0
      %3529 = vadd.xlane.f32.xlu0 %v3528
      %v3530 = vpop.xlane.xlu0 %3529
      %v3531 = vrcp.pop %v3530
      %v3532 = vmul.f32 %v3527, %v3531
      %3533 = vrot.lane.b32.xlu0 %v3273, 56
      %v3534 = vpop.permute.xlu0 %3533
      %v3537 = vsel %vm1135, %v3532, 0
      %3539 = vmatprep.subr.mxu0 0.0
      %3540 = vmatpush1.msra.mxu0 %v3534
      %3541 = vmatprep.subr.mxu0 0.0
      %3542 = vmatpush1.msra.mxu0 0.0
      %3543 = vmatprep.subr.mxu0 0.0
      %3544 = vmatpush1.msra.mxu0 0.0
      %3545 = vmatprep.subr.mxu0 0.0
      %3546 = vmatpush1.msra.mxu0 0.0
      %3547 = vmatprep.subr.mxu0 0.0
      %3548 = vmatpush1.msra.mxu0 0.0
      %3549 = vmatprep.subr.mxu0 0.0
      %3550 = vmatpush1.msra.mxu0 0.0
      %3551 = vmatprep.subr.mxu0 0.0
      %3552 = vmatpush1.msra.mxu0 0.0
      %3553 = vmatprep.subr.mxu0 0.0
      %3554 = vmatpush1.msra.mxu0 0.0
      %3555 = vmatprep.subr.mxu0 0.0
      %3556 = vmatpush1.msra.mxu0 0.0
      %3557 = vmatprep.subr.mxu0 0.0
      %3558 = vmatpush1.msra.mxu0 0.0
      %3559 = vmatprep.subr.mxu0 0.0
      %3560 = vmatpush1.msra.mxu0 0.0
      %3561 = vmatprep.subr.mxu0 0.0
      %3562 = vmatpush1.msra.mxu0 0.0
      %3563 = vmatprep.subr.mxu0 0.0
      %3564 = vmatpush1.msra.mxu0 0.0
      %3565 = vmatprep.subr.mxu0 0.0
      %3566 = vmatpush1.msra.mxu0 0.0
      %3567 = vmatprep.subr.mxu0 0.0
      %3568 = vmatpush1.msra.mxu0 0.0
      %3569 = vmatprep.subr.mxu0 0.0
      %3570 = vmatpush1.msra.mxu0 0.0
      %3571 = vmatprep.subr.mxu0 0.0
      %3572 = vmatpush1.msra.mxu0 0.0
      %3573 = vmatprep.subr.mxu0 0.0
      %3574 = vmatpush1.msra.mxu0 0.0
      %3575 = vmatprep.subr.mxu0 0.0
      %3576 = vmatpush1.msra.mxu0 0.0
      %3577 = vmatprep.subr.mxu0 0.0
      %3578 = vmatpush1.msra.mxu0 0.0
      %3579 = vmatprep.subr.mxu0 0.0
      %3580 = vmatpush1.msra.mxu0 0.0
      %3581 = vmatprep.subr.mxu0 0.0
      %3582 = vmatpush1.msra.mxu0 0.0
      %3583 = vmatprep.subr.mxu0 0.0
      %3584 = vmatpush1.msra.mxu0 0.0
      %3585 = vmatprep.subr.mxu0 0.0
      %3586 = vmatpush1.msra.mxu0 0.0
      %3587 = vmatprep.subr.mxu0 0.0
      %3588 = vmatpush1.msra.mxu0 0.0
      %3589 = vmatprep.subr.mxu0 0.0
      %3590 = vmatpush1.msra.mxu0 0.0
      %3591 = vmatprep.subr.mxu0 0.0
      %3592 = vmatpush1.msra.mxu0 0.0
      %3593 = vmatprep.subr.mxu0 0.0
      %3594 = vmatpush1.msra.mxu0 0.0
      %3595 = vmatprep.subr.mxu0 0.0
      %3596 = vmatpush1.msra.mxu0 0.0
      %3597 = vmatprep.subr.mxu0 0.0
      %3598 = vmatpush1.msra.mxu0 0.0
      %3599 = vmatprep.subr.mxu0 0.0
      %3600 = vmatpush1.msra.mxu0 0.0
      %3601 = vmatprep.subr.mxu0 0.0
      %3602 = vmatpush1.msra.mxu0 0.0
      %3603 = vmatprep.mubr.f32.mxu0 0.0
      %3604 = vmatmul.mubr.f32.gmra.mrb[0].mxu0 %v3537
      %v3605 = vpop.f32.mrb[0].mxu0
      %v3606 = vadd.f32 0.0, %v3605
      %v3607 = vpop.f32.mrb[0].mxu0
      %3608 = vdwg.mxu0
      %3609 = vrot.lane.b32.xlu0 %v3273, 112
      %v3610 = vpop.permute.xlu0 %3609
      %3611 = vrot.lane.b32.xlu0 %v3273, 80
      %v3612 = vpop.permute.xlu0 %3611
      %v3613 = vsel %vm1135, %v3610, 0
      %v3615 = vsel %vm1135, %v3612, 0
      %3617 = vmatprep.subr.mxu0 0.0
      %3618 = vmatpush1.xpose.msra.mxu0 %v3615
      %3619 = vmatprep.subr.mxu0 0.0
      %3620 = vmatpush1.xpose.msra.mxu0 0.0
      %3621 = vmatprep.subr.mxu0 0.0
      %3622 = vmatpush1.xpose.msra.mxu0 0.0
      %3623 = vmatprep.subr.mxu0 0.0
      %3624 = vmatpush1.xpose.msra.mxu0 0.0
      %3625 = vmatprep.subr.mxu0 0.0
      %3626 = vmatpush1.xpose.msra.mxu0 0.0
      %3627 = vmatprep.subr.mxu0 0.0
      %3628 = vmatpush1.xpose.msra.mxu0 0.0
      %3629 = vmatprep.subr.mxu0 0.0
      %3630 = vmatpush1.xpose.msra.mxu0 0.0
      %3631 = vmatprep.subr.mxu0 0.0
      %3632 = vmatpush1.xpose.msra.mxu0 0.0
      %3633 = vmatprep.subr.mxu0 0.0
      %3634 = vmatpush1.xpose.msra.mxu0 0.0
      %3635 = vmatprep.subr.mxu0 0.0
      %3636 = vmatpush1.xpose.msra.mxu0 0.0
      %3637 = vmatprep.subr.mxu0 0.0
      %3638 = vmatpush1.xpose.msra.mxu0 0.0
      %3639 = vmatprep.subr.mxu0 0.0
      %3640 = vmatpush1.xpose.msra.mxu0 0.0
      %3641 = vmatprep.subr.mxu0 0.0
      %3642 = vmatpush1.xpose.msra.mxu0 0.0
      %3643 = vmatprep.subr.mxu0 0.0
      %3644 = vmatpush1.xpose.msra.mxu0 0.0
      %3645 = vmatprep.subr.mxu0 0.0
      %3646 = vmatpush1.xpose.msra.mxu0 0.0
      %3647 = vmatprep.subr.mxu0 0.0
      %3648 = vmatpush1.xpose.msra.mxu0 0.0
      %3649 = vmatprep.subr.mxu0 0.0
      %3650 = vmatpush1.xpose.msra.mxu0 0.0
      %3651 = vmatprep.subr.mxu0 0.0
      %3652 = vmatpush1.xpose.msra.mxu0 0.0
      %3653 = vmatprep.subr.mxu0 0.0
      %3654 = vmatpush1.xpose.msra.mxu0 0.0
      %3655 = vmatprep.subr.mxu0 0.0
      %3656 = vmatpush1.xpose.msra.mxu0 0.0
      %3657 = vmatprep.subr.mxu0 0.0
      %3658 = vmatpush1.xpose.msra.mxu0 0.0
      %3659 = vmatprep.subr.mxu0 0.0
      %3660 = vmatpush1.xpose.msra.mxu0 0.0
      %3661 = vmatprep.subr.mxu0 0.0
      %3662 = vmatpush1.xpose.msra.mxu0 0.0
      %3663 = vmatprep.subr.mxu0 0.0
      %3664 = vmatpush1.xpose.msra.mxu0 0.0
      %3665 = vmatprep.subr.mxu0 0.0
      %3666 = vmatpush1.xpose.msra.mxu0 0.0
      %3667 = vmatprep.subr.mxu0 0.0
      %3668 = vmatpush1.xpose.msra.mxu0 0.0
      %3669 = vmatprep.subr.mxu0 0.0
      %3670 = vmatpush1.xpose.msra.mxu0 0.0
      %3671 = vmatprep.subr.mxu0 0.0
      %3672 = vmatpush1.xpose.msra.mxu0 0.0
      %3673 = vmatprep.subr.mxu0 0.0
      %3674 = vmatpush1.xpose.msra.mxu0 0.0
      %3675 = vmatprep.subr.mxu0 0.0
      %3676 = vmatpush1.xpose.msra.mxu0 0.0
      %3677 = vmatprep.subr.mxu0 0.0
      %3678 = vmatpush1.xpose.msra.mxu0 0.0
      %3679 = vmatprep.subr.mxu0 0.0
      %3680 = vmatpush1.xpose.msra.mxu0 0.0
      %3681 = vmatprep.mubr.f32.mxu0 0.0
      %3682 = vmatmul.mubr.f32.gmra.mrb[0].mxu0 %v3613
      %v3683 = vpop.f32.mrb[0].mxu0
      %v3684 = vadd.f32 0.0, %v3683
      %v3685 = vpop.f32.mrb[0].mxu0
      %3686 = vdwg.mxu0
      %v3687 = vmul.f32 %v3684, 0.35355338
      %v3688 = vsel %vm1135, %v3687, -inf
      %3689 = vmax.xlane.f32.xlu0 %v3688
      %v3690 = vpop.xlane.xlu0 %3689
      %v3691 = vsub.f32 %v3687, %v3690
      %v3692 = vmul.f32 %v3691, 1.442695
      %v3693 = vpow.pop %v3692
      %v3694 = vsel %vm1135, %v3693, 0.0
      %3695 = vadd.xlane.f32.xlu0 %v3694
      %v3696 = vpop.xlane.xlu0 %3695
      %v3697 = vrcp.pop %v3696
      %v3698 = vmul.f32 %v3693, %v3697
      %3699 = vrot.lane.b32.xlu0 %v3273, 48
      %v3700 = vpop.permute.xlu0 %3699
      %v3703 = vsel %vm1135, %v3698, 0
      %3705 = vmatprep.subr.mxu0 0.0
      %3706 = vmatpush1.msra.mxu0 %v3700
      %3707 = vmatprep.subr.mxu0 0.0
      %3708 = vmatpush1.msra.mxu0 0.0
      %3709 = vmatprep.subr.mxu0 0.0
      %3710 = vmatpush1.msra.mxu0 0.0
      %3711 = vmatprep.subr.mxu0 0.0
      %3712 = vmatpush1.msra.mxu0 0.0
      %3713 = vmatprep.subr.mxu0 0.0
      %3714 = vmatpush1.msra.mxu0 0.0
      %3715 = vmatprep.subr.mxu0 0.0
      %3716 = vmatpush1.msra.mxu0 0.0
      %3717 = vmatprep.subr.mxu0 0.0
      %3718 = vmatpush1.msra.mxu0 0.0
      %3719 = vmatprep.subr.mxu0 0.0
      %3720 = vmatpush1.msra.mxu0 0.0
      %3721 = vmatprep.subr.mxu0 0.0
      %3722 = vmatpush1.msra.mxu0 0.0
      %3723 = vmatprep.subr.mxu0 0.0
      %3724 = vmatpush1.msra.mxu0 0.0
      %3725 = vmatprep.subr.mxu0 0.0
      %3726 = vmatpush1.msra.mxu0 0.0
      %3727 = vmatprep.subr.mxu0 0.0
      %3728 = vmatpush1.msra.mxu0 0.0
      %3729 = vmatprep.subr.mxu0 0.0
      %3730 = vmatpush1.msra.mxu0 0.0
      %3731 = vmatprep.subr.mxu0 0.0
      %3732 = vmatpush1.msra.mxu0 0.0
      %3733 = vmatprep.subr.mxu0 0.0
      %3734 = vmatpush1.msra.mxu0 0.0
      %3735 = vmatprep.subr.mxu0 0.0
      %3736 = vmatpush1.msra.mxu0 0.0
      %3737 = vmatprep.subr.mxu0 0.0
      %3738 = vmatpush1.msra.mxu0 0.0
      %3739 = vmatprep.subr.mxu0 0.0
      %3740 = vmatpush1.msra.mxu0 0.0
      %3741 = vmatprep.subr.mxu0 0.0
      %3742 = vmatpush1.msra.mxu0 0.0
      %3743 = vmatprep.subr.mxu0 0.0
      %3744 = vmatpush1.msra.mxu0 0.0
      %3745 = vmatprep.subr.mxu0 0.0
      %3746 = vmatpush1.msra.mxu0 0.0
      %3747 = vmatprep.subr.mxu0 0.0
      %3748 = vmatpush1.msra.mxu0 0.0
      %3749 = vmatprep.subr.mxu0 0.0
      %3750 = vmatpush1.msra.mxu0 0.0
      %3751 = vmatprep.subr.mxu0 0.0
      %3752 = vmatpush1.msra.mxu0 0.0
      %3753 = vmatprep.subr.mxu0 0.0
      %3754 = vmatpush1.msra.mxu0 0.0
      %3755 = vmatprep.subr.mxu0 0.0
      %3756 = vmatpush1.msra.mxu0 0.0
      %3757 = vmatprep.subr.mxu0 0.0
      %3758 = vmatpush1.msra.mxu0 0.0
      %3759 = vmatprep.subr.mxu0 0.0
      %3760 = vmatpush1.msra.mxu0 0.0
      %3761 = vmatprep.subr.mxu0 0.0
      %3762 = vmatpush1.msra.mxu0 0.0
      %3763 = vmatprep.subr.mxu0 0.0
      %3764 = vmatpush1.msra.mxu0 0.0
      %3765 = vmatprep.subr.mxu0 0.0
      %3766 = vmatpush1.msra.mxu0 0.0
      %3767 = vmatprep.subr.mxu0 0.0
      %3768 = vmatpush1.msra.mxu0 0.0
      %3769 = vmatprep.mubr.f32.mxu0 0.0
      %3770 = vmatmul.mubr.f32.gmra.mrb[0].mxu0 %v3703
      %v3771 = vpop.f32.mrb[0].mxu0
      %v3772 = vadd.f32 0.0, %v3771
      %v3773 = vpop.f32.mrb[0].mxu0
      %3774 = vdwg.mxu0
      %3775 = vrot.lane.b32.xlu0 %v3273, 104
      %v3776 = vpop.permute.xlu0 %3775
      %3777 = vrot.lane.b32.xlu0 %v3273, 72
      %v3778 = vpop.permute.xlu0 %3777
      %v3779 = vsel %vm1135, %v3776, 0
      %v3781 = vsel %vm1135, %v3778, 0
      %3783 = vmatprep.subr.mxu0 0.0
      %3784 = vmatpush1.xpose.msra.mxu0 %v3781
      %3785 = vmatprep.subr.mxu0 0.0
      %3786 = vmatpush1.xpose.msra.mxu0 0.0
      %3787 = vmatprep.subr.mxu0 0.0
      %3788 = vmatpush1.xpose.msra.mxu0 0.0
      %3789 = vmatprep.subr.mxu0 0.0
      %3790 = vmatpush1.xpose.msra.mxu0 0.0
      %3791 = vmatprep.subr.mxu0 0.0
      %3792 = vmatpush1.xpose.msra.mxu0 0.0
      %3793 = vmatprep.subr.mxu0 0.0
      %3794 = vmatpush1.xpose.msra.mxu0 0.0
      %3795 = vmatprep.subr.mxu0 0.0
      %3796 = vmatpush1.xpose.msra.mxu0 0.0
      %3797 = vmatprep.subr.mxu0 0.0
      %3798 = vmatpush1.xpose.msra.mxu0 0.0
      %3799 = vmatprep.subr.mxu0 0.0
      %3800 = vmatpush1.xpose.msra.mxu0 0.0
      %3801 = vmatprep.subr.mxu0 0.0
      %3802 = vmatpush1.xpose.msra.mxu0 0.0
      %3803 = vmatprep.subr.mxu0 0.0
      %3804 = vmatpush1.xpose.msra.mxu0 0.0
      %3805 = vmatprep.subr.mxu0 0.0
      %3806 = vmatpush1.xpose.msra.mxu0 0.0
      %3807 = vmatprep.subr.mxu0 0.0
      %3808 = vmatpush1.xpose.msra.mxu0 0.0
      %3809 = vmatprep.subr.mxu0 0.0
      %3810 = vmatpush1.xpose.msra.mxu0 0.0
      %3811 = vmatprep.subr.mxu0 0.0
      %3812 = vmatpush1.xpose.msra.mxu0 0.0
      %3813 = vmatprep.subr.mxu0 0.0
      %3814 = vmatpush1.xpose.msra.mxu0 0.0
      %3815 = vmatprep.subr.mxu0 0.0
      %3816 = vmatpush1.xpose.msra.mxu0 0.0
      %3817 = vmatprep.subr.mxu0 0.0
      %3818 = vmatpush1.xpose.msra.mxu0 0.0
      %3819 = vmatprep.subr.mxu0 0.0
      %3820 = vmatpush1.xpose.msra.mxu0 0.0
      %3821 = vmatprep.subr.mxu0 0.0
      %3822 = vmatpush1.xpose.msra.mxu0 0.0
      %3823 = vmatprep.subr.mxu0 0.0
      %3824 = vmatpush1.xpose.msra.mxu0 0.0
      %3825 = vmatprep.subr.mxu0 0.0
      %3826 = vmatpush1.xpose.msra.mxu0 0.0
      %3827 = vmatprep.subr.mxu0 0.0
      %3828 = vmatpush1.xpose.msra.mxu0 0.0
      %3829 = vmatprep.subr.mxu0 0.0
      %3830 = vmatpush1.xpose.msra.mxu0 0.0
      %3831 = vmatprep.subr.mxu0 0.0
      %3832 = vmatpush1.xpose.msra.mxu0 0.0
      %3833 = vmatprep.subr.mxu0 0.0
      %3834 = vmatpush1.xpose.msra.mxu0 0.0
      %3835 = vmatprep.subr.mxu0 0.0
      %3836 = vmatpush1.xpose.msra.mxu0 0.0
      %3837 = vmatprep.subr.mxu0 0.0
      %3838 = vmatpush1.xpose.msra.mxu0 0.0
      %3839 = vmatprep.subr.mxu0 0.0
      %3840 = vmatpush1.xpose.msra.mxu0 0.0
      %3841 = vmatprep.subr.mxu0 0.0
      %3842 = vmatpush1.xpose.msra.mxu0 0.0
      %3843 = vmatprep.subr.mxu0 0.0
      %3844 = vmatpush1.xpose.msra.mxu0 0.0
      %3845 = vmatprep.subr.mxu0 0.0
      %3846 = vmatpush1.xpose.msra.mxu0 0.0
      %3847 = vmatprep.mubr.f32.mxu0 0.0
      %3848 = vmatmul.mubr.f32.gmra.mrb[0].mxu0 %v3779
      %v3849 = vpop.f32.mrb[0].mxu0
      %v3850 = vadd.f32 0.0, %v3849
      %v3851 = vpop.f32.mrb[0].mxu0
      %3852 = vdwg.mxu0
      %v3853 = vmul.f32 %v3850, 0.35355338
      %v3854 = vsel %vm1135, %v3853, -inf
      %3855 = vmax.xlane.f32.xlu0 %v3854
      %v3856 = vpop.xlane.xlu0 %3855
      %v3857 = vsub.f32 %v3853, %v3856
      %v3858 = vmul.f32 %v3857, 1.442695
      %v3859 = vpow.pop %v3858
      %v3860 = vsel %vm1135, %v3859, 0.0
      %3861 = vadd.xlane.f32.xlu0 %v3860
      %v3862 = vpop.xlane.xlu0 %3861
      %v3863 = vrcp.pop %v3862
      %v3864 = vmul.f32 %v3859, %v3863
      %3865 = vrot.lane.b32.xlu0 %v3273, 40
      %v3866 = vpop.permute.xlu0 %3865
      %v3869 = vsel %vm1135, %v3864, 0
      %3871 = vmatprep.subr.mxu0 0.0
      %3872 = vmatpush1.msra.mxu0 %v3866
      %3873 = vmatprep.subr.mxu0 0.0
      %3874 = vmatpush1.msra.mxu0 0.0
      %3875 = vmatprep.subr.mxu0 0.0
      %3876 = vmatpush1.msra.mxu0 0.0
      %3877 = vmatprep.subr.mxu0 0.0
      %3878 = vmatpush1.msra.mxu0 0.0
      %3879 = vmatprep.subr.mxu0 0.0
      %3880 = vmatpush1.msra.mxu0 0.0
      %3881 = vmatprep.subr.mxu0 0.0
      %3882 = vmatpush1.msra.mxu0 0.0
      %3883 = vmatprep.subr.mxu0 0.0
      %3884 = vmatpush1.msra.mxu0 0.0
      %3885 = vmatprep.subr.mxu0 0.0
      %3886 = vmatpush1.msra.mxu0 0.0
      %3887 = vmatprep.subr.mxu0 0.0
      %3888 = vmatpush1.msra.mxu0 0.0
      %3889 = vmatprep.subr.mxu0 0.0
      %3890 = vmatpush1.msra.mxu0 0.0
      %3891 = vmatprep.subr.mxu0 0.0
      %3892 = vmatpush1.msra.mxu0 0.0
      %3893 = vmatprep.subr.mxu0 0.0
      %3894 = vmatpush1.msra.mxu0 0.0
      %3895 = vmatprep.subr.mxu0 0.0
      %3896 = vmatpush1.msra.mxu0 0.0
      %3897 = vmatprep.subr.mxu0 0.0
      %3898 = vmatpush1.msra.mxu0 0.0
      %3899 = vmatprep.subr.mxu0 0.0
      %3900 = vmatpush1.msra.mxu0 0.0
      %3901 = vmatprep.subr.mxu0 0.0
      %3902 = vmatpush1.msra.mxu0 0.0
      %3903 = vmatprep.subr.mxu0 0.0
      %3904 = vmatpush1.msra.mxu0 0.0
      %3905 = vmatprep.subr.mxu0 0.0
      %3906 = vmatpush1.msra.mxu0 0.0
      %3907 = vmatprep.subr.mxu0 0.0
      %3908 = vmatpush1.msra.mxu0 0.0
      %3909 = vmatprep.subr.mxu0 0.0
      %3910 = vmatpush1.msra.mxu0 0.0
      %3911 = vmatprep.subr.mxu0 0.0
      %3912 = vmatpush1.msra.mxu0 0.0
      %3913 = vmatprep.subr.mxu0 0.0
      %3914 = vmatpush1.msra.mxu0 0.0
      %3915 = vmatprep.subr.mxu0 0.0
      %3916 = vmatpush1.msra.mxu0 0.0
      %3917 = vmatprep.subr.mxu0 0.0
      %3918 = vmatpush1.msra.mxu0 0.0
      %3919 = vmatprep.subr.mxu0 0.0
      %3920 = vmatpush1.msra.mxu0 0.0
      %3921 = vmatprep.subr.mxu0 0.0
      %3922 = vmatpush1.msra.mxu0 0.0
      %3923 = vmatprep.subr.mxu0 0.0
      %3924 = vmatpush1.msra.mxu0 0.0
      %3925 = vmatprep.subr.mxu0 0.0
      %3926 = vmatpush1.msra.mxu0 0.0
      %3927 = vmatprep.subr.mxu0 0.0
      %3928 = vmatpush1.msra.mxu0 0.0
      %3929 = vmatprep.subr.mxu0 0.0
      %3930 = vmatpush1.msra.mxu0 0.0
      %3931 = vmatprep.subr.mxu0 0.0
      %3932 = vmatpush1.msra.mxu0 0.0
      %3933 = vmatprep.subr.mxu0 0.0
      %3934 = vmatpush1.msra.mxu0 0.0
      %3935 = vmatprep.mubr.f32.mxu0 0.0
      %3936 = vmatmul.mubr.f32.gmra.mrb[0].mxu0 %v3869
      %v3937 = vpop.f32.mrb[0].mxu0
      %v3938 = vadd.f32 0.0, %v3937
      %v3939 = vpop.f32.mrb[0].mxu0
      %3940 = vdwg.mxu0
      %3942 = vrot.lane.b32.xlu0 %v3606, 8
      %v3943 = vpop.permute.xlu0 %3942
      %3946 = vrot.lane.b32.xlu0 %v3772, 16
      %v3947 = vpop.permute.xlu0 %3946
      %3950 = vrot.lane.b32.xlu0 %v3938, 24
      %v3951 = vpop.permute.xlu0 %3950
      %v3953 = vsel %vm1135, %v3440, %v3943
      %v3954 = vsel %vm1809, %v3953, %v3947
      %v3955 = vsel %vm994, %v3954, %v3951
      %s3956 = scalar_lea.vmem %s19, 64
      %v3957 = vld [vmem:[%s3956] sm:$0xff]
      %v3958 = vld [vmem:[%s3956 + $0x8] sm:$0xff]
      %v3959 = vld [vmem:[%s3956 + $0x10] sm:$0xff]
      %v3960 = vld [vmem:[%s3956 + $0x18] sm:$0xff]
      %v3961 = vpack.c.bf16 %v3955, %v3955
      %v3962 = vpack.c.bf16 %v3958, %v3957
      %v3963 = vpack.c.bf16 %v3960, %v3959
      %v3965 = vsel %vm1046, %v3961, 0
      %3967 = vmatprep.subr.bf16.mxu0 0
      %3968 = vmatpush1.bf16.msra.mxu0 %v3962
      %3969 = vmatprep.subr.bf16.mxu0 0
      %3970 = vmatpush1.bf16.msra.mxu0 %v3963
      %3971 = vmatprep.subr.bf16.mxu0 0
      %3972 = vmatpush1.bf16.msra.mxu0 0
      %3973 = vmatprep.subr.bf16.mxu0 0
      %3974 = vmatpush1.bf16.msra.mxu0 0
      %3975 = vmatprep.subr.bf16.mxu0 0
      %3976 = vmatpush1.bf16.msra.mxu0 0
      %3977 = vmatprep.subr.bf16.mxu0 0
      %3978 = vmatpush1.bf16.msra.mxu0 0
      %3979 = vmatprep.subr.bf16.mxu0 0
      %3980 = vmatpush1.bf16.msra.mxu0 0
      %3981 = vmatprep.subr.bf16.mxu0 0
      %3982 = vmatpush1.bf16.msra.mxu0 0
      %3983 = vmatprep.subr.bf16.mxu0 0
      %3984 = vmatpush1.bf16.msra.mxu0 0
      %3985 = vmatprep.subr.bf16.mxu0 0
      %3986 = vmatpush1.bf16.msra.mxu0 0
      %3987 = vmatprep.subr.bf16.mxu0 0
      %3988 = vmatpush1.bf16.msra.mxu0 0
      %3989 = vmatprep.subr.bf16.mxu0 0
      %3990 = vmatpush1.bf16.msra.mxu0 0
      %3991 = vmatprep.subr.bf16.mxu0 0
      %3992 = vmatpush1.bf16.msra.mxu0 0
      %3993 = vmatprep.subr.bf16.mxu0 0
      %3994 = vmatpush1.bf16.msra.mxu0 0
      %3995 = vmatprep.subr.bf16.mxu0 0
      %3996 = vmatpush1.bf16.msra.mxu0 0
      %3997 = vmatprep.subr.bf16.mxu0 0
      %3998 = vmatpush1.bf16.msra.mxu0 0
      %3999 = vmatprep.mubr.bf16.mxu0 0
      %4000 = vmatmul.mubr.bf16.gmra.mrb[0].mxu0 %v3965
      %v4001 = vpop.f32.mrb[0].mxu0
      %v4002 = vadd.f32 0.0, %v4001
      %v4003 = vpop.f32.mrb[0].mxu0
      %v4004 = vpop.f32.mrb[0].mxu0
      %v4005 = vpop.f32.mrb[0].mxu0
      %4006 = vdwg.mxu0
      %v4007 = vadd.f32 %v3183, %v4002
      %s4008 = scalar_lea.vmem %s21, 2
      %v4009 = vld [vmem:[%s4008] sm:$0x1]
      %v4011 = vlaneseq
      %v4012 = vshrl.u32 %v4011, 7
      %v4013 = vsub.s32 0, %v4012
      %v4014 = vrot.slane %v4009, %v4013
      %v4016 = vadd.f32 %v4007, %v4014
      %s4017 = scalar_lea.vmem %s23, 2
      %v4018 = vld [vmem:[%s4017] sm:$0x1]
      %s4019 = scalar_lea.vmem %s25, 2
      %v4020 = vld [vmem:[%s4019] sm:$0x1]
      %v4021 = vsel %vm1046, %v4016, 0.0
      %4022 = vadd.xlane.f32.xlu0 %v4021
      %v4023 = vpop.xlane.xlu0 %4022
      %v4024 = vmul.f32 %v4023, %v1050
      %v4025 = vsub.f32 %v4016, %v4024
      %v4026 = vmul.f32 %v4025, %v4025
      %v4027 = vsel %vm1046, %v4026, 0.0
      %4028 = vadd.xlane.f32.xlu0 %v4027
      %v4029 = vpop.xlane.xlu0 %4028
      %v4030 = vmul.f32 %v4029, %v1050
      %v4031 = vadd.f32 %v4030, 1e-05
      %v4032 = vrsqrt.pop %v4031
      %v4033 = vmul.f32 %v4025, %v4032
      %v4035 = vlaneseq
      %v4036 = vshrl.u32 %v4035, 7
      %v4037 = vsub.s32 0, %v4036
      %v4038 = vrot.slane %v4018, %v4037
      %v4040 = vmul.f32 %v4033, %v4038
      %v4042 = vlaneseq
      %v4043 = vshrl.u32 %v4042, 7
      %v4044 = vsub.s32 0, %v4043
      %v4045 = vrot.slane %v4020, %v4044
      %v4047 = vadd.f32 %v4040, %v4045
      %s4048 = scalar_lea.vmem %s27, 64
      %v4049 = vld [vmem:[%s4048] sm:$0xff]
      %v4050 = vld [vmem:[%s4048 + $0x8] sm:$0xff]
      %v4051 = vld [vmem:[%s4048 + $0x10] sm:$0xff]
      %v4052 = vld [vmem:[%s4048 + $0x18] sm:$0xff]
      %v4053 = vpack.c.bf16 %v4047, %v4047
      %v4054 = vpack.c.bf16 %v4050, %v4049
      %v4055 = vpack.c.bf16 %v4052, %v4051
      %s4056 = scalar_lea.vmem %s29, 2
      %v4057 = vld [vmem:[%s4056] sm:$0x1]
      %v4059 = vlaneseq
      %v4060 = vshrl.u32 %v4059, 7
      %v4061 = vsub.s32 0, %v4060
      %v4062 = vrot.slane %v4057, %v4061
      %v4065 = vsel %vm1046, %v4053, 0
      %4067 = vmatprep.subr.bf16.mxu0 0
      %4068 = vmatpush1.bf16.msra.mxu0 %v4054
      %4069 = vmatprep.subr.bf16.mxu0 0
      %4070 = vmatpush1.bf16.msra.mxu0 %v4055
      %4071 = vmatprep.subr.bf16.mxu0 0
      %4072 = vmatpush1.bf16.msra.mxu0 0
      %4073 = vmatprep.subr.bf16.mxu0 0
      %4074 = vmatpush1.bf16.msra.mxu0 0
      %4075 = vmatprep.subr.bf16.mxu0 0
      %4076 = vmatpush1.bf16.msra.mxu0 0
      %4077 = vmatprep.subr.bf16.mxu0 0
      %4078 = vmatpush1.bf16.msra.mxu0 0
      %4079 = vmatprep.subr.bf16.mxu0 0
      %4080 = vmatpush1.bf16.msra.mxu0 0
      %4081 = vmatprep.subr.bf16.mxu0 0
      %4082 = vmatpush1.bf16.msra.mxu0 0
      %4083 = vmatprep.subr.bf16.mxu0 0
      %4084 = vmatpush1.bf16.msra.mxu0 0
      %4085 = vmatprep.subr.bf16.mxu0 0
      %4086 = vmatpush1.bf16.msra.mxu0 0
      %4087 = vmatprep.subr.bf16.mxu0 0
      %4088 = vmatpush1.bf16.msra.mxu0 0
      %4089 = vmatprep.subr.bf16.mxu0 0
      %4090 = vmatpush1.bf16.msra.mxu0 0
      %4091 = vmatprep.subr.bf16.mxu0 0
      %4092 = vmatpush1.bf16.msra.mxu0 0
      %4093 = vmatprep.subr.bf16.mxu0 0
      %4094 = vmatpush1.bf16.msra.mxu0 0
      %4095 = vmatprep.subr.bf16.mxu0 0
      %4096 = vmatpush1.bf16.msra.mxu0 0
      %4097 = vmatprep.subr.bf16.mxu0 0
      %4098 = vmatpush1.bf16.msra.mxu0 0
      %4099 = vmatprep.mubr.bf16.mxu0 0
      %4100 = vmatmul.mubr.bf16.gmra.mrb[0].mxu0 %v4065
      %v4101 = vpop.f32.mrb[0].mxu0
      %v4102 = vadd.f32 %v4062, %v4101
      %v4103 = vpop.f32.mrb[0].mxu0
      %v4104 = vpop.f32.mrb[0].mxu0
      %v4105 = vpop.f32.mrb[0].mxu0
      %4106 = vdwg.mxu0
      %v4107 = vmul.f32 %v4102, %v4102
      %v4108 = vmul.f32 %v4102, %v4107
      %v4109 = vmul.f32 %v4108, 0.044715
      %v4110 = vadd.f32 %v4102, %v4109
      %v4111 = vmul.f32 %v4110, 0.7978846
      %v4112 = vtanh.pop %v4111
      %v4113 = vadd.f32 %v4112, 1.0
      %v4114 = vmul.f32 %v4113, 0.5
      %v4115 = vmul.f32 %v4102, %v4114
      %s4116 = scalar_lea.vmem %s31, 256
      %v4117 = vld [vmem:[%s4116] sm:$0xff]
      %v4118 = vld [vmem:[%s4116 + $0x8] sm:$0xff]
      %v4119 = vld [vmem:[%s4116 + $0x10] sm:$0xff]
      %v4120 = vld [vmem:[%s4116 + $0x18] sm:$0xff]
      %v4121 = vld [vmem:[%s4116 + $0x20] sm:$0xff]
      %v4122 = vld [vmem:[%s4116 + $0x28] sm:$0xff]
      %v4123 = vld [vmem:[%s4116 + $0x30] sm:$0xff]
      %v4124 = vld [vmem:[%s4116 + $0x38] sm:$0xff]
      %v4125 = vld [vmem:[%s4116 + $0x40] sm:$0xff]
      %v4126 = vld [vmem:[%s4116 + $0x48] sm:$0xff]
      %v4127 = vld [vmem:[%s4116 + $0x50] sm:$0xff]
      %v4128 = vld [vmem:[%s4116 + $0x58] sm:$0xff]
      %v4129 = vld [vmem:[%s4116 + $0x60] sm:$0xff]
      %v4130 = vld [vmem:[%s4116 + $0x68] sm:$0xff]
      %v4131 = vld [vmem:[%s4116 + $0x70] sm:$0xff]
      %v4132 = vld [vmem:[%s4116 + $0x78] sm:$0xff]
      %v4133 = vpack.c.bf16 %v4115, %v4115
      %v4134 = vpack.c.bf16 %v4118, %v4117
      %v4135 = vpack.c.bf16 %v4120, %v4119
      %v4136 = vpack.c.bf16 %v4122, %v4121
      %v4137 = vpack.c.bf16 %v4124, %v4123
      %v4138 = vpack.c.bf16 %v4126, %v4125
      %v4139 = vpack.c.bf16 %v4128, %v4127
      %v4140 = vpack.c.bf16 %v4130, %v4129
      %v4141 = vpack.c.bf16 %v4132, %v4131
      %4142 = vmatprep.subr.bf16.mxu0 0
      %4143 = vmatpush1.bf16.msra.mxu0 %v4134
      %4144 = vmatprep.subr.bf16.mxu0 0
      %4145 = vmatpush1.bf16.msra.mxu0 %v4135
      %4146 = vmatprep.subr.bf16.mxu0 0
      %4147 = vmatpush1.bf16.msra.mxu0 %v4136
      %4148 = vmatprep.subr.bf16.mxu0 0
      %4149 = vmatpush1.bf16.msra.mxu0 %v4137
      %4150 = vmatprep.subr.bf16.mxu0 0
      %4151 = vmatpush1.bf16.msra.mxu0 %v4138
      %4152 = vmatprep.subr.bf16.mxu0 0
      %4153 = vmatpush1.bf16.msra.mxu0 %v4139
      %4154 = vmatprep.subr.bf16.mxu0 0
      %4155 = vmatpush1.bf16.msra.mxu0 %v4140
      %4156 = vmatprep.subr.bf16.mxu0 0
      %4157 = vmatpush1.bf16.msra.mxu0 %v4141
      %4158 = vmatprep.subr.bf16.mxu0 0
      %4159 = vmatpush1.bf16.msra.mxu0 0
      %4160 = vmatprep.subr.bf16.mxu0 0
      %4161 = vmatpush1.bf16.msra.mxu0 0
      %4162 = vmatprep.subr.bf16.mxu0 0
      %4163 = vmatpush1.bf16.msra.mxu0 0
      %4164 = vmatprep.subr.bf16.mxu0 0
      %4165 = vmatpush1.bf16.msra.mxu0 0
      %4166 = vmatprep.subr.bf16.mxu0 0
      %4167 = vmatpush1.bf16.msra.mxu0 0
      %4168 = vmatprep.subr.bf16.mxu0 0
      %4169 = vmatpush1.bf16.msra.mxu0 0
      %4170 = vmatprep.subr.bf16.mxu0 0
      %4171 = vmatpush1.bf16.msra.mxu0 0
      %4172 = vmatprep.subr.bf16.mxu0 0
      %4173 = vmatpush1.bf16.msra.mxu0 0
      %4174 = vmatprep.mubr.bf16.mxu0 0
      %4175 = vmatmul.mubr.bf16.gmra.mrb[0].mxu0 %v4133
      %v4176 = vpop.f32.mrb[0].mxu0
      %v4177 = vadd.f32 0.0, %v4176
      %v4178 = vpop.f32.mrb[0].mxu0
      %v4179 = vpop.f32.mrb[0].mxu0
      %v4180 = vpop.f32.mrb[0].mxu0
      %4181 = vdwg.mxu0
      %v4182 = vadd.f32 %v4016, %v4177
      %s4183 = scalar_lea.vmem %s33, 2
      %v4184 = vld [vmem:[%s4183] sm:$0x1]
      %v4186 = vlaneseq
      %v4187 = vshrl.u32 %v4186, 7
      %v4188 = vsub.s32 0, %v4187
      %v4189 = vrot.slane %v4184, %v4188
      %v4191 = vadd.f32 %v4182, %v4189
      %s4192 = scalar_lea.vmem %s49, 1
      %v4193 = vld [vmem:[%s4192] sm:$0x1]
      %s4194 = scalar_lea.vmem %s51, 1
      %v4195 = vld [vmem:[%s4194] sm:$0x1]
      %v4196 = vsel %vm1046, %v4191, 0.0
      %4197 = vadd.xlane.f32.xlu0 %v4196
      %v4198 = vpop.xlane.xlu0 %4197
      %v4199 = vmul.f32 %v4198, %v1050
      %v4200 = vsub.f32 %v4191, %v4199
      %v4201 = vmul.f32 %v4200, %v4200
      %v4202 = vsel %vm1046, %v4201, 0.0
      %4203 = vadd.xlane.f32.xlu0 %v4202
      %v4204 = vpop.xlane.xlu0 %4203
      %v4205 = vmul.f32 %v4204, %v1050
      %v4206 = vadd.f32 %v4205, 1e-05
      %v4207 = vrsqrt.pop %v4206
      %v4208 = vmul.f32 %v4200, %v4207
      %v4210 = vlaneseq
      %v4211 = vshrl.u32 %v4210, 7
      %v4212 = vsub.s32 0, %v4211
      %v4213 = vrot.slane %v4193, %v4212
      %v4215 = vmul.f32 %v4208, %v4213
      %v4217 = vlaneseq
      %v4218 = vshrl.u32 %v4217, 7
      %v4219 = vsub.s32 0, %v4218
      %v4220 = vrot.slane %v4195, %v4219
      %v4222 = vadd.f32 %v4215, %v4220
      %s4223 = scalar_lea.vmem %s53, 1
      %v4224 = vld [vmem:[%s4223] sm:$0x1]
      %v4226 = vlaneseq
      %v4227 = vshrl.u32 %v4226, 7
      %v4228 = vsub.s32 0, %v4227
      %v4229 = vrot.slane %v4224, %v4228
      %v4231 = vmul.f32 %v4222, %v4229
      %v4232 = vsel %vm1046, %v4231, 0.0
      %4233 = vadd.xlane.f32.xlu0 %v4232
      %v4234 = vpop.xlane.xlu0 %4233
      %s4235 = scalar_lea.vmem %s55, 1
      %v4236 = vld [vmem:[%s4235] sm:$0x1]
      %v4238 = vlaneseq
      %v4239 = vshrl.u32 %v4238, 7
      %v4240 = vsub.s32 0, %v4239
      %v4241 = vrot.slane %v4236, %v4240
      %v4243 = vadd.f32 %v4234, %v4241
      %4244 = vst.msk [vmem:[%s978] sm:$0xff] %vm3092, %v4243
      %s4245 = scalar_lea.vmem %s11, 3
      %v4246 = vld [vmem:[%s4245] sm:$0x1]
      %s4247 = scalar_lea.vmem %s13, 3
      %v4248 = vld [vmem:[%s4247] sm:$0x1]
      %v4250 = vlaneseq
      %v4251 = vshrl.u32 %v4250, 7
      %v4252 = vsub.s32 0, %v4251
      %v4253 = vrot.slane %v4246, %v4252
      %v4255 = vmul.f32 %v4208, %v4253
      %v4257 = vlaneseq
      %v4258 = vshrl.u32 %v4257, 7
      %v4259 = vsub.s32 0, %v4258
      %v4260 = vrot.slane %v4248, %v4259
      %v4262 = vadd.f32 %v4255, %v4260
      %s4263 = scalar_lea.vmem %s15, 96
      %v4264 = vld [vmem:[%s4263] sm:$0xff]
      %v4265 = vld [vmem:[%s4263 + $0x8] sm:$0xff]
      %v4266 = vld [vmem:[%s4263 + $0x10] sm:$0xff]
      %v4267 = vld [vmem:[%s4263 + $0x18] sm:$0xff]
      %v4268 = vpack.c.bf16 %v4262, %v4262
      %v4269 = vpack.c.bf16 %v4265, %v4264
      %v4270 = vpack.c.bf16 %v4267, %v4266
      %s4271 = scalar_lea.vmem %s17, 3
      %v4272 = vld [vmem:[%s4271] sm:$0x1]
      %v4274 = vlaneseq
      %v4275 = vshrl.u32 %v4274, 7
      %v4276 = vsub.s32 0, %v4275
      %v4277 = vrot.slane %v4272, %v4276
      %v4280 = vsel %vm1046, %v4268, 0
      %4282 = vmatprep.subr.bf16.mxu0 0
      %4283 = vmatpush1.bf16.msra.mxu0 %v4269
      %4284 = vmatprep.subr.bf16.mxu0 0
      %4285 = vmatpush1.bf16.msra.mxu0 %v4270
      %4286 = vmatprep.subr.bf16.mxu0 0
      %4287 = vmatpush1.bf16.msra.mxu0 0
      %4288 = vmatprep.subr.bf16.mxu0 0
      %4289 = vmatpush1.bf16.msra.mxu0 0
      %4290 = vmatprep.subr.bf16.mxu0 0
      %4291 = vmatpush1.bf16.msra.mxu0 0
      %4292 = vmatprep.subr.bf16.mxu0 0
      %4293 = vmatpush1.bf16.msra.mxu0 0
      %4294 = vmatprep.subr.bf16.mxu0 0
      %4295 = vmatpush1.bf16.msra.mxu0 0
      %4296 = vmatprep.subr.bf16.mxu0 0
      %4297 = vmatpush1.bf16.msra.mxu0 0
      %4298 = vmatprep.subr.bf16.mxu0 0
      %4299 = vmatpush1.bf16.msra.mxu0 0
      %4300 = vmatprep.subr.bf16.mxu0 0
      %4301 = vmatpush1.bf16.msra.mxu0 0
      %4302 = vmatprep.subr.bf16.mxu0 0
      %4303 = vmatpush1.bf16.msra.mxu0 0
      %4304 = vmatprep.subr.bf16.mxu0 0
      %4305 = vmatpush1.bf16.msra.mxu0 0
      %4306 = vmatprep.subr.bf16.mxu0 0
      %4307 = vmatpush1.bf16.msra.mxu0 0
      %4308 = vmatprep.subr.bf16.mxu0 0
      %4309 = vmatpush1.bf16.msra.mxu0 0
      %4310 = vmatprep.subr.bf16.mxu0 0
      %4311 = vmatpush1.bf16.msra.mxu0 0
      %4312 = vmatprep.subr.bf16.mxu0 0
      %4313 = vmatpush1.bf16.msra.mxu0 0
      %4314 = vmatprep.mubr.bf16.mxu0 0
      %4315 = vmatmul.mubr.bf16.gmra.mrb[0].mxu0 %v4280
      %v4316 = vpop.f32.mrb[0].mxu0
      %v4317 = vadd.f32 %v4277, %v4316
      %v4318 = vpop.f32.mrb[0].mxu0
      %v4319 = vpop.f32.mrb[0].mxu0
      %v4320 = vpop.f32.mrb[0].mxu0
      %4321 = vdwg.mxu0
      %4323 = vrot.lane.b32.xlu0 %v4317, 96
      %v4324 = vpop.permute.xlu0 %4323
      %v4325 = vsel %vm1135, %v4317, 0
      %v4327 = vsel %vm1135, %v4324, 0
      %4329 = vmatprep.subr.mxu0 0.0
      %4330 = vmatpush1.xpose.msra.mxu0 %v4327
      %4331 = vmatprep.subr.mxu0 0.0
      %4332 = vmatpush1.xpose.msra.mxu0 0.0
      %4333 = vmatprep.subr.mxu0 0.0
      %4334 = vmatpush1.xpose.msra.mxu0 0.0
      %4335 = vmatprep.subr.mxu0 0.0
      %4336 = vmatpush1.xpose.msra.mxu0 0.0
      %4337 = vmatprep.subr.mxu0 0.0
      %4338 = vmatpush1.xpose.msra.mxu0 0.0
      %4339 = vmatprep.subr.mxu0 0.0
      %4340 = vmatpush1.xpose.msra.mxu0 0.0
      %4341 = vmatprep.subr.mxu0 0.0
      %4342 = vmatpush1.xpose.msra.mxu0 0.0
      %4343 = vmatprep.subr.mxu0 0.0
      %4344 = vmatpush1.xpose.msra.mxu0 0.0
      %4345 = vmatprep.subr.mxu0 0.0
      %4346 = vmatpush1.xpose.msra.mxu0 0.0
      %4347 = vmatprep.subr.mxu0 0.0
      %4348 = vmatpush1.xpose.msra.mxu0 0.0
      %4349 = vmatprep.subr.mxu0 0.0
      %4350 = vmatpush1.xpose.msra.mxu0 0.0
      %4351 = vmatprep.subr.mxu0 0.0
      %4352 = vmatpush1.xpose.msra.mxu0 0.0
      %4353 = vmatprep.subr.mxu0 0.0
      %4354 = vmatpush1.xpose.msra.mxu0 0.0
      %4355 = vmatprep.subr.mxu0 0.0
      %4356 = vmatpush1.xpose.msra.mxu0 0.0
      %4357 = vmatprep.subr.mxu0 0.0
      %4358 = vmatpush1.xpose.msra.mxu0 0.0
      %4359 = vmatprep.subr.mxu0 0.0
      %4360 = vmatpush1.xpose.msra.mxu0 0.0
      %4361 = vmatprep.subr.mxu0 0.0
      %4362 = vmatpush1.xpose.msra.mxu0 0.0
      %4363 = vmatprep.subr.mxu0 0.0
      %4364 = vmatpush1.xpose.msra.mxu0 0.0
      %4365 = vmatprep.subr.mxu0 0.0
      %4366 = vmatpush1.xpose.msra.mxu0 0.0
      %4367 = vmatprep.subr.mxu0 0.0
      %4368 = vmatpush1.xpose.msra.mxu0 0.0
      %4369 = vmatprep.subr.mxu0 0.0
      %4370 = vmatpush1.xpose.msra.mxu0 0.0
      %4371 = vmatprep.subr.mxu0 0.0
      %4372 = vmatpush1.xpose.msra.mxu0 0.0
      %4373 = vmatprep.subr.mxu0 0.0
      %4374 = vmatpush1.xpose.msra.mxu0 0.0
      %4375 = vmatprep.subr.mxu0 0.0
      %4376 = vmatpush1.xpose.msra.mxu0 0.0
      %4377 = vmatprep.subr.mxu0 0.0
      %4378 = vmatpush1.xpose.msra.mxu0 0.0
      %4379 = vmatprep.subr.mxu0 0.0
      %4380 = vmatpush1.xpose.msra.mxu0 0.0
      %4381 = vmatprep.subr.mxu0 0.0
      %4382 = vmatpush1.xpose.msra.mxu0 0.0
      %4383 = vmatprep.subr.mxu0 0.0
      %4384 = vmatpush1.xpose.msra.mxu0 0.0
      %4385 = vmatprep.subr.mxu0 0.0
      %4386 = vmatpush1.xpose.msra.mxu0 0.0
      %4387 = vmatprep.subr.mxu0 0.0
      %4388 = vmatpush1.xpose.msra.mxu0 0.0
      %4389 = vmatprep.subr.mxu0 0.0
      %4390 = vmatpush1.xpose.msra.mxu0 0.0
      %4391 = vmatprep.subr.mxu0 0.0
      %4392 = vmatpush1.xpose.msra.mxu0 0.0
      %4393 = vmatprep.mubr.f32.mxu0 0.0
      %4394 = vmatmul.mubr.f32.gmra.mrb[0].mxu0 %v4325
      %v4395 = vpop.f32.mrb[0].mxu0
      %v4396 = vadd.f32 0.0, %v4395
      %v4397 = vpop.f32.mrb[0].mxu0
      %4398 = vdwg.mxu0
      %v4399 = vmul.f32 %v4396, 0.35355338
      %v4400 = vsel %vm1135, %v4399, -inf
      %4401 = vmax.xlane.f32.xlu0 %v4400
      %v4402 = vpop.xlane.xlu0 %4401
      %v4403 = vsub.f32 %v4399, %v4402
      %v4404 = vmul.f32 %v4403, 1.442695
      %v4405 = vpow.pop %v4404
      %v4406 = vsel %vm1135, %v4405, 0.0
      %4407 = vadd.xlane.f32.xlu0 %v4406
      %v4408 = vpop.xlane.xlu0 %4407
      %v4409 = vrcp.pop %v4408
      %v4410 = vmul.f32 %v4405, %v4409
      %4411 = vrot.lane.b32.xlu0 %v4317, 64
      %v4412 = vpop.permute.xlu0 %4411
      %v4415 = vsel %vm1135, %v4410, 0
      %4417 = vmatprep.subr.mxu0 0.0
      %4418 = vmatpush1.msra.mxu0 %v4412
      %4419 = vmatprep.subr.mxu0 0.0
      %4420 = vmatpush1.msra.mxu0 0.0
      %4421 = vmatprep.subr.mxu0 0.0
      %4422 = vmatpush1.msra.mxu0 0.0
      %4423 = vmatprep.subr.mxu0 0.0
      %4424 = vmatpush1.msra.mxu0 0.0
      %4425 = vmatprep.subr.mxu0 0.0
      %4426 = vmatpush1.msra.mxu0 0.0
      %4427 = vmatprep.subr.mxu0 0.0
      %4428 = vmatpush1.msra.mxu0 0.0
      %4429 = vmatprep.subr.mxu0 0.0
      %4430 = vmatpush1.msra.mxu0 0.0
      %4431 = vmatprep.subr.mxu0 0.0
      %4432 = vmatpush1.msra.mxu0 0.0
      %4433 = vmatprep.subr.mxu0 0.0
      %4434 = vmatpush1.msra.mxu0 0.0
      %4435 = vmatprep.subr.mxu0 0.0
      %4436 = vmatpush1.msra.mxu0 0.0
      %4437 = vmatprep.subr.mxu0 0.0
      %4438 = vmatpush1.msra.mxu0 0.0
      %4439 = vmatprep.subr.mxu0 0.0
      %4440 = vmatpush1.msra.mxu0 0.0
      %4441 = vmatprep.subr.mxu0 0.0
      %4442 = vmatpush1.msra.mxu0 0.0
      %4443 = vmatprep.subr.mxu0 0.0
      %4444 = vmatpush1.msra.mxu0 0.0
      %4445 = vmatprep.subr.mxu0 0.0
      %4446 = vmatpush1.msra.mxu0 0.0
      %4447 = vmatprep.subr.mxu0 0.0
      %4448 = vmatpush1.msra.mxu0 0.0
      %4449 = vmatprep.subr.mxu0 0.0
      %4450 = vmatpush1.msra.mxu0 0.0
      %4451 = vmatprep.subr.mxu0 0.0
      %4452 = vmatpush1.msra.mxu0 0.0
      %4453 = vmatprep.subr.mxu0 0.0
      %4454 = vmatpush1.msra.mxu0 0.0
      %4455 = vmatprep.subr.mxu0 0.0
      %4456 = vmatpush1.msra.mxu0 0.0
      %4457 = vmatprep.subr.mxu0 0.0
      %4458 = vmatpush1.msra.mxu0 0.0
      %4459 = vmatprep.subr.mxu0 0.0
      %4460 = vmatpush1.msra.mxu0 0.0
      %4461 = vmatprep.subr.mxu0 0.0
      %4462 = vmatpush1.msra.mxu0 0.0
      %4463 = vmatprep.subr.mxu0 0.0
      %4464 = vmatpush1.msra.mxu0 0.0
      %4465 = vmatprep.subr.mxu0 0.0
      %4466 = vmatpush1.msra.mxu0 0.0
      %4467 = vmatprep.subr.mxu0 0.0
      %4468 = vmatpush1.msra.mxu0 0.0
      %4469 = vmatprep.subr.mxu0 0.0
      %4470 = vmatpush1.msra.mxu0 0.0
      %4471 = vmatprep.subr.mxu0 0.0
      %4472 = vmatpush1.msra.mxu0 0.0
      %4473 = vmatprep.subr.mxu0 0.0
      %4474 = vmatpush1.msra.mxu0 0.0
      %4475 = vmatprep.subr.mxu0 0.0
      %4476 = vmatpush1.msra.mxu0 0.0
      %4477 = vmatprep.subr.mxu0 0.0
      %4478 = vmatpush1.msra.mxu0 0.0
      %4479 = vmatprep.subr.mxu0 0.0
      %4480 = vmatpush1.msra.mxu0 0.0
      %4481 = vmatprep.mubr.f32.mxu0 0.0
      %4482 = vmatmul.mubr.f32.gmra.mrb[0].mxu0 %v4415
      %v4483 = vpop.f32.mrb[0].mxu0
      %v4484 = vadd.f32 0.0, %v4483
      %v4485 = vpop.f32.mrb[0].mxu0
      %4486 = vdwg.mxu0
      %4487 = vrot.lane.b32.xlu0 %v4317, 120
      %v4488 = vpop.permute.xlu0 %4487
      %4489 = vrot.lane.b32.xlu0 %v4317, 88
      %v4490 = vpop.permute.xlu0 %4489
      %v4491 = vsel %vm1135, %v4488, 0
      %v4493 = vsel %vm1135, %v4490, 0
      %4495 = vmatprep.subr.mxu0 0.0
      %4496 = vmatpush1.xpose.msra.mxu0 %v4493
      %4497 = vmatprep.subr.mxu0 0.0
      %4498 = vmatpush1.xpose.msra.mxu0 0.0
      %4499 = vmatprep.subr.mxu0 0.0
      %4500 = vmatpush1.xpose.msra.mxu0 0.0
      %4501 = vmatprep.subr.mxu0 0.0
      %4502 = vmatpush1.xpose.msra.mxu0 0.0
      %4503 = vmatprep.subr.mxu0 0.0
      %4504 = vmatpush1.xpose.msra.mxu0 0.0
      %4505 = vmatprep.subr.mxu0 0.0
      %4506 = vmatpush1.xpose.msra.mxu0 0.0
      %4507 = vmatprep.subr.mxu0 0.0
      %4508 = vmatpush1.xpose.msra.mxu0 0.0
      %4509 = vmatprep.subr.mxu0 0.0
      %4510 = vmatpush1.xpose.msra.mxu0 0.0
      %4511 = vmatprep.subr.mxu0 0.0
      %4512 = vmatpush1.xpose.msra.mxu0 0.0
      %4513 = vmatprep.subr.mxu0 0.0
      %4514 = vmatpush1.xpose.msra.mxu0 0.0
      %4515 = vmatprep.subr.mxu0 0.0
      %4516 = vmatpush1.xpose.msra.mxu0 0.0
      %4517 = vmatprep.subr.mxu0 0.0
      %4518 = vmatpush1.xpose.msra.mxu0 0.0
      %4519 = vmatprep.subr.mxu0 0.0
      %4520 = vmatpush1.xpose.msra.mxu0 0.0
      %4521 = vmatprep.subr.mxu0 0.0
      %4522 = vmatpush1.xpose.msra.mxu0 0.0
      %4523 = vmatprep.subr.mxu0 0.0
      %4524 = vmatpush1.xpose.msra.mxu0 0.0
      %4525 = vmatprep.subr.mxu0 0.0
      %4526 = vmatpush1.xpose.msra.mxu0 0.0
      %4527 = vmatprep.subr.mxu0 0.0
      %4528 = vmatpush1.xpose.msra.mxu0 0.0
      %4529 = vmatprep.subr.mxu0 0.0
      %4530 = vmatpush1.xpose.msra.mxu0 0.0
      %4531 = vmatprep.subr.mxu0 0.0
      %4532 = vmatpush1.xpose.msra.mxu0 0.0
      %4533 = vmatprep.subr.mxu0 0.0
      %4534 = vmatpush1.xpose.msra.mxu0 0.0
      %4535 = vmatprep.subr.mxu0 0.0
      %4536 = vmatpush1.xpose.msra.mxu0 0.0
      %4537 = vmatprep.subr.mxu0 0.0
      %4538 = vmatpush1.xpose.msra.mxu0 0.0
      %4539 = vmatprep.subr.mxu0 0.0
      %4540 = vmatpush1.xpose.msra.mxu0 0.0
      %4541 = vmatprep.subr.mxu0 0.0
      %4542 = vmatpush1.xpose.msra.mxu0 0.0
      %4543 = vmatprep.subr.mxu0 0.0
      %4544 = vmatpush1.xpose.msra.mxu0 0.0
      %4545 = vmatprep.subr.mxu0 0.0
      %4546 = vmatpush1.xpose.msra.mxu0 0.0
      %4547 = vmatprep.subr.mxu0 0.0
      %4548 = vmatpush1.xpose.msra.mxu0 0.0
      %4549 = vmatprep.subr.mxu0 0.0
      %4550 = vmatpush1.xpose.msra.mxu0 0.0
      %4551 = vmatprep.subr.mxu0 0.0
      %4552 = vmatpush1.xpose.msra.mxu0 0.0
      %4553 = vmatprep.subr.mxu0 0.0
      %4554 = vmatpush1.xpose.msra.mxu0 0.0
      %4555 = vmatprep.subr.mxu0 0.0
      %4556 = vmatpush1.xpose.msra.mxu0 0.0
      %4557 = vmatprep.subr.mxu0 0.0
      %4558 = vmatpush1.xpose.msra.mxu0 0.0
      %4559 = vmatprep.mubr.f32.mxu0 0.0
      %4560 = vmatmul.mubr.f32.gmra.mrb[0].mxu0 %v4491
      %v4561 = vpop.f32.mrb[0].mxu0
      %v4562 = vadd.f32 0.0, %v4561
      %v4563 = vpop.f32.mrb[0].mxu0
      %4564 = vdwg.mxu0
      %v4565 = vmul.f32 %v4562, 0.35355338
      %v4566 = vsel %vm1135, %v4565, -inf
      %4567 = vmax.xlane.f32.xlu0 %v4566
      %v4568 = vpop.xlane.xlu0 %4567
      %v4569 = vsub.f32 %v4565, %v4568
      %v4570 = vmul.f32 %v4569, 1.442695
      %v4571 = vpow.pop %v4570
      %v4572 = vsel %vm1135, %v4571, 0.0
      %4573 = vadd.xlane.f32.xlu0 %v4572
      %v4574 = vpop.xlane.xlu0 %4573
      %v4575 = vrcp.pop %v4574
      %v4576 = vmul.f32 %v4571, %v4575
      %4577 = vrot.lane.b32.xlu0 %v4317, 56
      %v4578 = vpop.permute.xlu0 %4577
      %v4581 = vsel %vm1135, %v4576, 0
      %4583 = vmatprep.subr.mxu0 0.0
      %4584 = vmatpush1.msra.mxu0 %v4578
      %4585 = vmatprep.subr.mxu0 0.0
      %4586 = vmatpush1.msra.mxu0 0.0
      %4587 = vmatprep.subr.mxu0 0.0
      %4588 = vmatpush1.msra.mxu0 0.0
      %4589 = vmatprep.subr.mxu0 0.0
      %4590 = vmatpush1.msra.mxu0 0.0
      %4591 = vmatprep.subr.mxu0 0.0
      %4592 = vmatpush1.msra.mxu0 0.0
      %4593 = vmatprep.subr.mxu0 0.0
      %4594 = vmatpush1.msra.mxu0 0.0
      %4595 = vmatprep.subr.mxu0 0.0
      %4596 = vmatpush1.msra.mxu0 0.0
      %4597 = vmatprep.subr.mxu0 0.0
      %4598 = vmatpush1.msra.mxu0 0.0
      %4599 = vmatprep.subr.mxu0 0.0
      %4600 = vmatpush1.msra.mxu0 0.0
      %4601 = vmatprep.subr.mxu0 0.0
      %4602 = vmatpush1.msra.mxu0 0.0
      %4603 = vmatprep.subr.mxu0 0.0
      %4604 = vmatpush1.msra.mxu0 0.0
      %4605 = vmatprep.subr.mxu0 0.0
      %4606 = vmatpush1.msra.mxu0 0.0
      %4607 = vmatprep.subr.mxu0 0.0
      %4608 = vmatpush1.msra.mxu0 0.0
      %4609 = vmatprep.subr.mxu0 0.0
      %4610 = vmatpush1.msra.mxu0 0.0
      %4611 = vmatprep.subr.mxu0 0.0
      %4612 = vmatpush1.msra.mxu0 0.0
      %4613 = vmatprep.subr.mxu0 0.0
      %4614 = vmatpush1.msra.mxu0 0.0
      %4615 = vmatprep.subr.mxu0 0.0
      %4616 = vmatpush1.msra.mxu0 0.0
      %4617 = vmatprep.subr.mxu0 0.0
      %4618 = vmatpush1.msra.mxu0 0.0
      %4619 = vmatprep.subr.mxu0 0.0
      %4620 = vmatpush1.msra.mxu0 0.0
      %4621 = vmatprep.subr.mxu0 0.0
      %4622 = vmatpush1.msra.mxu0 0.0
      %4623 = vmatprep.subr.mxu0 0.0
      %4624 = vmatpush1.msra.mxu0 0.0
      %4625 = vmatprep.subr.mxu0 0.0
      %4626 = vmatpush1.msra.mxu0 0.0
      %4627 = vmatprep.subr.mxu0 0.0
      %4628 = vmatpush1.msra.mxu0 0.0
      %4629 = vmatprep.subr.mxu0 0.0
      %4630 = vmatpush1.msra.mxu0 0.0
      %4631 = vmatprep.subr.mxu0 0.0
      %4632 = vmatpush1.msra.mxu0 0.0
      %4633 = vmatprep.subr.mxu0 0.0
      %4634 = vmatpush1.msra.mxu0 0.0
      %4635 = vmatprep.subr.mxu0 0.0
      %4636 = vmatpush1.msra.mxu0 0.0
      %4637 = vmatprep.subr.mxu0 0.0
      %4638 = vmatpush1.msra.mxu0 0.0
      %4639 = vmatprep.subr.mxu0 0.0
      %4640 = vmatpush1.msra.mxu0 0.0
      %4641 = vmatprep.subr.mxu0 0.0
      %4642 = vmatpush1.msra.mxu0 0.0
      %4643 = vmatprep.subr.mxu0 0.0
      %4644 = vmatpush1.msra.mxu0 0.0
      %4645 = vmatprep.subr.mxu0 0.0
      %4646 = vmatpush1.msra.mxu0 0.0
      %4647 = vmatprep.mubr.f32.mxu0 0.0
      %4648 = vmatmul.mubr.f32.gmra.mrb[0].mxu0 %v4581
      %v4649 = vpop.f32.mrb[0].mxu0
      %v4650 = vadd.f32 0.0, %v4649
      %v4651 = vpop.f32.mrb[0].mxu0
      %4652 = vdwg.mxu0
      %4653 = vrot.lane.b32.xlu0 %v4317, 112
      %v4654 = vpop.permute.xlu0 %4653
      %4655 = vrot.lane.b32.xlu0 %v4317, 80
      %v4656 = vpop.permute.xlu0 %4655
      %v4657 = vsel %vm1135, %v4654, 0
      %v4659 = vsel %vm1135, %v4656, 0
      %4661 = vmatprep.subr.mxu0 0.0
      %4662 = vmatpush1.xpose.msra.mxu0 %v4659
      %4663 = vmatprep.subr.mxu0 0.0
      %4664 = vmatpush1.xpose.msra.mxu0 0.0
      %4665 = vmatprep.subr.mxu0 0.0
      %4666 = vmatpush1.xpose.msra.mxu0 0.0
      %4667 = vmatprep.subr.mxu0 0.0
      %4668 = vmatpush1.xpose.msra.mxu0 0.0
      %4669 = vmatprep.subr.mxu0 0.0
      %4670 = vmatpush1.xpose.msra.mxu0 0.0
      %4671 = vmatprep.subr.mxu0 0.0
      %4672 = vmatpush1.xpose.msra.mxu0 0.0
      %4673 = vmatprep.subr.mxu0 0.0
      %4674 = vmatpush1.xpose.msra.mxu0 0.0
      %4675 = vmatprep.subr.mxu0 0.0
      %4676 = vmatpush1.xpose.msra.mxu0 0.0
      %4677 = vmatprep.subr.mxu0 0.0
      %4678 = vmatpush1.xpose.msra.mxu0 0.0
      %4679 = vmatprep.subr.mxu0 0.0
      %4680 = vmatpush1.xpose.msra.mxu0 0.0
      %4681 = vmatprep.subr.mxu0 0.0
      %4682 = vmatpush1.xpose.msra.mxu0 0.0
      %4683 = vmatprep.subr.mxu0 0.0
      %4684 = vmatpush1.xpose.msra.mxu0 0.0
      %4685 = vmatprep.subr.mxu0 0.0
      %4686 = vmatpush1.xpose.msra.mxu0 0.0
      %4687 = vmatprep.subr.mxu0 0.0
      %4688 = vmatpush1.xpose.msra.mxu0 0.0
      %4689 = vmatprep.subr.mxu0 0.0
      %4690 = vmatpush1.xpose.msra.mxu0 0.0
      %4691 = vmatprep.subr.mxu0 0.0
      %4692 = vmatpush1.xpose.msra.mxu0 0.0
      %4693 = vmatprep.subr.mxu0 0.0
      %4694 = vmatpush1.xpose.msra.mxu0 0.0
      %4695 = vmatprep.subr.mxu0 0.0
      %4696 = vmatpush1.xpose.msra.mxu0 0.0
      %4697 = vmatprep.subr.mxu0 0.0
      %4698 = vmatpush1.xpose.msra.mxu0 0.0
      %4699 = vmatprep.subr.mxu0 0.0
      %4700 = vmatpush1.xpose.msra.mxu0 0.0
      %4701 = vmatprep.subr.mxu0 0.0
      %4702 = vmatpush1.xpose.msra.mxu0 0.0
      %4703 = vmatprep.subr.mxu0 0.0
      %4704 = vmatpush1.xpose.msra.mxu0 0.0
      %4705 = vmatprep.subr.mxu0 0.0
      %4706 = vmatpush1.xpose.msra.mxu0 0.0
      %4707 = vmatprep.subr.mxu0 0.0
      %4708 = vmatpush1.xpose.msra.mxu0 0.0
      %4709 = vmatprep.subr.mxu0 0.0
      %4710 = vmatpush1.xpose.msra.mxu0 0.0
      %4711 = vmatprep.subr.mxu0 0.0
      %4712 = vmatpush1.xpose.msra.mxu0 0.0
      %4713 = vmatprep.subr.mxu0 0.0
      %4714 = vmatpush1.xpose.msra.mxu0 0.0
      %4715 = vmatprep.subr.mxu0 0.0
      %4716 = vmatpush1.xpose.msra.mxu0 0.0
      %4717 = vmatprep.subr.mxu0 0.0
      %4718 = vmatpush1.xpose.msra.mxu0 0.0
      %4719 = vmatprep.subr.mxu0 0.0
      %4720 = vmatpush1.xpose.msra.mxu0 0.0
      %4721 = vmatprep.subr.mxu0 0.0
      %4722 = vmatpush1.xpose.msra.mxu0 0.0
      %4723 = vmatprep.subr.mxu0 0.0
      %4724 = vmatpush1.xpose.msra.mxu0 0.0
      %4725 = vmatprep.mubr.f32.mxu0 0.0
      %4726 = vmatmul.mubr.f32.gmra.mrb[0].mxu0 %v4657
      %v4727 = vpop.f32.mrb[0].mxu0
      %v4728 = vadd.f32 0.0, %v4727
      %v4729 = vpop.f32.mrb[0].mxu0
      %4730 = vdwg.mxu0
      %v4731 = vmul.f32 %v4728, 0.35355338
      %v4732 = vsel %vm1135, %v4731, -inf
      %4733 = vmax.xlane.f32.xlu0 %v4732
      %v4734 = vpop.xlane.xlu0 %4733
      %v4735 = vsub.f32 %v4731, %v4734
      %v4736 = vmul.f32 %v4735, 1.442695
      %v4737 = vpow.pop %v4736
      %v4738 = vsel %vm1135, %v4737, 0.0
      %4739 = vadd.xlane.f32.xlu0 %v4738
      %v4740 = vpop.xlane.xlu0 %4739
      %v4741 = vrcp.pop %v4740
      %v4742 = vmul.f32 %v4737, %v4741
      %4743 = vrot.lane.b32.xlu0 %v4317, 48
      %v4744 = vpop.permute.xlu0 %4743
      %v4747 = vsel %vm1135, %v4742, 0
      %4749 = vmatprep.subr.mxu0 0.0
      %4750 = vmatpush1.msra.mxu0 %v4744
      %4751 = vmatprep.subr.mxu0 0.0
      %4752 = vmatpush1.msra.mxu0 0.0
      %4753 = vmatprep.subr.mxu0 0.0
      %4754 = vmatpush1.msra.mxu0 0.0
      %4755 = vmatprep.subr.mxu0 0.0
      %4756 = vmatpush1.msra.mxu0 0.0
      %4757 = vmatprep.subr.mxu0 0.0
      %4758 = vmatpush1.msra.mxu0 0.0
      %4759 = vmatprep.subr.mxu0 0.0
      %4760 = vmatpush1.msra.mxu0 0.0
      %4761 = vmatprep.subr.mxu0 0.0
      %4762 = vmatpush1.msra.mxu0 0.0
      %4763 = vmatprep.subr.mxu0 0.0
      %4764 = vmatpush1.msra.mxu0 0.0
      %4765 = vmatprep.subr.mxu0 0.0
      %4766 = vmatpush1.msra.mxu0 0.0
      %4767 = vmatprep.subr.mxu0 0.0
      %4768 = vmatpush1.msra.mxu0 0.0
      %4769 = vmatprep.subr.mxu0 0.0
      %4770 = vmatpush1.msra.mxu0 0.0
      %4771 = vmatprep.subr.mxu0 0.0
      %4772 = vmatpush1.msra.mxu0 0.0
      %4773 = vmatprep.subr.mxu0 0.0
      %4774 = vmatpush1.msra.mxu0 0.0
      %4775 = vmatprep.subr.mxu0 0.0
      %4776 = vmatpush1.msra.mxu0 0.0
      %4777 = vmatprep.subr.mxu0 0.0
      %4778 = vmatpush1.msra.mxu0 0.0
      %4779 = vmatprep.subr.mxu0 0.0
      %4780 = vmatpush1.msra.mxu0 0.0
      %4781 = vmatprep.subr.mxu0 0.0
      %4782 = vmatpush1.msra.mxu0 0.0
      %4783 = vmatprep.subr.mxu0 0.0
      %4784 = vmatpush1.msra.mxu0 0.0
      %4785 = vmatprep.subr.mxu0 0.0
      %4786 = vmatpush1.msra.mxu0 0.0
      %4787 = vmatprep.subr.mxu0 0.0
      %4788 = vmatpush1.msra.mxu0 0.0
      %4789 = vmatprep.subr.mxu0 0.0
      %4790 = vmatpush1.msra.mxu0 0.0
      %4791 = vmatprep.subr.mxu0 0.0
      %4792 = vmatpush1.msra.mxu0 0.0
      %4793 = vmatprep.subr.mxu0 0.0
      %4794 = vmatpush1.msra.mxu0 0.0
      %4795 = vmatprep.subr.mxu0 0.0
      %4796 = vmatpush1.msra.mxu0 0.0
      %4797 = vmatprep.subr.mxu0 0.0
      %4798 = vmatpush1.msra.mxu0 0.0
      %4799 = vmatprep.subr.mxu0 0.0
      %4800 = vmatpush1.msra.mxu0 0.0
      %4801 = vmatprep.subr.mxu0 0.0
      %4802 = vmatpush1.msra.mxu0 0.0
      %4803 = vmatprep.subr.mxu0 0.0
      %4804 = vmatpush1.msra.mxu0 0.0
      %4805 = vmatprep.subr.mxu0 0.0
      %4806 = vmatpush1.msra.mxu0 0.0
      %4807 = vmatprep.subr.mxu0 0.0
      %4808 = vmatpush1.msra.mxu0 0.0
      %4809 = vmatprep.subr.mxu0 0.0
      %4810 = vmatpush1.msra.mxu0 0.0
      %4811 = vmatprep.subr.mxu0 0.0
      %4812 = vmatpush1.msra.mxu0 0.0
      %4813 = vmatprep.mubr.f32.mxu0 0.0
      %4814 = vmatmul.mubr.f32.gmra.mrb[0].mxu0 %v4747
      %v4815 = vpop.f32.mrb[0].mxu0
      %v4816 = vadd.f32 0.0, %v4815
      %v4817 = vpop.f32.mrb[0].mxu0
      %4818 = vdwg.mxu0
      %4819 = vrot.lane.b32.xlu0 %v4317, 104
      %v4820 = vpop.permute.xlu0 %4819
      %4821 = vrot.lane.b32.xlu0 %v4317, 72
      %v4822 = vpop.permute.xlu0 %4821
      %v4823 = vsel %vm1135, %v4820, 0
      %v4825 = vsel %vm1135, %v4822, 0
      %4827 = vmatprep.subr.mxu0 0.0
      %4828 = vmatpush1.xpose.msra.mxu0 %v4825
      %4829 = vmatprep.subr.mxu0 0.0
      %4830 = vmatpush1.xpose.msra.mxu0 0.0
      %4831 = vmatprep.subr.mxu0 0.0
      %4832 = vmatpush1.xpose.msra.mxu0 0.0
      %4833 = vmatprep.subr.mxu0 0.0
      %4834 = vmatpush1.xpose.msra.mxu0 0.0
      %4835 = vmatprep.subr.mxu0 0.0
      %4836 = vmatpush1.xpose.msra.mxu0 0.0
      %4837 = vmatprep.subr.mxu0 0.0
      %4838 = vmatpush1.xpose.msra.mxu0 0.0
      %4839 = vmatprep.subr.mxu0 0.0
      %4840 = vmatpush1.xpose.msra.mxu0 0.0
      %4841 = vmatprep.subr.mxu0 0.0
      %4842 = vmatpush1.xpose.msra.mxu0 0.0
      %4843 = vmatprep.subr.mxu0 0.0
      %4844 = vmatpush1.xpose.msra.mxu0 0.0
      %4845 = vmatprep.subr.mxu0 0.0
      %4846 = vmatpush1.xpose.msra.mxu0 0.0
      %4847 = vmatprep.subr.mxu0 0.0
      %4848 = vmatpush1.xpose.msra.mxu0 0.0
      %4849 = vmatprep.subr.mxu0 0.0
      %4850 = vmatpush1.xpose.msra.mxu0 0.0
      %4851 = vmatprep.subr.mxu0 0.0
      %4852 = vmatpush1.xpose.msra.mxu0 0.0
      %4853 = vmatprep.subr.mxu0 0.0
      %4854 = vmatpush1.xpose.msra.mxu0 0.0
      %4855 = vmatprep.subr.mxu0 0.0
      %4856 = vmatpush1.xpose.msra.mxu0 0.0
      %4857 = vmatprep.subr.mxu0 0.0
      %4858 = vmatpush1.xpose.msra.mxu0 0.0
      %4859 = vmatprep.subr.mxu0 0.0
      %4860 = vmatpush1.xpose.msra.mxu0 0.0
      %4861 = vmatprep.subr.mxu0 0.0
      %4862 = vmatpush1.xpose.msra.mxu0 0.0
      %4863 = vmatprep.subr.mxu0 0.0
      %4864 = vmatpush1.xpose.msra.mxu0 0.0
      %4865 = vmatprep.subr.mxu0 0.0
      %4866 = vmatpush1.xpose.msra.mxu0 0.0
      %4867 = vmatprep.subr.mxu0 0.0
      %4868 = vmatpush1.xpose.msra.mxu0 0.0
      %4869 = vmatprep.subr.mxu0 0.0
      %4870 = vmatpush1.xpose.msra.mxu0 0.0
      %4871 = vmatprep.subr.mxu0 0.0
      %4872 = vmatpush1.xpose.msra.mxu0 0.0
      %4873 = vmatprep.subr.mxu0 0.0
      %4874 = vmatpush1.xpose.msra.mxu0 0.0
      %4875 = vmatprep.subr.mxu0 0.0
      %4876 = vmatpush1.xpose.msra.mxu0 0.0
      %4877 = vmatprep.subr.mxu0 0.0
      %4878 = vmatpush1.xpose.msra.mxu0 0.0
      %4879 = vmatprep.subr.mxu0 0.0
      %4880 = vmatpush1.xpose.msra.mxu0 0.0
      %4881 = vmatprep.subr.mxu0 0.0
      %4882 = vmatpush1.xpose.msra.mxu0 0.0
      %4883 = vmatprep.subr.mxu0 0.0
      %4884 = vmatpush1.xpose.msra.mxu0 0.0
      %4885 = vmatprep.subr.mxu0 0.0
      %4886 = vmatpush1.xpose.msra.mxu0 0.0
      %4887 = vmatprep.subr.mxu0 0.0
      %4888 = vmatpush1.xpose.msra.mxu0 0.0
      %4889 = vmatprep.subr.mxu0 0.0
      %4890 = vmatpush1.xpose.msra.mxu0 0.0
      %4891 = vmatprep.mubr.f32.mxu0 0.0
      %4892 = vmatmul.mubr.f32.gmra.mrb[0].mxu0 %v4823
      %v4893 = vpop.f32.mrb[0].mxu0
      %v4894 = vadd.f32 0.0, %v4893
      %v4895 = vpop.f32.mrb[0].mxu0
      %4896 = vdwg.mxu0
      %v4897 = vmul.f32 %v4894, 0.35355338
      %v4898 = vsel %vm1135, %v4897, -inf
      %4899 = vmax.xlane.f32.xlu0 %v4898
      %v4900 = vpop.xlane.xlu0 %4899
      %v4901 = vsub.f32 %v4897, %v4900
      %v4902 = vmul.f32 %v4901, 1.442695
      %v4903 = vpow.pop %v4902
      %v4904 = vsel %vm1135, %v4903, 0.0
      %4905 = vadd.xlane.f32.xlu0 %v4904
      %v4906 = vpop.xlane.xlu0 %4905
      %v4907 = vrcp.pop %v4906
      %v4908 = vmul.f32 %v4903, %v4907
      %4909 = vrot.lane.b32.xlu0 %v4317, 40
      %v4910 = vpop.permute.xlu0 %4909
      %v4913 = vsel %vm1135, %v4908, 0
      %4915 = vmatprep.subr.mxu0 0.0
      %4916 = vmatpush1.msra.mxu0 %v4910
      %4917 = vmatprep.subr.mxu0 0.0
      %4918 = vmatpush1.msra.mxu0 0.0
      %4919 = vmatprep.subr.mxu0 0.0
      %4920 = vmatpush1.msra.mxu0 0.0
      %4921 = vmatprep.subr.mxu0 0.0
      %4922 = vmatpush1.msra.mxu0 0.0
      %4923 = vmatprep.subr.mxu0 0.0
      %4924 = vmatpush1.msra.mxu0 0.0
      %4925 = vmatprep.subr.mxu0 0.0
      %4926 = vmatpush1.msra.mxu0 0.0
      %4927 = vmatprep.subr.mxu0 0.0
      %4928 = vmatpush1.msra.mxu0 0.0
      %4929 = vmatprep.subr.mxu0 0.0
      %4930 = vmatpush1.msra.mxu0 0.0
      %4931 = vmatprep.subr.mxu0 0.0
      %4932 = vmatpush1.msra.mxu0 0.0
      %4933 = vmatprep.subr.mxu0 0.0
      %4934 = vmatpush1.msra.mxu0 0.0
      %4935 = vmatprep.subr.mxu0 0.0
      %4936 = vmatpush1.msra.mxu0 0.0
      %4937 = vmatprep.subr.mxu0 0.0
      %4938 = vmatpush1.msra.mxu0 0.0
      %4939 = vmatprep.subr.mxu0 0.0
      %4940 = vmatpush1.msra.mxu0 0.0
      %4941 = vmatprep.subr.mxu0 0.0
      %4942 = vmatpush1.msra.mxu0 0.0
      %4943 = vmatprep.subr.mxu0 0.0
      %4944 = vmatpush1.msra.mxu0 0.0
      %4945 = vmatprep.subr.mxu0 0.0
      %4946 = vmatpush1.msra.mxu0 0.0
      %4947 = vmatprep.subr.mxu0 0.0
      %4948 = vmatpush1.msra.mxu0 0.0
      %4949 = vmatprep.subr.mxu0 0.0
      %4950 = vmatpush1.msra.mxu0 0.0
      %4951 = vmatprep.subr.mxu0 0.0
      %4952 = vmatpush1.msra.mxu0 0.0
      %4953 = vmatprep.subr.mxu0 0.0
      %4954 = vmatpush1.msra.mxu0 0.0
      %4955 = vmatprep.subr.mxu0 0.0
      %4956 = vmatpush1.msra.mxu0 0.0
      %4957 = vmatprep.subr.mxu0 0.0
      %4958 = vmatpush1.msra.mxu0 0.0
      %4959 = vmatprep.subr.mxu0 0.0
      %4960 = vmatpush1.msra.mxu0 0.0
      %4961 = vmatprep.subr.mxu0 0.0
      %4962 = vmatpush1.msra.mxu0 0.0
      %4963 = vmatprep.subr.mxu0 0.0
      %4964 = vmatpush1.msra.mxu0 0.0
      %4965 = vmatprep.subr.mxu0 0.0
      %4966 = vmatpush1.msra.mxu0 0.0
      %4967 = vmatprep.subr.mxu0 0.0
      %4968 = vmatpush1.msra.mxu0 0.0
      %4969 = vmatprep.subr.mxu0 0.0
      %4970 = vmatpush1.msra.mxu0 0.0
      %4971 = vmatprep.subr.mxu0 0.0
      %4972 = vmatpush1.msra.mxu0 0.0
      %4973 = vmatprep.subr.mxu0 0.0
      %4974 = vmatpush1.msra.mxu0 0.0
      %4975 = vmatprep.subr.mxu0 0.0
      %4976 = vmatpush1.msra.mxu0 0.0
      %4977 = vmatprep.subr.mxu0 0.0
      %4978 = vmatpush1.msra.mxu0 0.0
      %4979 = vmatprep.mubr.f32.mxu0 0.0
      %4980 = vmatmul.mubr.f32.gmra.mrb[0].mxu0 %v4913
      %v4981 = vpop.f32.mrb[0].mxu0
      %v4982 = vadd.f32 0.0, %v4981
      %v4983 = vpop.f32.mrb[0].mxu0
      %4984 = vdwg.mxu0
      %4986 = vrot.lane.b32.xlu0 %v4650, 8
      %v4987 = vpop.permute.xlu0 %4986
      %4990 = vrot.lane.b32.xlu0 %v4816, 16
      %v4991 = vpop.permute.xlu0 %4990
      %4994 = vrot.lane.b32.xlu0 %v4982, 24
      %v4995 = vpop.permute.xlu0 %4994
      %v4997 = vsel %vm1135, %v4484, %v4987
      %v4998 = vsel %vm1809, %v4997, %v4991
      %v4999 = vsel %vm994, %v4998, %v4995
      %s5000 = scalar_lea.vmem %s19, 96
      %v5001 = vld [vmem:[%s5000] sm:$0xff]
      %v5002 = vld [vmem:[%s5000 + $0x8] sm:$0xff]
      %v5003 = vld [vmem:[%s5000 + $0x10] sm:$0xff]
      %v5004 = vld [vmem:[%s5000 + $0x18] sm:$0xff]
      %v5005 = vpack.c.bf16 %v4999, %v4999
      %v5006 = vpack.c.bf16 %v5002, %v5001
      %v5007 = vpack.c.bf16 %v5004, %v5003
      %v5009 = vsel %vm1046, %v5005, 0
      %5011 = vmatprep.subr.bf16.mxu0 0
      %5012 = vmatpush1.bf16.msra.mxu0 %v5006
      %5013 = vmatprep.subr.bf16.mxu0 0
      %5014 = vmatpush1.bf16.msra.mxu0 %v5007
      %5015 = vmatprep.subr.bf16.mxu0 0
      %5016 = vmatpush1.bf16.msra.mxu0 0
      %5017 = vmatprep.subr.bf16.mxu0 0
      %5018 = vmatpush1.bf16.msra.mxu0 0
      %5019 = vmatprep.subr.bf16.mxu0 0
      %5020 = vmatpush1.bf16.msra.mxu0 0
      %5021 = vmatprep.subr.bf16.mxu0 0
      %5022 = vmatpush1.bf16.msra.mxu0 0
      %5023 = vmatprep.subr.bf16.mxu0 0
      %5024 = vmatpush1.bf16.msra.mxu0 0
      %5025 = vmatprep.subr.bf16.mxu0 0
      %5026 = vmatpush1.bf16.msra.mxu0 0
      %5027 = vmatprep.subr.bf16.mxu0 0
      %5028 = vmatpush1.bf16.msra.mxu0 0
      %5029 = vmatprep.subr.bf16.mxu0 0
      %5030 = vmatpush1.bf16.msra.mxu0 0
      %5031 = vmatprep.subr.bf16.mxu0 0
      %5032 = vmatpush1.bf16.msra.mxu0 0
      %5033 = vmatprep.subr.bf16.mxu0 0
      %5034 = vmatpush1.bf16.msra.mxu0 0
      %5035 = vmatprep.subr.bf16.mxu0 0
      %5036 = vmatpush1.bf16.msra.mxu0 0
      %5037 = vmatprep.subr.bf16.mxu0 0
      %5038 = vmatpush1.bf16.msra.mxu0 0
      %5039 = vmatprep.subr.bf16.mxu0 0
      %5040 = vmatpush1.bf16.msra.mxu0 0
      %5041 = vmatprep.subr.bf16.mxu0 0
      %5042 = vmatpush1.bf16.msra.mxu0 0
      %5043 = vmatprep.mubr.bf16.mxu0 0
      %5044 = vmatmul.mubr.bf16.gmra.mrb[0].mxu0 %v5009
      %v5045 = vpop.f32.mrb[0].mxu0
      %v5046 = vadd.f32 0.0, %v5045
      %v5047 = vpop.f32.mrb[0].mxu0
      %v5048 = vpop.f32.mrb[0].mxu0
      %v5049 = vpop.f32.mrb[0].mxu0
      %5050 = vdwg.mxu0
      %v5051 = vadd.f32 %v4191, %v5046
      %s5052 = scalar_lea.vmem %s21, 3
      %v5053 = vld [vmem:[%s5052] sm:$0x1]
      %v5055 = vlaneseq
      %v5056 = vshrl.u32 %v5055, 7
      %v5057 = vsub.s32 0, %v5056
      %v5058 = vrot.slane %v5053, %v5057
      %v5060 = vadd.f32 %v5051, %v5058
      %s5061 = scalar_lea.vmem %s23, 3
      %v5062 = vld [vmem:[%s5061] sm:$0x1]
      %s5063 = scalar_lea.vmem %s25, 3
      %v5064 = vld [vmem:[%s5063] sm:$0x1]
      %v5065 = vsel %vm1046, %v5060, 0.0
      %5066 = vadd.xlane.f32.xlu0 %v5065
      %v5067 = vpop.xlane.xlu0 %5066
      %v5068 = vmul.f32 %v5067, %v1050
      %v5069 = vsub.f32 %v5060, %v5068
      %v5070 = vmul.f32 %v5069, %v5069
      %v5071 = vsel %vm1046, %v5070, 0.0
      %5072 = vadd.xlane.f32.xlu0 %v5071
      %v5073 = vpop.xlane.xlu0 %5072
      %v5074 = vmul.f32 %v5073, %v1050
      %v5075 = vadd.f32 %v5074, 1e-05
      %v5076 = vrsqrt.pop %v5075
      %v5077 = vmul.f32 %v5069, %v5076
      %v5079 = vlaneseq
      %v5080 = vshrl.u32 %v5079, 7
      %v5081 = vsub.s32 0, %v5080
      %v5082 = vrot.slane %v5062, %v5081
      %v5084 = vmul.f32 %v5077, %v5082
      %v5086 = vlaneseq
      %v5087 = vshrl.u32 %v5086, 7
      %v5088 = vsub.s32 0, %v5087
      %v5089 = vrot.slane %v5064, %v5088
      %v5091 = vadd.f32 %v5084, %v5089
      %s5092 = scalar_lea.vmem %s27, 96
      %v5093 = vld [vmem:[%s5092] sm:$0xff]
      %v5094 = vld [vmem:[%s5092 + $0x8] sm:$0xff]
      %v5095 = vld [vmem:[%s5092 + $0x10] sm:$0xff]
      %v5096 = vld [vmem:[%s5092 + $0x18] sm:$0xff]
      %v5097 = vpack.c.bf16 %v5091, %v5091
      %v5098 = vpack.c.bf16 %v5094, %v5093
      %v5099 = vpack.c.bf16 %v5096, %v5095
      %s5100 = scalar_lea.vmem %s29, 3
      %v5101 = vld [vmem:[%s5100] sm:$0x1]
      %v5103 = vlaneseq
      %v5104 = vshrl.u32 %v5103, 7
      %v5105 = vsub.s32 0, %v5104
      %v5106 = vrot.slane %v5101, %v5105
      %v5109 = vsel %vm1046, %v5097, 0
      %5111 = vmatprep.subr.bf16.mxu0 0
      %5112 = vmatpush1.bf16.msra.mxu0 %v5098
      %5113 = vmatprep.subr.bf16.mxu0 0
      %5114 = vmatpush1.bf16.msra.mxu0 %v5099
      %5115 = vmatprep.subr.bf16.mxu0 0
      %5116 = vmatpush1.bf16.msra.mxu0 0
      %5117 = vmatprep.subr.bf16.mxu0 0
      %5118 = vmatpush1.bf16.msra.mxu0 0
      %5119 = vmatprep.subr.bf16.mxu0 0
      %5120 = vmatpush1.bf16.msra.mxu0 0
      %5121 = vmatprep.subr.bf16.mxu0 0
      %5122 = vmatpush1.bf16.msra.mxu0 0
      %5123 = vmatprep.subr.bf16.mxu0 0
      %5124 = vmatpush1.bf16.msra.mxu0 0
      %5125 = vmatprep.subr.bf16.mxu0 0
      %5126 = vmatpush1.bf16.msra.mxu0 0
      %5127 = vmatprep.subr.bf16.mxu0 0
      %5128 = vmatpush1.bf16.msra.mxu0 0
      %5129 = vmatprep.subr.bf16.mxu0 0
      %5130 = vmatpush1.bf16.msra.mxu0 0
      %5131 = vmatprep.subr.bf16.mxu0 0
      %5132 = vmatpush1.bf16.msra.mxu0 0
      %5133 = vmatprep.subr.bf16.mxu0 0
      %5134 = vmatpush1.bf16.msra.mxu0 0
      %5135 = vmatprep.subr.bf16.mxu0 0
      %5136 = vmatpush1.bf16.msra.mxu0 0
      %5137 = vmatprep.subr.bf16.mxu0 0
      %5138 = vmatpush1.bf16.msra.mxu0 0
      %5139 = vmatprep.subr.bf16.mxu0 0
      %5140 = vmatpush1.bf16.msra.mxu0 0
      %5141 = vmatprep.subr.bf16.mxu0 0
      %5142 = vmatpush1.bf16.msra.mxu0 0
      %5143 = vmatprep.mubr.bf16.mxu0 0
      %5144 = vmatmul.mubr.bf16.gmra.mrb[0].mxu0 %v5109
      %v5145 = vpop.f32.mrb[0].mxu0
      %v5146 = vadd.f32 %v5106, %v5145
      %v5147 = vpop.f32.mrb[0].mxu0
      %v5148 = vpop.f32.mrb[0].mxu0
      %v5149 = vpop.f32.mrb[0].mxu0
      %5150 = vdwg.mxu0
      %v5151 = vmul.f32 %v5146, %v5146
      %v5152 = vmul.f32 %v5146, %v5151
      %v5153 = vmul.f32 %v5152, 0.044715
      %v5154 = vadd.f32 %v5146, %v5153
      %v5155 = vmul.f32 %v5154, 0.7978846
      %v5156 = vtanh.pop %v5155
      %v5157 = vadd.f32 %v5156, 1.0
      %v5158 = vmul.f32 %v5157, 0.5
      %v5159 = vmul.f32 %v5146, %v5158
      %s5160 = scalar_lea.vmem %s31, 384
      %v5161 = vld [vmem:[%s5160] sm:$0xff]
      %v5162 = vld [vmem:[%s5160 + $0x8] sm:$0xff]
      %v5163 = vld [vmem:[%s5160 + $0x10] sm:$0xff]
      %v5164 = vld [vmem:[%s5160 + $0x18] sm:$0xff]
      %v5165 = vld [vmem:[%s5160 + $0x20] sm:$0xff]
      %v5166 = vld [vmem:[%s5160 + $0x28] sm:$0xff]
      %v5167 = vld [vmem:[%s5160 + $0x30] sm:$0xff]
      %v5168 = vld [vmem:[%s5160 + $0x38] sm:$0xff]
      %v5169 = vld [vmem:[%s5160 + $0x40] sm:$0xff]
      %v5170 = vld [vmem:[%s5160 + $0x48] sm:$0xff]
      %v5171 = vld [vmem:[%s5160 + $0x50] sm:$0xff]
      %v5172 = vld [vmem:[%s5160 + $0x58] sm:$0xff]
      %v5173 = vld [vmem:[%s5160 + $0x60] sm:$0xff]
      %v5174 = vld [vmem:[%s5160 + $0x68] sm:$0xff]
      %v5175 = vld [vmem:[%s5160 + $0x70] sm:$0xff]
      %v5176 = vld [vmem:[%s5160 + $0x78] sm:$0xff]
      %v5177 = vpack.c.bf16 %v5159, %v5159
      %v5178 = vpack.c.bf16 %v5162, %v5161
      %v5179 = vpack.c.bf16 %v5164, %v5163
      %v5180 = vpack.c.bf16 %v5166, %v5165
      %v5181 = vpack.c.bf16 %v5168, %v5167
      %v5182 = vpack.c.bf16 %v5170, %v5169
      %v5183 = vpack.c.bf16 %v5172, %v5171
      %v5184 = vpack.c.bf16 %v5174, %v5173
      %v5185 = vpack.c.bf16 %v5176, %v5175
      %5186 = vmatprep.subr.bf16.mxu0 0
      %5187 = vmatpush1.bf16.msra.mxu0 %v5178
      %5188 = vmatprep.subr.bf16.mxu0 0
      %5189 = vmatpush1.bf16.msra.mxu0 %v5179
      %5190 = vmatprep.subr.bf16.mxu0 0
      %5191 = vmatpush1.bf16.msra.mxu0 %v5180
      %5192 = vmatprep.subr.bf16.mxu0 0
      %5193 = vmatpush1.bf16.msra.mxu0 %v5181
      %5194 = vmatprep.subr.bf16.mxu0 0
      %5195 = vmatpush1.bf16.msra.mxu0 %v5182
      %5196 = vmatprep.subr.bf16.mxu0 0
      %5197 = vmatpush1.bf16.msra.mxu0 %v5183
      %5198 = vmatprep.subr.bf16.mxu0 0
      %5199 = vmatpush1.bf16.msra.mxu0 %v5184
      %5200 = vmatprep.subr.bf16.mxu0 0
      %5201 = vmatpush1.bf16.msra.mxu0 %v5185
      %5202 = vmatprep.subr.bf16.mxu0 0
      %5203 = vmatpush1.bf16.msra.mxu0 0
      %5204 = vmatprep.subr.bf16.mxu0 0
      %5205 = vmatpush1.bf16.msra.mxu0 0
      %5206 = vmatprep.subr.bf16.mxu0 0
      %5207 = vmatpush1.bf16.msra.mxu0 0
      %5208 = vmatprep.subr.bf16.mxu0 0
      %5209 = vmatpush1.bf16.msra.mxu0 0
      %5210 = vmatprep.subr.bf16.mxu0 0
      %5211 = vmatpush1.bf16.msra.mxu0 0
      %5212 = vmatprep.subr.bf16.mxu0 0
      %5213 = vmatpush1.bf16.msra.mxu0 0
      %5214 = vmatprep.subr.bf16.mxu0 0
      %5215 = vmatpush1.bf16.msra.mxu0 0
      %5216 = vmatprep.subr.bf16.mxu0 0
      %5217 = vmatpush1.bf16.msra.mxu0 0
      %5218 = vmatprep.mubr.bf16.mxu0 0
      %5219 = vmatmul.mubr.bf16.gmra.mrb[0].mxu0 %v5177
      %v5220 = vpop.f32.mrb[0].mxu0
      %v5221 = vadd.f32 0.0, %v5220
      %v5222 = vpop.f32.mrb[0].mxu0
      %v5223 = vpop.f32.mrb[0].mxu0
      %v5224 = vpop.f32.mrb[0].mxu0
      %5225 = vdwg.mxu0
      %v5226 = vadd.f32 %v5060, %v5221
      %s5227 = scalar_lea.vmem %s33, 3
      %v5228 = vld [vmem:[%s5227] sm:$0x1]
      %v5230 = vlaneseq
      %v5231 = vshrl.u32 %v5230, 7
      %v5232 = vsub.s32 0, %v5231
      %v5233 = vrot.slane %v5228, %v5232
      %v5235 = vadd.f32 %v5226, %v5233
      %v5236 = vadd.f32 %v3043, %v5235
      %v5237 = vld [vmem:[%s43] sm:$0xff]
      %v5238 = vld [vmem:[%s43 + $0x8] sm:$0xff]
      %v5239 = vld [vmem:[%s43 + $0x10] sm:$0xff]
      %v5240 = vld [vmem:[%s43 + $0x18] sm:$0xff]
      %v5241 = vpack.c.bf16 %v5236, %v5236
      %v5242 = vpack.c.bf16 %v5238, %v5237
      %v5243 = vpack.c.bf16 %v5240, %v5239
      %v5244 = vld [vmem:[%s45] sm:$0x1]
      %v5246 = vlaneseq
      %v5247 = vshrl.u32 %v5246, 7
      %v5248 = vsub.s32 0, %v5247
      %v5249 = vrot.slane %v5244, %v5248
      %v5252 = vsel %vm1046, %v5241, 0
      %5254 = vmatprep.subr.bf16.mxu0 0
      %5255 = vmatpush1.bf16.msra.mxu0 %v5242
      %5256 = vmatprep.subr.bf16.mxu0 0
      %5257 = vmatpush1.bf16.msra.mxu0 %v5243
      %5258 = vmatprep.subr.bf16.mxu0 0
      %5259 = vmatpush1.bf16.msra.mxu0 0
      %5260 = vmatprep.subr.bf16.mxu0 0
      %5261 = vmatpush1.bf16.msra.mxu0 0
      %5262 = vmatprep.subr.bf16.mxu0 0
      %5263 = vmatpush1.bf16.msra.mxu0 0
      %5264 = vmatprep.subr.bf16.mxu0 0
      %5265 = vmatpush1.bf16.msra.mxu0 0
      %5266 = vmatprep.subr.bf16.mxu0 0
      %5267 = vmatpush1.bf16.msra.mxu0 0
      %5268 = vmatprep.subr.bf16.mxu0 0
      %5269 = vmatpush1.bf16.msra.mxu0 0
      %5270 = vmatprep.subr.bf16.mxu0 0
      %5271 = vmatpush1.bf16.msra.mxu0 0
      %5272 = vmatprep.subr.bf16.mxu0 0
      %5273 = vmatpush1.bf16.msra.mxu0 0
      %5274 = vmatprep.subr.bf16.mxu0 0
      %5275 = vmatpush1.bf16.msra.mxu0 0
      %5276 = vmatprep.subr.bf16.mxu0 0
      %5277 = vmatpush1.bf16.msra.mxu0 0
      %5278 = vmatprep.subr.bf16.mxu0 0
      %5279 = vmatpush1.bf16.msra.mxu0 0
      %5280 = vmatprep.subr.bf16.mxu0 0
      %5281 = vmatpush1.bf16.msra.mxu0 0
      %5282 = vmatprep.subr.bf16.mxu0 0
      %5283 = vmatpush1.bf16.msra.mxu0 0
      %5284 = vmatprep.subr.bf16.mxu0 0
      %5285 = vmatpush1.bf16.msra.mxu0 0
      %5286 = vmatprep.mubr.bf16.mxu0 0
      %5287 = vmatmul.mubr.bf16.gmra.mrb[0].mxu0 %v5252
      %v5288 = vpop.f32.mrb[0].mxu0
      %v5289 = vadd.f32 %v5249, %v5288
      %v5290 = vpop.f32.mrb[0].mxu0
      %v5291 = vpop.f32.mrb[0].mxu0
      %v5292 = vpop.f32.mrb[0].mxu0
      %5293 = vdwg.mxu0
      %v5294 = vtanh.pop %v5289
      %v5295 = vld [vmem:[%s47] sm:$0x1]
      %v5297 = vlaneseq
      %v5298 = vshrl.u32 %v5297, 7
      %v5299 = vsub.s32 0, %v5298
      %v5300 = vrot.slane %v5295, %v5299
      %v5302 = vmul.f32 %v5294, %v5300
      %v5303 = vsel %vm1046, %v5302, 0.0
      %5304 = vadd.xlane.f32.xlu0 %v5303
      %v5305 = vpop.xlane.xlu0 %5304
      %v5306 = vrot.slane %v5305, 4
      %v5307 = vmax.f32 %v5305, %v5306
      %v5308 = vrot.slane %v5307, 2
      %v5309 = vmax.f32 %v5307, %v5308
      %v5310 = vrot.slane %v5309, 1
      %v5311 = vmax.f32 %v5309, %v5310
      %v5312 = vsub.f32 %v5305, %v5311
      %v5313 = vmul.f32 %v5312, 1.442695
      %v5314 = vpow.pop %v5313
      %v5315 = vrot.slane %v5314, 4
      %v5316 = vadd.f32 %v5314, %v5315
      %v5317 = vrot.slane %v5316, 2
      %v5318 = vadd.f32 %v5316, %v5317
      %v5319 = vrot.slane %v5318, 1
      %v5320 = vadd.f32 %v5318, %v5319
      %v5321 = vrcp.pop %v5320
      %v5322 = vmul.f32 %v5314, %v5321
      %v5323 = vmul.f32 %v5322, %v5236
      %v5324 = vsel %vm1046, %v5323, 0.0
      %v5325 = vrot.slane %v5324, 4
      %v5326 = vadd.f32 %v5324, %v5325
      %v5327 = vrot.slane %v5326, 2
      %v5328 = vadd.f32 %v5326, %v5327
      %v5329 = vrot.slane %v5328, 1
      %v5330 = vadd.f32 %v5328, %v5329
      %s5331 = scalar_lea.vmem %s49, 2
      %v5332 = vld [vmem:[%s5331] sm:$0x1]
      %s5333 = scalar_lea.vmem %s51, 2
      %v5334 = vld [vmem:[%s5333] sm:$0x1]
      %v5335 = vsel %vm1046, %v5330, 0.0
      %5336 = vadd.xlane.f32.xlu0 %v5335
      %v5337 = vpop.xlane.xlu0 %5336
      %v5338 = vmul.f32 %v5337, %v1050
      %v5339 = vsub.f32 %v5330, %v5338
      %v5340 = vmul.f32 %v5339, %v5339
      %v5341 = vsel %vm1046, %v5340, 0.0
      %5342 = vadd.xlane.f32.xlu0 %v5341
      %v5343 = vpop.xlane.xlu0 %5342
      %v5344 = vmul.f32 %v5343, %v1050
      %v5345 = vadd.f32 %v5344, 1e-05
      %v5346 = vrsqrt.pop %v5345
      %v5347 = vmul.f32 %v5339, %v5346
      %v5348 = vmul.f32 %v5347, %v5332
      %v5349 = vadd.f32 %v5348, %v5334
      %s5350 = scalar_lea.vmem %s53, 2
      %v5351 = vld [vmem:[%s5350] sm:$0x1]
      %v5352 = vmul.f32 %v5349, %v5351
      %vm5353 = vcmask 253952
      %v5354 = vsel %vm5353, %v5352, 0.0
      %5355 = vadd.xlane.f32.xlu0 %v5354
      %v5356 = vpop.xlane.xlu0 %5355
      %s5357 = scalar_lea.vmem %s55, 2
      %v5358 = vld [vmem:[%s5357] sm:$0x1]
      %v5359 = vadd.f32 %v5356, %v5358
      %vm5360 = vcmask 0
      %5361 = vst.msk [vmem:[%s970] sm:$0x1] %vm5360, %v5359
      %p5362 = scmp.lt.s32.totalorder %s73, 1
      %s5363 = scalar_select %p5362, %s73, 1
      %s5364 = scalar_lea.vmem %s57, %s5363
      %p5365 = scmp.lt.s32.totalorder %s73, 1
      %s5366 = scalar_select %p5365, %s73, 1
      %s5367 = smul.addr %s5366, 8
      %s5368 = scalar_lea.vmem %s59, %s5367
      %p5369 = scmp.lt.s32.totalorder %s73, 1
      %s5370 = scalar_select %p5369, %s73, 1
      %s5371 = smul.addr %s5370, 8
      %s5372 = scalar_lea.vmem %s61, %s5371
      // Predicated region
      $region133: #{prep_model_forward.1} parent=131 // pred_check
        %p5373 = pneg %p694
      $region134: #{prep_model_forward.1} parent=131 // pred_check_branch
        %5375 = sbr.rel (%p5373) target = $region136
      $region135: #{prep_model_forward.1} parent=131 // pred_region
        _
      $region136: #{prep_model_forward.1} parent=131 // pred_fallthru
        _
      // Predicated region
      $region137: #{prep_model_forward.1} parent=131 // pred_check
        %p5376 = pneg %p720
      $region138: #{prep_model_forward.1} parent=131 // pred_check_branch
        %5378 = sbr.rel (%p5376) target = $region140
      $region139: #{prep_model_forward.1} parent=131 // pred_region
        _
      $region140: #{prep_model_forward.1} parent=131 // pred_fallthru
        _
      // Predicated region
      $region141: #{prep_model_forward.1} parent=131 // pred_check
        %p5379 = pneg %p746
      $region142: #{prep_model_forward.1} parent=131 // pred_check_branch
        %5381 = sbr.rel (%p5379) target = $region144
      $region143: #{prep_model_forward.1} parent=131 // pred_region
        _
      $region144: #{prep_model_forward.1} parent=131 // pred_fallthru
        _
    $region132: #{prep_model_forward.1} parent=5 // pred_fallthru
      _
    %p5382 = scmp.le.s32.totalorder 2, %s68
    // Predicated region
    $region145: #{prep_model_forward.1} parent=5 // pred_check
      %p5383 = pneg %p5382
    $region146: #{prep_model_forward.1} parent=5 // pred_check_branch
      %5385 = sbr.rel (%p5383) target = $region148
    $region147: #{prep_model_forward.1} parent=5 // pred_region
      %s5386 = ssub.s32 %s68, 2
      // Predicated region
      $region149: #{prep_model_forward.1} parent=147 // pred_check
        %p5387 = pneg %p700
      $region150: #{prep_model_forward.1} parent=147 // pred_check_branch
        %5389 = sbr.rel (%p5387) target = $region152
      $region151: #{prep_model_forward.1} parent=147 // pred_region
        %p5390 = scmp.lt.s32.totalorder %s74, 1
        %s5391 = scalar_select %p5390, %s74, 1
        %s5392 = scalar_lea.vmem %s57, %s5391
      $region152: #{prep_model_forward.1} parent=147 // pred_fallthru
        _
      // Predicated region
      $region153: #{prep_model_forward.1} parent=147 // pred_check
        %p5393 = pneg %p726
      $region154: #{prep_model_forward.1} parent=147 // pred_check_branch
        %5395 = sbr.rel (%p5393) target = $region156
      $region155: #{prep_model_forward.1} parent=147 // pred_region
        %p5396 = scmp.lt.s32.totalorder %s74, 1
        %s5397 = scalar_select %p5396, %s74, 1
        %s5398 = smul.addr %s5397, 8
        %s5399 = scalar_lea.vmem %s59, %s5398
      $region156: #{prep_model_forward.1} parent=147 // pred_fallthru
        _
      // Predicated region
      $region157: #{prep_model_forward.1} parent=147 // pred_check
        %p5400 = pneg %p752
      $region158: #{prep_model_forward.1} parent=147 // pred_check_branch
        %5402 = sbr.rel (%p5400) target = $region160
      $region159: #{prep_model_forward.1} parent=147 // pred_region
        %p5403 = scmp.lt.s32.totalorder %s74, 1
        %s5404 = scalar_select %p5403, %s74, 1
        %s5405 = smul.addr %s5404, 8
        %s5406 = scalar_lea.vmem %s61, %s5405
      $region160: #{prep_model_forward.1} parent=147 // pred_fallthru
        _
    $region148: #{prep_model_forward.1} parent=5 // pred_fallthru
      _
  $region6: #{prep_model_forward.1} parent=0 // loop_footer
    %s72 = sadd.s32 1, %s68
  $region7: #{prep_model_forward.1} parent=0 // loop_footer_branch
    %67 = sbr.rel target = $region3
  $region8: #{prep_model_forward.1} parent=0 // loop_exit
    _

</llo_original>
